<compile_context>
chip_gen: v7x
topology: tpu7x:2x2x1
jax: 0.10.0
libtpu: 0.0.40
codegen_flags: <defaults>
</compile_context>

<pallas_src>
import functools

import jax
import jax.numpy as jnp
from jax.experimental import pallas as pl
from jax.experimental.pallas import tpu as pltpu


def _softplus(x):
    # numerically stable softplus using only exp / log / abs / max (EUP-friendly)
    return jnp.maximum(x, 0.0) + jnp.log(1.0 + jnp.exp(-jnp.abs(x)))


WEIGHT_ORDER = [
    "w1k", "w1kt", "b1c",            # front-end Conv1d(1->F,K,'same') (+ shared deconv weights)
    "lcwt", "lcbr",                  # locally connected conv (per-time taps, shared over channels)
    "wls", "blr", "wdt", "bdr",      # pooled-select+latent dense, time-distributed softplus dense
    "umat",                          # 0/1 upsample matrix (P latent frames -> L samples)
    "wat", "bac", "wbt", "bbc", "wct", "bcc", "wd2t", "bd2c", "wet", "bec",  # dense chain
    "sw0c", "sb0c", "sat",           # SAAF coefficients
]


def distortion_kernel(
    x_ref,                                  # (TB, 1, L) f32
    w1k_ref, w1kt_ref, b1c_ref,             # (F,K) f32, (K,F) f32, (F,1) f32
    lcwt_ref, lcbr_ref,                     # (2K,L) f32, (1,L) f32
    wls_ref, blr_ref, wdt_ref, bdr_ref,     # (L,P) bf16, (1,P) f32, (P,P) bf16, (1,P) f32
    umat_ref,                               # (P,L) f32
    wat_ref, bac_ref, wbt_ref, bbc_ref,     # dense chain: transposed weights (bf16),
    wct_ref, bcc_ref, wd2t_ref, bd2c_ref,   #   column biases (f32)
    wet_ref, bec_ref,
    sw0c_ref, sb0c_ref, sat_ref,            # (F,1) f32, (F,1) f32, (F,NB) f32
    out_ref,                                # (TB, 1, L) f32
    xpad, im2, pad2, mpad, pad3, gbuf,      # VMEM scratch
    *, L, F, K, P, NB, TB, BREAK_RANGE):
  K2 = 2 * K
  left1 = (K - 1) // 2
  right1 = K - 1 - left1
  left2 = (K2 - 1) // 2
  right2 = K2 - 1 - left2
  f32 = jnp.float32
  bf16 = jnp.bfloat16

  # Zero only the halo columns of the padding scratch (interiors are always fully
  # overwritten below); hoisted out of the per-batch loop.
  if left1 > 0:
    xpad[:, 0:left1] = jnp.zeros((1, left1), f32)
    pad3[:, 0:left1] = jnp.zeros((F, left1), f32)
  if right1 > 0:
    xpad[:, left1 + L:L + K - 1] = jnp.zeros((1, right1), f32)
    pad3[:, left1 + L:L + K - 1] = jnp.zeros((F, right1), f32)
  if left2 > 0:
    pad2[:, 0:left2] = jnp.zeros((F, left2), f32)
  if right2 > 0:
    pad2[:, left2 + L:L + K2 - 1] = jnp.zeros((F, right2), f32)
  mpad[:, L:L + P] = jnp.zeros((F, P), f32)

  # ------------- per-batch front section (conv / gate / latent / multiply) -------------
  pre = []
  for b in range(TB):
    xrow = x_ref[b]                                         # (1, L)

    # Conv1d(1 -> F, K, padding='same'): im2col (K, L) + one MXU matmul.
    xpad[:, left1:left1 + L] = xrow
    for k in range(K):
      im2[k:k + 1, :] = xpad[:, k:k + L]
    xconv = jnp.dot(w1k_ref[...], im2[...],
                    preferred_element_type=f32) + b1c_ref[...]           # (F, L)
    xabs = jnp.abs(xconv)

    # Locally connected conv (per-time taps shared over channels) + softplus gate.
    # TODO(synk): `layers.Convolution1D_Locally_Connected` unavailable; same
    # interpretation as v1 (distinct taps per time step, shared across channels).
    pad2[:, left2:left2 + L] = xabs
    m = jnp.zeros((F, L), f32)
    for j in range(K2):
      m = m + pad2[:, j:j + L] * lcwt_ref[j:j + 1, :]
    m = _softplus(m + lcbr_ref[...])                                     # (F, L)

    # BatchMaxPooling1d(P): running max over windows of P along lanes; the stride-P
    # down-select is folded into the latent matmul weights (wls) instead of strided loads.
    mpad[:, 0:L] = m
    mmax = mpad[:, 0:L]
    for r in range(1, P):
      mmax = jnp.maximum(mmax, mpad[:, r:r + L])

    # Latent locally-connected dense + TimeDistributed softplus dense (MXU, bf16).
    # TODO(synk): `layers.LatentSpace_DNN_LocallyConnected_Dense` unavailable; same
    # interpretation as v1 (dense over the 64 pooled frames, then dense P->P).
    z1 = jnp.dot(mmax.astype(bf16), wls_ref[...],
                 preferred_element_type=f32) + blr_ref[...]              # (F, P)
    z2 = _softplus(jnp.dot(z1.astype(bf16), wdt_ref[...],
                           preferred_element_type=f32) + bdr_ref[...])   # (F, P)

    # UpSampling1D back to L via a 0/1 matrix on the MXU, then Multiply([P, M_]).
    ups = jnp.dot(z2, umat_ref[...], preferred_element_type=f32)         # (F, L)
    pre.append(xconv * ups)

  y = pre[0] if TB == 1 else jnp.concatenate(pre, axis=1)                # (F, TB*L)

  # ------------- shared dense chain (MXU, bf16 operands, f32 accumulate) ---------------
  def dense(w_ref, b_ref, v):
    return jnp.dot(w_ref[...], v.astype(bf16),
                   preferred_element_type=f32) + b_ref[...]

  y = jnp.maximum(dense(wat_ref, bac_ref, y), 0.0)
  y = jnp.maximum(dense(wbt_ref, bbc_ref, y), 0.0)
  y = jnp.maximum(dense(wct_ref, bcc_ref, y), 0.0)
  y = jnp.maximum(dense(wd2t_ref, bd2c_ref, y), 0.0)
  y = dense(wet_ref, bec_ref, y)

  # ------------- SAAF (per-channel piecewise-linear hinge basis), lane-dense -----------
  # TODO(synk): exact SAAF basis lives in `layers`; same hinge-basis interpretation as
  # v1, now evaluated on fully lane-dense (F, TB*L) tiles (4x fewer VPU vreg-ops).
  saaf = sw0c_ref[...] * y + sb0c_ref[...]
  for k in range(NB):
    bp = -BREAK_RANGE + (2.0 * BREAK_RANGE) * k / (NB - 1)
    saaf = saaf + sat_ref[:, k:k + 1] * jnp.maximum(y - bp, 0.0)
  y = saaf                                                               # (F, TB*L)

  # ------------- Deconvolution back to one channel (per batch), lane-dense output ------
  # TODO(synk): `layers.Deconvolution` unavailable; same interpretation as v1 (transpose
  # of the front conv, shared flipped kernel).  G = w1^T @ Ypad runs on the MXU (also
  # performing the cross-channel reduction); only K shifted single-sublane rows are
  # accumulated on the VPU and the result is stored as an unmasked (1, L) lane row.
  for b in range(TB):
    yb = y[:, b * L:(b + 1) * L]                                         # (F, L)
    pad3[:, left1:left1 + L] = yb
    gbuf[...] = jnp.dot(w1kt_ref[...], pad3[...],
                        preferred_element_type=f32)                      # (K, L+K-1)
    orow = jnp.zeros((1, L), f32)
    for k in range(K):
      s = K - 1 - k
      orow = orow + gbuf[k:k + 1, s:s + L]
    out_ref[b] = orow


def init_params(key, *, L, F, K):
    """Module parameters in their 'natural' (PyTorch-like) orientation."""
    P = L // 64
    F2 = F // 2
    K2 = 2 * K
    NB = 25
    keys = jax.random.split(key, 32)

    def w(k, shape, scale):
        return jax.random.normal(k, shape, jnp.float32) * scale

    return {
        "w1":  w(keys[0], (K, F), 0.3),
        "b1":  w(keys[1], (1, F), 0.05),
        "lcw": w(keys[2], (L, K2), 0.1),
        "lcb": w(keys[3], (L, 1), 0.05),
        "wl":  w(keys[4], (P, 64), 0.1),
        "bl":  w(keys[5], (P, 1), 0.05),
        "wd":  w(keys[6], (P, P), 0.2),
        "bd":  w(keys[7], (P, 1), 0.05),
        "wa":  w(keys[8], (F, F), 0.15),
        "ba":  w(keys[9], (1, F), 0.05),
        "wb":  w(keys[10], (F, F2), 0.15),
        "bb":  w(keys[11], (1, F2), 0.05),
        "wc":  w(keys[12], (F2, F2), 0.2),
        "bc":  w(keys[13], (1, F2), 0.05),
        "wd2": w(keys[14], (F2, F2), 0.2),
        "bd2": w(keys[15], (1, F2), 0.05),
        "we":  w(keys[16], (F2, F), 0.2),
        "be":  w(keys[17], (1, F), 0.05),
        "sw0": jnp.ones((1, F), jnp.float32),
        "sb0": jnp.zeros((1, F), jnp.float32),
        "sa":  w(keys[18], (NB, F), 0.02),
    }


def _kernel_weights(params, *, L, F, K):
    """Precompute kernel-layout (channels-on-sublanes) weights in the wrapper."""
    P = L // 64
    NFRAMES = L // P          # = 64 pooled frames
    f32 = jnp.float32
    bf16 = jnp.bfloat16
    F2 = F // 2

    # Pool-frame selection folded into the latent dense: wls[t, p] = wl[p, t // P] for
    # t a multiple of P (the columns where the running max equals the group max), else 0.
    wls = jnp.zeros((L, P), f32).at[jnp.arange(NFRAMES) * P, :].set(params["wl"].T)
    # 0/1 upsample matrix: each latent frame repeated L // P times along lanes.
    umat = (jnp.arange(L)[None, :] // (L // P) == jnp.arange(P)[:, None]).astype(f32)

    kw = {
        "w1k":  params["w1"].T,                       # (F, K)  front conv (im2col matmul)
        "w1kt": params["w1"],                         # (K, F)  deconv matmul
        "b1c":  params["b1"].reshape(F, 1),
        "lcwt": params["lcw"].T,                      # (2K, L) per-time taps as lane rows
        "lcbr": params["lcb"].reshape(1, L),
        "wls":  wls.astype(bf16),
        "blr":  params["bl"].reshape(1, P),
        "wdt":  params["wd"].T.astype(bf16),
        "bdr":  params["bd"].reshape(1, P),
        "umat": umat,
        "wat":  params["wa"].T.astype(bf16),  "bac":  params["ba"].reshape(F, 1),
        "wbt":  params["wb"].T.astype(bf16),  "bbc":  params["bb"].reshape(F2, 1),
        "wct":  params["wc"].T.astype(bf16),  "bcc":  params["bc"].reshape(F2, 1),
        "wd2t": params["wd2"].T.astype(bf16), "bd2c": params["bd2"].reshape(F2, 1),
        "wet":  params["we"].T.astype(bf16),  "bec":  params["be"].reshape(F, 1),
        "sw0c": params["sw0"].reshape(F, 1),
        "sb0c": params["sb0"].reshape(F, 1),
        "sat":  params["sa"].T,                       # (F, NB)
    }
    return [kw[name] for name in WEIGHT_ORDER]


def distortion_forward(x, params, *, L, F, K, batch_tile=1):
    """x: (B, L, 1) float32 -> (B, L, 1) float32."""
    B = x.shape[0]
    TB = batch_tile
    assert B % TB == 0, (B, TB)
    P = L // 64
    NB = 25

    weights = _kernel_weights(params, L=L, F=F, K=K)
    x_rows = x.reshape(B, 1, L)                       # lane-dense input rows

    kernel = functools.partial(
        distortion_kernel, L=L, F=F, K=K, P=P, NB=NB, TB=TB, BREAK_RANGE=0.2)

    in_specs = [pl.BlockSpec((TB, 1, L), lambda g: (g, 0, 0))]
    in_specs += [pl.BlockSpec(w.shape, lambda g: (0, 0)) for w in weights]

    out = pl.pallas_call(
        kernel,
        out_shape=jax.ShapeDtypeStruct((B, 1, L), jnp.float32),
        grid_spec=pltpu.PrefetchScalarGridSpec(
            num_scalar_prefetch=0,
            grid=(B // TB,),
            in_specs=in_specs,
            out_specs=pl.BlockSpec((TB, 1, L), lambda g: (g, 0, 0)),
            scratch_shapes=[
                pltpu.VMEM((1, L + K - 1), jnp.float32),        # padded input row
                pltpu.VMEM((K, L), jnp.float32),                # front-conv im2col
                pltpu.VMEM((F, L + 2 * K - 1), jnp.float32),    # locally-connected padding
                pltpu.VMEM((F, L + P), jnp.float32),            # max-pool shift buffer
                pltpu.VMEM((F, L + K - 1), jnp.float32),        # deconv padding
                pltpu.VMEM((K, L + K - 1), jnp.float32),        # deconv per-tap rows
            ],
        ),
        # Grid steps (batch tiles) are fully independent -> parallel lets v7x shard them
        # across its two TensorCores; measured-neutral on single-TC v5e/v6e.
        # For real window lengths (L~4096, F=128) also set vmem_limit_bytes with headroom
        # (v7x: 64 MiB physical / 32 MiB default scoped) and shrink batch_tile.
        compiler_params=pltpu.CompilerParams(
            dimension_semantics=("parallel",)),
    )(x_rows, *weights)

    return out.reshape(B, L, 1)


if __name__ == "__main__":
    # small, self-consistent config: window_length=256, filters=32, kernel_size=9
    B, L, F, K = 4, 256, 32, 9
    key = jax.random.PRNGKey(0)
    kx, kp = jax.random.split(key)
    x = jax.random.normal(kx, (B, L, 1), jnp.float32)
    params = init_params(kp, L=L, F=F, K=K)

    # two batch elements per grid step (amortizes per-step pipeline overhead, widens the
    # dense-chain matmul N) and two grid steps for the parallel batch axis (v7x megacore).
    out = distortion_forward(x, params, L=L, F=F, K=K, batch_tile=2)
    out = jax.block_until_ready(out)
    assert out.shape == (B, L, 1), out.shape
    assert bool(jnp.all(jnp.isfinite(out)))
    print("KERNEL_OK")
</pallas_src>

<mosaic_0001>
module attributes {stable_mosaic.version = 11 : i64} {
  func.func @distortion_kernel(%arg0: i32, %arg1: memref<2x1x256xf32, #tpu.memory_space<vmem>>, %arg2: memref<32x9xf32, #tpu.memory_space<vmem>>, %arg3: memref<9x32xf32, #tpu.memory_space<vmem>>, %arg4: memref<32x1xf32, #tpu.memory_space<vmem>>, %arg5: memref<18x256xf32, #tpu.memory_space<vmem>>, %arg6: memref<1x256xf32, #tpu.memory_space<vmem>>, %arg7: memref<256x4xbf16, #tpu.memory_space<vmem>>, %arg8: memref<1x4xf32, #tpu.memory_space<vmem>>, %arg9: memref<4x4xbf16, #tpu.memory_space<vmem>>, %arg10: memref<1x4xf32, #tpu.memory_space<vmem>>, %arg11: memref<4x256xf32, #tpu.memory_space<vmem>>, %arg12: memref<32x32xbf16, #tpu.memory_space<vmem>>, %arg13: memref<32x1xf32, #tpu.memory_space<vmem>>, %arg14: memref<16x32xbf16, #tpu.memory_space<vmem>>, %arg15: memref<16x1xf32, #tpu.memory_space<vmem>>, %arg16: memref<16x16xbf16, #tpu.memory_space<vmem>>, %arg17: memref<16x1xf32, #tpu.memory_space<vmem>>, %arg18: memref<16x16xbf16, #tpu.memory_space<vmem>>, %arg19: memref<16x1xf32, #tpu.memory_space<vmem>>, %arg20: memref<32x16xbf16, #tpu.memory_space<vmem>>, %arg21: memref<32x1xf32, #tpu.memory_space<vmem>>, %arg22: memref<32x1xf32, #tpu.memory_space<vmem>>, %arg23: memref<32x1xf32, #tpu.memory_space<vmem>>, %arg24: memref<32x25xf32, #tpu.memory_space<vmem>>, %arg25: memref<2x1x256xf32, #tpu.memory_space<vmem>>, %arg26: memref<1x264xf32, #tpu.memory_space<vmem>>, %arg27: memref<9x256xf32, #tpu.memory_space<vmem>>, %arg28: memref<32x273xf32, #tpu.memory_space<vmem>>, %arg29: memref<32x260xf32, #tpu.memory_space<vmem>>, %arg30: memref<32x264xf32, #tpu.memory_space<vmem>>, %arg31: memref<9x264xf32, #tpu.memory_space<vmem>>) attributes {dimension_semantics = [#tpu.dimension_semantics<parallel>], iteration_bounds = array<i64: 2>, scalar_prefetch = 0 : i64, scratch_operands = 6 : i64, tpu.core_type = #tpu.core_type<tc>, window_params = [{transform_indices = @transform_0, window_bounds = array<i64: 2, 1, 256>}, {pipeline_mode = #tpu.pipeline_mode<synchronous>, transform_indices = @transform_1, window_bounds = array<i64: 32, 9>}, {pipeline_mode = #tpu.pipeline_mode<synchronous>, transform_indices = @transform_2, window_bounds = array<i64: 9, 32>}, {pipeline_mode = #tpu.pipeline_mode<synchronous>, transform_indices = @transform_3, window_bounds = array<i64: 32, 1>}, {pipeline_mode = #tpu.pipeline_mode<synchronous>, transform_indices = @transform_4, window_bounds = array<i64: 18, 256>}, {pipeline_mode = #tpu.pipeline_mode<synchronous>, transform_indices = @transform_5, window_bounds = array<i64: 1, 256>}, {pipeline_mode = #tpu.pipeline_mode<synchronous>, transform_indices = @transform_6, window_bounds = array<i64: 256, 4>}, {pipeline_mode = #tpu.pipeline_mode<synchronous>, transform_indices = @transform_7, window_bounds = array<i64: 1, 4>}, {pipeline_mode = #tpu.pipeline_mode<synchronous>, transform_indices = @transform_8, window_bounds = array<i64: 4, 4>}, {pipeline_mode = #tpu.pipeline_mode<synchronous>, transform_indices = @transform_9, window_bounds = array<i64: 1, 4>}, {pipeline_mode = #tpu.pipeline_mode<synchronous>, transform_indices = @transform_10, window_bounds = array<i64: 4, 256>}, {pipeline_mode = #tpu.pipeline_mode<synchronous>, transform_indices = @transform_11, window_bounds = array<i64: 32, 32>}, {pipeline_mode = #tpu.pipeline_mode<synchronous>, transform_indices = @transform_12, window_bounds = array<i64: 32, 1>}, {pipeline_mode = #tpu.pipeline_mode<synchronous>, transform_indices = @transform_13, window_bounds = array<i64: 16, 32>}, {pipeline_mode = #tpu.pipeline_mode<synchronous>, transform_indices = @transform_14, window_bounds = array<i64: 16, 1>}, {pipeline_mode = #tpu.pipeline_mode<synchronous>, transform_indices = @transform_15, window_bounds = array<i64: 16, 16>}, {pipeline_mode = #tpu.pipeline_mode<synchronous>, transform_indices = @transform_16, window_bounds = array<i64: 16, 1>}, {pipeline_mode = #tpu.pipeline_mode<synchronous>, transform_indices = @transform_17, window_bounds = array<i64: 16, 16>}, {pipeline_mode = #tpu.pipeline_mode<synchronous>, transform_indices = @transform_18, window_bounds = array<i64: 16, 1>}, {pipeline_mode = #tpu.pipeline_mode<synchronous>, transform_indices = @transform_19, window_bounds = array<i64: 32, 16>}, {pipeline_mode = #tpu.pipeline_mode<synchronous>, transform_indices = @transform_20, window_bounds = array<i64: 32, 1>}, {pipeline_mode = #tpu.pipeline_mode<synchronous>, transform_indices = @transform_21, window_bounds = array<i64: 32, 1>}, {pipeline_mode = #tpu.pipeline_mode<synchronous>, transform_indices = @transform_22, window_bounds = array<i64: 32, 1>}, {pipeline_mode = #tpu.pipeline_mode<synchronous>, transform_indices = @transform_23, window_bounds = array<i64: 32, 25>}, {transform_indices = @transform_24, window_bounds = array<i64: 2, 1, 256>}]} {
    %cst = arith.constant 0.000000e+00 : f32
    %0 = vector.broadcast %cst : f32 to vector<1x4xf32>
    %c0 = arith.constant 0 : index
    %c0_0 = arith.constant 0 : index
    %1 = vector.load %arg26[%c0, %c0_0] : memref<1x264xf32, #tpu.memory_space<vmem>>, vector<1x4xf32>
    tpu.vector_store %arg26[%c0, %c0_0], %0 {strides = array<i32>} : memref<1x264xf32, #tpu.memory_space<vmem>>, vector<1x4xf32>,
    %cst_1 = arith.constant 0.000000e+00 : f32
    %2 = vector.broadcast %cst_1 : f32 to vector<32x4xf32>
    %c0_2 = arith.constant 0 : index
    %c0_3 = arith.constant 0 : index
    %3 = vector.load %arg30[%c0_2, %c0_3] : memref<32x264xf32, #tpu.memory_space<vmem>>, vector<32x4xf32>
    tpu.vector_store %arg30[%c0_2, %c0_3], %2 {strides = array<i32>} : memref<32x264xf32, #tpu.memory_space<vmem>>, vector<32x4xf32>,
    %cst_4 = arith.constant 0.000000e+00 : f32
    %4 = vector.broadcast %cst_4 : f32 to vector<1x4xf32>
    %c0_5 = arith.constant 0 : index
    %c260 = arith.constant 260 : index
    %5 = vector.load %arg26[%c0_5, %c260] : memref<1x264xf32, #tpu.memory_space<vmem>>, vector<1x4xf32>
    tpu.vector_store %arg26[%c0_5, %c260], %4 {strides = array<i32>} : memref<1x264xf32, #tpu.memory_space<vmem>>, vector<1x4xf32>,
    %cst_6 = arith.constant 0.000000e+00 : f32
    %6 = vector.broadcast %cst_6 : f32 to vector<32x4xf32>
    %c0_7 = arith.constant 0 : index
    %c260_8 = arith.constant 260 : index
    %7 = vector.load %arg30[%c0_7, %c260_8] : memref<32x264xf32, #tpu.memory_space<vmem>>, vector<32x4xf32>
    tpu.vector_store %arg30[%c0_7, %c260_8], %6 {strides = array<i32>} : memref<32x264xf32, #tpu.memory_space<vmem>>, vector<32x4xf32>,
    %cst_9 = arith.constant 0.000000e+00 : f32
    %8 = vector.broadcast %cst_9 : f32 to vector<32x8xf32>
    %c0_10 = arith.constant 0 : index
    %c0_11 = arith.constant 0 : index
    %9 = vector.load %arg28[%c0_10, %c0_11] : memref<32x273xf32, #tpu.memory_space<vmem>>, vector<32x8xf32>
    tpu.vector_store %arg28[%c0_10, %c0_11], %8 {strides = array<i32>} : memref<32x273xf32, #tpu.memory_space<vmem>>, vector<32x8xf32>,
    %cst_12 = arith.constant 0.000000e+00 : f32
    %10 = vector.broadcast %cst_12 : f32 to vector<32x9xf32>
    %c0_13 = arith.constant 0 : index
    %c264 = arith.constant 264 : index
    %11 = vector.load %arg28[%c0_13, %c264] : memref<32x273xf32, #tpu.memory_space<vmem>>, vector<32x9xf32>
    tpu.vector_store %arg28[%c0_13, %c264], %10 {strides = array<i32>} : memref<32x273xf32, #tpu.memory_space<vmem>>, vector<32x9xf32>,
    %cst_14 = arith.constant 0.000000e+00 : f32
    %12 = vector.broadcast %cst_14 : f32 to vector<32x4xf32>
    %c0_15 = arith.constant 0 : index
    %c256 = arith.constant 256 : index
    %13 = vector.load %arg29[%c0_15, %c256] : memref<32x260xf32, #tpu.memory_space<vmem>>, vector<32x4xf32>
    tpu.vector_store %arg29[%c0_15, %c256], %12 {strides = array<i32>} : memref<32x260xf32, #tpu.memory_space<vmem>>, vector<32x4xf32>,
    %c0_16 = arith.constant 0 : index
    %c0_17 = arith.constant 0 : index
    %c0_18 = arith.constant 0 : index
    %14 = vector.load %arg1[%c0_16, %c0_17, %c0_18] : memref<2x1x256xf32, #tpu.memory_space<vmem>>, vector<1x1x256xf32>
    %15 = vector.shape_cast %14 : vector<1x1x256xf32> to vector<1x256xf32>
    %c0_19 = arith.constant 0 : index
    %c4 = arith.constant 4 : index
    %16 = vector.load %arg26[%c0_19, %c4] : memref<1x264xf32, #tpu.memory_space<vmem>>, vector<1x256xf32>
    tpu.vector_store %arg26[%c0_19, %c4], %15 {strides = array<i32>} : memref<1x264xf32, #tpu.memory_space<vmem>>, vector<1x256xf32>,
    %c0_20 = arith.constant 0 : index
    %c0_21 = arith.constant 0 : index
    %17 = vector.load %arg26[%c0_20, %c0_21] : memref<1x264xf32, #tpu.memory_space<vmem>>, vector<1x256xf32>
    %c0_22 = arith.constant 0 : index
    %c0_23 = arith.constant 0 : index
    %18 = vector.load %arg27[%c0_22, %c0_23] : memref<9x256xf32, #tpu.memory_space<vmem>>, vector<1x256xf32>
    tpu.vector_store %arg27[%c0_22, %c0_23], %17 {strides = array<i32>} : memref<9x256xf32, #tpu.memory_space<vmem>>, vector<1x256xf32>,
    %c0_24 = arith.constant 0 : index
    %c1 = arith.constant 1 : index
    %19 = vector.load %arg26[%c0_24, %c1] : memref<1x264xf32, #tpu.memory_space<vmem>>, vector<1x256xf32>
    %c1_25 = arith.constant 1 : index
    %c0_26 = arith.constant 0 : index
    %20 = vector.load %arg27[%c1_25, %c0_26] : memref<9x256xf32, #tpu.memory_space<vmem>>, vector<1x256xf32>
    tpu.vector_store %arg27[%c1_25, %c0_26], %19 {strides = array<i32>} : memref<9x256xf32, #tpu.memory_space<vmem>>, vector<1x256xf32>,
    %c0_27 = arith.constant 0 : index
    %c2 = arith.constant 2 : index
    %21 = vector.load %arg26[%c0_27, %c2] : memref<1x264xf32, #tpu.memory_space<vmem>>, vector<1x256xf32>
    %c2_28 = arith.constant 2 : index
    %c0_29 = arith.constant 0 : index
    %22 = vector.load %arg27[%c2_28, %c0_29] : memref<9x256xf32, #tpu.memory_space<vmem>>, vector<1x256xf32>
    tpu.vector_store %arg27[%c2_28, %c0_29], %21 {strides = array<i32>} : memref<9x256xf32, #tpu.memory_space<vmem>>, vector<1x256xf32>,
    %c0_30 = arith.constant 0 : index
    %c3 = arith.constant 3 : index
    %23 = vector.load %arg26[%c0_30, %c3] : memref<1x264xf32, #tpu.memory_space<vmem>>, vector<1x256xf32>
    %c3_31 = arith.constant 3 : index
    %c0_32 = arith.constant 0 : index
    %24 = vector.load %arg27[%c3_31, %c0_32] : memref<9x256xf32, #tpu.memory_space<vmem>>, vector<1x256xf32>
    tpu.vector_store %arg27[%c3_31, %c0_32], %23 {strides = array<i32>} : memref<9x256xf32, #tpu.memory_space<vmem>>, vector<1x256xf32>,
    %c0_33 = arith.constant 0 : index
    %c4_34 = arith.constant 4 : index
    %25 = vector.load %arg26[%c0_33, %c4_34] : memref<1x264xf32, #tpu.memory_space<vmem>>, vector<1x256xf32>
    %c4_35 = arith.constant 4 : index
    %c0_36 = arith.constant 0 : index
    %26 = vector.load %arg27[%c4_35, %c0_36] : memref<9x256xf32, #tpu.memory_space<vmem>>, vector<1x256xf32>
    tpu.vector_store %arg27[%c4_35, %c0_36], %25 {strides = array<i32>} : memref<9x256xf32, #tpu.memory_space<vmem>>, vector<1x256xf32>,
    %c0_37 = arith.constant 0 : index
    %c5 = arith.constant 5 : index
    %27 = vector.load %arg26[%c0_37, %c5] : memref<1x264xf32, #tpu.memory_space<vmem>>, vector<1x256xf32>
    %c5_38 = arith.constant 5 : index
    %c0_39 = arith.constant 0 : index
    %28 = vector.load %arg27[%c5_38, %c0_39] : memref<9x256xf32, #tpu.memory_space<vmem>>, vector<1x256xf32>
    tpu.vector_store %arg27[%c5_38, %c0_39], %27 {strides = array<i32>} : memref<9x256xf32, #tpu.memory_space<vmem>>, vector<1x256xf32>,
    %c0_40 = arith.constant 0 : index
    %c6 = arith.constant 6 : index
    %29 = vector.load %arg26[%c0_40, %c6] : memref<1x264xf32, #tpu.memory_space<vmem>>, vector<1x256xf32>
    %c6_41 = arith.constant 6 : index
    %c0_42 = arith.constant 0 : index
    %30 = vector.load %arg27[%c6_41, %c0_42] : memref<9x256xf32, #tpu.memory_space<vmem>>, vector<1x256xf32>
    tpu.vector_store %arg27[%c6_41, %c0_42], %29 {strides = array<i32>} : memref<9x256xf32, #tpu.memory_space<vmem>>, vector<1x256xf32>,
    %c0_43 = arith.constant 0 : index
    %c7 = arith.constant 7 : index
    %31 = vector.load %arg26[%c0_43, %c7] : memref<1x264xf32, #tpu.memory_space<vmem>>, vector<1x256xf32>
    %c7_44 = arith.constant 7 : index
    %c0_45 = arith.constant 0 : index
    %32 = vector.load %arg27[%c7_44, %c0_45] : memref<9x256xf32, #tpu.memory_space<vmem>>, vector<1x256xf32>
    tpu.vector_store %arg27[%c7_44, %c0_45], %31 {strides = array<i32>} : memref<9x256xf32, #tpu.memory_space<vmem>>, vector<1x256xf32>,
    %c0_46 = arith.constant 0 : index
    %c8 = arith.constant 8 : index
    %33 = vector.load %arg26[%c0_46, %c8] : memref<1x264xf32, #tpu.memory_space<vmem>>, vector<1x256xf32>
    %c8_47 = arith.constant 8 : index
    %c0_48 = arith.constant 0 : index
    %34 = vector.load %arg27[%c8_47, %c0_48] : memref<9x256xf32, #tpu.memory_space<vmem>>, vector<1x256xf32>
    tpu.vector_store %arg27[%c8_47, %c0_48], %33 {strides = array<i32>} : memref<9x256xf32, #tpu.memory_space<vmem>>, vector<1x256xf32>,
    %c0_49 = arith.constant 0 : index
    %c0_50 = arith.constant 0 : index
    %35 = vector.load %arg2[%c0_49, %c0_50] : memref<32x9xf32, #tpu.memory_space<vmem>>, vector<32x9xf32>
    %c0_51 = arith.constant 0 : index
    %c0_52 = arith.constant 0 : index
    %36 = vector.load %arg27[%c0_51, %c0_52] : memref<9x256xf32, #tpu.memory_space<vmem>>, vector<9x256xf32>
    %cst_53 = arith.constant dense<0.000000e+00> : vector<32x256xf32>
    %37 = tpu.matmul %35, %36, %cst_53 {dimension_numbers = #tpu.dot_dimension_numbers<[1], [0], [0], [1], [0, 0, 1, 1], [], []>} : vector<32x9xf32>, vector<9x256xf32>, vector<32x256xf32> -> vector<32x256xf32>
    %c0_54 = arith.constant 0 : index
    %c0_55 = arith.constant 0 : index
    %38 = vector.load %arg4[%c0_54, %c0_55] : memref<32x1xf32, #tpu.memory_space<vmem>>, vector<32x1xf32>
    %39 = vector.broadcast %38 : vector<32x1xf32> to vector<32x256xf32>
    %40 = arith.addf %37, %39 : vector<32x256xf32>
    %41 = math.absf %40 : vector<32x256xf32>
    %c0_56 = arith.constant 0 : index
    %c8_57 = arith.constant 8 : index
    %42 = vector.load %arg28[%c0_56, %c8_57] : memref<32x273xf32, #tpu.memory_space<vmem>>, vector<32x256xf32>
    tpu.vector_store %arg28[%c0_56, %c8_57], %41 {strides = array<i32>} : memref<32x273xf32, #tpu.memory_space<vmem>>, vector<32x256xf32>,
    %cst_58 = arith.constant 0.000000e+00 : f32
    %43 = vector.broadcast %cst_58 : f32 to vector<32x256xf32>
    %c0_59 = arith.constant 0 : index
    %c0_60 = arith.constant 0 : index
    %44 = vector.load %arg28[%c0_59, %c0_60] : memref<32x273xf32, #tpu.memory_space<vmem>>, vector<32x256xf32>
    %c0_61 = arith.constant 0 : index
    %c0_62 = arith.constant 0 : index
    %45 = vector.load %arg5[%c0_61, %c0_62] : memref<18x256xf32, #tpu.memory_space<vmem>>, vector<1x256xf32>
    %46 = vector.broadcast %45 : vector<1x256xf32> to vector<32x256xf32>
    %47 = arith.mulf %44, %46 : vector<32x256xf32>
    %48 = arith.addf %43, %47 : vector<32x256xf32>
    %c0_63 = arith.constant 0 : index
    %c1_64 = arith.constant 1 : index
    %49 = vector.load %arg28[%c0_63, %c1_64] : memref<32x273xf32, #tpu.memory_space<vmem>>, vector<32x256xf32>
    %c1_65 = arith.constant 1 : index
    %c0_66 = arith.constant 0 : index
    %50 = vector.load %arg5[%c1_65, %c0_66] : memref<18x256xf32, #tpu.memory_space<vmem>>, vector<1x256xf32>
    %51 = vector.broadcast %50 : vector<1x256xf32> to vector<32x256xf32>
    %52 = arith.mulf %49, %51 : vector<32x256xf32>
    %53 = arith.addf %48, %52 : vector<32x256xf32>
    %c0_67 = arith.constant 0 : index
    %c2_68 = arith.constant 2 : index
    %54 = vector.load %arg28[%c0_67, %c2_68] : memref<32x273xf32, #tpu.memory_space<vmem>>, vector<32x256xf32>
    %c2_69 = arith.constant 2 : index
    %c0_70 = arith.constant 0 : index
    %55 = vector.load %arg5[%c2_69, %c0_70] : memref<18x256xf32, #tpu.memory_space<vmem>>, vector<1x256xf32>
    %56 = vector.broadcast %55 : vector<1x256xf32> to vector<32x256xf32>
    %57 = arith.mulf %54, %56 : vector<32x256xf32>
    %58 = arith.addf %53, %57 : vector<32x256xf32>
    %c0_71 = arith.constant 0 : index
    %c3_72 = arith.constant 3 : index
    %59 = vector.load %arg28[%c0_71, %c3_72] : memref<32x273xf32, #tpu.memory_space<vmem>>, vector<32x256xf32>
    %c3_73 = arith.constant 3 : index
    %c0_74 = arith.constant 0 : index
    %60 = vector.load %arg5[%c3_73, %c0_74] : memref<18x256xf32, #tpu.memory_space<vmem>>, vector<1x256xf32>
    %61 = vector.broadcast %60 : vector<1x256xf32> to vector<32x256xf32>
    %62 = arith.mulf %59, %61 : vector<32x256xf32>
    %63 = arith.addf %58, %62 : vector<32x256xf32>
    %c0_75 = arith.constant 0 : index
    %c4_76 = arith.constant 4 : index
    %64 = vector.load %arg28[%c0_75, %c4_76] : memref<32x273xf32, #tpu.memory_space<vmem>>, vector<32x256xf32>
    %c4_77 = arith.constant 4 : index
    %c0_78 = arith.constant 0 : index
    %65 = vector.load %arg5[%c4_77, %c0_78] : memref<18x256xf32, #tpu.memory_space<vmem>>, vector<1x256xf32>
    %66 = vector.broadcast %65 : vector<1x256xf32> to vector<32x256xf32>
    %67 = arith.mulf %64, %66 : vector<32x256xf32>
    %68 = arith.addf %63, %67 : vector<32x256xf32>
    %c0_79 = arith.constant 0 : index
    %c5_80 = arith.constant 5 : index
    %69 = vector.load %arg28[%c0_79, %c5_80] : memref<32x273xf32, #tpu.memory_space<vmem>>, vector<32x256xf32>
    %c5_81 = arith.constant 5 : index
    %c0_82 = arith.constant 0 : index
    %70 = vector.load %arg5[%c5_81, %c0_82] : memref<18x256xf32, #tpu.memory_space<vmem>>, vector<1x256xf32>
    %71 = vector.broadcast %70 : vector<1x256xf32> to vector<32x256xf32>
    %72 = arith.mulf %69, %71 : vector<32x256xf32>
    %73 = arith.addf %68, %72 : vector<32x256xf32>
    %c0_83 = arith.constant 0 : index
    %c6_84 = arith.constant 6 : index
    %74 = vector.load %arg28[%c0_83, %c6_84] : memref<32x273xf32, #tpu.memory_space<vmem>>, vector<32x256xf32>
    %c6_85 = arith.constant 6 : index
    %c0_86 = arith.constant 0 : index
    %75 = vector.load %arg5[%c6_85, %c0_86] : memref<18x256xf32, #tpu.memory_space<vmem>>, vector<1x256xf32>
    %76 = vector.broadcast %75 : vector<1x256xf32> to vector<32x256xf32>
    %77 = arith.mulf %74, %76 : vector<32x256xf32>
    %78 = arith.addf %73, %77 : vector<32x256xf32>
    %c0_87 = arith.constant 0 : index
    %c7_88 = arith.constant 7 : index
    %79 = vector.load %arg28[%c0_87, %c7_88] : memref<32x273xf32, #tpu.memory_space<vmem>>, vector<32x256xf32>
    %c7_89 = arith.constant 7 : index
    %c0_90 = arith.constant 0 : index
    %80 = vector.load %arg5[%c7_89, %c0_90] : memref<18x256xf32, #tpu.memory_space<vmem>>, vector<1x256xf32>
    %81 = vector.broadcast %80 : vector<1x256xf32> to vector<32x256xf32>
    %82 = arith.mulf %79, %81 : vector<32x256xf32>
    %83 = arith.addf %78, %82 : vector<32x256xf32>
    %c0_91 = arith.constant 0 : index
    %c8_92 = arith.constant 8 : index
    %84 = vector.load %arg28[%c0_91, %c8_92] : memref<32x273xf32, #tpu.memory_space<vmem>>, vector<32x256xf32>
    %c8_93 = arith.constant 8 : index
    %c0_94 = arith.constant 0 : index
    %85 = vector.load %arg5[%c8_93, %c0_94] : memref<18x256xf32, #tpu.memory_space<vmem>>, vector<1x256xf32>
    %86 = vector.broadcast %85 : vector<1x256xf32> to vector<32x256xf32>
    %87 = arith.mulf %84, %86 : vector<32x256xf32>
    %88 = arith.addf %83, %87 : vector<32x256xf32>
    %c0_95 = arith.constant 0 : index
    %c9 = arith.constant 9 : index
    %89 = vector.load %arg28[%c0_95, %c9] : memref<32x273xf32, #tpu.memory_space<vmem>>, vector<32x256xf32>
    %c9_96 = arith.constant 9 : index
    %c0_97 = arith.constant 0 : index
    %90 = vector.load %arg5[%c9_96, %c0_97] : memref<18x256xf32, #tpu.memory_space<vmem>>, vector<1x256xf32>
    %91 = vector.broadcast %90 : vector<1x256xf32> to vector<32x256xf32>
    %92 = arith.mulf %89, %91 : vector<32x256xf32>
    %93 = arith.addf %88, %92 : vector<32x256xf32>
    %c0_98 = arith.constant 0 : index
    %c10 = arith.constant 10 : index
    %94 = vector.load %arg28[%c0_98, %c10] : memref<32x273xf32, #tpu.memory_space<vmem>>, vector<32x256xf32>
    %c10_99 = arith.constant 10 : index
    %c0_100 = arith.constant 0 : index
    %95 = vector.load %arg5[%c10_99, %c0_100] : memref<18x256xf32, #tpu.memory_space<vmem>>, vector<1x256xf32>
    %96 = vector.broadcast %95 : vector<1x256xf32> to vector<32x256xf32>
    %97 = arith.mulf %94, %96 : vector<32x256xf32>
    %98 = arith.addf %93, %97 : vector<32x256xf32>
    %c0_101 = arith.constant 0 : index
    %c11 = arith.constant 11 : index
    %99 = vector.load %arg28[%c0_101, %c11] : memref<32x273xf32, #tpu.memory_space<vmem>>, vector<32x256xf32>
    %c11_102 = arith.constant 11 : index
    %c0_103 = arith.constant 0 : index
    %100 = vector.load %arg5[%c11_102, %c0_103] : memref<18x256xf32, #tpu.memory_space<vmem>>, vector<1x256xf32>
    %101 = vector.broadcast %100 : vector<1x256xf32> to vector<32x256xf32>
    %102 = arith.mulf %99, %101 : vector<32x256xf32>
    %103 = arith.addf %98, %102 : vector<32x256xf32>
    %c0_104 = arith.constant 0 : index
    %c12 = arith.constant 12 : index
    %104 = vector.load %arg28[%c0_104, %c12] : memref<32x273xf32, #tpu.memory_space<vmem>>, vector<32x256xf32>
    %c12_105 = arith.constant 12 : index
    %c0_106 = arith.constant 0 : index
    %105 = vector.load %arg5[%c12_105, %c0_106] : memref<18x256xf32, #tpu.memory_space<vmem>>, vector<1x256xf32>
    %106 = vector.broadcast %105 : vector<1x256xf32> to vector<32x256xf32>
    %107 = arith.mulf %104, %106 : vector<32x256xf32>
    %108 = arith.addf %103, %107 : vector<32x256xf32>
    %c0_107 = arith.constant 0 : index
    %c13 = arith.constant 13 : index
    %109 = vector.load %arg28[%c0_107, %c13] : memref<32x273xf32, #tpu.memory_space<vmem>>, vector<32x256xf32>
    %c13_108 = arith.constant 13 : index
    %c0_109 = arith.constant 0 : index
    %110 = vector.load %arg5[%c13_108, %c0_109] : memref<18x256xf32, #tpu.memory_space<vmem>>, vector<1x256xf32>
    %111 = vector.broadcast %110 : vector<1x256xf32> to vector<32x256xf32>
    %112 = arith.mulf %109, %111 : vector<32x256xf32>
    %113 = arith.addf %108, %112 : vector<32x256xf32>
    %c0_110 = arith.constant 0 : index
    %c14 = arith.constant 14 : index
    %114 = vector.load %arg28[%c0_110, %c14] : memref<32x273xf32, #tpu.memory_space<vmem>>, vector<32x256xf32>
    %c14_111 = arith.constant 14 : index
    %c0_112 = arith.constant 0 : index
    %115 = vector.load %arg5[%c14_111, %c0_112] : memref<18x256xf32, #tpu.memory_space<vmem>>, vector<1x256xf32>
    %116 = vector.broadcast %115 : vector<1x256xf32> to vector<32x256xf32>
    %117 = arith.mulf %114, %116 : vector<32x256xf32>
    %118 = arith.addf %113, %117 : vector<32x256xf32>
    %c0_113 = arith.constant 0 : index
    %c15 = arith.constant 15 : index
    %119 = vector.load %arg28[%c0_113, %c15] : memref<32x273xf32, #tpu.memory_space<vmem>>, vector<32x256xf32>
    %c15_114 = arith.constant 15 : index
    %c0_115 = arith.constant 0 : index
    %120 = vector.load %arg5[%c15_114, %c0_115] : memref<18x256xf32, #tpu.memory_space<vmem>>, vector<1x256xf32>
    %121 = vector.broadcast %120 : vector<1x256xf32> to vector<32x256xf32>
    %122 = arith.mulf %119, %121 : vector<32x256xf32>
    %123 = arith.addf %118, %122 : vector<32x256xf32>
    %c0_116 = arith.constant 0 : index
    %c16 = arith.constant 16 : index
    %124 = vector.load %arg28[%c0_116, %c16] : memref<32x273xf32, #tpu.memory_space<vmem>>, vector<32x256xf32>
    %c16_117 = arith.constant 16 : index
    %c0_118 = arith.constant 0 : index
    %125 = vector.load %arg5[%c16_117, %c0_118] : memref<18x256xf32, #tpu.memory_space<vmem>>, vector<1x256xf32>
    %126 = vector.broadcast %125 : vector<1x256xf32> to vector<32x256xf32>
    %127 = arith.mulf %124, %126 : vector<32x256xf32>
    %128 = arith.addf %123, %127 : vector<32x256xf32>
    %c0_119 = arith.constant 0 : index
    %c17 = arith.constant 17 : index
    %129 = vector.load %arg28[%c0_119, %c17] : memref<32x273xf32, #tpu.memory_space<vmem>>, vector<32x256xf32>
    %c17_120 = arith.constant 17 : index
    %c0_121 = arith.constant 0 : index
    %130 = vector.load %arg5[%c17_120, %c0_121] : memref<18x256xf32, #tpu.memory_space<vmem>>, vector<1x256xf32>
    %131 = vector.broadcast %130 : vector<1x256xf32> to vector<32x256xf32>
    %132 = arith.mulf %129, %131 : vector<32x256xf32>
    %133 = arith.addf %128, %132 : vector<32x256xf32>
    %c0_122 = arith.constant 0 : index
    %c0_123 = arith.constant 0 : index
    %134 = vector.load %arg6[%c0_122, %c0_123] : memref<1x256xf32, #tpu.memory_space<vmem>>, vector<1x256xf32>
    %135 = vector.broadcast %134 : vector<1x256xf32> to vector<32x256xf32>
    %136 = arith.addf %133, %135 : vector<32x256xf32>
    %cst_124 = arith.constant 0.000000e+00 : f32
    %137 = vector.broadcast %cst_124 : f32 to vector<32x256xf32>
    %138 = arith.maximumf %136, %137 : vector<32x256xf32>
    %139 = math.absf %136 : vector<32x256xf32>
    %cst_125 = arith.constant 0.000000e+00 : f32
    %140 = vector.broadcast %cst_125 : f32 to vector<32x256xf32>
    %141 = arith.subf %140, %139 : vector<32x256xf32>
    %142 = math.exp %141 : vector<32x256xf32>
    %cst_126 = arith.constant 1.000000e+00 : f32
    %143 = vector.broadcast %cst_126 : f32 to vector<32x256xf32>
    %144 = arith.addf %143, %142 : vector<32x256xf32>
    %145 = math.log %144 : vector<32x256xf32>
    %146 = arith.addf %138, %145 : vector<32x256xf32>
    %c0_127 = arith.constant 0 : index
    %c0_128 = arith.constant 0 : index
    %147 = vector.load %arg29[%c0_127, %c0_128] : memref<32x260xf32, #tpu.memory_space<vmem>>, vector<32x256xf32>
    tpu.vector_store %arg29[%c0_127, %c0_128], %146 {strides = array<i32>} : memref<32x260xf32, #tpu.memory_space<vmem>>, vector<32x256xf32>,
    %c0_129 = arith.constant 0 : index
    %c0_130 = arith.constant 0 : index
    %148 = vector.load %arg29[%c0_129, %c0_130] : memref<32x260xf32, #tpu.memory_space<vmem>>, vector<32x256xf32>
    %c0_131 = arith.constant 0 : index
    %c1_132 = arith.constant 1 : index
    %149 = vector.load %arg29[%c0_131, %c1_132] : memref<32x260xf32, #tpu.memory_space<vmem>>, vector<32x256xf32>
    %150 = arith.maximumf %148, %149 : vector<32x256xf32>
    %c0_133 = arith.constant 0 : index
    %c2_134 = arith.constant 2 : index
    %151 = vector.load %arg29[%c0_133, %c2_134] : memref<32x260xf32, #tpu.memory_space<vmem>>, vector<32x256xf32>
    %152 = arith.maximumf %150, %151 : vector<32x256xf32>
    %c0_135 = arith.constant 0 : index
    %c3_136 = arith.constant 3 : index
    %153 = vector.load %arg29[%c0_135, %c3_136] : memref<32x260xf32, #tpu.memory_space<vmem>>, vector<32x256xf32>
    %154 = arith.maximumf %152, %153 : vector<32x256xf32>
    %155 = arith.truncf %154 : vector<32x256xf32> to vector<32x256xbf16>
    %c0_137 = arith.constant 0 : index
    %c0_138 = arith.constant 0 : index
    %156 = vector.load %arg7[%c0_137, %c0_138] : memref<256x4xbf16, #tpu.memory_space<vmem>>, vector<256x4xbf16>
    %cst_139 = arith.constant dense<0.000000e+00> : vector<32x4xf32>
    %157 = tpu.matmul %155, %156, %cst_139 {dimension_numbers = #tpu.dot_dimension_numbers<[1], [0], [0], [1], [0, 0, 1, 1], [], []>} : vector<32x256xbf16>, vector<256x4xbf16>, vector<32x4xf32> -> vector<32x4xf32>
    %c0_140 = arith.constant 0 : index
    %c0_141 = arith.constant 0 : index
    %158 = vector.load %arg8[%c0_140, %c0_141] : memref<1x4xf32, #tpu.memory_space<vmem>>, vector<1x4xf32>
    %159 = vector.broadcast %158 : vector<1x4xf32> to vector<32x4xf32>
    %160 = arith.addf %157, %159 : vector<32x4xf32>
    %161 = arith.truncf %160 : vector<32x4xf32> to vector<32x4xbf16>
    %c0_142 = arith.constant 0 : index
    %c0_143 = arith.constant 0 : index
    %162 = vector.load %arg9[%c0_142, %c0_143] : memref<4x4xbf16, #tpu.memory_space<vmem>>, vector<4x4xbf16>
    %cst_144 = arith.constant dense<0.000000e+00> : vector<32x4xf32>
    %163 = tpu.matmul %161, %162, %cst_144 {dimension_numbers = #tpu.dot_dimension_numbers<[1], [0], [0], [1], [0, 0, 1, 1], [], []>} : vector<32x4xbf16>, vector<4x4xbf16>, vector<32x4xf32> -> vector<32x4xf32>
    %c0_145 = arith.constant 0 : index
    %c0_146 = arith.constant 0 : index
    %164 = vector.load %arg10[%c0_145, %c0_146] : memref<1x4xf32, #tpu.memory_space<vmem>>, vector<1x4xf32>
    %165 = vector.broadcast %164 : vector<1x4xf32> to vector<32x4xf32>
    %166 = arith.addf %163, %165 : vector<32x4xf32>
    %cst_147 = arith.constant 0.000000e+00 : f32
    %167 = vector.broadcast %cst_147 : f32 to vector<32x4xf32>
    %168 = arith.maximumf %166, %167 : vector<32x4xf32>
    %169 = math.absf %166 : vector<32x4xf32>
    %cst_148 = arith.constant 0.000000e+00 : f32
    %170 = vector.broadcast %cst_148 : f32 to vector<32x4xf32>
    %171 = arith.subf %170, %169 : vector<32x4xf32>
    %172 = math.exp %171 : vector<32x4xf32>
    %cst_149 = arith.constant 1.000000e+00 : f32
    %173 = vector.broadcast %cst_149 : f32 to vector<32x4xf32>
    %174 = arith.addf %173, %172 : vector<32x4xf32>
    %175 = math.log %174 : vector<32x4xf32>
    %176 = arith.addf %168, %175 : vector<32x4xf32>
    %c0_150 = arith.constant 0 : index
    %c0_151 = arith.constant 0 : index
    %177 = vector.load %arg11[%c0_150, %c0_151] : memref<4x256xf32, #tpu.memory_space<vmem>>, vector<4x256xf32>
    %cst_152 = arith.constant dense<0.000000e+00> : vector<32x256xf32>
    %178 = tpu.matmul %176, %177, %cst_152 {dimension_numbers = #tpu.dot_dimension_numbers<[1], [0], [0], [1], [0, 0, 1, 1], [], []>} : vector<32x4xf32>, vector<4x256xf32>, vector<32x256xf32> -> vector<32x256xf32>
    %179 = arith.mulf %40, %178 : vector<32x256xf32>
    %c1_153 = arith.constant 1 : index
    %c0_154 = arith.constant 0 : index
    %c0_155 = arith.constant 0 : index
    %180 = vector.load %arg1[%c1_153, %c0_154, %c0_155] : memref<2x1x256xf32, #tpu.memory_space<vmem>>, vector<1x1x256xf32>
    %181 = vector.shape_cast %180 : vector<1x1x256xf32> to vector<1x256xf32>
    %c0_156 = arith.constant 0 : index
    %c4_157 = arith.constant 4 : index
    %182 = vector.load %arg26[%c0_156, %c4_157] : memref<1x264xf32, #tpu.memory_space<vmem>>, vector<1x256xf32>
    tpu.vector_store %arg26[%c0_156, %c4_157], %181 {strides = array<i32>} : memref<1x264xf32, #tpu.memory_space<vmem>>, vector<1x256xf32>,
    %c0_158 = arith.constant 0 : index
    %c0_159 = arith.constant 0 : index
    %183 = vector.load %arg26[%c0_158, %c0_159] : memref<1x264xf32, #tpu.memory_space<vmem>>, vector<1x256xf32>
    %c0_160 = arith.constant 0 : index
    %c0_161 = arith.constant 0 : index
    %184 = vector.load %arg27[%c0_160, %c0_161] : memref<9x256xf32, #tpu.memory_space<vmem>>, vector<1x256xf32>
    tpu.vector_store %arg27[%c0_160, %c0_161], %183 {strides = array<i32>} : memref<9x256xf32, #tpu.memory_space<vmem>>, vector<1x256xf32>,
    %c0_162 = arith.constant 0 : index
    %c1_163 = arith.constant 1 : index
    %185 = vector.load %arg26[%c0_162, %c1_163] : memref<1x264xf32, #tpu.memory_space<vmem>>, vector<1x256xf32>
    %c1_164 = arith.constant 1 : index
    %c0_165 = arith.constant 0 : index
    %186 = vector.load %arg27[%c1_164, %c0_165] : memref<9x256xf32, #tpu.memory_space<vmem>>, vector<1x256xf32>
    tpu.vector_store %arg27[%c1_164, %c0_165], %185 {strides = array<i32>} : memref<9x256xf32, #tpu.memory_space<vmem>>, vector<1x256xf32>,
    %c0_166 = arith.constant 0 : index
    %c2_167 = arith.constant 2 : index
    %187 = vector.load %arg26[%c0_166, %c2_167] : memref<1x264xf32, #tpu.memory_space<vmem>>, vector<1x256xf32>
    %c2_168 = arith.constant 2 : index
    %c0_169 = arith.constant 0 : index
    %188 = vector.load %arg27[%c2_168, %c0_169] : memref<9x256xf32, #tpu.memory_space<vmem>>, vector<1x256xf32>
    tpu.vector_store %arg27[%c2_168, %c0_169], %187 {strides = array<i32>} : memref<9x256xf32, #tpu.memory_space<vmem>>, vector<1x256xf32>,
    %c0_170 = arith.constant 0 : index
    %c3_171 = arith.constant 3 : index
    %189 = vector.load %arg26[%c0_170, %c3_171] : memref<1x264xf32, #tpu.memory_space<vmem>>, vector<1x256xf32>
    %c3_172 = arith.constant 3 : index
    %c0_173 = arith.constant 0 : index
    %190 = vector.load %arg27[%c3_172, %c0_173] : memref<9x256xf32, #tpu.memory_space<vmem>>, vector<1x256xf32>
    tpu.vector_store %arg27[%c3_172, %c0_173], %189 {strides = array<i32>} : memref<9x256xf32, #tpu.memory_space<vmem>>, vector<1x256xf32>,
    %c0_174 = arith.constant 0 : index
    %c4_175 = arith.constant 4 : index
    %191 = vector.load %arg26[%c0_174, %c4_175] : memref<1x264xf32, #tpu.memory_space<vmem>>, vector<1x256xf32>
    %c4_176 = arith.constant 4 : index
    %c0_177 = arith.constant 0 : index
    %192 = vector.load %arg27[%c4_176, %c0_177] : memref<9x256xf32, #tpu.memory_space<vmem>>, vector<1x256xf32>
    tpu.vector_store %arg27[%c4_176, %c0_177], %191 {strides = array<i32>} : memref<9x256xf32, #tpu.memory_space<vmem>>, vector<1x256xf32>,
    %c0_178 = arith.constant 0 : index
    %c5_179 = arith.constant 5 : index
    %193 = vector.load %arg26[%c0_178, %c5_179] : memref<1x264xf32, #tpu.memory_space<vmem>>, vector<1x256xf32>
    %c5_180 = arith.constant 5 : index
    %c0_181 = arith.constant 0 : index
    %194 = vector.load %arg27[%c5_180, %c0_181] : memref<9x256xf32, #tpu.memory_space<vmem>>, vector<1x256xf32>
    tpu.vector_store %arg27[%c5_180, %c0_181], %193 {strides = array<i32>} : memref<9x256xf32, #tpu.memory_space<vmem>>, vector<1x256xf32>,
    %c0_182 = arith.constant 0 : index
    %c6_183 = arith.constant 6 : index
    %195 = vector.load %arg26[%c0_182, %c6_183] : memref<1x264xf32, #tpu.memory_space<vmem>>, vector<1x256xf32>
    %c6_184 = arith.constant 6 : index
    %c0_185 = arith.constant 0 : index
    %196 = vector.load %arg27[%c6_184, %c0_185] : memref<9x256xf32, #tpu.memory_space<vmem>>, vector<1x256xf32>
    tpu.vector_store %arg27[%c6_184, %c0_185], %195 {strides = array<i32>} : memref<9x256xf32, #tpu.memory_space<vmem>>, vector<1x256xf32>,
    %c0_186 = arith.constant 0 : index
    %c7_187 = arith.constant 7 : index
    %197 = vector.load %arg26[%c0_186, %c7_187] : memref<1x264xf32, #tpu.memory_space<vmem>>, vector<1x256xf32>
    %c7_188 = arith.constant 7 : index
    %c0_189 = arith.constant 0 : index
    %198 = vector.load %arg27[%c7_188, %c0_189] : memref<9x256xf32, #tpu.memory_space<vmem>>, vector<1x256xf32>
    tpu.vector_store %arg27[%c7_188, %c0_189], %197 {strides = array<i32>} : memref<9x256xf32, #tpu.memory_space<vmem>>, vector<1x256xf32>,
    %c0_190 = arith.constant 0 : index
    %c8_191 = arith.constant 8 : index
    %199 = vector.load %arg26[%c0_190, %c8_191] : memref<1x264xf32, #tpu.memory_space<vmem>>, vector<1x256xf32>
    %c8_192 = arith.constant 8 : index
    %c0_193 = arith.constant 0 : index
    %200 = vector.load %arg27[%c8_192, %c0_193] : memref<9x256xf32, #tpu.memory_space<vmem>>, vector<1x256xf32>
    tpu.vector_store %arg27[%c8_192, %c0_193], %199 {strides = array<i32>} : memref<9x256xf32, #tpu.memory_space<vmem>>, vector<1x256xf32>,
    %c0_194 = arith.constant 0 : index
    %c0_195 = arith.constant 0 : index
    %201 = vector.load %arg2[%c0_194, %c0_195] : memref<32x9xf32, #tpu.memory_space<vmem>>, vector<32x9xf32>
    %c0_196 = arith.constant 0 : index
    %c0_197 = arith.constant 0 : index
    %202 = vector.load %arg27[%c0_196, %c0_197] : memref<9x256xf32, #tpu.memory_space<vmem>>, vector<9x256xf32>
    %cst_198 = arith.constant dense<0.000000e+00> : vector<32x256xf32>
    %203 = tpu.matmul %201, %202, %cst_198 {dimension_numbers = #tpu.dot_dimension_numbers<[1], [0], [0], [1], [0, 0, 1, 1], [], []>} : vector<32x9xf32>, vector<9x256xf32>, vector<32x256xf32> -> vector<32x256xf32>
    %c0_199 = arith.constant 0 : index
    %c0_200 = arith.constant 0 : index
    %204 = vector.load %arg4[%c0_199, %c0_200] : memref<32x1xf32, #tpu.memory_space<vmem>>, vector<32x1xf32>
    %205 = vector.broadcast %204 : vector<32x1xf32> to vector<32x256xf32>
    %206 = arith.addf %203, %205 : vector<32x256xf32>
    %207 = math.absf %206 : vector<32x256xf32>
    %c0_201 = arith.constant 0 : index
    %c8_202 = arith.constant 8 : index
    %208 = vector.load %arg28[%c0_201, %c8_202] : memref<32x273xf32, #tpu.memory_space<vmem>>, vector<32x256xf32>
    tpu.vector_store %arg28[%c0_201, %c8_202], %207 {strides = array<i32>} : memref<32x273xf32, #tpu.memory_space<vmem>>, vector<32x256xf32>,
    %cst_203 = arith.constant 0.000000e+00 : f32
    %209 = vector.broadcast %cst_203 : f32 to vector<32x256xf32>
    %c0_204 = arith.constant 0 : index
    %c0_205 = arith.constant 0 : index
    %210 = vector.load %arg28[%c0_204, %c0_205] : memref<32x273xf32, #tpu.memory_space<vmem>>, vector<32x256xf32>
    %c0_206 = arith.constant 0 : index
    %c0_207 = arith.constant 0 : index
    %211 = vector.load %arg5[%c0_206, %c0_207] : memref<18x256xf32, #tpu.memory_space<vmem>>, vector<1x256xf32>
    %212 = vector.broadcast %211 : vector<1x256xf32> to vector<32x256xf32>
    %213 = arith.mulf %210, %212 : vector<32x256xf32>
    %214 = arith.addf %209, %213 : vector<32x256xf32>
    %c0_208 = arith.constant 0 : index
    %c1_209 = arith.constant 1 : index
    %215 = vector.load %arg28[%c0_208, %c1_209] : memref<32x273xf32, #tpu.memory_space<vmem>>, vector<32x256xf32>
    %c1_210 = arith.constant 1 : index
    %c0_211 = arith.constant 0 : index
    %216 = vector.load %arg5[%c1_210, %c0_211] : memref<18x256xf32, #tpu.memory_space<vmem>>, vector<1x256xf32>
    %217 = vector.broadcast %216 : vector<1x256xf32> to vector<32x256xf32>
    %218 = arith.mulf %215, %217 : vector<32x256xf32>
    %219 = arith.addf %214, %218 : vector<32x256xf32>
    %c0_212 = arith.constant 0 : index
    %c2_213 = arith.constant 2 : index
    %220 = vector.load %arg28[%c0_212, %c2_213] : memref<32x273xf32, #tpu.memory_space<vmem>>, vector<32x256xf32>
    %c2_214 = arith.constant 2 : index
    %c0_215 = arith.constant 0 : index
    %221 = vector.load %arg5[%c2_214, %c0_215] : memref<18x256xf32, #tpu.memory_space<vmem>>, vector<1x256xf32>
    %222 = vector.broadcast %221 : vector<1x256xf32> to vector<32x256xf32>
    %223 = arith.mulf %220, %222 : vector<32x256xf32>
    %224 = arith.addf %219, %223 : vector<32x256xf32>
    %c0_216 = arith.constant 0 : index
    %c3_217 = arith.constant 3 : index
    %225 = vector.load %arg28[%c0_216, %c3_217] : memref<32x273xf32, #tpu.memory_space<vmem>>, vector<32x256xf32>
    %c3_218 = arith.constant 3 : index
    %c0_219 = arith.constant 0 : index
    %226 = vector.load %arg5[%c3_218, %c0_219] : memref<18x256xf32, #tpu.memory_space<vmem>>, vector<1x256xf32>
    %227 = vector.broadcast %226 : vector<1x256xf32> to vector<32x256xf32>
    %228 = arith.mulf %225, %227 : vector<32x256xf32>
    %229 = arith.addf %224, %228 : vector<32x256xf32>
    %c0_220 = arith.constant 0 : index
    %c4_221 = arith.constant 4 : index
    %230 = vector.load %arg28[%c0_220, %c4_221] : memref<32x273xf32, #tpu.memory_space<vmem>>, vector<32x256xf32>
    %c4_222 = arith.constant 4 : index
    %c0_223 = arith.constant 0 : index
    %231 = vector.load %arg5[%c4_222, %c0_223] : memref<18x256xf32, #tpu.memory_space<vmem>>, vector<1x256xf32>
    %232 = vector.broadcast %231 : vector<1x256xf32> to vector<32x256xf32>
    %233 = arith.mulf %230, %232 : vector<32x256xf32>
    %234 = arith.addf %229, %233 : vector<32x256xf32>
    %c0_224 = arith.constant 0 : index
    %c5_225 = arith.constant 5 : index
    %235 = vector.load %arg28[%c0_224, %c5_225] : memref<32x273xf32, #tpu.memory_space<vmem>>, vector<32x256xf32>
    %c5_226 = arith.constant 5 : index
    %c0_227 = arith.constant 0 : index
    %236 = vector.load %arg5[%c5_226, %c0_227] : memref<18x256xf32, #tpu.memory_space<vmem>>, vector<1x256xf32>
    %237 = vector.broadcast %236 : vector<1x256xf32> to vector<32x256xf32>
    %238 = arith.mulf %235, %237 : vector<32x256xf32>
    %239 = arith.addf %234, %238 : vector<32x256xf32>
    %c0_228 = arith.constant 0 : index
    %c6_229 = arith.constant 6 : index
    %240 = vector.load %arg28[%c0_228, %c6_229] : memref<32x273xf32, #tpu.memory_space<vmem>>, vector<32x256xf32>
    %c6_230 = arith.constant 6 : index
    %c0_231 = arith.constant 0 : index
    %241 = vector.load %arg5[%c6_230, %c0_231] : memref<18x256xf32, #tpu.memory_space<vmem>>, vector<1x256xf32>
    %242 = vector.broadcast %241 : vector<1x256xf32> to vector<32x256xf32>
    %243 = arith.mulf %240, %242 : vector<32x256xf32>
    %244 = arith.addf %239, %243 : vector<32x256xf32>
    %c0_232 = arith.constant 0 : index
    %c7_233 = arith.constant 7 : index
    %245 = vector.load %arg28[%c0_232, %c7_233] : memref<32x273xf32, #tpu.memory_space<vmem>>, vector<32x256xf32>
    %c7_234 = arith.constant 7 : index
    %c0_235 = arith.constant 0 : index
    %246 = vector.load %arg5[%c7_234, %c0_235] : memref<18x256xf32, #tpu.memory_space<vmem>>, vector<1x256xf32>
    %247 = vector.broadcast %246 : vector<1x256xf32> to vector<32x256xf32>
    %248 = arith.mulf %245, %247 : vector<32x256xf32>
    %249 = arith.addf %244, %248 : vector<32x256xf32>
    %c0_236 = arith.constant 0 : index
    %c8_237 = arith.constant 8 : index
    %250 = vector.load %arg28[%c0_236, %c8_237] : memref<32x273xf32, #tpu.memory_space<vmem>>, vector<32x256xf32>
    %c8_238 = arith.constant 8 : index
    %c0_239 = arith.constant 0 : index
    %251 = vector.load %arg5[%c8_238, %c0_239] : memref<18x256xf32, #tpu.memory_space<vmem>>, vector<1x256xf32>
    %252 = vector.broadcast %251 : vector<1x256xf32> to vector<32x256xf32>
    %253 = arith.mulf %250, %252 : vector<32x256xf32>
    %254 = arith.addf %249, %253 : vector<32x256xf32>
    %c0_240 = arith.constant 0 : index
    %c9_241 = arith.constant 9 : index
    %255 = vector.load %arg28[%c0_240, %c9_241] : memref<32x273xf32, #tpu.memory_space<vmem>>, vector<32x256xf32>
    %c9_242 = arith.constant 9 : index
    %c0_243 = arith.constant 0 : index
    %256 = vector.load %arg5[%c9_242, %c0_243] : memref<18x256xf32, #tpu.memory_space<vmem>>, vector<1x256xf32>
    %257 = vector.broadcast %256 : vector<1x256xf32> to vector<32x256xf32>
    %258 = arith.mulf %255, %257 : vector<32x256xf32>
    %259 = arith.addf %254, %258 : vector<32x256xf32>
    %c0_244 = arith.constant 0 : index
    %c10_245 = arith.constant 10 : index
    %260 = vector.load %arg28[%c0_244, %c10_245] : memref<32x273xf32, #tpu.memory_space<vmem>>, vector<32x256xf32>
    %c10_246 = arith.constant 10 : index
    %c0_247 = arith.constant 0 : index
    %261 = vector.load %arg5[%c10_246, %c0_247] : memref<18x256xf32, #tpu.memory_space<vmem>>, vector<1x256xf32>
    %262 = vector.broadcast %261 : vector<1x256xf32> to vector<32x256xf32>
    %263 = arith.mulf %260, %262 : vector<32x256xf32>
    %264 = arith.addf %259, %263 : vector<32x256xf32>
    %c0_248 = arith.constant 0 : index
    %c11_249 = arith.constant 11 : index
    %265 = vector.load %arg28[%c0_248, %c11_249] : memref<32x273xf32, #tpu.memory_space<vmem>>, vector<32x256xf32>
    %c11_250 = arith.constant 11 : index
    %c0_251 = arith.constant 0 : index
    %266 = vector.load %arg5[%c11_250, %c0_251] : memref<18x256xf32, #tpu.memory_space<vmem>>, vector<1x256xf32>
    %267 = vector.broadcast %266 : vector<1x256xf32> to vector<32x256xf32>
    %268 = arith.mulf %265, %267 : vector<32x256xf32>
    %269 = arith.addf %264, %268 : vector<32x256xf32>
    %c0_252 = arith.constant 0 : index
    %c12_253 = arith.constant 12 : index
    %270 = vector.load %arg28[%c0_252, %c12_253] : memref<32x273xf32, #tpu.memory_space<vmem>>, vector<32x256xf32>
    %c12_254 = arith.constant 12 : index
    %c0_255 = arith.constant 0 : index
    %271 = vector.load %arg5[%c12_254, %c0_255] : memref<18x256xf32, #tpu.memory_space<vmem>>, vector<1x256xf32>
    %272 = vector.broadcast %271 : vector<1x256xf32> to vector<32x256xf32>
    %273 = arith.mulf %270, %272 : vector<32x256xf32>
    %274 = arith.addf %269, %273 : vector<32x256xf32>
    %c0_256 = arith.constant 0 : index
    %c13_257 = arith.constant 13 : index
    %275 = vector.load %arg28[%c0_256, %c13_257] : memref<32x273xf32, #tpu.memory_space<vmem>>, vector<32x256xf32>
    %c13_258 = arith.constant 13 : index
    %c0_259 = arith.constant 0 : index
    %276 = vector.load %arg5[%c13_258, %c0_259] : memref<18x256xf32, #tpu.memory_space<vmem>>, vector<1x256xf32>
    %277 = vector.broadcast %276 : vector<1x256xf32> to vector<32x256xf32>
    %278 = arith.mulf %275, %277 : vector<32x256xf32>
    %279 = arith.addf %274, %278 : vector<32x256xf32>
    %c0_260 = arith.constant 0 : index
    %c14_261 = arith.constant 14 : index
    %280 = vector.load %arg28[%c0_260, %c14_261] : memref<32x273xf32, #tpu.memory_space<vmem>>, vector<32x256xf32>
    %c14_262 = arith.constant 14 : index
    %c0_263 = arith.constant 0 : index
    %281 = vector.load %arg5[%c14_262, %c0_263] : memref<18x256xf32, #tpu.memory_space<vmem>>, vector<1x256xf32>
    %282 = vector.broadcast %281 : vector<1x256xf32> to vector<32x256xf32>
    %283 = arith.mulf %280, %282 : vector<32x256xf32>
    %284 = arith.addf %279, %283 : vector<32x256xf32>
    %c0_264 = arith.constant 0 : index
    %c15_265 = arith.constant 15 : index
    %285 = vector.load %arg28[%c0_264, %c15_265] : memref<32x273xf32, #tpu.memory_space<vmem>>, vector<32x256xf32>
    %c15_266 = arith.constant 15 : index
    %c0_267 = arith.constant 0 : index
    %286 = vector.load %arg5[%c15_266, %c0_267] : memref<18x256xf32, #tpu.memory_space<vmem>>, vector<1x256xf32>
    %287 = vector.broadcast %286 : vector<1x256xf32> to vector<32x256xf32>
    %288 = arith.mulf %285, %287 : vector<32x256xf32>
    %289 = arith.addf %284, %288 : vector<32x256xf32>
    %c0_268 = arith.constant 0 : index
    %c16_269 = arith.constant 16 : index
    %290 = vector.load %arg28[%c0_268, %c16_269] : memref<32x273xf32, #tpu.memory_space<vmem>>, vector<32x256xf32>
    %c16_270 = arith.constant 16 : index
    %c0_271 = arith.constant 0 : index
    %291 = vector.load %arg5[%c16_270, %c0_271] : memref<18x256xf32, #tpu.memory_space<vmem>>, vector<1x256xf32>
    %292 = vector.broadcast %291 : vector<1x256xf32> to vector<32x256xf32>
    %293 = arith.mulf %290, %292 : vector<32x256xf32>
    %294 = arith.addf %289, %293 : vector<32x256xf32>
    %c0_272 = arith.constant 0 : index
    %c17_273 = arith.constant 17 : index
    %295 = vector.load %arg28[%c0_272, %c17_273] : memref<32x273xf32, #tpu.memory_space<vmem>>, vector<32x256xf32>
    %c17_274 = arith.constant 17 : index
    %c0_275 = arith.constant 0 : index
    %296 = vector.load %arg5[%c17_274, %c0_275] : memref<18x256xf32, #tpu.memory_space<vmem>>, vector<1x256xf32>
    %297 = vector.broadcast %296 : vector<1x256xf32> to vector<32x256xf32>
    %298 = arith.mulf %295, %297 : vector<32x256xf32>
    %299 = arith.addf %294, %298 : vector<32x256xf32>
    %c0_276 = arith.constant 0 : index
    %c0_277 = arith.constant 0 : index
    %300 = vector.load %arg6[%c0_276, %c0_277] : memref<1x256xf32, #tpu.memory_space<vmem>>, vector<1x256xf32>
    %301 = vector.broadcast %300 : vector<1x256xf32> to vector<32x256xf32>
    %302 = arith.addf %299, %301 : vector<32x256xf32>
    %cst_278 = arith.constant 0.000000e+00 : f32
    %303 = vector.broadcast %cst_278 : f32 to vector<32x256xf32>
    %304 = arith.maximumf %302, %303 : vector<32x256xf32>
    %305 = math.absf %302 : vector<32x256xf32>
    %cst_279 = arith.constant 0.000000e+00 : f32
    %306 = vector.broadcast %cst_279 : f32 to vector<32x256xf32>
    %307 = arith.subf %306, %305 : vector<32x256xf32>
    %308 = math.exp %307 : vector<32x256xf32>
    %cst_280 = arith.constant 1.000000e+00 : f32
    %309 = vector.broadcast %cst_280 : f32 to vector<32x256xf32>
    %310 = arith.addf %309, %308 : vector<32x256xf32>
    %311 = math.log %310 : vector<32x256xf32>
    %312 = arith.addf %304, %311 : vector<32x256xf32>
    %c0_281 = arith.constant 0 : index
    %c0_282 = arith.constant 0 : index
    %313 = vector.load %arg29[%c0_281, %c0_282] : memref<32x260xf32, #tpu.memory_space<vmem>>, vector<32x256xf32>
    tpu.vector_store %arg29[%c0_281, %c0_282], %312 {strides = array<i32>} : memref<32x260xf32, #tpu.memory_space<vmem>>, vector<32x256xf32>,
    %c0_283 = arith.constant 0 : index
    %c0_284 = arith.constant 0 : index
    %314 = vector.load %arg29[%c0_283, %c0_284] : memref<32x260xf32, #tpu.memory_space<vmem>>, vector<32x256xf32>
    %c0_285 = arith.constant 0 : index
    %c1_286 = arith.constant 1 : index
    %315 = vector.load %arg29[%c0_285, %c1_286] : memref<32x260xf32, #tpu.memory_space<vmem>>, vector<32x256xf32>
    %316 = arith.maximumf %314, %315 : vector<32x256xf32>
    %c0_287 = arith.constant 0 : index
    %c2_288 = arith.constant 2 : index
    %317 = vector.load %arg29[%c0_287, %c2_288] : memref<32x260xf32, #tpu.memory_space<vmem>>, vector<32x256xf32>
    %318 = arith.maximumf %316, %317 : vector<32x256xf32>
    %c0_289 = arith.constant 0 : index
    %c3_290 = arith.constant 3 : index
    %319 = vector.load %arg29[%c0_289, %c3_290] : memref<32x260xf32, #tpu.memory_space<vmem>>, vector<32x256xf32>
    %320 = arith.maximumf %318, %319 : vector<32x256xf32>
    %321 = arith.truncf %320 : vector<32x256xf32> to vector<32x256xbf16>
    %c0_291 = arith.constant 0 : index
    %c0_292 = arith.constant 0 : index
    %322 = vector.load %arg7[%c0_291, %c0_292] : memref<256x4xbf16, #tpu.memory_space<vmem>>, vector<256x4xbf16>
    %cst_293 = arith.constant dense<0.000000e+00> : vector<32x4xf32>
    %323 = tpu.matmul %321, %322, %cst_293 {dimension_numbers = #tpu.dot_dimension_numbers<[1], [0], [0], [1], [0, 0, 1, 1], [], []>} : vector<32x256xbf16>, vector<256x4xbf16>, vector<32x4xf32> -> vector<32x4xf32>
    %c0_294 = arith.constant 0 : index
    %c0_295 = arith.constant 0 : index
    %324 = vector.load %arg8[%c0_294, %c0_295] : memref<1x4xf32, #tpu.memory_space<vmem>>, vector<1x4xf32>
    %325 = vector.broadcast %324 : vector<1x4xf32> to vector<32x4xf32>
    %326 = arith.addf %323, %325 : vector<32x4xf32>
    %327 = arith.truncf %326 : vector<32x4xf32> to vector<32x4xbf16>
    %c0_296 = arith.constant 0 : index
    %c0_297 = arith.constant 0 : index
    %328 = vector.load %arg9[%c0_296, %c0_297] : memref<4x4xbf16, #tpu.memory_space<vmem>>, vector<4x4xbf16>
    %cst_298 = arith.constant dense<0.000000e+00> : vector<32x4xf32>
    %329 = tpu.matmul %327, %328, %cst_298 {dimension_numbers = #tpu.dot_dimension_numbers<[1], [0], [0], [1], [0, 0, 1, 1], [], []>} : vector<32x4xbf16>, vector<4x4xbf16>, vector<32x4xf32> -> vector<32x4xf32>
    %c0_299 = arith.constant 0 : index
    %c0_300 = arith.constant 0 : index
    %330 = vector.load %arg10[%c0_299, %c0_300] : memref<1x4xf32, #tpu.memory_space<vmem>>, vector<1x4xf32>
    %331 = vector.broadcast %330 : vector<1x4xf32> to vector<32x4xf32>
    %332 = arith.addf %329, %331 : vector<32x4xf32>
    %cst_301 = arith.constant 0.000000e+00 : f32
    %333 = vector.broadcast %cst_301 : f32 to vector<32x4xf32>
    %334 = arith.maximumf %332, %333 : vector<32x4xf32>
    %335 = math.absf %332 : vector<32x4xf32>
    %cst_302 = arith.constant 0.000000e+00 : f32
    %336 = vector.broadcast %cst_302 : f32 to vector<32x4xf32>
    %337 = arith.subf %336, %335 : vector<32x4xf32>
    %338 = math.exp %337 : vector<32x4xf32>
    %cst_303 = arith.constant 1.000000e+00 : f32
    %339 = vector.broadcast %cst_303 : f32 to vector<32x4xf32>
    %340 = arith.addf %339, %338 : vector<32x4xf32>
    %341 = math.log %340 : vector<32x4xf32>
    %342 = arith.addf %334, %341 : vector<32x4xf32>
    %c0_304 = arith.constant 0 : index
    %c0_305 = arith.constant 0 : index
    %343 = vector.load %arg11[%c0_304, %c0_305] : memref<4x256xf32, #tpu.memory_space<vmem>>, vector<4x256xf32>
    %cst_306 = arith.constant dense<0.000000e+00> : vector<32x256xf32>
    %344 = tpu.matmul %342, %343, %cst_306 {dimension_numbers = #tpu.dot_dimension_numbers<[1], [0], [0], [1], [0, 0, 1, 1], [], []>} : vector<32x4xf32>, vector<4x256xf32>, vector<32x256xf32> -> vector<32x256xf32>
    %345 = arith.mulf %206, %344 : vector<32x256xf32>
    %346 = tpu.concatenate %179, %345 in 1 : vector<32x256xf32>, vector<32x256xf32> -> vector<32x512xf32>
    %c0_307 = arith.constant 0 : index
    %c0_308 = arith.constant 0 : index
    %347 = vector.load %arg12[%c0_307, %c0_308] : memref<32x32xbf16, #tpu.memory_space<vmem>>, vector<32x32xbf16>
    %348 = arith.truncf %346 : vector<32x512xf32> to vector<32x512xbf16>
    %cst_309 = arith.constant dense<0.000000e+00> : vector<32x512xf32>
    %349 = tpu.matmul %347, %348, %cst_309 {dimension_numbers = #tpu.dot_dimension_numbers<[1], [0], [0], [1], [0, 0, 1, 1], [], []>} : vector<32x32xbf16>, vector<32x512xbf16>, vector<32x512xf32> -> vector<32x512xf32>
    %c0_310 = arith.constant 0 : index
    %c0_311 = arith.constant 0 : index
    %350 = vector.load %arg13[%c0_310, %c0_311] : memref<32x1xf32, #tpu.memory_space<vmem>>, vector<32x1xf32>
    %351 = vector.broadcast %350 : vector<32x1xf32> to vector<32x512xf32>
    %352 = arith.addf %349, %351 : vector<32x512xf32>
    %cst_312 = arith.constant 0.000000e+00 : f32
    %353 = vector.broadcast %cst_312 : f32 to vector<32x512xf32>
    %354 = arith.maximumf %352, %353 : vector<32x512xf32>
    %c0_313 = arith.constant 0 : index
    %c0_314 = arith.constant 0 : index
    %355 = vector.load %arg14[%c0_313, %c0_314] : memref<16x32xbf16, #tpu.memory_space<vmem>>, vector<16x32xbf16>
    %356 = arith.truncf %354 : vector<32x512xf32> to vector<32x512xbf16>
    %cst_315 = arith.constant dense<0.000000e+00> : vector<16x512xf32>
    %357 = tpu.matmul %355, %356, %cst_315 {dimension_numbers = #tpu.dot_dimension_numbers<[1], [0], [0], [1], [0, 0, 1, 1], [], []>} : vector<16x32xbf16>, vector<32x512xbf16>, vector<16x512xf32> -> vector<16x512xf32>
    %c0_316 = arith.constant 0 : index
    %c0_317 = arith.constant 0 : index
    %358 = vector.load %arg15[%c0_316, %c0_317] : memref<16x1xf32, #tpu.memory_space<vmem>>, vector<16x1xf32>
    %359 = vector.broadcast %358 : vector<16x1xf32> to vector<16x512xf32>
    %360 = arith.addf %357, %359 : vector<16x512xf32>
    %cst_318 = arith.constant 0.000000e+00 : f32
    %361 = vector.broadcast %cst_318 : f32 to vector<16x512xf32>
    %362 = arith.maximumf %360, %361 : vector<16x512xf32>
    %c0_319 = arith.constant 0 : index
    %c0_320 = arith.constant 0 : index
    %363 = vector.load %arg16[%c0_319, %c0_320] : memref<16x16xbf16, #tpu.memory_space<vmem>>, vector<16x16xbf16>
    %364 = arith.truncf %362 : vector<16x512xf32> to vector<16x512xbf16>
    %cst_321 = arith.constant dense<0.000000e+00> : vector<16x512xf32>
    %365 = tpu.matmul %363, %364, %cst_321 {dimension_numbers = #tpu.dot_dimension_numbers<[1], [0], [0], [1], [0, 0, 1, 1], [], []>} : vector<16x16xbf16>, vector<16x512xbf16>, vector<16x512xf32> -> vector<16x512xf32>
    %c0_322 = arith.constant 0 : index
    %c0_323 = arith.constant 0 : index
    %366 = vector.load %arg17[%c0_322, %c0_323] : memref<16x1xf32, #tpu.memory_space<vmem>>, vector<16x1xf32>
    %367 = vector.broadcast %366 : vector<16x1xf32> to vector<16x512xf32>
    %368 = arith.addf %365, %367 : vector<16x512xf32>
    %cst_324 = arith.constant 0.000000e+00 : f32
    %369 = vector.broadcast %cst_324 : f32 to vector<16x512xf32>
    %370 = arith.maximumf %368, %369 : vector<16x512xf32>
    %c0_325 = arith.constant 0 : index
    %c0_326 = arith.constant 0 : index
    %371 = vector.load %arg18[%c0_325, %c0_326] : memref<16x16xbf16, #tpu.memory_space<vmem>>, vector<16x16xbf16>
    %372 = arith.truncf %370 : vector<16x512xf32> to vector<16x512xbf16>
    %cst_327 = arith.constant dense<0.000000e+00> : vector<16x512xf32>
    %373 = tpu.matmul %371, %372, %cst_327 {dimension_numbers = #tpu.dot_dimension_numbers<[1], [0], [0], [1], [0, 0, 1, 1], [], []>} : vector<16x16xbf16>, vector<16x512xbf16>, vector<16x512xf32> -> vector<16x512xf32>
    %c0_328 = arith.constant 0 : index
    %c0_329 = arith.constant 0 : index
    %374 = vector.load %arg19[%c0_328, %c0_329] : memref<16x1xf32, #tpu.memory_space<vmem>>, vector<16x1xf32>
    %375 = vector.broadcast %374 : vector<16x1xf32> to vector<16x512xf32>
    %376 = arith.addf %373, %375 : vector<16x512xf32>
    %cst_330 = arith.constant 0.000000e+00 : f32
    %377 = vector.broadcast %cst_330 : f32 to vector<16x512xf32>
    %378 = arith.maximumf %376, %377 : vector<16x512xf32>
    %c0_331 = arith.constant 0 : index
    %c0_332 = arith.constant 0 : index
    %379 = vector.load %arg20[%c0_331, %c0_332] : memref<32x16xbf16, #tpu.memory_space<vmem>>, vector<32x16xbf16>
    %380 = arith.truncf %378 : vector<16x512xf32> to vector<16x512xbf16>
    %cst_333 = arith.constant dense<0.000000e+00> : vector<32x512xf32>
    %381 = tpu.matmul %379, %380, %cst_333 {dimension_numbers = #tpu.dot_dimension_numbers<[1], [0], [0], [1], [0, 0, 1, 1], [], []>} : vector<32x16xbf16>, vector<16x512xbf16>, vector<32x512xf32> -> vector<32x512xf32>
    %c0_334 = arith.constant 0 : index
    %c0_335 = arith.constant 0 : index
    %382 = vector.load %arg21[%c0_334, %c0_335] : memref<32x1xf32, #tpu.memory_space<vmem>>, vector<32x1xf32>
    %383 = vector.broadcast %382 : vector<32x1xf32> to vector<32x512xf32>
    %384 = arith.addf %381, %383 : vector<32x512xf32>
    %c0_336 = arith.constant 0 : index
    %c0_337 = arith.constant 0 : index
    %385 = vector.load %arg22[%c0_336, %c0_337] : memref<32x1xf32, #tpu.memory_space<vmem>>, vector<32x1xf32>
    %386 = vector.broadcast %385 : vector<32x1xf32> to vector<32x512xf32>
    %387 = arith.mulf %386, %384 : vector<32x512xf32>
    %c0_338 = arith.constant 0 : index
    %c0_339 = arith.constant 0 : index
    %388 = vector.load %arg23[%c0_338, %c0_339] : memref<32x1xf32, #tpu.memory_space<vmem>>, vector<32x1xf32>
    %389 = vector.broadcast %388 : vector<32x1xf32> to vector<32x512xf32>
    %390 = arith.addf %387, %389 : vector<32x512xf32>
    %c0_340 = arith.constant 0 : index
    %c0_341 = arith.constant 0 : index
    %391 = vector.load %arg24[%c0_340, %c0_341] : memref<32x25xf32, #tpu.memory_space<vmem>>, vector<32x1xf32>
    %cst_342 = arith.constant -2.000000e-01 : f32
    %392 = vector.broadcast %cst_342 : f32 to vector<32x512xf32>
    %393 = arith.subf %384, %392 : vector<32x512xf32>
    %cst_343 = arith.constant 0.000000e+00 : f32
    %394 = vector.broadcast %cst_343 : f32 to vector<32x512xf32>
    %395 = arith.maximumf %393, %394 : vector<32x512xf32>
    %396 = vector.broadcast %391 : vector<32x1xf32> to vector<32x512xf32>
    %397 = arith.mulf %396, %395 : vector<32x512xf32>
    %398 = arith.addf %390, %397 : vector<32x512xf32>
    %c0_344 = arith.constant 0 : index
    %c1_345 = arith.constant 1 : index
    %399 = vector.load %arg24[%c0_344, %c1_345] : memref<32x25xf32, #tpu.memory_space<vmem>>, vector<32x1xf32>
    %cst_346 = arith.constant -0.183333337 : f32
    %400 = vector.broadcast %cst_346 : f32 to vector<32x512xf32>
    %401 = arith.subf %384, %400 : vector<32x512xf32>
    %cst_347 = arith.constant 0.000000e+00 : f32
    %402 = vector.broadcast %cst_347 : f32 to vector<32x512xf32>
    %403 = arith.maximumf %401, %402 : vector<32x512xf32>
    %404 = vector.broadcast %399 : vector<32x1xf32> to vector<32x512xf32>
    %405 = arith.mulf %404, %403 : vector<32x512xf32>
    %406 = arith.addf %398, %405 : vector<32x512xf32>
    %c0_348 = arith.constant 0 : index
    %c2_349 = arith.constant 2 : index
    %407 = vector.load %arg24[%c0_348, %c2_349] : memref<32x25xf32, #tpu.memory_space<vmem>>, vector<32x1xf32>
    %cst_350 = arith.constant -0.166666672 : f32
    %408 = vector.broadcast %cst_350 : f32 to vector<32x512xf32>
    %409 = arith.subf %384, %408 : vector<32x512xf32>
    %cst_351 = arith.constant 0.000000e+00 : f32
    %410 = vector.broadcast %cst_351 : f32 to vector<32x512xf32>
    %411 = arith.maximumf %409, %410 : vector<32x512xf32>
    %412 = vector.broadcast %407 : vector<32x1xf32> to vector<32x512xf32>
    %413 = arith.mulf %412, %411 : vector<32x512xf32>
    %414 = arith.addf %406, %413 : vector<32x512xf32>
    %c0_352 = arith.constant 0 : index
    %c3_353 = arith.constant 3 : index
    %415 = vector.load %arg24[%c0_352, %c3_353] : memref<32x25xf32, #tpu.memory_space<vmem>>, vector<32x1xf32>
    %cst_354 = arith.constant -1.500000e-01 : f32
    %416 = vector.broadcast %cst_354 : f32 to vector<32x512xf32>
    %417 = arith.subf %384, %416 : vector<32x512xf32>
    %cst_355 = arith.constant 0.000000e+00 : f32
    %418 = vector.broadcast %cst_355 : f32 to vector<32x512xf32>
    %419 = arith.maximumf %417, %418 : vector<32x512xf32>
    %420 = vector.broadcast %415 : vector<32x1xf32> to vector<32x512xf32>
    %421 = arith.mulf %420, %419 : vector<32x512xf32>
    %422 = arith.addf %414, %421 : vector<32x512xf32>
    %c0_356 = arith.constant 0 : index
    %c4_357 = arith.constant 4 : index
    %423 = vector.load %arg24[%c0_356, %c4_357] : memref<32x25xf32, #tpu.memory_space<vmem>>, vector<32x1xf32>
    %cst_358 = arith.constant -0.13333334 : f32
    %424 = vector.broadcast %cst_358 : f32 to vector<32x512xf32>
    %425 = arith.subf %384, %424 : vector<32x512xf32>
    %cst_359 = arith.constant 0.000000e+00 : f32
    %426 = vector.broadcast %cst_359 : f32 to vector<32x512xf32>
    %427 = arith.maximumf %425, %426 : vector<32x512xf32>
    %428 = vector.broadcast %423 : vector<32x1xf32> to vector<32x512xf32>
    %429 = arith.mulf %428, %427 : vector<32x512xf32>
    %430 = arith.addf %422, %429 : vector<32x512xf32>
    %c0_360 = arith.constant 0 : index
    %c5_361 = arith.constant 5 : index
    %431 = vector.load %arg24[%c0_360, %c5_361] : memref<32x25xf32, #tpu.memory_space<vmem>>, vector<32x1xf32>
    %cst_362 = arith.constant -0.116666667 : f32
    %432 = vector.broadcast %cst_362 : f32 to vector<32x512xf32>
    %433 = arith.subf %384, %432 : vector<32x512xf32>
    %cst_363 = arith.constant 0.000000e+00 : f32
    %434 = vector.broadcast %cst_363 : f32 to vector<32x512xf32>
    %435 = arith.maximumf %433, %434 : vector<32x512xf32>
    %436 = vector.broadcast %431 : vector<32x1xf32> to vector<32x512xf32>
    %437 = arith.mulf %436, %435 : vector<32x512xf32>
    %438 = arith.addf %430, %437 : vector<32x512xf32>
    %c0_364 = arith.constant 0 : index
    %c6_365 = arith.constant 6 : index
    %439 = vector.load %arg24[%c0_364, %c6_365] : memref<32x25xf32, #tpu.memory_space<vmem>>, vector<32x1xf32>
    %cst_366 = arith.constant -1.000000e-01 : f32
    %440 = vector.broadcast %cst_366 : f32 to vector<32x512xf32>
    %441 = arith.subf %384, %440 : vector<32x512xf32>
    %cst_367 = arith.constant 0.000000e+00 : f32
    %442 = vector.broadcast %cst_367 : f32 to vector<32x512xf32>
    %443 = arith.maximumf %441, %442 : vector<32x512xf32>
    %444 = vector.broadcast %439 : vector<32x1xf32> to vector<32x512xf32>
    %445 = arith.mulf %444, %443 : vector<32x512xf32>
    %446 = arith.addf %438, %445 : vector<32x512xf32>
    %c0_368 = arith.constant 0 : index
    %c7_369 = arith.constant 7 : index
    %447 = vector.load %arg24[%c0_368, %c7_369] : memref<32x25xf32, #tpu.memory_space<vmem>>, vector<32x1xf32>
    %cst_370 = arith.constant -0.0833333358 : f32
    %448 = vector.broadcast %cst_370 : f32 to vector<32x512xf32>
    %449 = arith.subf %384, %448 : vector<32x512xf32>
    %cst_371 = arith.constant 0.000000e+00 : f32
    %450 = vector.broadcast %cst_371 : f32 to vector<32x512xf32>
    %451 = arith.maximumf %449, %450 : vector<32x512xf32>
    %452 = vector.broadcast %447 : vector<32x1xf32> to vector<32x512xf32>
    %453 = arith.mulf %452, %451 : vector<32x512xf32>
    %454 = arith.addf %446, %453 : vector<32x512xf32>
    %c0_372 = arith.constant 0 : index
    %c8_373 = arith.constant 8 : index
    %455 = vector.load %arg24[%c0_372, %c8_373] : memref<32x25xf32, #tpu.memory_space<vmem>>, vector<32x1xf32>
    %cst_374 = arith.constant -0.0666666701 : f32
    %456 = vector.broadcast %cst_374 : f32 to vector<32x512xf32>
    %457 = arith.subf %384, %456 : vector<32x512xf32>
    %cst_375 = arith.constant 0.000000e+00 : f32
    %458 = vector.broadcast %cst_375 : f32 to vector<32x512xf32>
    %459 = arith.maximumf %457, %458 : vector<32x512xf32>
    %460 = vector.broadcast %455 : vector<32x1xf32> to vector<32x512xf32>
    %461 = arith.mulf %460, %459 : vector<32x512xf32>
    %462 = arith.addf %454, %461 : vector<32x512xf32>
    %c0_376 = arith.constant 0 : index
    %c9_377 = arith.constant 9 : index
    %463 = vector.load %arg24[%c0_376, %c9_377] : memref<32x25xf32, #tpu.memory_space<vmem>>, vector<32x1xf32>
    %cst_378 = arith.constant -5.000000e-02 : f32
    %464 = vector.broadcast %cst_378 : f32 to vector<32x512xf32>
    %465 = arith.subf %384, %464 : vector<32x512xf32>
    %cst_379 = arith.constant 0.000000e+00 : f32
    %466 = vector.broadcast %cst_379 : f32 to vector<32x512xf32>
    %467 = arith.maximumf %465, %466 : vector<32x512xf32>
    %468 = vector.broadcast %463 : vector<32x1xf32> to vector<32x512xf32>
    %469 = arith.mulf %468, %467 : vector<32x512xf32>
    %470 = arith.addf %462, %469 : vector<32x512xf32>
    %c0_380 = arith.constant 0 : index
    %c10_381 = arith.constant 10 : index
    %471 = vector.load %arg24[%c0_380, %c10_381] : memref<32x25xf32, #tpu.memory_space<vmem>>, vector<32x1xf32>
    %cst_382 = arith.constant -0.0333333351 : f32
    %472 = vector.broadcast %cst_382 : f32 to vector<32x512xf32>
    %473 = arith.subf %384, %472 : vector<32x512xf32>
    %cst_383 = arith.constant 0.000000e+00 : f32
    %474 = vector.broadcast %cst_383 : f32 to vector<32x512xf32>
    %475 = arith.maximumf %473, %474 : vector<32x512xf32>
    %476 = vector.broadcast %471 : vector<32x1xf32> to vector<32x512xf32>
    %477 = arith.mulf %476, %475 : vector<32x512xf32>
    %478 = arith.addf %470, %477 : vector<32x512xf32>
    %c0_384 = arith.constant 0 : index
    %c11_385 = arith.constant 11 : index
    %479 = vector.load %arg24[%c0_384, %c11_385] : memref<32x25xf32, #tpu.memory_space<vmem>>, vector<32x1xf32>
    %cst_386 = arith.constant -0.0166666675 : f32
    %480 = vector.broadcast %cst_386 : f32 to vector<32x512xf32>
    %481 = arith.subf %384, %480 : vector<32x512xf32>
    %cst_387 = arith.constant 0.000000e+00 : f32
    %482 = vector.broadcast %cst_387 : f32 to vector<32x512xf32>
    %483 = arith.maximumf %481, %482 : vector<32x512xf32>
    %484 = vector.broadcast %479 : vector<32x1xf32> to vector<32x512xf32>
    %485 = arith.mulf %484, %483 : vector<32x512xf32>
    %486 = arith.addf %478, %485 : vector<32x512xf32>
    %c0_388 = arith.constant 0 : index
    %c12_389 = arith.constant 12 : index
    %487 = vector.load %arg24[%c0_388, %c12_389] : memref<32x25xf32, #tpu.memory_space<vmem>>, vector<32x1xf32>
    %cst_390 = arith.constant 2.77555756E-17 : f32
    %488 = vector.broadcast %cst_390 : f32 to vector<32x512xf32>
    %489 = arith.subf %384, %488 : vector<32x512xf32>
    %cst_391 = arith.constant 0.000000e+00 : f32
    %490 = vector.broadcast %cst_391 : f32 to vector<32x512xf32>
    %491 = arith.maximumf %489, %490 : vector<32x512xf32>
    %492 = vector.broadcast %487 : vector<32x1xf32> to vector<32x512xf32>
    %493 = arith.mulf %492, %491 : vector<32x512xf32>
    %494 = arith.addf %486, %493 : vector<32x512xf32>
    %c0_392 = arith.constant 0 : index
    %c13_393 = arith.constant 13 : index
    %495 = vector.load %arg24[%c0_392, %c13_393] : memref<32x25xf32, #tpu.memory_space<vmem>>, vector<32x1xf32>
    %cst_394 = arith.constant 0.0166666675 : f32
    %496 = vector.broadcast %cst_394 : f32 to vector<32x512xf32>
    %497 = arith.subf %384, %496 : vector<32x512xf32>
    %cst_395 = arith.constant 0.000000e+00 : f32
    %498 = vector.broadcast %cst_395 : f32 to vector<32x512xf32>
    %499 = arith.maximumf %497, %498 : vector<32x512xf32>
    %500 = vector.broadcast %495 : vector<32x1xf32> to vector<32x512xf32>
    %501 = arith.mulf %500, %499 : vector<32x512xf32>
    %502 = arith.addf %494, %501 : vector<32x512xf32>
    %c0_396 = arith.constant 0 : index
    %c14_397 = arith.constant 14 : index
    %503 = vector.load %arg24[%c0_396, %c14_397] : memref<32x25xf32, #tpu.memory_space<vmem>>, vector<32x1xf32>
    %cst_398 = arith.constant 0.0333333351 : f32
    %504 = vector.broadcast %cst_398 : f32 to vector<32x512xf32>
    %505 = arith.subf %384, %504 : vector<32x512xf32>
    %cst_399 = arith.constant 0.000000e+00 : f32
    %506 = vector.broadcast %cst_399 : f32 to vector<32x512xf32>
    %507 = arith.maximumf %505, %506 : vector<32x512xf32>
    %508 = vector.broadcast %503 : vector<32x1xf32> to vector<32x512xf32>
    %509 = arith.mulf %508, %507 : vector<32x512xf32>
    %510 = arith.addf %502, %509 : vector<32x512xf32>
    %c0_400 = arith.constant 0 : index
    %c15_401 = arith.constant 15 : index
    %511 = vector.load %arg24[%c0_400, %c15_401] : memref<32x25xf32, #tpu.memory_space<vmem>>, vector<32x1xf32>
    %cst_402 = arith.constant 5.000000e-02 : f32
    %512 = vector.broadcast %cst_402 : f32 to vector<32x512xf32>
    %513 = arith.subf %384, %512 : vector<32x512xf32>
    %cst_403 = arith.constant 0.000000e+00 : f32
    %514 = vector.broadcast %cst_403 : f32 to vector<32x512xf32>
    %515 = arith.maximumf %513, %514 : vector<32x512xf32>
    %516 = vector.broadcast %511 : vector<32x1xf32> to vector<32x512xf32>
    %517 = arith.mulf %516, %515 : vector<32x512xf32>
    %518 = arith.addf %510, %517 : vector<32x512xf32>
    %c0_404 = arith.constant 0 : index
    %c16_405 = arith.constant 16 : index
    %519 = vector.load %arg24[%c0_404, %c16_405] : memref<32x25xf32, #tpu.memory_space<vmem>>, vector<32x1xf32>
    %cst_406 = arith.constant 0.0666666701 : f32
    %520 = vector.broadcast %cst_406 : f32 to vector<32x512xf32>
    %521 = arith.subf %384, %520 : vector<32x512xf32>
    %cst_407 = arith.constant 0.000000e+00 : f32
    %522 = vector.broadcast %cst_407 : f32 to vector<32x512xf32>
    %523 = arith.maximumf %521, %522 : vector<32x512xf32>
    %524 = vector.broadcast %519 : vector<32x1xf32> to vector<32x512xf32>
    %525 = arith.mulf %524, %523 : vector<32x512xf32>
    %526 = arith.addf %518, %525 : vector<32x512xf32>
    %c0_408 = arith.constant 0 : index
    %c17_409 = arith.constant 17 : index
    %527 = vector.load %arg24[%c0_408, %c17_409] : memref<32x25xf32, #tpu.memory_space<vmem>>, vector<32x1xf32>
    %cst_410 = arith.constant 0.0833333358 : f32
    %528 = vector.broadcast %cst_410 : f32 to vector<32x512xf32>
    %529 = arith.subf %384, %528 : vector<32x512xf32>
    %cst_411 = arith.constant 0.000000e+00 : f32
    %530 = vector.broadcast %cst_411 : f32 to vector<32x512xf32>
    %531 = arith.maximumf %529, %530 : vector<32x512xf32>
    %532 = vector.broadcast %527 : vector<32x1xf32> to vector<32x512xf32>
    %533 = arith.mulf %532, %531 : vector<32x512xf32>
    %534 = arith.addf %526, %533 : vector<32x512xf32>
    %c0_412 = arith.constant 0 : index
    %c18 = arith.constant 18 : index
    %535 = vector.load %arg24[%c0_412, %c18] : memref<32x25xf32, #tpu.memory_space<vmem>>, vector<32x1xf32>
    %cst_413 = arith.constant 1.000000e-01 : f32
    %536 = vector.broadcast %cst_413 : f32 to vector<32x512xf32>
    %537 = arith.subf %384, %536 : vector<32x512xf32>
    %cst_414 = arith.constant 0.000000e+00 : f32
    %538 = vector.broadcast %cst_414 : f32 to vector<32x512xf32>
    %539 = arith.maximumf %537, %538 : vector<32x512xf32>
    %540 = vector.broadcast %535 : vector<32x1xf32> to vector<32x512xf32>
    %541 = arith.mulf %540, %539 : vector<32x512xf32>
    %542 = arith.addf %534, %541 : vector<32x512xf32>
    %c0_415 = arith.constant 0 : index
    %c19 = arith.constant 19 : index
    %543 = vector.load %arg24[%c0_415, %c19] : memref<32x25xf32, #tpu.memory_space<vmem>>, vector<32x1xf32>
    %cst_416 = arith.constant 0.116666667 : f32
    %544 = vector.broadcast %cst_416 : f32 to vector<32x512xf32>
    %545 = arith.subf %384, %544 : vector<32x512xf32>
    %cst_417 = arith.constant 0.000000e+00 : f32
    %546 = vector.broadcast %cst_417 : f32 to vector<32x512xf32>
    %547 = arith.maximumf %545, %546 : vector<32x512xf32>
    %548 = vector.broadcast %543 : vector<32x1xf32> to vector<32x512xf32>
    %549 = arith.mulf %548, %547 : vector<32x512xf32>
    %550 = arith.addf %542, %549 : vector<32x512xf32>
    %c0_418 = arith.constant 0 : index
    %c20 = arith.constant 20 : index
    %551 = vector.load %arg24[%c0_418, %c20] : memref<32x25xf32, #tpu.memory_space<vmem>>, vector<32x1xf32>
    %cst_419 = arith.constant 0.13333334 : f32
    %552 = vector.broadcast %cst_419 : f32 to vector<32x512xf32>
    %553 = arith.subf %384, %552 : vector<32x512xf32>
    %cst_420 = arith.constant 0.000000e+00 : f32
    %554 = vector.broadcast %cst_420 : f32 to vector<32x512xf32>
    %555 = arith.maximumf %553, %554 : vector<32x512xf32>
    %556 = vector.broadcast %551 : vector<32x1xf32> to vector<32x512xf32>
    %557 = arith.mulf %556, %555 : vector<32x512xf32>
    %558 = arith.addf %550, %557 : vector<32x512xf32>
    %c0_421 = arith.constant 0 : index
    %c21 = arith.constant 21 : index
    %559 = vector.load %arg24[%c0_421, %c21] : memref<32x25xf32, #tpu.memory_space<vmem>>, vector<32x1xf32>
    %cst_422 = arith.constant 1.500000e-01 : f32
    %560 = vector.broadcast %cst_422 : f32 to vector<32x512xf32>
    %561 = arith.subf %384, %560 : vector<32x512xf32>
    %cst_423 = arith.constant 0.000000e+00 : f32
    %562 = vector.broadcast %cst_423 : f32 to vector<32x512xf32>
    %563 = arith.maximumf %561, %562 : vector<32x512xf32>
    %564 = vector.broadcast %559 : vector<32x1xf32> to vector<32x512xf32>
    %565 = arith.mulf %564, %563 : vector<32x512xf32>
    %566 = arith.addf %558, %565 : vector<32x512xf32>
    %c0_424 = arith.constant 0 : index
    %c22 = arith.constant 22 : index
    %567 = vector.load %arg24[%c0_424, %c22] : memref<32x25xf32, #tpu.memory_space<vmem>>, vector<32x1xf32>
    %cst_425 = arith.constant 0.166666672 : f32
    %568 = vector.broadcast %cst_425 : f32 to vector<32x512xf32>
    %569 = arith.subf %384, %568 : vector<32x512xf32>
    %cst_426 = arith.constant 0.000000e+00 : f32
    %570 = vector.broadcast %cst_426 : f32 to vector<32x512xf32>
    %571 = arith.maximumf %569, %570 : vector<32x512xf32>
    %572 = vector.broadcast %567 : vector<32x1xf32> to vector<32x512xf32>
    %573 = arith.mulf %572, %571 : vector<32x512xf32>
    %574 = arith.addf %566, %573 : vector<32x512xf32>
    %c0_427 = arith.constant 0 : index
    %c23 = arith.constant 23 : index
    %575 = vector.load %arg24[%c0_427, %c23] : memref<32x25xf32, #tpu.memory_space<vmem>>, vector<32x1xf32>
    %cst_428 = arith.constant 0.183333337 : f32
    %576 = vector.broadcast %cst_428 : f32 to vector<32x512xf32>
    %577 = arith.subf %384, %576 : vector<32x512xf32>
    %cst_429 = arith.constant 0.000000e+00 : f32
    %578 = vector.broadcast %cst_429 : f32 to vector<32x512xf32>
    %579 = arith.maximumf %577, %578 : vector<32x512xf32>
    %580 = vector.broadcast %575 : vector<32x1xf32> to vector<32x512xf32>
    %581 = arith.mulf %580, %579 : vector<32x512xf32>
    %582 = arith.addf %574, %581 : vector<32x512xf32>
    %c0_430 = arith.constant 0 : index
    %c24 = arith.constant 24 : index
    %583 = vector.load %arg24[%c0_430, %c24] : memref<32x25xf32, #tpu.memory_space<vmem>>, vector<32x1xf32>
    %cst_431 = arith.constant 2.000000e-01 : f32
    %584 = vector.broadcast %cst_431 : f32 to vector<32x512xf32>
    %585 = arith.subf %384, %584 : vector<32x512xf32>
    %cst_432 = arith.constant 0.000000e+00 : f32
    %586 = vector.broadcast %cst_432 : f32 to vector<32x512xf32>
    %587 = arith.maximumf %585, %586 : vector<32x512xf32>
    %588 = vector.broadcast %583 : vector<32x1xf32> to vector<32x512xf32>
    %589 = arith.mulf %588, %587 : vector<32x512xf32>
    %590 = arith.addf %582, %589 : vector<32x512xf32>
    %591 = vector.extract_strided_slice %590 {offsets = [0, 0], sizes = [32, 256], strides = [1, 1]} : vector<32x512xf32> to vector<32x256xf32>
    %c0_433 = arith.constant 0 : index
    %c4_434 = arith.constant 4 : index
    %592 = vector.load %arg30[%c0_433, %c4_434] : memref<32x264xf32, #tpu.memory_space<vmem>>, vector<32x256xf32>
    tpu.vector_store %arg30[%c0_433, %c4_434], %591 {strides = array<i32>} : memref<32x264xf32, #tpu.memory_space<vmem>>, vector<32x256xf32>,
    %c0_435 = arith.constant 0 : index
    %c0_436 = arith.constant 0 : index
    %593 = vector.load %arg3[%c0_435, %c0_436] : memref<9x32xf32, #tpu.memory_space<vmem>>, vector<9x32xf32>
    %c0_437 = arith.constant 0 : index
    %c0_438 = arith.constant 0 : index
    %594 = vector.load %arg30[%c0_437, %c0_438] : memref<32x264xf32, #tpu.memory_space<vmem>>, vector<32x264xf32>
    %cst_439 = arith.constant dense<0.000000e+00> : vector<9x264xf32>
    %595 = tpu.matmul %593, %594, %cst_439 {dimension_numbers = #tpu.dot_dimension_numbers<[1], [0], [0], [1], [0, 0, 1, 1], [], []>} : vector<9x32xf32>, vector<32x264xf32>, vector<9x264xf32> -> vector<9x264xf32>
    %c0_440 = arith.constant 0 : index
    %c0_441 = arith.constant 0 : index
    %596 = vector.load %arg31[%c0_440, %c0_441] : memref<9x264xf32, #tpu.memory_space<vmem>>, vector<9x264xf32>
    tpu.vector_store %arg31[%c0_440, %c0_441], %595 {strides = array<i32>} : memref<9x264xf32, #tpu.memory_space<vmem>>, vector<9x264xf32>,
    %cst_442 = arith.constant 0.000000e+00 : f32
    %597 = vector.broadcast %cst_442 : f32 to vector<1x256xf32>
    %c0_443 = arith.constant 0 : index
    %c8_444 = arith.constant 8 : index
    %598 = vector.load %arg31[%c0_443, %c8_444] : memref<9x264xf32, #tpu.memory_space<vmem>>, vector<1x256xf32>
    %599 = arith.addf %597, %598 : vector<1x256xf32>
    %c1_445 = arith.constant 1 : index
    %c7_446 = arith.constant 7 : index
    %600 = vector.load %arg31[%c1_445, %c7_446] : memref<9x264xf32, #tpu.memory_space<vmem>>, vector<1x256xf32>
    %601 = arith.addf %599, %600 : vector<1x256xf32>
    %c2_447 = arith.constant 2 : index
    %c6_448 = arith.constant 6 : index
    %602 = vector.load %arg31[%c2_447, %c6_448] : memref<9x264xf32, #tpu.memory_space<vmem>>, vector<1x256xf32>
    %603 = arith.addf %601, %602 : vector<1x256xf32>
    %c3_449 = arith.constant 3 : index
    %c5_450 = arith.constant 5 : index
    %604 = vector.load %arg31[%c3_449, %c5_450] : memref<9x264xf32, #tpu.memory_space<vmem>>, vector<1x256xf32>
    %605 = arith.addf %603, %604 : vector<1x256xf32>
    %c4_451 = arith.constant 4 : index
    %c4_452 = arith.constant 4 : index
    %606 = vector.load %arg31[%c4_451, %c4_452] : memref<9x264xf32, #tpu.memory_space<vmem>>, vector<1x256xf32>
    %607 = arith.addf %605, %606 : vector<1x256xf32>
    %c5_453 = arith.constant 5 : index
    %c3_454 = arith.constant 3 : index
    %608 = vector.load %arg31[%c5_453, %c3_454] : memref<9x264xf32, #tpu.memory_space<vmem>>, vector<1x256xf32>
    %609 = arith.addf %607, %608 : vector<1x256xf32>
    %c6_455 = arith.constant 6 : index
    %c2_456 = arith.constant 2 : index
    %610 = vector.load %arg31[%c6_455, %c2_456] : memref<9x264xf32, #tpu.memory_space<vmem>>, vector<1x256xf32>
    %611 = arith.addf %609, %610 : vector<1x256xf32>
    %c7_457 = arith.constant 7 : index
    %c1_458 = arith.constant 1 : index
    %612 = vector.load %arg31[%c7_457, %c1_458] : memref<9x264xf32, #tpu.memory_space<vmem>>, vector<1x256xf32>
    %613 = arith.addf %611, %612 : vector<1x256xf32>
    %c8_459 = arith.constant 8 : index
    %c0_460 = arith.constant 0 : index
    %614 = vector.load %arg31[%c8_459, %c0_460] : memref<9x264xf32, #tpu.memory_space<vmem>>, vector<1x256xf32>
    %615 = arith.addf %613, %614 : vector<1x256xf32>
    %c0_461 = arith.constant 0 : index
    %c0_462 = arith.constant 0 : index
    %c0_463 = arith.constant 0 : index
    %616 = vector.load %arg25[%c0_461, %c0_462, %c0_463] : memref<2x1x256xf32, #tpu.memory_space<vmem>>, vector<1x1x256xf32>
    %617 = vector.shape_cast %616 : vector<1x1x256xf32> to vector<1x256xf32>
    %618 = vector.shape_cast %615 : vector<1x256xf32> to vector<1x1x256xf32>
    tpu.vector_store %arg25[%c0_461, %c0_462, %c0_463], %618 {strides = array<i32>} : memref<2x1x256xf32, #tpu.memory_space<vmem>>, vector<1x1x256xf32>,
    %619 = vector.extract_strided_slice %590 {offsets = [0, 256], sizes = [32, 256], strides = [1, 1]} : vector<32x512xf32> to vector<32x256xf32>
    %c0_464 = arith.constant 0 : index
    %c4_465 = arith.constant 4 : index
    %620 = vector.load %arg30[%c0_464, %c4_465] : memref<32x264xf32, #tpu.memory_space<vmem>>, vector<32x256xf32>
    tpu.vector_store %arg30[%c0_464, %c4_465], %619 {strides = array<i32>} : memref<32x264xf32, #tpu.memory_space<vmem>>, vector<32x256xf32>,
    %c0_466 = arith.constant 0 : index
    %c0_467 = arith.constant 0 : index
    %621 = vector.load %arg3[%c0_466, %c0_467] : memref<9x32xf32, #tpu.memory_space<vmem>>, vector<9x32xf32>
    %c0_468 = arith.constant 0 : index
    %c0_469 = arith.constant 0 : index
    %622 = vector.load %arg30[%c0_468, %c0_469] : memref<32x264xf32, #tpu.memory_space<vmem>>, vector<32x264xf32>
    %cst_470 = arith.constant dense<0.000000e+00> : vector<9x264xf32>
    %623 = tpu.matmul %621, %622, %cst_470 {dimension_numbers = #tpu.dot_dimension_numbers<[1], [0], [0], [1], [0, 0, 1, 1], [], []>} : vector<9x32xf32>, vector<32x264xf32>, vector<9x264xf32> -> vector<9x264xf32>
    %c0_471 = arith.constant 0 : index
    %c0_472 = arith.constant 0 : index
    %624 = vector.load %arg31[%c0_471, %c0_472] : memref<9x264xf32, #tpu.memory_space<vmem>>, vector<9x264xf32>
    tpu.vector_store %arg31[%c0_471, %c0_472], %623 {strides = array<i32>} : memref<9x264xf32, #tpu.memory_space<vmem>>, vector<9x264xf32>,
    %cst_473 = arith.constant 0.000000e+00 : f32
    %625 = vector.broadcast %cst_473 : f32 to vector<1x256xf32>
    %c0_474 = arith.constant 0 : index
    %c8_475 = arith.constant 8 : index
    %626 = vector.load %arg31[%c0_474, %c8_475] : memref<9x264xf32, #tpu.memory_space<vmem>>, vector<1x256xf32>
    %627 = arith.addf %625, %626 : vector<1x256xf32>
    %c1_476 = arith.constant 1 : index
    %c7_477 = arith.constant 7 : index
    %628 = vector.load %arg31[%c1_476, %c7_477] : memref<9x264xf32, #tpu.memory_space<vmem>>, vector<1x256xf32>
    %629 = arith.addf %627, %628 : vector<1x256xf32>
    %c2_478 = arith.constant 2 : index
    %c6_479 = arith.constant 6 : index
    %630 = vector.load %arg31[%c2_478, %c6_479] : memref<9x264xf32, #tpu.memory_space<vmem>>, vector<1x256xf32>
    %631 = arith.addf %629, %630 : vector<1x256xf32>
    %c3_480 = arith.constant 3 : index
    %c5_481 = arith.constant 5 : index
    %632 = vector.load %arg31[%c3_480, %c5_481] : memref<9x264xf32, #tpu.memory_space<vmem>>, vector<1x256xf32>
    %633 = arith.addf %631, %632 : vector<1x256xf32>
    %c4_482 = arith.constant 4 : index
    %c4_483 = arith.constant 4 : index
    %634 = vector.load %arg31[%c4_482, %c4_483] : memref<9x264xf32, #tpu.memory_space<vmem>>, vector<1x256xf32>
    %635 = arith.addf %633, %634 : vector<1x256xf32>
    %c5_484 = arith.constant 5 : index
    %c3_485 = arith.constant 3 : index
    %636 = vector.load %arg31[%c5_484, %c3_485] : memref<9x264xf32, #tpu.memory_space<vmem>>, vector<1x256xf32>
    %637 = arith.addf %635, %636 : vector<1x256xf32>
    %c6_486 = arith.constant 6 : index
    %c2_487 = arith.constant 2 : index
    %638 = vector.load %arg31[%c6_486, %c2_487] : memref<9x264xf32, #tpu.memory_space<vmem>>, vector<1x256xf32>
    %639 = arith.addf %637, %638 : vector<1x256xf32>
    %c7_488 = arith.constant 7 : index
    %c1_489 = arith.constant 1 : index
    %640 = vector.load %arg31[%c7_488, %c1_489] : memref<9x264xf32, #tpu.memory_space<vmem>>, vector<1x256xf32>
    %641 = arith.addf %639, %640 : vector<1x256xf32>
    %c8_490 = arith.constant 8 : index
    %c0_491 = arith.constant 0 : index
    %642 = vector.load %arg31[%c8_490, %c0_491] : memref<9x264xf32, #tpu.memory_space<vmem>>, vector<1x256xf32>
    %643 = arith.addf %641, %642 : vector<1x256xf32>
    %c1_492 = arith.constant 1 : index
    %c0_493 = arith.constant 0 : index
    %c0_494 = arith.constant 0 : index
    %644 = vector.load %arg25[%c1_492, %c0_493, %c0_494] : memref<2x1x256xf32, #tpu.memory_space<vmem>>, vector<1x1x256xf32>
    %645 = vector.shape_cast %644 : vector<1x1x256xf32> to vector<1x256xf32>
    %646 = vector.shape_cast %643 : vector<1x256xf32> to vector<1x1x256xf32>
    tpu.vector_store %arg25[%c1_492, %c0_493, %c0_494], %646 {strides = array<i32>} : memref<2x1x256xf32, #tpu.memory_space<vmem>>, vector<1x1x256xf32>,
    return
  }
  func.func @transform_0(%arg0: i32) -> (i32, i32, i32) {
    %c0_i32 = arith.constant 0 : i32
    %c0_i32_0 = arith.constant 0 : i32
    %c0_i32_1 = arith.constant 0 : i32
    return %arg0, %c0_i32, %c0_i32_0 : i32, i32, i32
  }
  func.func @transform_1(%arg0: i32) -> (i32, i32) {
    %c0_i32 = arith.constant 0 : i32
    %c0_i32_0 = arith.constant 0 : i32
    %c0_i32_1 = arith.constant 0 : i32
    return %c0_i32, %c0_i32_0 : i32, i32
  }
  func.func @transform_2(%arg0: i32) -> (i32, i32) {
    %c0_i32 = arith.constant 0 : i32
    %c0_i32_0 = arith.constant 0 : i32
    %c0_i32_1 = arith.constant 0 : i32
    return %c0_i32, %c0_i32_0 : i32, i32
  }
  func.func @transform_3(%arg0: i32) -> (i32, i32) {
    %c0_i32 = arith.constant 0 : i32
    %c0_i32_0 = arith.constant 0 : i32
    %c0_i32_1 = arith.constant 0 : i32
    return %c0_i32, %c0_i32_0 : i32, i32
  }
  func.func @transform_4(%arg0: i32) -> (i32, i32) {
    %c0_i32 = arith.constant 0 : i32
    %c0_i32_0 = arith.constant 0 : i32
    %c0_i32_1 = arith.constant 0 : i32
    return %c0_i32, %c0_i32_0 : i32, i32
  }
  func.func @transform_5(%arg0: i32) -> (i32, i32) {
    %c0_i32 = arith.constant 0 : i32
    %c0_i32_0 = arith.constant 0 : i32
    %c0_i32_1 = arith.constant 0 : i32
    return %c0_i32, %c0_i32_0 : i32, i32
  }
  func.func @transform_6(%arg0: i32) -> (i32, i32) {
    %c0_i32 = arith.constant 0 : i32
    %c0_i32_0 = arith.constant 0 : i32
    %c0_i32_1 = arith.constant 0 : i32
    return %c0_i32, %c0_i32_0 : i32, i32
  }
  func.func @transform_7(%arg0: i32) -> (i32, i32) {
    %c0_i32 = arith.constant 0 : i32
    %c0_i32_0 = arith.constant 0 : i32
    %c0_i32_1 = arith.constant 0 : i32
    return %c0_i32, %c0_i32_0 : i32, i32
  }
  func.func @transform_8(%arg0: i32) -> (i32, i32) {
    %c0_i32 = arith.constant 0 : i32
    %c0_i32_0 = arith.constant 0 : i32
    %c0_i32_1 = arith.constant 0 : i32
    return %c0_i32, %c0_i32_0 : i32, i32
  }
  func.func @transform_9(%arg0: i32) -> (i32, i32) {
    %c0_i32 = arith.constant 0 : i32
    %c0_i32_0 = arith.constant 0 : i32
    %c0_i32_1 = arith.constant 0 : i32
    return %c0_i32, %c0_i32_0 : i32, i32
  }
  func.func @transform_10(%arg0: i32) -> (i32, i32) {
    %c0_i32 = arith.constant 0 : i32
    %c0_i32_0 = arith.constant 0 : i32
    %c0_i32_1 = arith.constant 0 : i32
    return %c0_i32, %c0_i32_0 : i32, i32
  }
  func.func @transform_11(%arg0: i32) -> (i32, i32) {
    %c0_i32 = arith.constant 0 : i32
    %c0_i32_0 = arith.constant 0 : i32
    %c0_i32_1 = arith.constant 0 : i32
    return %c0_i32, %c0_i32_0 : i32, i32
  }
  func.func @transform_12(%arg0: i32) -> (i32, i32) {
    %c0_i32 = arith.constant 0 : i32
    %c0_i32_0 = arith.constant 0 : i32
    %c0_i32_1 = arith.constant 0 : i32
    return %c0_i32, %c0_i32_0 : i32, i32
  }
  func.func @transform_13(%arg0: i32) -> (i32, i32) {
    %c0_i32 = arith.constant 0 : i32
    %c0_i32_0 = arith.constant 0 : i32
    %c0_i32_1 = arith.constant 0 : i32
    return %c0_i32, %c0_i32_0 : i32, i32
  }
  func.func @transform_14(%arg0: i32) -> (i32, i32) {
    %c0_i32 = arith.constant 0 : i32
    %c0_i32_0 = arith.constant 0 : i32
    %c0_i32_1 = arith.constant 0 : i32
    return %c0_i32, %c0_i32_0 : i32, i32
  }
  func.func @transform_15(%arg0: i32) -> (i32, i32) {
    %c0_i32 = arith.constant 0 : i32
    %c0_i32_0 = arith.constant 0 : i32
    %c0_i32_1 = arith.constant 0 : i32
    return %c0_i32, %c0_i32_0 : i32, i32
  }
  func.func @transform_16(%arg0: i32) -> (i32, i32) {
    %c0_i32 = arith.constant 0 : i32
    %c0_i32_0 = arith.constant 0 : i32
    %c0_i32_1 = arith.constant 0 : i32
    return %c0_i32, %c0_i32_0 : i32, i32
  }
  func.func @transform_17(%arg0: i32) -> (i32, i32) {
    %c0_i32 = arith.constant 0 : i32
    %c0_i32_0 = arith.constant 0 : i32
    %c0_i32_1 = arith.constant 0 : i32
    return %c0_i32, %c0_i32_0 : i32, i32
  }
  func.func @transform_18(%arg0: i32) -> (i32, i32) {
    %c0_i32 = arith.constant 0 : i32
    %c0_i32_0 = arith.constant 0 : i32
    %c0_i32_1 = arith.constant 0 : i32
    return %c0_i32, %c0_i32_0 : i32, i32
  }
  func.func @transform_19(%arg0: i32) -> (i32, i32) {
    %c0_i32 = arith.constant 0 : i32
    %c0_i32_0 = arith.constant 0 : i32
    %c0_i32_1 = arith.constant 0 : i32
    return %c0_i32, %c0_i32_0 : i32, i32
  }
  func.func @transform_20(%arg0: i32) -> (i32, i32) {
    %c0_i32 = arith.constant 0 : i32
    %c0_i32_0 = arith.constant 0 : i32
    %c0_i32_1 = arith.constant 0 : i32
    return %c0_i32, %c0_i32_0 : i32, i32
  }
  func.func @transform_21(%arg0: i32) -> (i32, i32) {
    %c0_i32 = arith.constant 0 : i32
    %c0_i32_0 = arith.constant 0 : i32
    %c0_i32_1 = arith.constant 0 : i32
    return %c0_i32, %c0_i32_0 : i32, i32
  }
  func.func @transform_22(%arg0: i32) -> (i32, i32) {
    %c0_i32 = arith.constant 0 : i32
    %c0_i32_0 = arith.constant 0 : i32
    %c0_i32_1 = arith.constant 0 : i32
    return %c0_i32, %c0_i32_0 : i32, i32
  }
  func.func @transform_23(%arg0: i32) -> (i32, i32) {
    %c0_i32 = arith.constant 0 : i32
    %c0_i32_0 = arith.constant 0 : i32
    %c0_i32_1 = arith.constant 0 : i32
    return %c0_i32, %c0_i32_0 : i32, i32
  }
  func.func @transform_24(%arg0: i32) -> (i32, i32, i32) {
    %c0_i32 = arith.constant 0 : i32
    %c0_i32_0 = arith.constant 0 : i32
    %c0_i32_1 = arith.constant 0 : i32
    return %arg0, %c0_i32, %c0_i32_0 : i32, i32, i32
  }
}

</mosaic_0001>

<llo_original>
// kernel: tpu_custom_call.1
$region0: #{tpu_custom_call.1}
  #allocation0 [shape = 'u32[]', space=smem, size = 0x4, offset = 0x4, fixed_abs, tag = 'smem constant byte address 0x4 - core index']
  #allocation1 [shape = 'u32[144,128]{1,0:T(1,128)}', space=vmem, size = 0x12000, scoped, tag = 'internal scratch']
  #allocation2 [shape = 'f32[1,264]{1,0:T(1,128)}', space=vmem, size = 0x600, scoped, tag = 'scratch operand']
  #allocation3 [shape = 'f32[9,256]{1,0:T(8,128)}', space=vmem, size = 0x4000, scoped, tag = 'scratch operand']
  #allocation4 [shape = 'f32[32,273]{1,0:T(8,128)}', space=vmem, size = 0xc000, scoped, tag = 'scratch operand']
  #allocation5 [shape = 'f32[32,260]{1,0:T(8,128)}', space=vmem, size = 0xc000, scoped, tag = 'scratch operand']
  #allocation6 [shape = 'f32[32,264]{1,0:T(8,128)}', space=vmem, size = 0xc000, scoped, tag = 'scratch operand']
  #allocation7 [shape = 'f32[9,264]{1,0:T(8,128)}', space=vmem, size = 0x6000, scoped, tag = 'scratch operand']
  %s0 = inlined_call_operand.vmem [shape: f32[4,1,256], index: 0, kind: input, shape index: {}]
  %s1 = inlined_call_operand.vmem [shape: f32[32,9], index: 1, kind: input, shape index: {}]
  %s2 = inlined_call_operand.vmem [shape: f32[9,32], index: 2, kind: input, shape index: {}]
  %s3 = inlined_call_operand.vmem [shape: f32[32,1], index: 3, kind: input, shape index: {}]
  %s4 = inlined_call_operand.vmem [shape: f32[18,256], index: 4, kind: input, shape index: {}]
  %s5 = inlined_call_operand.vmem [shape: f32[1,256], index: 5, kind: input, shape index: {}]
  %s6 = inlined_call_operand.vmem [shape: bf16[256,4], index: 6, kind: input, shape index: {}]
  %s7 = inlined_call_operand.vmem [shape: f32[1,4], index: 7, kind: input, shape index: {}]
  %s8 = inlined_call_operand.vmem [shape: bf16[4,4], index: 8, kind: input, shape index: {}]
  %s9 = inlined_call_operand.vmem [shape: f32[1,4], index: 9, kind: input, shape index: {}]
  %s10 = inlined_call_operand.vmem [shape: f32[4,256], index: 10, kind: input, shape index: {}]
  %s11 = inlined_call_operand.vmem [shape: bf16[32,32], index: 11, kind: input, shape index: {}]
  %s12 = inlined_call_operand.vmem [shape: f32[32,1], index: 12, kind: input, shape index: {}]
  %s13 = inlined_call_operand.vmem [shape: bf16[16,32], index: 13, kind: input, shape index: {}]
  %s14 = inlined_call_operand.vmem [shape: f32[16,1], index: 14, kind: input, shape index: {}]
  %s15 = inlined_call_operand.vmem [shape: bf16[16,16], index: 15, kind: input, shape index: {}]
  %s16 = inlined_call_operand.vmem [shape: f32[16,1], index: 16, kind: input, shape index: {}]
  %s17 = inlined_call_operand.vmem [shape: bf16[16,16], index: 17, kind: input, shape index: {}]
  %s18 = inlined_call_operand.vmem [shape: f32[16,1], index: 18, kind: input, shape index: {}]
  %s19 = inlined_call_operand.vmem [shape: bf16[32,16], index: 19, kind: input, shape index: {}]
  %s20 = inlined_call_operand.vmem [shape: f32[32,1], index: 20, kind: input, shape index: {}]
  %s21 = inlined_call_operand.vmem [shape: f32[32,1], index: 21, kind: input, shape index: {}]
  %s22 = inlined_call_operand.vmem [shape: f32[32,1], index: 22, kind: input, shape index: {}]
  %s23 = inlined_call_operand.vmem [shape: f32[32,25], index: 23, kind: input, shape index: {}]
  %s24 = inlined_call_operand.hbm [shape: f32[4,1,256], index: 24, kind: output, shape index: {}]
  %s25 = sld [smem:[#allocation0]]
  $region129: #{tpu_custom_call.1} parent=0
    _
  %s27 = ssub.s32 1, %s25
  %s28 = scalar_select 0, %s27, %s25
  $region1: #{tpu_custom_call.1} parent=0
    #allocation8 [shape = 'u8[4096]{0}', space=vmem, size = 0x1000, scoped, tag = 'output window, operand 0']
    #allocation9 [shape = 's32[2]{0}', space=sflag, size = 0x8, scoped, tag = 'scoped memory for tpu_custom_call.1']
    %29 = vsyncpa [#allocation9], 0
    %s30 = scalar_lea.sflag [#allocation9], 1
    %31 = vsyncpa %s30, 0
    loop: start=0, step=1, limit=4
    $region2: #{tpu_custom_call.1} parent=1 // loop_pre_header
      _
    $region3: #{tpu_custom_call.1} parent=1 // loop_header
      %s33 = sphi 0, %s37
      %p34 = scmp.ge.s32.totalorder %s33, 4
      %s43 = sphi 0, %s45
      %s46 = sphi 0, %s43
      %s47 = sphi 0, %s46
      %s63 = sphi 0, %s47
      %s67 = sphi 0, %s67
      %s69 = sphi 0, %s67
      %s70 = sphi 0, %s69
      %s84 = sphi 0, %s70
      %s88 = sphi 0, %s88
      %s90 = sphi 0, %s88
      %s91 = sphi 0, %s90
      %s105 = sphi 0, %s91
      %s109 = sphi 0, %s109
      %s111 = sphi 0, %s109
      %s112 = sphi 0, %s111
      %s126 = sphi 0, %s112
      %s130 = sphi 0, %s130
      %s132 = sphi 0, %s130
      %s133 = sphi 0, %s132
      %s147 = sphi 0, %s133
      %s151 = sphi 0, %s151
      %s153 = sphi 0, %s151
      %s154 = sphi 0, %s153
      %s168 = sphi 0, %s154
      %s172 = sphi 0, %s172
      %s174 = sphi 0, %s172
      %s175 = sphi 0, %s174
      %s189 = sphi 0, %s175
      %s193 = sphi 0, %s193
      %s195 = sphi 0, %s193
      %s196 = sphi 0, %s195
      %s210 = sphi 0, %s196
      %s214 = sphi 0, %s214
      %s216 = sphi 0, %s214
      %s217 = sphi 0, %s216
      %s231 = sphi 0, %s217
      %s235 = sphi 0, %s235
      %s237 = sphi 0, %s235
      %s238 = sphi 0, %s237
      %s252 = sphi 0, %s238
      %s256 = sphi 0, %s256
      %s258 = sphi 0, %s256
      %s259 = sphi 0, %s258
      %s273 = sphi 0, %s259
      %s277 = sphi 0, %s277
      %s279 = sphi 0, %s277
      %s280 = sphi 0, %s279
      %s294 = sphi 0, %s280
      %s298 = sphi 0, %s298
      %s300 = sphi 0, %s298
      %s301 = sphi 0, %s300
      %s315 = sphi 0, %s301
      %s319 = sphi 0, %s319
      %s321 = sphi 0, %s319
      %s322 = sphi 0, %s321
      %s336 = sphi 0, %s322
      %s340 = sphi 0, %s340
      %s342 = sphi 0, %s340
      %s343 = sphi 0, %s342
      %s357 = sphi 0, %s343
      %s361 = sphi 0, %s361
      %s363 = sphi 0, %s361
      %s364 = sphi 0, %s363
      %s378 = sphi 0, %s364
      %s382 = sphi 0, %s382
      %s384 = sphi 0, %s382
      %s385 = sphi 0, %s384
      %s399 = sphi 0, %s385
      %s403 = sphi 0, %s403
      %s405 = sphi 0, %s403
      %s406 = sphi 0, %s405
      %s420 = sphi 0, %s406
      %s424 = sphi 0, %s424
      %s426 = sphi 0, %s424
      %s427 = sphi 0, %s426
      %s441 = sphi 0, %s427
      %s445 = sphi 0, %s445
      %s447 = sphi 0, %s445
      %s448 = sphi 0, %s447
      %s462 = sphi 0, %s448
      %s466 = sphi 0, %s466
      %s468 = sphi 0, %s466
      %s469 = sphi 0, %s468
      %s483 = sphi 0, %s469
      %s487 = sphi 0, %s487
      %s489 = sphi 0, %s487
      %s490 = sphi 0, %s489
      %s504 = sphi 0, %s490
      %s508 = sphi 0, %s508
      %s510 = sphi 0, %s508
      %s511 = sphi 0, %s510
      %s525 = sphi 0, %s511
      %s529 = sphi 0, %s529
      %s531 = sphi 0, %s529
      %s532 = sphi 0, %s531
      %s546 = sphi 0, %s532
      %s552 = sphi 0, %s554
      %s555 = sphi 0, %s552
      %s556 = sphi 0, %s555
      %s572 = sphi 0, %s556
    $region4: #{tpu_custom_call.1} parent=1 // loop_header_branch
      %36 = sbr.rel (%p34) target = $region8
    $region5: #{tpu_custom_call.1} parent=1 // loop_body
      %s38 = ssub.s32 %s33, 1
      %s39 = ssub.s32 %s33, 2
      %s40 = sadd.s32 %s33, 1
      %s41 = ssub.s32 %s33, %s40
      %p42 = scmp.eq.s32.totalorder %s41, 0
      %s44 = sadd.s32 %s43, 1
      %s45 = scalar_select %p42, %s43, %s44
      %p48 = pneg %p42
      %p49 = scmp.eq.s32.totalorder %s33, 1
      %p50 = por %p48, %p49
      %p51 = scmp.ne.s32.totalorder %s43, %s46
      %p52 = scmp.eq.s32.totalorder %s33, 0
      %p53 = por %p51, %p52
      %p54 = scmp.ne.s32.totalorder %s43, %s46
      %p55 = scmp.eq.s32.totalorder %s38, 1
      %p56 = por %p54, %p55
      %p57 = scmp.ne.s32.totalorder %s46, %s47
      %p58 = scmp.eq.s32.totalorder %s38, 0
      %p59 = por %p57, %p58
      %p60 = scmp.ne.s32.totalorder %s46, %s47
      %p61 = scmp.eq.s32.totalorder %s39, 1
      %p62 = por %p60, %p61
      %p64 = scmp.ne.s32.totalorder %s47, %s63
      %p65 = scmp.eq.s32.totalorder %s39, 0
      %p66 = por %p64, %p65
      %s68 = sadd.s32 %s67, 1
      %p71 = scmp.eq.s32.totalorder %s33, 1
      %p72 = scmp.ne.s32.totalorder %s67, %s69
      %p73 = scmp.eq.s32.totalorder %s33, 0
      %p74 = por %p72, %p73
      %p75 = scmp.ne.s32.totalorder %s67, %s69
      %p76 = scmp.eq.s32.totalorder %s38, 1
      %p77 = por %p75, %p76
      %p78 = scmp.ne.s32.totalorder %s69, %s70
      %p79 = scmp.eq.s32.totalorder %s38, 0
      %p80 = por %p78, %p79
      %p81 = scmp.ne.s32.totalorder %s69, %s70
      %p82 = scmp.eq.s32.totalorder %s39, 1
      %p83 = por %p81, %p82
      %p85 = scmp.ne.s32.totalorder %s70, %s84
      %p86 = scmp.eq.s32.totalorder %s39, 0
      %p87 = por %p85, %p86
      %s89 = sadd.s32 %s88, 1
      %p92 = scmp.eq.s32.totalorder %s33, 1
      %p93 = scmp.ne.s32.totalorder %s88, %s90
      %p94 = scmp.eq.s32.totalorder %s33, 0
      %p95 = por %p93, %p94
      %p96 = scmp.ne.s32.totalorder %s88, %s90
      %p97 = scmp.eq.s32.totalorder %s38, 1
      %p98 = por %p96, %p97
      %p99 = scmp.ne.s32.totalorder %s90, %s91
      %p100 = scmp.eq.s32.totalorder %s38, 0
      %p101 = por %p99, %p100
      %p102 = scmp.ne.s32.totalorder %s90, %s91
      %p103 = scmp.eq.s32.totalorder %s39, 1
      %p104 = por %p102, %p103
      %p106 = scmp.ne.s32.totalorder %s91, %s105
      %p107 = scmp.eq.s32.totalorder %s39, 0
      %p108 = por %p106, %p107
      %s110 = sadd.s32 %s109, 1
      %p113 = scmp.eq.s32.totalorder %s33, 1
      %p114 = scmp.ne.s32.totalorder %s109, %s111
      %p115 = scmp.eq.s32.totalorder %s33, 0
      %p116 = por %p114, %p115
      %p117 = scmp.ne.s32.totalorder %s109, %s111
      %p118 = scmp.eq.s32.totalorder %s38, 1
      %p119 = por %p117, %p118
      %p120 = scmp.ne.s32.totalorder %s111, %s112
      %p121 = scmp.eq.s32.totalorder %s38, 0
      %p122 = por %p120, %p121
      %p123 = scmp.ne.s32.totalorder %s111, %s112
      %p124 = scmp.eq.s32.totalorder %s39, 1
      %p125 = por %p123, %p124
      %p127 = scmp.ne.s32.totalorder %s112, %s126
      %p128 = scmp.eq.s32.totalorder %s39, 0
      %p129 = por %p127, %p128
      %s131 = sadd.s32 %s130, 1
      %p134 = scmp.eq.s32.totalorder %s33, 1
      %p135 = scmp.ne.s32.totalorder %s130, %s132
      %p136 = scmp.eq.s32.totalorder %s33, 0
      %p137 = por %p135, %p136
      %p138 = scmp.ne.s32.totalorder %s130, %s132
      %p139 = scmp.eq.s32.totalorder %s38, 1
      %p140 = por %p138, %p139
      %p141 = scmp.ne.s32.totalorder %s132, %s133
      %p142 = scmp.eq.s32.totalorder %s38, 0
      %p143 = por %p141, %p142
      %p144 = scmp.ne.s32.totalorder %s132, %s133
      %p145 = scmp.eq.s32.totalorder %s39, 1
      %p146 = por %p144, %p145
      %p148 = scmp.ne.s32.totalorder %s133, %s147
      %p149 = scmp.eq.s32.totalorder %s39, 0
      %p150 = por %p148, %p149
      %s152 = sadd.s32 %s151, 1
      %p155 = scmp.eq.s32.totalorder %s33, 1
      %p156 = scmp.ne.s32.totalorder %s151, %s153
      %p157 = scmp.eq.s32.totalorder %s33, 0
      %p158 = por %p156, %p157
      %p159 = scmp.ne.s32.totalorder %s151, %s153
      %p160 = scmp.eq.s32.totalorder %s38, 1
      %p161 = por %p159, %p160
      %p162 = scmp.ne.s32.totalorder %s153, %s154
      %p163 = scmp.eq.s32.totalorder %s38, 0
      %p164 = por %p162, %p163
      %p165 = scmp.ne.s32.totalorder %s153, %s154
      %p166 = scmp.eq.s32.totalorder %s39, 1
      %p167 = por %p165, %p166
      %p169 = scmp.ne.s32.totalorder %s154, %s168
      %p170 = scmp.eq.s32.totalorder %s39, 0
      %p171 = por %p169, %p170
      %s173 = sadd.s32 %s172, 1
      %p176 = scmp.eq.s32.totalorder %s33, 1
      %p177 = scmp.ne.s32.totalorder %s172, %s174
      %p178 = scmp.eq.s32.totalorder %s33, 0
      %p179 = por %p177, %p178
      %p180 = scmp.ne.s32.totalorder %s172, %s174
      %p181 = scmp.eq.s32.totalorder %s38, 1
      %p182 = por %p180, %p181
      %p183 = scmp.ne.s32.totalorder %s174, %s175
      %p184 = scmp.eq.s32.totalorder %s38, 0
      %p185 = por %p183, %p184
      %p186 = scmp.ne.s32.totalorder %s174, %s175
      %p187 = scmp.eq.s32.totalorder %s39, 1
      %p188 = por %p186, %p187
      %p190 = scmp.ne.s32.totalorder %s175, %s189
      %p191 = scmp.eq.s32.totalorder %s39, 0
      %p192 = por %p190, %p191
      %s194 = sadd.s32 %s193, 1
      %p197 = scmp.eq.s32.totalorder %s33, 1
      %p198 = scmp.ne.s32.totalorder %s193, %s195
      %p199 = scmp.eq.s32.totalorder %s33, 0
      %p200 = por %p198, %p199
      %p201 = scmp.ne.s32.totalorder %s193, %s195
      %p202 = scmp.eq.s32.totalorder %s38, 1
      %p203 = por %p201, %p202
      %p204 = scmp.ne.s32.totalorder %s195, %s196
      %p205 = scmp.eq.s32.totalorder %s38, 0
      %p206 = por %p204, %p205
      %p207 = scmp.ne.s32.totalorder %s195, %s196
      %p208 = scmp.eq.s32.totalorder %s39, 1
      %p209 = por %p207, %p208
      %p211 = scmp.ne.s32.totalorder %s196, %s210
      %p212 = scmp.eq.s32.totalorder %s39, 0
      %p213 = por %p211, %p212
      %s215 = sadd.s32 %s214, 1
      %p218 = scmp.eq.s32.totalorder %s33, 1
      %p219 = scmp.ne.s32.totalorder %s214, %s216
      %p220 = scmp.eq.s32.totalorder %s33, 0
      %p221 = por %p219, %p220
      %p222 = scmp.ne.s32.totalorder %s214, %s216
      %p223 = scmp.eq.s32.totalorder %s38, 1
      %p224 = por %p222, %p223
      %p225 = scmp.ne.s32.totalorder %s216, %s217
      %p226 = scmp.eq.s32.totalorder %s38, 0
      %p227 = por %p225, %p226
      %p228 = scmp.ne.s32.totalorder %s216, %s217
      %p229 = scmp.eq.s32.totalorder %s39, 1
      %p230 = por %p228, %p229
      %p232 = scmp.ne.s32.totalorder %s217, %s231
      %p233 = scmp.eq.s32.totalorder %s39, 0
      %p234 = por %p232, %p233
      %s236 = sadd.s32 %s235, 1
      %p239 = scmp.eq.s32.totalorder %s33, 1
      %p240 = scmp.ne.s32.totalorder %s235, %s237
      %p241 = scmp.eq.s32.totalorder %s33, 0
      %p242 = por %p240, %p241
      %p243 = scmp.ne.s32.totalorder %s235, %s237
      %p244 = scmp.eq.s32.totalorder %s38, 1
      %p245 = por %p243, %p244
      %p246 = scmp.ne.s32.totalorder %s237, %s238
      %p247 = scmp.eq.s32.totalorder %s38, 0
      %p248 = por %p246, %p247
      %p249 = scmp.ne.s32.totalorder %s237, %s238
      %p250 = scmp.eq.s32.totalorder %s39, 1
      %p251 = por %p249, %p250
      %p253 = scmp.ne.s32.totalorder %s238, %s252
      %p254 = scmp.eq.s32.totalorder %s39, 0
      %p255 = por %p253, %p254
      %s257 = sadd.s32 %s256, 1
      %p260 = scmp.eq.s32.totalorder %s33, 1
      %p261 = scmp.ne.s32.totalorder %s256, %s258
      %p262 = scmp.eq.s32.totalorder %s33, 0
      %p263 = por %p261, %p262
      %p264 = scmp.ne.s32.totalorder %s256, %s258
      %p265 = scmp.eq.s32.totalorder %s38, 1
      %p266 = por %p264, %p265
      %p267 = scmp.ne.s32.totalorder %s258, %s259
      %p268 = scmp.eq.s32.totalorder %s38, 0
      %p269 = por %p267, %p268
      %p270 = scmp.ne.s32.totalorder %s258, %s259
      %p271 = scmp.eq.s32.totalorder %s39, 1
      %p272 = por %p270, %p271
      %p274 = scmp.ne.s32.totalorder %s259, %s273
      %p275 = scmp.eq.s32.totalorder %s39, 0
      %p276 = por %p274, %p275
      %s278 = sadd.s32 %s277, 1
      %p281 = scmp.eq.s32.totalorder %s33, 1
      %p282 = scmp.ne.s32.totalorder %s277, %s279
      %p283 = scmp.eq.s32.totalorder %s33, 0
      %p284 = por %p282, %p283
      %p285 = scmp.ne.s32.totalorder %s277, %s279
      %p286 = scmp.eq.s32.totalorder %s38, 1
      %p287 = por %p285, %p286
      %p288 = scmp.ne.s32.totalorder %s279, %s280
      %p289 = scmp.eq.s32.totalorder %s38, 0
      %p290 = por %p288, %p289
      %p291 = scmp.ne.s32.totalorder %s279, %s280
      %p292 = scmp.eq.s32.totalorder %s39, 1
      %p293 = por %p291, %p292
      %p295 = scmp.ne.s32.totalorder %s280, %s294
      %p296 = scmp.eq.s32.totalorder %s39, 0
      %p297 = por %p295, %p296
      %s299 = sadd.s32 %s298, 1
      %p302 = scmp.eq.s32.totalorder %s33, 1
      %p303 = scmp.ne.s32.totalorder %s298, %s300
      %p304 = scmp.eq.s32.totalorder %s33, 0
      %p305 = por %p303, %p304
      %p306 = scmp.ne.s32.totalorder %s298, %s300
      %p307 = scmp.eq.s32.totalorder %s38, 1
      %p308 = por %p306, %p307
      %p309 = scmp.ne.s32.totalorder %s300, %s301
      %p310 = scmp.eq.s32.totalorder %s38, 0
      %p311 = por %p309, %p310
      %p312 = scmp.ne.s32.totalorder %s300, %s301
      %p313 = scmp.eq.s32.totalorder %s39, 1
      %p314 = por %p312, %p313
      %p316 = scmp.ne.s32.totalorder %s301, %s315
      %p317 = scmp.eq.s32.totalorder %s39, 0
      %p318 = por %p316, %p317
      %s320 = sadd.s32 %s319, 1
      %p323 = scmp.eq.s32.totalorder %s33, 1
      %p324 = scmp.ne.s32.totalorder %s319, %s321
      %p325 = scmp.eq.s32.totalorder %s33, 0
      %p326 = por %p324, %p325
      %p327 = scmp.ne.s32.totalorder %s319, %s321
      %p328 = scmp.eq.s32.totalorder %s38, 1
      %p329 = por %p327, %p328
      %p330 = scmp.ne.s32.totalorder %s321, %s322
      %p331 = scmp.eq.s32.totalorder %s38, 0
      %p332 = por %p330, %p331
      %p333 = scmp.ne.s32.totalorder %s321, %s322
      %p334 = scmp.eq.s32.totalorder %s39, 1
      %p335 = por %p333, %p334
      %p337 = scmp.ne.s32.totalorder %s322, %s336
      %p338 = scmp.eq.s32.totalorder %s39, 0
      %p339 = por %p337, %p338
      %s341 = sadd.s32 %s340, 1
      %p344 = scmp.eq.s32.totalorder %s33, 1
      %p345 = scmp.ne.s32.totalorder %s340, %s342
      %p346 = scmp.eq.s32.totalorder %s33, 0
      %p347 = por %p345, %p346
      %p348 = scmp.ne.s32.totalorder %s340, %s342
      %p349 = scmp.eq.s32.totalorder %s38, 1
      %p350 = por %p348, %p349
      %p351 = scmp.ne.s32.totalorder %s342, %s343
      %p352 = scmp.eq.s32.totalorder %s38, 0
      %p353 = por %p351, %p352
      %p354 = scmp.ne.s32.totalorder %s342, %s343
      %p355 = scmp.eq.s32.totalorder %s39, 1
      %p356 = por %p354, %p355
      %p358 = scmp.ne.s32.totalorder %s343, %s357
      %p359 = scmp.eq.s32.totalorder %s39, 0
      %p360 = por %p358, %p359
      %s362 = sadd.s32 %s361, 1
      %p365 = scmp.eq.s32.totalorder %s33, 1
      %p366 = scmp.ne.s32.totalorder %s361, %s363
      %p367 = scmp.eq.s32.totalorder %s33, 0
      %p368 = por %p366, %p367
      %p369 = scmp.ne.s32.totalorder %s361, %s363
      %p370 = scmp.eq.s32.totalorder %s38, 1
      %p371 = por %p369, %p370
      %p372 = scmp.ne.s32.totalorder %s363, %s364
      %p373 = scmp.eq.s32.totalorder %s38, 0
      %p374 = por %p372, %p373
      %p375 = scmp.ne.s32.totalorder %s363, %s364
      %p376 = scmp.eq.s32.totalorder %s39, 1
      %p377 = por %p375, %p376
      %p379 = scmp.ne.s32.totalorder %s364, %s378
      %p380 = scmp.eq.s32.totalorder %s39, 0
      %p381 = por %p379, %p380
      %s383 = sadd.s32 %s382, 1
      %p386 = scmp.eq.s32.totalorder %s33, 1
      %p387 = scmp.ne.s32.totalorder %s382, %s384
      %p388 = scmp.eq.s32.totalorder %s33, 0
      %p389 = por %p387, %p388
      %p390 = scmp.ne.s32.totalorder %s382, %s384
      %p391 = scmp.eq.s32.totalorder %s38, 1
      %p392 = por %p390, %p391
      %p393 = scmp.ne.s32.totalorder %s384, %s385
      %p394 = scmp.eq.s32.totalorder %s38, 0
      %p395 = por %p393, %p394
      %p396 = scmp.ne.s32.totalorder %s384, %s385
      %p397 = scmp.eq.s32.totalorder %s39, 1
      %p398 = por %p396, %p397
      %p400 = scmp.ne.s32.totalorder %s385, %s399
      %p401 = scmp.eq.s32.totalorder %s39, 0
      %p402 = por %p400, %p401
      %s404 = sadd.s32 %s403, 1
      %p407 = scmp.eq.s32.totalorder %s33, 1
      %p408 = scmp.ne.s32.totalorder %s403, %s405
      %p409 = scmp.eq.s32.totalorder %s33, 0
      %p410 = por %p408, %p409
      %p411 = scmp.ne.s32.totalorder %s403, %s405
      %p412 = scmp.eq.s32.totalorder %s38, 1
      %p413 = por %p411, %p412
      %p414 = scmp.ne.s32.totalorder %s405, %s406
      %p415 = scmp.eq.s32.totalorder %s38, 0
      %p416 = por %p414, %p415
      %p417 = scmp.ne.s32.totalorder %s405, %s406
      %p418 = scmp.eq.s32.totalorder %s39, 1
      %p419 = por %p417, %p418
      %p421 = scmp.ne.s32.totalorder %s406, %s420
      %p422 = scmp.eq.s32.totalorder %s39, 0
      %p423 = por %p421, %p422
      %s425 = sadd.s32 %s424, 1
      %p428 = scmp.eq.s32.totalorder %s33, 1
      %p429 = scmp.ne.s32.totalorder %s424, %s426
      %p430 = scmp.eq.s32.totalorder %s33, 0
      %p431 = por %p429, %p430
      %p432 = scmp.ne.s32.totalorder %s424, %s426
      %p433 = scmp.eq.s32.totalorder %s38, 1
      %p434 = por %p432, %p433
      %p435 = scmp.ne.s32.totalorder %s426, %s427
      %p436 = scmp.eq.s32.totalorder %s38, 0
      %p437 = por %p435, %p436
      %p438 = scmp.ne.s32.totalorder %s426, %s427
      %p439 = scmp.eq.s32.totalorder %s39, 1
      %p440 = por %p438, %p439
      %p442 = scmp.ne.s32.totalorder %s427, %s441
      %p443 = scmp.eq.s32.totalorder %s39, 0
      %p444 = por %p442, %p443
      %s446 = sadd.s32 %s445, 1
      %p449 = scmp.eq.s32.totalorder %s33, 1
      %p450 = scmp.ne.s32.totalorder %s445, %s447
      %p451 = scmp.eq.s32.totalorder %s33, 0
      %p452 = por %p450, %p451
      %p453 = scmp.ne.s32.totalorder %s445, %s447
      %p454 = scmp.eq.s32.totalorder %s38, 1
      %p455 = por %p453, %p454
      %p456 = scmp.ne.s32.totalorder %s447, %s448
      %p457 = scmp.eq.s32.totalorder %s38, 0
      %p458 = por %p456, %p457
      %p459 = scmp.ne.s32.totalorder %s447, %s448
      %p460 = scmp.eq.s32.totalorder %s39, 1
      %p461 = por %p459, %p460
      %p463 = scmp.ne.s32.totalorder %s448, %s462
      %p464 = scmp.eq.s32.totalorder %s39, 0
      %p465 = por %p463, %p464
      %s467 = sadd.s32 %s466, 1
      %p470 = scmp.eq.s32.totalorder %s33, 1
      %p471 = scmp.ne.s32.totalorder %s466, %s468
      %p472 = scmp.eq.s32.totalorder %s33, 0
      %p473 = por %p471, %p472
      %p474 = scmp.ne.s32.totalorder %s466, %s468
      %p475 = scmp.eq.s32.totalorder %s38, 1
      %p476 = por %p474, %p475
      %p477 = scmp.ne.s32.totalorder %s468, %s469
      %p478 = scmp.eq.s32.totalorder %s38, 0
      %p479 = por %p477, %p478
      %p480 = scmp.ne.s32.totalorder %s468, %s469
      %p481 = scmp.eq.s32.totalorder %s39, 1
      %p482 = por %p480, %p481
      %p484 = scmp.ne.s32.totalorder %s469, %s483
      %p485 = scmp.eq.s32.totalorder %s39, 0
      %p486 = por %p484, %p485
      %s488 = sadd.s32 %s487, 1
      %p491 = scmp.eq.s32.totalorder %s33, 1
      %p492 = scmp.ne.s32.totalorder %s487, %s489
      %p493 = scmp.eq.s32.totalorder %s33, 0
      %p494 = por %p492, %p493
      %p495 = scmp.ne.s32.totalorder %s487, %s489
      %p496 = scmp.eq.s32.totalorder %s38, 1
      %p497 = por %p495, %p496
      %p498 = scmp.ne.s32.totalorder %s489, %s490
      %p499 = scmp.eq.s32.totalorder %s38, 0
      %p500 = por %p498, %p499
      %p501 = scmp.ne.s32.totalorder %s489, %s490
      %p502 = scmp.eq.s32.totalorder %s39, 1
      %p503 = por %p501, %p502
      %p505 = scmp.ne.s32.totalorder %s490, %s504
      %p506 = scmp.eq.s32.totalorder %s39, 0
      %p507 = por %p505, %p506
      %s509 = sadd.s32 %s508, 1
      %p512 = scmp.eq.s32.totalorder %s33, 1
      %p513 = scmp.ne.s32.totalorder %s508, %s510
      %p514 = scmp.eq.s32.totalorder %s33, 0
      %p515 = por %p513, %p514
      %p516 = scmp.ne.s32.totalorder %s508, %s510
      %p517 = scmp.eq.s32.totalorder %s38, 1
      %p518 = por %p516, %p517
      %p519 = scmp.ne.s32.totalorder %s510, %s511
      %p520 = scmp.eq.s32.totalorder %s38, 0
      %p521 = por %p519, %p520
      %p522 = scmp.ne.s32.totalorder %s510, %s511
      %p523 = scmp.eq.s32.totalorder %s39, 1
      %p524 = por %p522, %p523
      %p526 = scmp.ne.s32.totalorder %s511, %s525
      %p527 = scmp.eq.s32.totalorder %s39, 0
      %p528 = por %p526, %p527
      %s530 = sadd.s32 %s529, 1
      %p533 = scmp.eq.s32.totalorder %s33, 1
      %p534 = scmp.ne.s32.totalorder %s529, %s531
      %p535 = scmp.eq.s32.totalorder %s33, 0
      %p536 = por %p534, %p535
      %p537 = scmp.ne.s32.totalorder %s529, %s531
      %p538 = scmp.eq.s32.totalorder %s38, 1
      %p539 = por %p537, %p538
      %p540 = scmp.ne.s32.totalorder %s531, %s532
      %p541 = scmp.eq.s32.totalorder %s38, 0
      %p542 = por %p540, %p541
      %p543 = scmp.ne.s32.totalorder %s531, %s532
      %p544 = scmp.eq.s32.totalorder %s39, 1
      %p545 = por %p543, %p544
      %p547 = scmp.ne.s32.totalorder %s532, %s546
      %p548 = scmp.eq.s32.totalorder %s39, 0
      %p549 = por %p547, %p548
      %s550 = ssub.s32 %s33, %s40
      %p551 = scmp.eq.s32.totalorder %s550, 0
      %s553 = sadd.s32 %s552, 1
      %s554 = scalar_select %p551, %s552, %s553
      %p557 = pneg %p551
      %p558 = scmp.eq.s32.totalorder %s33, 1
      %p559 = por %p557, %p558
      %p560 = scmp.ne.s32.totalorder %s552, %s555
      %p561 = scmp.eq.s32.totalorder %s33, 0
      %p562 = por %p560, %p561
      %p563 = scmp.ne.s32.totalorder %s552, %s555
      %p564 = scmp.eq.s32.totalorder %s38, 1
      %p565 = por %p563, %p564
      %p566 = scmp.ne.s32.totalorder %s555, %s556
      %p567 = scmp.eq.s32.totalorder %s38, 0
      %p568 = por %p566, %p567
      %p569 = scmp.ne.s32.totalorder %s555, %s556
      %p570 = scmp.eq.s32.totalorder %s39, 1
      %p571 = por %p569, %p570
      %p573 = scmp.ne.s32.totalorder %s556, %s572
      %p574 = scmp.eq.s32.totalorder %s39, 0
      %p575 = por %p573, %p574
      %p576 = scmp.le.s32.totalorder 1, %s33
      %p577 = scmp.lt.s32.totalorder %s33, 3
      %p578 = pnand %p576, %p577
      %p579 = pneg %p578
      // Predicated region
      $region9: #{tpu_custom_call.1} parent=5 // pred_check
        _
      $region10: #{tpu_custom_call.1} parent=5 // pred_check_branch
        %581 = sbr.rel (%p578) target = $region12
      $region11: #{tpu_custom_call.1} parent=5 // pred_region
        %s582 = ssub.s32 %s33, 1
        // Predicated region
        $region13: #{tpu_custom_call.1} parent=11 // pred_check
          %p583 = pneg %p80
        $region14: #{tpu_custom_call.1} parent=11 // pred_check_branch
          %585 = sbr.rel (%p583) target = $region16
        $region15: #{tpu_custom_call.1} parent=11 // pred_region
          _
        $region16: #{tpu_custom_call.1} parent=11 // pred_fallthru
          _
        // Predicated region
        $region17: #{tpu_custom_call.1} parent=11 // pred_check
          %p586 = pneg %p101
        $region18: #{tpu_custom_call.1} parent=11 // pred_check_branch
          %588 = sbr.rel (%p586) target = $region20
        $region19: #{tpu_custom_call.1} parent=11 // pred_region
          _
        $region20: #{tpu_custom_call.1} parent=11 // pred_fallthru
          _
        // Predicated region
        $region21: #{tpu_custom_call.1} parent=11 // pred_check
          %p589 = pneg %p122
        $region22: #{tpu_custom_call.1} parent=11 // pred_check_branch
          %591 = sbr.rel (%p589) target = $region24
        $region23: #{tpu_custom_call.1} parent=11 // pred_region
          _
        $region24: #{tpu_custom_call.1} parent=11 // pred_fallthru
          _
        // Predicated region
        $region25: #{tpu_custom_call.1} parent=11 // pred_check
          %p592 = pneg %p143
        $region26: #{tpu_custom_call.1} parent=11 // pred_check_branch
          %594 = sbr.rel (%p592) target = $region28
        $region27: #{tpu_custom_call.1} parent=11 // pred_region
          _
        $region28: #{tpu_custom_call.1} parent=11 // pred_fallthru
          _
        // Predicated region
        $region29: #{tpu_custom_call.1} parent=11 // pred_check
          %p595 = pneg %p164
        $region30: #{tpu_custom_call.1} parent=11 // pred_check_branch
          %597 = sbr.rel (%p595) target = $region32
        $region31: #{tpu_custom_call.1} parent=11 // pred_region
          _
        $region32: #{tpu_custom_call.1} parent=11 // pred_fallthru
          _
        // Predicated region
        $region33: #{tpu_custom_call.1} parent=11 // pred_check
          %p598 = pneg %p185
        $region34: #{tpu_custom_call.1} parent=11 // pred_check_branch
          %600 = sbr.rel (%p598) target = $region36
        $region35: #{tpu_custom_call.1} parent=11 // pred_region
          _
        $region36: #{tpu_custom_call.1} parent=11 // pred_fallthru
          _
        // Predicated region
        $region37: #{tpu_custom_call.1} parent=11 // pred_check
          %p601 = pneg %p206
        $region38: #{tpu_custom_call.1} parent=11 // pred_check_branch
          %603 = sbr.rel (%p601) target = $region40
        $region39: #{tpu_custom_call.1} parent=11 // pred_region
          _
        $region40: #{tpu_custom_call.1} parent=11 // pred_fallthru
          _
        // Predicated region
        $region41: #{tpu_custom_call.1} parent=11 // pred_check
          %p604 = pneg %p227
        $region42: #{tpu_custom_call.1} parent=11 // pred_check_branch
          %606 = sbr.rel (%p604) target = $region44
        $region43: #{tpu_custom_call.1} parent=11 // pred_region
          _
        $region44: #{tpu_custom_call.1} parent=11 // pred_fallthru
          _
        // Predicated region
        $region45: #{tpu_custom_call.1} parent=11 // pred_check
          %p607 = pneg %p248
        $region46: #{tpu_custom_call.1} parent=11 // pred_check_branch
          %609 = sbr.rel (%p607) target = $region48
        $region47: #{tpu_custom_call.1} parent=11 // pred_region
          _
        $region48: #{tpu_custom_call.1} parent=11 // pred_fallthru
          _
        // Predicated region
        $region49: #{tpu_custom_call.1} parent=11 // pred_check
          %p610 = pneg %p269
        $region50: #{tpu_custom_call.1} parent=11 // pred_check_branch
          %612 = sbr.rel (%p610) target = $region52
        $region51: #{tpu_custom_call.1} parent=11 // pred_region
          _
        $region52: #{tpu_custom_call.1} parent=11 // pred_fallthru
          _
        // Predicated region
        $region53: #{tpu_custom_call.1} parent=11 // pred_check
          %p613 = pneg %p290
        $region54: #{tpu_custom_call.1} parent=11 // pred_check_branch
          %615 = sbr.rel (%p613) target = $region56
        $region55: #{tpu_custom_call.1} parent=11 // pred_region
          _
        $region56: #{tpu_custom_call.1} parent=11 // pred_fallthru
          _
        // Predicated region
        $region57: #{tpu_custom_call.1} parent=11 // pred_check
          %p616 = pneg %p311
        $region58: #{tpu_custom_call.1} parent=11 // pred_check_branch
          %618 = sbr.rel (%p616) target = $region60
        $region59: #{tpu_custom_call.1} parent=11 // pred_region
          _
        $region60: #{tpu_custom_call.1} parent=11 // pred_fallthru
          _
        // Predicated region
        $region61: #{tpu_custom_call.1} parent=11 // pred_check
          %p619 = pneg %p332
        $region62: #{tpu_custom_call.1} parent=11 // pred_check_branch
          %621 = sbr.rel (%p619) target = $region64
        $region63: #{tpu_custom_call.1} parent=11 // pred_region
          _
        $region64: #{tpu_custom_call.1} parent=11 // pred_fallthru
          _
        // Predicated region
        $region65: #{tpu_custom_call.1} parent=11 // pred_check
          %p622 = pneg %p353
        $region66: #{tpu_custom_call.1} parent=11 // pred_check_branch
          %624 = sbr.rel (%p622) target = $region68
        $region67: #{tpu_custom_call.1} parent=11 // pred_region
          _
        $region68: #{tpu_custom_call.1} parent=11 // pred_fallthru
          _
        // Predicated region
        $region69: #{tpu_custom_call.1} parent=11 // pred_check
          %p625 = pneg %p374
        $region70: #{tpu_custom_call.1} parent=11 // pred_check_branch
          %627 = sbr.rel (%p625) target = $region72
        $region71: #{tpu_custom_call.1} parent=11 // pred_region
          _
        $region72: #{tpu_custom_call.1} parent=11 // pred_fallthru
          _
        // Predicated region
        $region73: #{tpu_custom_call.1} parent=11 // pred_check
          %p628 = pneg %p395
        $region74: #{tpu_custom_call.1} parent=11 // pred_check_branch
          %630 = sbr.rel (%p628) target = $region76
        $region75: #{tpu_custom_call.1} parent=11 // pred_region
          _
        $region76: #{tpu_custom_call.1} parent=11 // pred_fallthru
          _
        // Predicated region
        $region77: #{tpu_custom_call.1} parent=11 // pred_check
          %p631 = pneg %p416
        $region78: #{tpu_custom_call.1} parent=11 // pred_check_branch
          %633 = sbr.rel (%p631) target = $region80
        $region79: #{tpu_custom_call.1} parent=11 // pred_region
          _
        $region80: #{tpu_custom_call.1} parent=11 // pred_fallthru
          _
        // Predicated region
        $region81: #{tpu_custom_call.1} parent=11 // pred_check
          %p634 = pneg %p437
        $region82: #{tpu_custom_call.1} parent=11 // pred_check_branch
          %636 = sbr.rel (%p634) target = $region84
        $region83: #{tpu_custom_call.1} parent=11 // pred_region
          _
        $region84: #{tpu_custom_call.1} parent=11 // pred_fallthru
          _
        // Predicated region
        $region85: #{tpu_custom_call.1} parent=11 // pred_check
          %p637 = pneg %p458
        $region86: #{tpu_custom_call.1} parent=11 // pred_check_branch
          %639 = sbr.rel (%p637) target = $region88
        $region87: #{tpu_custom_call.1} parent=11 // pred_region
          _
        $region88: #{tpu_custom_call.1} parent=11 // pred_fallthru
          _
        // Predicated region
        $region89: #{tpu_custom_call.1} parent=11 // pred_check
          %p640 = pneg %p479
        $region90: #{tpu_custom_call.1} parent=11 // pred_check_branch
          %642 = sbr.rel (%p640) target = $region92
        $region91: #{tpu_custom_call.1} parent=11 // pred_region
          _
        $region92: #{tpu_custom_call.1} parent=11 // pred_fallthru
          _
        // Predicated region
        $region93: #{tpu_custom_call.1} parent=11 // pred_check
          %p643 = pneg %p500
        $region94: #{tpu_custom_call.1} parent=11 // pred_check_branch
          %645 = sbr.rel (%p643) target = $region96
        $region95: #{tpu_custom_call.1} parent=11 // pred_region
          _
        $region96: #{tpu_custom_call.1} parent=11 // pred_fallthru
          _
        // Predicated region
        $region97: #{tpu_custom_call.1} parent=11 // pred_check
          %p646 = pneg %p521
        $region98: #{tpu_custom_call.1} parent=11 // pred_check_branch
          %648 = sbr.rel (%p646) target = $region100
        $region99: #{tpu_custom_call.1} parent=11 // pred_region
          _
        $region100: #{tpu_custom_call.1} parent=11 // pred_fallthru
          _
        // Predicated region
        $region101: #{tpu_custom_call.1} parent=11 // pred_check
          %p649 = pneg %p542
        $region102: #{tpu_custom_call.1} parent=11 // pred_check_branch
          %651 = sbr.rel (%p649) target = $region104
        $region103: #{tpu_custom_call.1} parent=11 // pred_region
          _
        $region104: #{tpu_custom_call.1} parent=11 // pred_fallthru
          _
      $region12: #{tpu_custom_call.1} parent=5 // pred_fallthru
        _
      %p652 = scmp.lt.s32.totalorder %s33, 2
      // Predicated region
      $region105: #{tpu_custom_call.1} parent=5 // pred_check
        %p653 = pneg %p652
      $region106: #{tpu_custom_call.1} parent=5 // pred_check_branch
        %655 = sbr.rel (%p653) target = $region108
      $region107: #{tpu_custom_call.1} parent=5 // pred_region
        // Predicated region
        $region109: #{tpu_custom_call.1} parent=107 // pred_check
          %p656 = pneg %p53
        $region110: #{tpu_custom_call.1} parent=107 // pred_check_branch
          %658 = sbr.rel (%p656) target = $region112
        $region111: #{tpu_custom_call.1} parent=107 // pred_region
          %s659 = smul.u32 2, %s33
          %p660 = scmp.lt.s32.totalorder %s659, 3
          %s661 = scalar_select %p660, %s659, 3
          %s662 = smul.addr %s661, 2
          %s663 = scalar_lea.vmem %s0, %s662
          %s664 = smul.u32 2, %s33
        $region112: #{tpu_custom_call.1} parent=107 // pred_fallthru
          _
      $region108: #{tpu_custom_call.1} parent=5 // pred_fallthru
        _
      %p665 = scmp.le.s32.totalorder 1, %s33
      %p666 = scmp.lt.s32.totalorder %s33, 3
      %p667 = pnand %p665, %p666
      %p668 = pneg %p667
      // Predicated region
      $region113: #{tpu_custom_call.1} parent=5 // pred_check
        _
      $region114: #{tpu_custom_call.1} parent=5 // pred_check_branch
        %670 = sbr.rel (%p667) target = $region116
      $region115: #{tpu_custom_call.1} parent=5 // pred_region
        %s671 = ssub.s32 %s33, 1
        %s672 = smul.u32 2, %s38
        %p673 = scmp.lt.s32.totalorder %s672, 3
        %s674 = scalar_select %p673, %s672, 3
        %s675 = smul.addr %s674, 2
        %s676 = scalar_lea.vmem %s0, %s675
        %p677 = pneg %p59
        %p678 = pneg %p56
        %p679 = pneg %p80
        %p680 = pneg %p77
        %p681 = pneg %p101
        %p682 = pneg %p98
        %p683 = pneg %p122
        %p684 = pneg %p119
        %p685 = pneg %p143
        %p686 = pneg %p140
        %p687 = pneg %p164
        %p688 = pneg %p161
        %p689 = pneg %p185
        %p690 = pneg %p182
        %p691 = pneg %p206
        %p692 = pneg %p203
        %p693 = pneg %p227
        %p694 = pneg %p224
        %p695 = pneg %p248
        %p696 = pneg %p245
        %p697 = pneg %p269
        %p698 = pneg %p266
        %p699 = pneg %p290
        %p700 = pneg %p287
        %p701 = pneg %p311
        %p702 = pneg %p308
        %p703 = pneg %p332
        %p704 = pneg %p329
        %p705 = pneg %p353
        %p706 = pneg %p350
        %p707 = pneg %p374
        %p708 = pneg %p371
        %p709 = pneg %p395
        %p710 = pneg %p392
        %p711 = pneg %p416
        %p712 = pneg %p413
        %p713 = pneg %p437
        %p714 = pneg %p434
        %p715 = pneg %p458
        %p716 = pneg %p455
        %p717 = pneg %p479
        %p718 = pneg %p476
        %p719 = pneg %p500
        %p720 = pneg %p497
        %p721 = pneg %p521
        %p722 = pneg %p518
        %p723 = pneg %p542
        %p724 = pneg %p539
        %p725 = pneg %p568
        %p726 = pneg %p565
        %s727 = sand.u32 %s555, 1
        %s728 = scalar_lea.sflag [#allocation9], %s727
        %s729 = sand.u32 %s555, 1
        %s730 = smul.addr %s729, 4
        %s731 = scalar_lea.vmem [#allocation8], %s730
        %s732 = smul.u32 2, %s38
        %p733 = scmp.lt.s32.totalorder %s732, 3
        %s734 = scalar_select %p733, %s732, 3
        %s735 = smul.addr %s734, 2
        %s736 = scalar_lea.vmem %s0, %s735
        %s737 = smul.u32 2, %s38
        %s738 = smul.u32 2, %s38
        %v740 = vlaneseq
        %vm741 = vcmp.ge.s32.totalorder %v740, 0
        %vm742 = vcmp.lt.s32.totalorder %v740, 4
        %vm743 = vmand %vm741, %vm742
        %744 = vst.msk [vmem:[#allocation2] sm:$0x1] %vm743, 0.0
        %vm745 = vcmask 31744
        %746 = vst.msk [vmem:[#allocation6] sm:$0xff] %vm745, 0.0
        %747 = vst.msk [vmem:[#allocation6 + $0x18] sm:$0xff] %vm745, 0.0
        %748 = vst.msk [vmem:[#allocation6 + $0x30] sm:$0xff] %vm745, 0.0
        %749 = vst.msk [vmem:[#allocation6 + $0x48] sm:$0xff] %vm745, 0.0
        %vm750 = vcmp.ge.s32.totalorder %v740, 4
        %vm751 = vcmp.lt.s32.totalorder %v740, 8
        %vm752 = vmand %vm750, %vm751
        %753 = vst.msk [vmem:[#allocation2 + $0x2] sm:$0x1] %vm752, 0.0
        %vm754 = vcmask 64544
        %755 = vst.msk [vmem:[#allocation6 + $0x10] sm:$0xff] %vm754, 0.0
        %756 = vst.msk [vmem:[#allocation6 + $0x28] sm:$0xff] %vm754, 0.0
        %757 = vst.msk [vmem:[#allocation6 + $0x40] sm:$0xff] %vm754, 0.0
        %758 = vst.msk [vmem:[#allocation6 + $0x58] sm:$0xff] %vm754, 0.0
        %vm759 = vcmask 64512
        %760 = vst.msk [vmem:[#allocation4] sm:$0xff] %vm759, 0.0
        %761 = vst.msk [vmem:[#allocation4 + $0x18] sm:$0xff] %vm759, 0.0
        %762 = vst.msk [vmem:[#allocation4 + $0x30] sm:$0xff] %vm759, 0.0
        %763 = vst.msk [vmem:[#allocation4 + $0x48] sm:$0xff] %vm759, 0.0
        %vm764 = vcmask 138304
        %765 = vst.msk [vmem:[#allocation4 + $0x10] sm:$0xff] %vm764, 0.0
        %766 = vst.msk [vmem:[#allocation4 + $0x28] sm:$0xff] %vm764, 0.0
        %767 = vst.msk [vmem:[#allocation4 + $0x40] sm:$0xff] %vm764, 0.0
        %768 = vst.msk [vmem:[#allocation4 + $0x58] sm:$0xff] %vm764, 0.0
        %769 = vst.msk [vmem:[#allocation5 + $0x10] sm:$0xff] %vm745, 0.0
        %770 = vst.msk [vmem:[#allocation5 + $0x28] sm:$0xff] %vm745, 0.0
        %771 = vst.msk [vmem:[#allocation5 + $0x40] sm:$0xff] %vm745, 0.0
        %772 = vst.msk [vmem:[#allocation5 + $0x58] sm:$0xff] %vm745, 0.0
        %v773 = vld [vmem:[%s736] sm:$0x3]
        %775 = vrot.lane.b32.xlu0 %v773, 4
        %v776 = vpop.permute.xlu0 %775
        %v777 = vrot.slane %v776, 7
        %v778 = vsel %vm745, %v777, %v776
        %vm780 = vcmp.lt.s32.totalorder %v740, 260
        %vm781 = vmand %vm750, %vm780
        %782 = vst.msk [vmem:[#allocation2] sm:$0x7] %vm781, %v778
        %v783 = vld [vmem:[#allocation2] sm:$0x3]
        %vm784 = vcmp.lt.s32.totalorder %v740, 256
        %vm785 = vmand %vm741, %vm784
        %786 = vst.msk [vmem:[#allocation3] ss:$8 sm:$0x3] %vm785, %v783
        %787 = vst.msk [vmem:[#allocation3] ss:$8 sm:$0x0] %vm785, %v783
        %v788 = vld [vmem:[#allocation2] sm:$0x7]
        %790 = vrot.lane.b32.xlu0 %v788, 127
        %v791 = vpop.permute.xlu0 %790
        %v792 = vrot.slane %v791, 1
        %vm793 = vcmask 1039360
        %v794 = vsel %vm793, %v791, %v792
        %s796 = scalar_lea.vmem [#allocation3], 1
        %797 = vst.msk [vmem:[%s796] ss:$8 sm:$0x3] %vm785, %v794
        %798 = vst.msk [vmem:[%s796] ss:$8 sm:$0x0] %vm785, %v794
        %v799 = vld [vmem:[#allocation2] sm:$0x7]
        %801 = vrot.lane.b32.xlu0 %v799, 126
        %v802 = vpop.permute.xlu0 %801
        %v803 = vrot.slane %v802, 1
        %vm804 = vcmask 1031168
        %v805 = vsel %vm804, %v802, %v803
        %s807 = scalar_lea.vmem [#allocation3], 2
        %808 = vst.msk [vmem:[%s807] ss:$8 sm:$0x3] %vm785, %v805
        %809 = vst.msk [vmem:[%s807] ss:$8 sm:$0x0] %vm785, %v805
        %v810 = vld [vmem:[#allocation2] sm:$0x7]
        %812 = vrot.lane.b32.xlu0 %v810, 125
        %v813 = vpop.permute.xlu0 %812
        %v814 = vrot.slane %v813, 1
        %vm815 = vcmask 1022976
        %v816 = vsel %vm815, %v813, %v814
        %s818 = scalar_lea.vmem [#allocation3], 3
        %819 = vst.msk [vmem:[%s818] ss:$8 sm:$0x3] %vm785, %v816
        %820 = vst.msk [vmem:[%s818] ss:$8 sm:$0x0] %vm785, %v816
        %v821 = vld [vmem:[#allocation2] sm:$0x7]
        %823 = vrot.lane.b32.xlu0 %v821, 124
        %v824 = vpop.permute.xlu0 %823
        %v825 = vrot.slane %v824, 1
        %vm826 = vcmask 1014784
        %v827 = vsel %vm826, %v824, %v825
        %s829 = scalar_lea.vmem [#allocation3], 4
        %830 = vst.msk [vmem:[%s829] ss:$8 sm:$0x3] %vm785, %v827
        %831 = vst.msk [vmem:[%s829] ss:$8 sm:$0x0] %vm785, %v827
        %v832 = vld [vmem:[#allocation2] sm:$0x7]
        %834 = vrot.lane.b32.xlu0 %v832, 123
        %v835 = vpop.permute.xlu0 %834
        %v836 = vrot.slane %v835, 1
        %vm837 = vcmask 1006592
        %v838 = vsel %vm837, %v835, %v836
        %s840 = scalar_lea.vmem [#allocation3], 5
        %841 = vst.msk [vmem:[%s840] ss:$8 sm:$0x3] %vm785, %v838
        %842 = vst.msk [vmem:[%s840] ss:$8 sm:$0x0] %vm785, %v838
        %v843 = vld [vmem:[#allocation2] sm:$0x7]
        %845 = vrot.lane.b32.xlu0 %v843, 122
        %v846 = vpop.permute.xlu0 %845
        %v847 = vrot.slane %v846, 1
        %vm848 = vcmask 998400
        %v849 = vsel %vm848, %v846, %v847
        %s851 = scalar_lea.vmem [#allocation3], 6
        %852 = vst.msk [vmem:[%s851] ss:$8 sm:$0x3] %vm785, %v849
        %853 = vst.msk [vmem:[%s851] ss:$8 sm:$0x0] %vm785, %v849
        %v854 = vld [vmem:[#allocation2] sm:$0x7]
        %856 = vrot.lane.b32.xlu0 %v854, 121
        %v857 = vpop.permute.xlu0 %856
        %v858 = vrot.slane %v857, 1
        %vm859 = vcmask 990208
        %v860 = vsel %vm859, %v857, %v858
        %s862 = scalar_lea.vmem [#allocation3], 7
        %863 = vst.msk [vmem:[%s862] ss:$8 sm:$0x3] %vm785, %v860
        %864 = vst.msk [vmem:[%s862] ss:$8 sm:$0x0] %vm785, %v860
        %v865 = vld [vmem:[#allocation2] sm:$0x7]
        %867 = vrot.lane.b32.xlu0 %v865, 120
        %v868 = vpop.permute.xlu0 %867
        %v869 = vrot.slane %v868, 1
        %vm870 = vcmask 982016
        %v871 = vsel %vm870, %v868, %v869
        %s873 = scalar_lea.vmem [#allocation3], 16
        %874 = vst.msk [vmem:[%s873] ss:$8 sm:$0x3] %vm785, %v871
        %875 = vst.msk [vmem:[%s873] ss:$8 sm:$0x0] %vm785, %v871
        %v876 = vld [vmem:[%s1] sm:$0xff]
        %v877 = vld [vmem:[%s1 + $0x8] sm:$0xff]
        %v878 = vld [vmem:[%s1 + $0x10] sm:$0xff]
        %v879 = vld [vmem:[%s1 + $0x18] sm:$0xff]
        %v880 = vld [vmem:[#allocation3] sm:$0xff]
        %v881 = vld [vmem:[#allocation3 + $0x8] sm:$0xff]
        %v882 = vld [vmem:[#allocation3 + $0x10] sm:$0x1]
        %v883 = vld [vmem:[#allocation3 + $0x18] sm:$0x1]
        %v884 = vld [vmem:[%s3] sm:$0xff]
        %v885 = vld [vmem:[%s3 + $0x8] sm:$0xff]
        %v886 = vld [vmem:[%s3 + $0x10] sm:$0xff]
        %v887 = vld [vmem:[%s3 + $0x18] sm:$0xff]
        %889 = vset.pattern.permute.xlu0 0
        %890 = vperm.xlu0 %889, %v884
        %v891 = vpop.permute.xlu0 %890
        %894 = vset.pattern.permute.xlu0 0
        %895 = vperm.xlu0 %894, %v885
        %v896 = vpop.permute.xlu0 %895
        %899 = vset.pattern.permute.xlu0 0
        %900 = vperm.xlu0 %899, %v886
        %v901 = vpop.permute.xlu0 %900
        %904 = vset.pattern.permute.xlu0 0
        %905 = vperm.xlu0 %904, %v887
        %v906 = vpop.permute.xlu0 %905
        %vm908 = vcmask 72704
        %v910 = vsel %vm908, %v876, 0
        %v913 = vsel %vm908, %v877, 0
        %v916 = vsel %vm908, %v878, 0
        %v919 = vsel %vm908, %v879, 0
        %vm921 = vcmask 1040384
        %v923 = vsel %vm921, %v882, 0
        %v926 = vsel %vm921, %v883, 0
        %928 = vmatprep.subr.mxu0 %v881
        %929 = vmatpush1.msra.mxu0 %v880
        %930 = vmatprep.subr.mxu0 %v926
        %931 = vmatpush1.msra.mxu0 %v923
        %932 = vmatprep.subr.mxu0 0.0
        %933 = vmatpush1.msra.mxu0 0.0
        %934 = vmatprep.subr.mxu0 0.0
        %935 = vmatpush1.msra.mxu0 0.0
        %936 = vmatprep.subr.mxu0 0.0
        %937 = vmatpush1.msra.mxu0 0.0
        %938 = vmatprep.subr.mxu0 0.0
        %939 = vmatpush1.msra.mxu0 0.0
        %940 = vmatprep.subr.mxu0 0.0
        %941 = vmatpush1.msra.mxu0 0.0
        %942 = vmatprep.subr.mxu0 0.0
        %943 = vmatpush1.msra.mxu0 0.0
        %944 = vmatprep.subr.mxu0 0.0
        %945 = vmatpush1.msra.mxu0 0.0
        %946 = vmatprep.subr.mxu0 0.0
        %947 = vmatpush1.msra.mxu0 0.0
        %948 = vmatprep.subr.mxu0 0.0
        %949 = vmatpush1.msra.mxu0 0.0
        %950 = vmatprep.subr.mxu0 0.0
        %951 = vmatpush1.msra.mxu0 0.0
        %952 = vmatprep.subr.mxu0 0.0
        %953 = vmatpush1.msra.mxu0 0.0
        %954 = vmatprep.subr.mxu0 0.0
        %955 = vmatpush1.msra.mxu0 0.0
        %956 = vmatprep.subr.mxu0 0.0
        %957 = vmatpush1.msra.mxu0 0.0
        %958 = vmatprep.subr.mxu0 0.0
        %959 = vmatpush1.msra.mxu0 0.0
        %960 = vmatprep.subr.mxu0 0.0
        %961 = vmatpush1.msra.mxu0 0.0
        %962 = vmatprep.subr.mxu0 0.0
        %963 = vmatpush1.msra.mxu0 0.0
        %964 = vmatprep.subr.mxu0 0.0
        %965 = vmatpush1.msra.mxu0 0.0
        %966 = vmatprep.subr.mxu0 0.0
        %967 = vmatpush1.msra.mxu0 0.0
        %968 = vmatprep.subr.mxu0 0.0
        %969 = vmatpush1.msra.mxu0 0.0
        %970 = vmatprep.subr.mxu0 0.0
        %971 = vmatpush1.msra.mxu0 0.0
        %972 = vmatprep.subr.mxu0 0.0
        %973 = vmatpush1.msra.mxu0 0.0
        %974 = vmatprep.subr.mxu0 0.0
        %975 = vmatpush1.msra.mxu0 0.0
        %976 = vmatprep.subr.mxu0 0.0
        %977 = vmatpush1.msra.mxu0 0.0
        %978 = vmatprep.subr.mxu0 0.0
        %979 = vmatpush1.msra.mxu0 0.0
        %980 = vmatprep.subr.mxu0 0.0
        %981 = vmatpush1.msra.mxu0 0.0
        %982 = vmatprep.subr.mxu0 0.0
        %983 = vmatpush1.msra.mxu0 0.0
        %984 = vmatprep.subr.mxu0 0.0
        %985 = vmatpush1.msra.mxu0 0.0
        %986 = vmatprep.subr.mxu0 0.0
        %987 = vmatpush1.msra.mxu0 0.0
        %988 = vmatprep.subr.mxu0 0.0
        %989 = vmatpush1.msra.mxu0 0.0
        %990 = vmatprep.subr.mxu0 0.0
        %991 = vmatpush1.msra.mxu0 0.0
        %992 = vmatprep.mubr.f32.mxu0 0.0
        %993 = vmatmul.mubr.f32.gmra.mrb[0].mxu0 %v910
        %v994 = vpop.f32.mrb[0].mxu0
        %v995 = vadd.f32 %v891, %v994
        %v996 = vpop.f32.mrb[0].mxu0
        %v997 = vadd.f32 %v891, %v996
        %998 = vmatprep.mubr.f32.mxu0 0.0
        %999 = vmatmul.mubr.f32.gmra.mrb[0].mxu0 %v913
        %v1000 = vpop.f32.mrb[0].mxu0
        %v1001 = vadd.f32 %v896, %v1000
        %v1002 = vpop.f32.mrb[0].mxu0
        %v1003 = vadd.f32 %v896, %v1002
        %1004 = vmatprep.mubr.f32.mxu0 0.0
        %1005 = vmatmul.mubr.f32.gmra.mrb[0].mxu0 %v916
        %v1006 = vpop.f32.mrb[0].mxu0
        %v1007 = vadd.f32 %v901, %v1006
        %v1008 = vpop.f32.mrb[0].mxu0
        %v1009 = vadd.f32 %v901, %v1008
        %1010 = vmatprep.mubr.f32.mxu0 0.0
        %1011 = vmatmul.mubr.f32.gmra.mrb[0].mxu0 %v919
        %v1012 = vpop.f32.mrb[0].mxu0
        %v1013 = vadd.f32 %v906, %v1012
        %v1014 = vpop.f32.mrb[0].mxu0
        %v1015 = vadd.f32 %v906, %v1014
        %1016 = vdwg.mxu0
        %v1017 = vand.u32 2147483647, %v995
        %v1018 = vand.u32 2147483647, %v997
        %v1019 = vand.u32 2147483647, %v1001
        %v1020 = vand.u32 2147483647, %v1003
        %v1021 = vand.u32 2147483647, %v1007
        %v1022 = vand.u32 2147483647, %v1009
        %v1023 = vand.u32 2147483647, %v1013
        %v1024 = vand.u32 2147483647, %v1015
        %1033 = vrot.lane.b32.xlu0 %v1017, 8
        %v1034 = vpop.permute.xlu0 %1033
        %1035 = vrot.lane.b32.xlu0 %v1018, 8
        %v1036 = vpop.permute.xlu0 %1035
        %1037 = vrot.lane.b32.xlu0 %v1019, 8
        %v1038 = vpop.permute.xlu0 %1037
        %1039 = vrot.lane.b32.xlu0 %v1020, 8
        %v1040 = vpop.permute.xlu0 %1039
        %1041 = vrot.lane.b32.xlu0 %v1021, 8
        %v1042 = vpop.permute.xlu0 %1041
        %1043 = vrot.lane.b32.xlu0 %v1022, 8
        %v1044 = vpop.permute.xlu0 %1043
        %1045 = vrot.lane.b32.xlu0 %v1023, 8
        %v1046 = vpop.permute.xlu0 %1045
        %1047 = vrot.lane.b32.xlu0 %v1024, 8
        %v1048 = vpop.permute.xlu0 %1047
        %v1049 = vsel %vm759, %v1034, %v1036
        %v1050 = vsel %vm759, %v1038, %v1040
        %v1051 = vsel %vm759, %v1042, %v1044
        %v1052 = vsel %vm759, %v1046, %v1048
        %vm1065 = vcmask 1047616
        %1066 = vst.msk [vmem:[#allocation4] sm:$0xff] %vm1065, %v1034
        %1067 = vst [vmem:[#allocation4 + $0x8] sm:$0xff] %v1049
        %1068 = vst.msk [vmem:[#allocation4 + $0x10] sm:$0xff] %vm759, %v1036
        %1069 = vst.msk [vmem:[#allocation4 + $0x18] sm:$0xff] %vm1065, %v1038
        %1070 = vst [vmem:[#allocation4 + $0x20] sm:$0xff] %v1050
        %1071 = vst.msk [vmem:[#allocation4 + $0x28] sm:$0xff] %vm759, %v1040
        %1072 = vst.msk [vmem:[#allocation4 + $0x30] sm:$0xff] %vm1065, %v1042
        %1073 = vst [vmem:[#allocation4 + $0x38] sm:$0xff] %v1051
        %1074 = vst.msk [vmem:[#allocation4 + $0x40] sm:$0xff] %vm759, %v1044
        %1075 = vst.msk [vmem:[#allocation4 + $0x48] sm:$0xff] %vm1065, %v1046
        %1076 = vst [vmem:[#allocation4 + $0x50] sm:$0xff] %v1052
        %1077 = vst.msk [vmem:[#allocation4 + $0x58] sm:$0xff] %vm759, %v1048
        %v1078 = vld [vmem:[#allocation4] sm:$0xff]
        %v1079 = vld [vmem:[#allocation4 + $0x8] sm:$0xff]
        %v1080 = vld [vmem:[#allocation4 + $0x18] sm:$0xff]
        %v1081 = vld [vmem:[#allocation4 + $0x20] sm:$0xff]
        %v1082 = vld [vmem:[#allocation4 + $0x30] sm:$0xff]
        %v1083 = vld [vmem:[#allocation4 + $0x38] sm:$0xff]
        %v1084 = vld [vmem:[#allocation4 + $0x48] sm:$0xff]
        %v1085 = vld [vmem:[#allocation4 + $0x50] sm:$0xff]
        %v1086 = vld [vmem:[%s4] ss:$8 sm:$0x3]
        %v1088 = vlaneseq
        %v1089 = vshrl.u32 %v1088, 7
        %v1090 = vsub.s32 0, %v1089
        %v1091 = vrot.slane %v1086, %v1090
        %v1092 = vlaneseq
        %v1093 = vshrl.u32 %v1092, 7
        %v1094 = vsub.s32 1, %v1093
        %v1095 = vrot.slane %v1086, %v1094
        %v1098 = vmul.f32 %v1078, %v1091
        %v1099 = vmul.f32 %v1079, %v1095
        %v1100 = vmul.f32 %v1080, %v1091
        %v1101 = vmul.f32 %v1081, %v1095
        %v1102 = vmul.f32 %v1082, %v1091
        %v1103 = vmul.f32 %v1083, %v1095
        %v1104 = vmul.f32 %v1084, %v1091
        %v1105 = vmul.f32 %v1085, %v1095
        %v1106 = vadd.f32 %v1098, 0.0
        %v1107 = vadd.f32 %v1099, 0.0
        %v1108 = vadd.f32 %v1100, 0.0
        %v1109 = vadd.f32 %v1101, 0.0
        %v1110 = vadd.f32 %v1102, 0.0
        %v1111 = vadd.f32 %v1103, 0.0
        %v1112 = vadd.f32 %v1104, 0.0
        %v1113 = vadd.f32 %v1105, 0.0
        %v1114 = vld [vmem:[#allocation4 + $0x10] sm:$0xff]
        %v1115 = vld [vmem:[#allocation4 + $0x28] sm:$0xff]
        %v1116 = vld [vmem:[#allocation4 + $0x40] sm:$0xff]
        %v1117 = vld [vmem:[#allocation4 + $0x58] sm:$0xff]
        %s1118 = scalar_lea.vmem %s4, 1
        %v1119 = vld [vmem:[%s1118] ss:$8 sm:$0x3]
        %v1121 = vlaneseq
        %v1122 = vshrl.u32 %v1121, 7
        %v1123 = vsub.s32 0, %v1122
        %v1124 = vrot.slane %v1119, %v1123
        %v1125 = vlaneseq
        %v1126 = vshrl.u32 %v1125, 7
        %v1127 = vsub.s32 1, %v1126
        %v1128 = vrot.slane %v1119, %v1127
        %1129 = vrot.lane.b32.xlu0 %v1124, 1
        %v1130 = vpop.permute.xlu0 %1129
        %1131 = vrot.lane.b32.xlu0 %v1128, 1
        %v1132 = vpop.permute.xlu0 %1131
        %vm1133 = vcmask 7168
        %v1134 = vsel %vm1133, %v1130, %v1132
        %v1138 = vmul.f32 %v1078, %v1130
        %v1139 = vmul.f32 %v1079, %v1134
        %v1140 = vmul.f32 %v1114, %v1132
        %v1141 = vmul.f32 %v1080, %v1130
        %v1142 = vmul.f32 %v1081, %v1134
        %v1143 = vmul.f32 %v1115, %v1132
        %v1144 = vmul.f32 %v1082, %v1130
        %v1145 = vmul.f32 %v1083, %v1134
        %v1146 = vmul.f32 %v1116, %v1132
        %v1147 = vmul.f32 %v1084, %v1130
        %v1148 = vmul.f32 %v1085, %v1134
        %v1149 = vmul.f32 %v1117, %v1132
        %1162 = vrot.lane.b32.xlu0 %v1138, 127
        %v1163 = vpop.permute.xlu0 %1162
        %1164 = vrot.lane.b32.xlu0 %v1139, 127
        %v1165 = vpop.permute.xlu0 %1164
        %1166 = vrot.lane.b32.xlu0 %v1140, 127
        %v1167 = vpop.permute.xlu0 %1166
        %1168 = vrot.lane.b32.xlu0 %v1141, 127
        %v1169 = vpop.permute.xlu0 %1168
        %1170 = vrot.lane.b32.xlu0 %v1142, 127
        %v1171 = vpop.permute.xlu0 %1170
        %1172 = vrot.lane.b32.xlu0 %v1143, 127
        %v1173 = vpop.permute.xlu0 %1172
        %1174 = vrot.lane.b32.xlu0 %v1144, 127
        %v1175 = vpop.permute.xlu0 %1174
        %1176 = vrot.lane.b32.xlu0 %v1145, 127
        %v1177 = vpop.permute.xlu0 %1176
        %1178 = vrot.lane.b32.xlu0 %v1146, 127
        %v1179 = vpop.permute.xlu0 %1178
        %1180 = vrot.lane.b32.xlu0 %v1147, 127
        %v1181 = vpop.permute.xlu0 %1180
        %1182 = vrot.lane.b32.xlu0 %v1148, 127
        %v1183 = vpop.permute.xlu0 %1182
        %1184 = vrot.lane.b32.xlu0 %v1149, 127
        %v1185 = vpop.permute.xlu0 %1184
        %v1186 = vsel %vm793, %v1163, %v1165
        %v1187 = vsel %vm793, %v1165, %v1167
        %v1188 = vsel %vm793, %v1169, %v1171
        %v1189 = vsel %vm793, %v1171, %v1173
        %v1190 = vsel %vm793, %v1175, %v1177
        %v1191 = vsel %vm793, %v1177, %v1179
        %v1192 = vsel %vm793, %v1181, %v1183
        %v1193 = vsel %vm793, %v1183, %v1185
        %v1202 = vadd.f32 %v1106, %v1186
        %v1203 = vadd.f32 %v1107, %v1187
        %v1204 = vadd.f32 %v1108, %v1188
        %v1205 = vadd.f32 %v1109, %v1189
        %v1206 = vadd.f32 %v1110, %v1190
        %v1207 = vadd.f32 %v1111, %v1191
        %v1208 = vadd.f32 %v1112, %v1192
        %v1209 = vadd.f32 %v1113, %v1193
        %s1210 = scalar_lea.vmem %s4, 2
        %v1211 = vld [vmem:[%s1210] ss:$8 sm:$0x3]
        %v1213 = vlaneseq
        %v1214 = vshrl.u32 %v1213, 7
        %v1215 = vsub.s32 0, %v1214
        %v1216 = vrot.slane %v1211, %v1215
        %v1217 = vlaneseq
        %v1218 = vshrl.u32 %v1217, 7
        %v1219 = vsub.s32 1, %v1218
        %v1220 = vrot.slane %v1211, %v1219
        %1221 = vrot.lane.b32.xlu0 %v1216, 2
        %v1222 = vpop.permute.xlu0 %1221
        %1223 = vrot.lane.b32.xlu0 %v1220, 2
        %v1224 = vpop.permute.xlu0 %1223
        %vm1225 = vcmask 15360
        %v1226 = vsel %vm1225, %v1222, %v1224
        %v1230 = vmul.f32 %v1078, %v1222
        %v1231 = vmul.f32 %v1079, %v1226
        %v1232 = vmul.f32 %v1114, %v1224
        %v1233 = vmul.f32 %v1080, %v1222
        %v1234 = vmul.f32 %v1081, %v1226
        %v1235 = vmul.f32 %v1115, %v1224
        %v1236 = vmul.f32 %v1082, %v1222
        %v1237 = vmul.f32 %v1083, %v1226
        %v1238 = vmul.f32 %v1116, %v1224
        %v1239 = vmul.f32 %v1084, %v1222
        %v1240 = vmul.f32 %v1085, %v1226
        %v1241 = vmul.f32 %v1117, %v1224
        %1254 = vrot.lane.b32.xlu0 %v1230, 126
        %v1255 = vpop.permute.xlu0 %1254
        %1256 = vrot.lane.b32.xlu0 %v1231, 126
        %v1257 = vpop.permute.xlu0 %1256
        %1258 = vrot.lane.b32.xlu0 %v1232, 126
        %v1259 = vpop.permute.xlu0 %1258
        %1260 = vrot.lane.b32.xlu0 %v1233, 126
        %v1261 = vpop.permute.xlu0 %1260
        %1262 = vrot.lane.b32.xlu0 %v1234, 126
        %v1263 = vpop.permute.xlu0 %1262
        %1264 = vrot.lane.b32.xlu0 %v1235, 126
        %v1265 = vpop.permute.xlu0 %1264
        %1266 = vrot.lane.b32.xlu0 %v1236, 126
        %v1267 = vpop.permute.xlu0 %1266
        %1268 = vrot.lane.b32.xlu0 %v1237, 126
        %v1269 = vpop.permute.xlu0 %1268
        %1270 = vrot.lane.b32.xlu0 %v1238, 126
        %v1271 = vpop.permute.xlu0 %1270
        %1272 = vrot.lane.b32.xlu0 %v1239, 126
        %v1273 = vpop.permute.xlu0 %1272
        %1274 = vrot.lane.b32.xlu0 %v1240, 126
        %v1275 = vpop.permute.xlu0 %1274
        %1276 = vrot.lane.b32.xlu0 %v1241, 126
        %v1277 = vpop.permute.xlu0 %1276
        %v1278 = vsel %vm804, %v1255, %v1257
        %v1279 = vsel %vm804, %v1257, %v1259
        %v1280 = vsel %vm804, %v1261, %v1263
        %v1281 = vsel %vm804, %v1263, %v1265
        %v1282 = vsel %vm804, %v1267, %v1269
        %v1283 = vsel %vm804, %v1269, %v1271
        %v1284 = vsel %vm804, %v1273, %v1275
        %v1285 = vsel %vm804, %v1275, %v1277
        %v1294 = vadd.f32 %v1202, %v1278
        %v1295 = vadd.f32 %v1203, %v1279
        %v1296 = vadd.f32 %v1204, %v1280
        %v1297 = vadd.f32 %v1205, %v1281
        %v1298 = vadd.f32 %v1206, %v1282
        %v1299 = vadd.f32 %v1207, %v1283
        %v1300 = vadd.f32 %v1208, %v1284
        %v1301 = vadd.f32 %v1209, %v1285
        %s1302 = scalar_lea.vmem %s4, 3
        %v1303 = vld [vmem:[%s1302] ss:$8 sm:$0x3]
        %v1305 = vlaneseq
        %v1306 = vshrl.u32 %v1305, 7
        %v1307 = vsub.s32 0, %v1306
        %v1308 = vrot.slane %v1303, %v1307
        %v1309 = vlaneseq
        %v1310 = vshrl.u32 %v1309, 7
        %v1311 = vsub.s32 1, %v1310
        %v1312 = vrot.slane %v1303, %v1311
        %1313 = vrot.lane.b32.xlu0 %v1308, 3
        %v1314 = vpop.permute.xlu0 %1313
        %1315 = vrot.lane.b32.xlu0 %v1312, 3
        %v1316 = vpop.permute.xlu0 %1315
        %vm1317 = vcmask 23552
        %v1318 = vsel %vm1317, %v1314, %v1316
        %v1322 = vmul.f32 %v1078, %v1314
        %v1323 = vmul.f32 %v1079, %v1318
        %v1324 = vmul.f32 %v1114, %v1316
        %v1325 = vmul.f32 %v1080, %v1314
        %v1326 = vmul.f32 %v1081, %v1318
        %v1327 = vmul.f32 %v1115, %v1316
        %v1328 = vmul.f32 %v1082, %v1314
        %v1329 = vmul.f32 %v1083, %v1318
        %v1330 = vmul.f32 %v1116, %v1316
        %v1331 = vmul.f32 %v1084, %v1314
        %v1332 = vmul.f32 %v1085, %v1318
        %v1333 = vmul.f32 %v1117, %v1316
        %1346 = vrot.lane.b32.xlu0 %v1322, 125
        %v1347 = vpop.permute.xlu0 %1346
        %1348 = vrot.lane.b32.xlu0 %v1323, 125
        %v1349 = vpop.permute.xlu0 %1348
        %1350 = vrot.lane.b32.xlu0 %v1324, 125
        %v1351 = vpop.permute.xlu0 %1350
        %1352 = vrot.lane.b32.xlu0 %v1325, 125
        %v1353 = vpop.permute.xlu0 %1352
        %1354 = vrot.lane.b32.xlu0 %v1326, 125
        %v1355 = vpop.permute.xlu0 %1354
        %1356 = vrot.lane.b32.xlu0 %v1327, 125
        %v1357 = vpop.permute.xlu0 %1356
        %1358 = vrot.lane.b32.xlu0 %v1328, 125
        %v1359 = vpop.permute.xlu0 %1358
        %1360 = vrot.lane.b32.xlu0 %v1329, 125
        %v1361 = vpop.permute.xlu0 %1360
        %1362 = vrot.lane.b32.xlu0 %v1330, 125
        %v1363 = vpop.permute.xlu0 %1362
        %1364 = vrot.lane.b32.xlu0 %v1331, 125
        %v1365 = vpop.permute.xlu0 %1364
        %1366 = vrot.lane.b32.xlu0 %v1332, 125
        %v1367 = vpop.permute.xlu0 %1366
        %1368 = vrot.lane.b32.xlu0 %v1333, 125
        %v1369 = vpop.permute.xlu0 %1368
        %v1370 = vsel %vm815, %v1347, %v1349
        %v1371 = vsel %vm815, %v1349, %v1351
        %v1372 = vsel %vm815, %v1353, %v1355
        %v1373 = vsel %vm815, %v1355, %v1357
        %v1374 = vsel %vm815, %v1359, %v1361
        %v1375 = vsel %vm815, %v1361, %v1363
        %v1376 = vsel %vm815, %v1365, %v1367
        %v1377 = vsel %vm815, %v1367, %v1369
        %v1386 = vadd.f32 %v1294, %v1370
        %v1387 = vadd.f32 %v1295, %v1371
        %v1388 = vadd.f32 %v1296, %v1372
        %v1389 = vadd.f32 %v1297, %v1373
        %v1390 = vadd.f32 %v1298, %v1374
        %v1391 = vadd.f32 %v1299, %v1375
        %v1392 = vadd.f32 %v1300, %v1376
        %v1393 = vadd.f32 %v1301, %v1377
        %s1394 = scalar_lea.vmem %s4, 4
        %v1395 = vld [vmem:[%s1394] ss:$8 sm:$0x3]
        %v1397 = vlaneseq
        %v1398 = vshrl.u32 %v1397, 7
        %v1399 = vsub.s32 0, %v1398
        %v1400 = vrot.slane %v1395, %v1399
        %v1401 = vlaneseq
        %v1402 = vshrl.u32 %v1401, 7
        %v1403 = vsub.s32 1, %v1402
        %v1404 = vrot.slane %v1395, %v1403
        %1405 = vrot.lane.b32.xlu0 %v1400, 4
        %v1406 = vpop.permute.xlu0 %1405
        %1407 = vrot.lane.b32.xlu0 %v1404, 4
        %v1408 = vpop.permute.xlu0 %1407
        %v1409 = vsel %vm745, %v1406, %v1408
        %v1413 = vmul.f32 %v1078, %v1406
        %v1414 = vmul.f32 %v1079, %v1409
        %v1415 = vmul.f32 %v1114, %v1408
        %v1416 = vmul.f32 %v1080, %v1406
        %v1417 = vmul.f32 %v1081, %v1409
        %v1418 = vmul.f32 %v1115, %v1408
        %v1419 = vmul.f32 %v1082, %v1406
        %v1420 = vmul.f32 %v1083, %v1409
        %v1421 = vmul.f32 %v1116, %v1408
        %v1422 = vmul.f32 %v1084, %v1406
        %v1423 = vmul.f32 %v1085, %v1409
        %v1424 = vmul.f32 %v1117, %v1408
        %1437 = vrot.lane.b32.xlu0 %v1413, 124
        %v1438 = vpop.permute.xlu0 %1437
        %1439 = vrot.lane.b32.xlu0 %v1414, 124
        %v1440 = vpop.permute.xlu0 %1439
        %1441 = vrot.lane.b32.xlu0 %v1415, 124
        %v1442 = vpop.permute.xlu0 %1441
        %1443 = vrot.lane.b32.xlu0 %v1416, 124
        %v1444 = vpop.permute.xlu0 %1443
        %1445 = vrot.lane.b32.xlu0 %v1417, 124
        %v1446 = vpop.permute.xlu0 %1445
        %1447 = vrot.lane.b32.xlu0 %v1418, 124
        %v1448 = vpop.permute.xlu0 %1447
        %1449 = vrot.lane.b32.xlu0 %v1419, 124
        %v1450 = vpop.permute.xlu0 %1449
        %1451 = vrot.lane.b32.xlu0 %v1420, 124
        %v1452 = vpop.permute.xlu0 %1451
        %1453 = vrot.lane.b32.xlu0 %v1421, 124
        %v1454 = vpop.permute.xlu0 %1453
        %1455 = vrot.lane.b32.xlu0 %v1422, 124
        %v1456 = vpop.permute.xlu0 %1455
        %1457 = vrot.lane.b32.xlu0 %v1423, 124
        %v1458 = vpop.permute.xlu0 %1457
        %1459 = vrot.lane.b32.xlu0 %v1424, 124
        %v1460 = vpop.permute.xlu0 %1459
        %v1461 = vsel %vm826, %v1438, %v1440
        %v1462 = vsel %vm826, %v1440, %v1442
        %v1463 = vsel %vm826, %v1444, %v1446
        %v1464 = vsel %vm826, %v1446, %v1448
        %v1465 = vsel %vm826, %v1450, %v1452
        %v1466 = vsel %vm826, %v1452, %v1454
        %v1467 = vsel %vm826, %v1456, %v1458
        %v1468 = vsel %vm826, %v1458, %v1460
        %v1477 = vadd.f32 %v1386, %v1461
        %v1478 = vadd.f32 %v1387, %v1462
        %v1479 = vadd.f32 %v1388, %v1463
        %v1480 = vadd.f32 %v1389, %v1464
        %v1481 = vadd.f32 %v1390, %v1465
        %v1482 = vadd.f32 %v1391, %v1466
        %v1483 = vadd.f32 %v1392, %v1467
        %v1484 = vadd.f32 %v1393, %v1468
        %s1485 = scalar_lea.vmem %s4, 5
        %v1486 = vld [vmem:[%s1485] ss:$8 sm:$0x3]
        %v1488 = vlaneseq
        %v1489 = vshrl.u32 %v1488, 7
        %v1490 = vsub.s32 0, %v1489
        %v1491 = vrot.slane %v1486, %v1490
        %v1492 = vlaneseq
        %v1493 = vshrl.u32 %v1492, 7
        %v1494 = vsub.s32 1, %v1493
        %v1495 = vrot.slane %v1486, %v1494
        %1496 = vrot.lane.b32.xlu0 %v1491, 5
        %v1497 = vpop.permute.xlu0 %1496
        %1498 = vrot.lane.b32.xlu0 %v1495, 5
        %v1499 = vpop.permute.xlu0 %1498
        %vm1500 = vcmask 39936
        %v1501 = vsel %vm1500, %v1497, %v1499
        %v1505 = vmul.f32 %v1078, %v1497
        %v1506 = vmul.f32 %v1079, %v1501
        %v1507 = vmul.f32 %v1114, %v1499
        %v1508 = vmul.f32 %v1080, %v1497
        %v1509 = vmul.f32 %v1081, %v1501
        %v1510 = vmul.f32 %v1115, %v1499
        %v1511 = vmul.f32 %v1082, %v1497
        %v1512 = vmul.f32 %v1083, %v1501
        %v1513 = vmul.f32 %v1116, %v1499
        %v1514 = vmul.f32 %v1084, %v1497
        %v1515 = vmul.f32 %v1085, %v1501
        %v1516 = vmul.f32 %v1117, %v1499
        %1529 = vrot.lane.b32.xlu0 %v1505, 123
        %v1530 = vpop.permute.xlu0 %1529
        %1531 = vrot.lane.b32.xlu0 %v1506, 123
        %v1532 = vpop.permute.xlu0 %1531
        %1533 = vrot.lane.b32.xlu0 %v1507, 123
        %v1534 = vpop.permute.xlu0 %1533
        %1535 = vrot.lane.b32.xlu0 %v1508, 123
        %v1536 = vpop.permute.xlu0 %1535
        %1537 = vrot.lane.b32.xlu0 %v1509, 123
        %v1538 = vpop.permute.xlu0 %1537
        %1539 = vrot.lane.b32.xlu0 %v1510, 123
        %v1540 = vpop.permute.xlu0 %1539
        %1541 = vrot.lane.b32.xlu0 %v1511, 123
        %v1542 = vpop.permute.xlu0 %1541
        %1543 = vrot.lane.b32.xlu0 %v1512, 123
        %v1544 = vpop.permute.xlu0 %1543
        %1545 = vrot.lane.b32.xlu0 %v1513, 123
        %v1546 = vpop.permute.xlu0 %1545
        %1547 = vrot.lane.b32.xlu0 %v1514, 123
        %v1548 = vpop.permute.xlu0 %1547
        %1549 = vrot.lane.b32.xlu0 %v1515, 123
        %v1550 = vpop.permute.xlu0 %1549
        %1551 = vrot.lane.b32.xlu0 %v1516, 123
        %v1552 = vpop.permute.xlu0 %1551
        %v1553 = vsel %vm837, %v1530, %v1532
        %v1554 = vsel %vm837, %v1532, %v1534
        %v1555 = vsel %vm837, %v1536, %v1538
        %v1556 = vsel %vm837, %v1538, %v1540
        %v1557 = vsel %vm837, %v1542, %v1544
        %v1558 = vsel %vm837, %v1544, %v1546
        %v1559 = vsel %vm837, %v1548, %v1550
        %v1560 = vsel %vm837, %v1550, %v1552
        %v1569 = vadd.f32 %v1477, %v1553
        %v1570 = vadd.f32 %v1478, %v1554
        %v1571 = vadd.f32 %v1479, %v1555
        %v1572 = vadd.f32 %v1480, %v1556
        %v1573 = vadd.f32 %v1481, %v1557
        %v1574 = vadd.f32 %v1482, %v1558
        %v1575 = vadd.f32 %v1483, %v1559
        %v1576 = vadd.f32 %v1484, %v1560
        %s1577 = scalar_lea.vmem %s4, 6
        %v1578 = vld [vmem:[%s1577] ss:$8 sm:$0x3]
        %v1580 = vlaneseq
        %v1581 = vshrl.u32 %v1580, 7
        %v1582 = vsub.s32 0, %v1581
        %v1583 = vrot.slane %v1578, %v1582
        %v1584 = vlaneseq
        %v1585 = vshrl.u32 %v1584, 7
        %v1586 = vsub.s32 1, %v1585
        %v1587 = vrot.slane %v1578, %v1586
        %1588 = vrot.lane.b32.xlu0 %v1583, 6
        %v1589 = vpop.permute.xlu0 %1588
        %1590 = vrot.lane.b32.xlu0 %v1587, 6
        %v1591 = vpop.permute.xlu0 %1590
        %vm1592 = vcmask 48128
        %v1593 = vsel %vm1592, %v1589, %v1591
        %v1597 = vmul.f32 %v1078, %v1589
        %v1598 = vmul.f32 %v1079, %v1593
        %v1599 = vmul.f32 %v1114, %v1591
        %v1600 = vmul.f32 %v1080, %v1589
        %v1601 = vmul.f32 %v1081, %v1593
        %v1602 = vmul.f32 %v1115, %v1591
        %v1603 = vmul.f32 %v1082, %v1589
        %v1604 = vmul.f32 %v1083, %v1593
        %v1605 = vmul.f32 %v1116, %v1591
        %v1606 = vmul.f32 %v1084, %v1589
        %v1607 = vmul.f32 %v1085, %v1593
        %v1608 = vmul.f32 %v1117, %v1591
        %1621 = vrot.lane.b32.xlu0 %v1597, 122
        %v1622 = vpop.permute.xlu0 %1621
        %1623 = vrot.lane.b32.xlu0 %v1598, 122
        %v1624 = vpop.permute.xlu0 %1623
        %1625 = vrot.lane.b32.xlu0 %v1599, 122
        %v1626 = vpop.permute.xlu0 %1625
        %1627 = vrot.lane.b32.xlu0 %v1600, 122
        %v1628 = vpop.permute.xlu0 %1627
        %1629 = vrot.lane.b32.xlu0 %v1601, 122
        %v1630 = vpop.permute.xlu0 %1629
        %1631 = vrot.lane.b32.xlu0 %v1602, 122
        %v1632 = vpop.permute.xlu0 %1631
        %1633 = vrot.lane.b32.xlu0 %v1603, 122
        %v1634 = vpop.permute.xlu0 %1633
        %1635 = vrot.lane.b32.xlu0 %v1604, 122
        %v1636 = vpop.permute.xlu0 %1635
        %1637 = vrot.lane.b32.xlu0 %v1605, 122
        %v1638 = vpop.permute.xlu0 %1637
        %1639 = vrot.lane.b32.xlu0 %v1606, 122
        %v1640 = vpop.permute.xlu0 %1639
        %1641 = vrot.lane.b32.xlu0 %v1607, 122
        %v1642 = vpop.permute.xlu0 %1641
        %1643 = vrot.lane.b32.xlu0 %v1608, 122
        %v1644 = vpop.permute.xlu0 %1643
        %v1645 = vsel %vm848, %v1622, %v1624
        %v1646 = vsel %vm848, %v1624, %v1626
        %v1647 = vsel %vm848, %v1628, %v1630
        %v1648 = vsel %vm848, %v1630, %v1632
        %v1649 = vsel %vm848, %v1634, %v1636
        %v1650 = vsel %vm848, %v1636, %v1638
        %v1651 = vsel %vm848, %v1640, %v1642
        %v1652 = vsel %vm848, %v1642, %v1644
        %v1661 = vadd.f32 %v1569, %v1645
        %v1662 = vadd.f32 %v1570, %v1646
        %v1663 = vadd.f32 %v1571, %v1647
        %v1664 = vadd.f32 %v1572, %v1648
        %v1665 = vadd.f32 %v1573, %v1649
        %v1666 = vadd.f32 %v1574, %v1650
        %v1667 = vadd.f32 %v1575, %v1651
        %v1668 = vadd.f32 %v1576, %v1652
        %s1669 = scalar_lea.vmem %s4, 7
        %v1670 = vld [vmem:[%s1669] ss:$8 sm:$0x3]
        %v1672 = vlaneseq
        %v1673 = vshrl.u32 %v1672, 7
        %v1674 = vsub.s32 0, %v1673
        %v1675 = vrot.slane %v1670, %v1674
        %v1676 = vlaneseq
        %v1677 = vshrl.u32 %v1676, 7
        %v1678 = vsub.s32 1, %v1677
        %v1679 = vrot.slane %v1670, %v1678
        %1680 = vrot.lane.b32.xlu0 %v1675, 7
        %v1681 = vpop.permute.xlu0 %1680
        %1682 = vrot.lane.b32.xlu0 %v1679, 7
        %v1683 = vpop.permute.xlu0 %1682
        %vm1684 = vcmask 56320
        %v1685 = vsel %vm1684, %v1681, %v1683
        %v1689 = vmul.f32 %v1078, %v1681
        %v1690 = vmul.f32 %v1079, %v1685
        %v1691 = vmul.f32 %v1114, %v1683
        %v1692 = vmul.f32 %v1080, %v1681
        %v1693 = vmul.f32 %v1081, %v1685
        %v1694 = vmul.f32 %v1115, %v1683
        %v1695 = vmul.f32 %v1082, %v1681
        %v1696 = vmul.f32 %v1083, %v1685
        %v1697 = vmul.f32 %v1116, %v1683
        %v1698 = vmul.f32 %v1084, %v1681
        %v1699 = vmul.f32 %v1085, %v1685
        %v1700 = vmul.f32 %v1117, %v1683
        %1713 = vrot.lane.b32.xlu0 %v1689, 121
        %v1714 = vpop.permute.xlu0 %1713
        %1715 = vrot.lane.b32.xlu0 %v1690, 121
        %v1716 = vpop.permute.xlu0 %1715
        %1717 = vrot.lane.b32.xlu0 %v1691, 121
        %v1718 = vpop.permute.xlu0 %1717
        %1719 = vrot.lane.b32.xlu0 %v1692, 121
        %v1720 = vpop.permute.xlu0 %1719
        %1721 = vrot.lane.b32.xlu0 %v1693, 121
        %v1722 = vpop.permute.xlu0 %1721
        %1723 = vrot.lane.b32.xlu0 %v1694, 121
        %v1724 = vpop.permute.xlu0 %1723
        %1725 = vrot.lane.b32.xlu0 %v1695, 121
        %v1726 = vpop.permute.xlu0 %1725
        %1727 = vrot.lane.b32.xlu0 %v1696, 121
        %v1728 = vpop.permute.xlu0 %1727
        %1729 = vrot.lane.b32.xlu0 %v1697, 121
        %v1730 = vpop.permute.xlu0 %1729
        %1731 = vrot.lane.b32.xlu0 %v1698, 121
        %v1732 = vpop.permute.xlu0 %1731
        %1733 = vrot.lane.b32.xlu0 %v1699, 121
        %v1734 = vpop.permute.xlu0 %1733
        %1735 = vrot.lane.b32.xlu0 %v1700, 121
        %v1736 = vpop.permute.xlu0 %1735
        %v1737 = vsel %vm859, %v1714, %v1716
        %v1738 = vsel %vm859, %v1716, %v1718
        %v1739 = vsel %vm859, %v1720, %v1722
        %v1740 = vsel %vm859, %v1722, %v1724
        %v1741 = vsel %vm859, %v1726, %v1728
        %v1742 = vsel %vm859, %v1728, %v1730
        %v1743 = vsel %vm859, %v1732, %v1734
        %v1744 = vsel %vm859, %v1734, %v1736
        %v1753 = vadd.f32 %v1661, %v1737
        %v1754 = vadd.f32 %v1662, %v1738
        %v1755 = vadd.f32 %v1663, %v1739
        %v1756 = vadd.f32 %v1664, %v1740
        %v1757 = vadd.f32 %v1665, %v1741
        %v1758 = vadd.f32 %v1666, %v1742
        %v1759 = vadd.f32 %v1667, %v1743
        %v1760 = vadd.f32 %v1668, %v1744
        %s1761 = scalar_lea.vmem %s4, 16
        %v1762 = vld [vmem:[%s1761] ss:$8 sm:$0x3]
        %v1764 = vlaneseq
        %v1765 = vshrl.u32 %v1764, 7
        %v1766 = vsub.s32 0, %v1765
        %v1767 = vrot.slane %v1762, %v1766
        %v1768 = vlaneseq
        %v1769 = vshrl.u32 %v1768, 7
        %v1770 = vsub.s32 1, %v1769
        %v1771 = vrot.slane %v1762, %v1770
        %1772 = vrot.lane.b32.xlu0 %v1767, 8
        %v1773 = vpop.permute.xlu0 %1772
        %1774 = vrot.lane.b32.xlu0 %v1771, 8
        %v1775 = vpop.permute.xlu0 %1774
        %v1776 = vsel %vm759, %v1773, %v1775
        %v1780 = vmul.f32 %v1078, %v1773
        %v1781 = vmul.f32 %v1079, %v1776
        %v1782 = vmul.f32 %v1114, %v1775
        %v1783 = vmul.f32 %v1080, %v1773
        %v1784 = vmul.f32 %v1081, %v1776
        %v1785 = vmul.f32 %v1115, %v1775
        %v1786 = vmul.f32 %v1082, %v1773
        %v1787 = vmul.f32 %v1083, %v1776
        %v1788 = vmul.f32 %v1116, %v1775
        %v1789 = vmul.f32 %v1084, %v1773
        %v1790 = vmul.f32 %v1085, %v1776
        %v1791 = vmul.f32 %v1117, %v1775
        %1804 = vrot.lane.b32.xlu0 %v1780, 120
        %v1805 = vpop.permute.xlu0 %1804
        %1806 = vrot.lane.b32.xlu0 %v1781, 120
        %v1807 = vpop.permute.xlu0 %1806
        %1808 = vrot.lane.b32.xlu0 %v1782, 120
        %v1809 = vpop.permute.xlu0 %1808
        %1810 = vrot.lane.b32.xlu0 %v1783, 120
        %v1811 = vpop.permute.xlu0 %1810
        %1812 = vrot.lane.b32.xlu0 %v1784, 120
        %v1813 = vpop.permute.xlu0 %1812
        %1814 = vrot.lane.b32.xlu0 %v1785, 120
        %v1815 = vpop.permute.xlu0 %1814
        %1816 = vrot.lane.b32.xlu0 %v1786, 120
        %v1817 = vpop.permute.xlu0 %1816
        %1818 = vrot.lane.b32.xlu0 %v1787, 120
        %v1819 = vpop.permute.xlu0 %1818
        %1820 = vrot.lane.b32.xlu0 %v1788, 120
        %v1821 = vpop.permute.xlu0 %1820
        %1822 = vrot.lane.b32.xlu0 %v1789, 120
        %v1823 = vpop.permute.xlu0 %1822
        %1824 = vrot.lane.b32.xlu0 %v1790, 120
        %v1825 = vpop.permute.xlu0 %1824
        %1826 = vrot.lane.b32.xlu0 %v1791, 120
        %v1827 = vpop.permute.xlu0 %1826
        %v1828 = vsel %vm870, %v1805, %v1807
        %v1829 = vsel %vm870, %v1807, %v1809
        %v1830 = vsel %vm870, %v1811, %v1813
        %v1831 = vsel %vm870, %v1813, %v1815
        %v1832 = vsel %vm870, %v1817, %v1819
        %v1833 = vsel %vm870, %v1819, %v1821
        %v1834 = vsel %vm870, %v1823, %v1825
        %v1835 = vsel %vm870, %v1825, %v1827
        %v1844 = vadd.f32 %v1753, %v1828
        %v1845 = vadd.f32 %v1754, %v1829
        %v1846 = vadd.f32 %v1755, %v1830
        %v1847 = vadd.f32 %v1756, %v1831
        %v1848 = vadd.f32 %v1757, %v1832
        %v1849 = vadd.f32 %v1758, %v1833
        %v1850 = vadd.f32 %v1759, %v1834
        %v1851 = vadd.f32 %v1760, %v1835
        %s1852 = scalar_lea.vmem %s4, 17
        %v1853 = vld [vmem:[%s1852] ss:$8 sm:$0x3]
        %v1855 = vlaneseq
        %v1856 = vshrl.u32 %v1855, 7
        %v1857 = vsub.s32 0, %v1856
        %v1858 = vrot.slane %v1853, %v1857
        %v1859 = vlaneseq
        %v1860 = vshrl.u32 %v1859, 7
        %v1861 = vsub.s32 1, %v1860
        %v1862 = vrot.slane %v1853, %v1861
        %1863 = vrot.lane.b32.xlu0 %v1858, 9
        %v1864 = vpop.permute.xlu0 %1863
        %1865 = vrot.lane.b32.xlu0 %v1862, 9
        %v1866 = vpop.permute.xlu0 %1865
        %v1867 = vsel %vm908, %v1864, %v1866
        %v1871 = vmul.f32 %v1078, %v1864
        %v1872 = vmul.f32 %v1079, %v1867
        %v1873 = vmul.f32 %v1114, %v1866
        %v1874 = vmul.f32 %v1080, %v1864
        %v1875 = vmul.f32 %v1081, %v1867
        %v1876 = vmul.f32 %v1115, %v1866
        %v1877 = vmul.f32 %v1082, %v1864
        %v1878 = vmul.f32 %v1083, %v1867
        %v1879 = vmul.f32 %v1116, %v1866
        %v1880 = vmul.f32 %v1084, %v1864
        %v1881 = vmul.f32 %v1085, %v1867
        %v1882 = vmul.f32 %v1117, %v1866
        %1895 = vrot.lane.b32.xlu0 %v1871, 119
        %v1896 = vpop.permute.xlu0 %1895
        %1897 = vrot.lane.b32.xlu0 %v1872, 119
        %v1898 = vpop.permute.xlu0 %1897
        %1899 = vrot.lane.b32.xlu0 %v1873, 119
        %v1900 = vpop.permute.xlu0 %1899
        %1901 = vrot.lane.b32.xlu0 %v1874, 119
        %v1902 = vpop.permute.xlu0 %1901
        %1903 = vrot.lane.b32.xlu0 %v1875, 119
        %v1904 = vpop.permute.xlu0 %1903
        %1905 = vrot.lane.b32.xlu0 %v1876, 119
        %v1906 = vpop.permute.xlu0 %1905
        %1907 = vrot.lane.b32.xlu0 %v1877, 119
        %v1908 = vpop.permute.xlu0 %1907
        %1909 = vrot.lane.b32.xlu0 %v1878, 119
        %v1910 = vpop.permute.xlu0 %1909
        %1911 = vrot.lane.b32.xlu0 %v1879, 119
        %v1912 = vpop.permute.xlu0 %1911
        %1913 = vrot.lane.b32.xlu0 %v1880, 119
        %v1914 = vpop.permute.xlu0 %1913
        %1915 = vrot.lane.b32.xlu0 %v1881, 119
        %v1916 = vpop.permute.xlu0 %1915
        %1917 = vrot.lane.b32.xlu0 %v1882, 119
        %v1918 = vpop.permute.xlu0 %1917
        %vm1919 = vcmask 973824
        %v1920 = vsel %vm1919, %v1896, %v1898
        %v1921 = vsel %vm1919, %v1898, %v1900
        %v1922 = vsel %vm1919, %v1902, %v1904
        %v1923 = vsel %vm1919, %v1904, %v1906
        %v1924 = vsel %vm1919, %v1908, %v1910
        %v1925 = vsel %vm1919, %v1910, %v1912
        %v1926 = vsel %vm1919, %v1914, %v1916
        %v1927 = vsel %vm1919, %v1916, %v1918
        %v1936 = vadd.f32 %v1844, %v1920
        %v1937 = vadd.f32 %v1845, %v1921
        %v1938 = vadd.f32 %v1846, %v1922
        %v1939 = vadd.f32 %v1847, %v1923
        %v1940 = vadd.f32 %v1848, %v1924
        %v1941 = vadd.f32 %v1849, %v1925
        %v1942 = vadd.f32 %v1850, %v1926
        %v1943 = vadd.f32 %v1851, %v1927
        %s1944 = scalar_lea.vmem %s4, 18
        %v1945 = vld [vmem:[%s1944] ss:$8 sm:$0x3]
        %v1947 = vlaneseq
        %v1948 = vshrl.u32 %v1947, 7
        %v1949 = vsub.s32 0, %v1948
        %v1950 = vrot.slane %v1945, %v1949
        %v1951 = vlaneseq
        %v1952 = vshrl.u32 %v1951, 7
        %v1953 = vsub.s32 1, %v1952
        %v1954 = vrot.slane %v1945, %v1953
        %1955 = vrot.lane.b32.xlu0 %v1950, 10
        %v1956 = vpop.permute.xlu0 %1955
        %1957 = vrot.lane.b32.xlu0 %v1954, 10
        %v1958 = vpop.permute.xlu0 %1957
        %vm1959 = vcmask 80896
        %v1960 = vsel %vm1959, %v1956, %v1958
        %v1964 = vmul.f32 %v1078, %v1956
        %v1965 = vmul.f32 %v1079, %v1960
        %v1966 = vmul.f32 %v1114, %v1958
        %v1967 = vmul.f32 %v1080, %v1956
        %v1968 = vmul.f32 %v1081, %v1960
        %v1969 = vmul.f32 %v1115, %v1958
        %v1970 = vmul.f32 %v1082, %v1956
        %v1971 = vmul.f32 %v1083, %v1960
        %v1972 = vmul.f32 %v1116, %v1958
        %v1973 = vmul.f32 %v1084, %v1956
        %v1974 = vmul.f32 %v1085, %v1960
        %v1975 = vmul.f32 %v1117, %v1958
        %1988 = vrot.lane.b32.xlu0 %v1964, 118
        %v1989 = vpop.permute.xlu0 %1988
        %1990 = vrot.lane.b32.xlu0 %v1965, 118
        %v1991 = vpop.permute.xlu0 %1990
        %1992 = vrot.lane.b32.xlu0 %v1966, 118
        %v1993 = vpop.permute.xlu0 %1992
        %1994 = vrot.lane.b32.xlu0 %v1967, 118
        %v1995 = vpop.permute.xlu0 %1994
        %1996 = vrot.lane.b32.xlu0 %v1968, 118
        %v1997 = vpop.permute.xlu0 %1996
        %1998 = vrot.lane.b32.xlu0 %v1969, 118
        %v1999 = vpop.permute.xlu0 %1998
        %2000 = vrot.lane.b32.xlu0 %v1970, 118
        %v2001 = vpop.permute.xlu0 %2000
        %2002 = vrot.lane.b32.xlu0 %v1971, 118
        %v2003 = vpop.permute.xlu0 %2002
        %2004 = vrot.lane.b32.xlu0 %v1972, 118
        %v2005 = vpop.permute.xlu0 %2004
        %2006 = vrot.lane.b32.xlu0 %v1973, 118
        %v2007 = vpop.permute.xlu0 %2006
        %2008 = vrot.lane.b32.xlu0 %v1974, 118
        %v2009 = vpop.permute.xlu0 %2008
        %2010 = vrot.lane.b32.xlu0 %v1975, 118
        %v2011 = vpop.permute.xlu0 %2010
        %vm2012 = vcmask 965632
        %v2013 = vsel %vm2012, %v1989, %v1991
        %v2014 = vsel %vm2012, %v1991, %v1993
        %v2015 = vsel %vm2012, %v1995, %v1997
        %v2016 = vsel %vm2012, %v1997, %v1999
        %v2017 = vsel %vm2012, %v2001, %v2003
        %v2018 = vsel %vm2012, %v2003, %v2005
        %v2019 = vsel %vm2012, %v2007, %v2009
        %v2020 = vsel %vm2012, %v2009, %v2011
        %v2029 = vadd.f32 %v1936, %v2013
        %v2030 = vadd.f32 %v1937, %v2014
        %v2031 = vadd.f32 %v1938, %v2015
        %v2032 = vadd.f32 %v1939, %v2016
        %v2033 = vadd.f32 %v1940, %v2017
        %v2034 = vadd.f32 %v1941, %v2018
        %v2035 = vadd.f32 %v1942, %v2019
        %v2036 = vadd.f32 %v1943, %v2020
        %s2037 = scalar_lea.vmem %s4, 19
        %v2038 = vld [vmem:[%s2037] ss:$8 sm:$0x3]
        %v2040 = vlaneseq
        %v2041 = vshrl.u32 %v2040, 7
        %v2042 = vsub.s32 0, %v2041
        %v2043 = vrot.slane %v2038, %v2042
        %v2044 = vlaneseq
        %v2045 = vshrl.u32 %v2044, 7
        %v2046 = vsub.s32 1, %v2045
        %v2047 = vrot.slane %v2038, %v2046
        %2048 = vrot.lane.b32.xlu0 %v2043, 11
        %v2049 = vpop.permute.xlu0 %2048
        %2050 = vrot.lane.b32.xlu0 %v2047, 11
        %v2051 = vpop.permute.xlu0 %2050
        %vm2052 = vcmask 89088
        %v2053 = vsel %vm2052, %v2049, %v2051
        %v2057 = vmul.f32 %v1078, %v2049
        %v2058 = vmul.f32 %v1079, %v2053
        %v2059 = vmul.f32 %v1114, %v2051
        %v2060 = vmul.f32 %v1080, %v2049
        %v2061 = vmul.f32 %v1081, %v2053
        %v2062 = vmul.f32 %v1115, %v2051
        %v2063 = vmul.f32 %v1082, %v2049
        %v2064 = vmul.f32 %v1083, %v2053
        %v2065 = vmul.f32 %v1116, %v2051
        %v2066 = vmul.f32 %v1084, %v2049
        %v2067 = vmul.f32 %v1085, %v2053
        %v2068 = vmul.f32 %v1117, %v2051
        %2081 = vrot.lane.b32.xlu0 %v2057, 117
        %v2082 = vpop.permute.xlu0 %2081
        %2083 = vrot.lane.b32.xlu0 %v2058, 117
        %v2084 = vpop.permute.xlu0 %2083
        %2085 = vrot.lane.b32.xlu0 %v2059, 117
        %v2086 = vpop.permute.xlu0 %2085
        %2087 = vrot.lane.b32.xlu0 %v2060, 117
        %v2088 = vpop.permute.xlu0 %2087
        %2089 = vrot.lane.b32.xlu0 %v2061, 117
        %v2090 = vpop.permute.xlu0 %2089
        %2091 = vrot.lane.b32.xlu0 %v2062, 117
        %v2092 = vpop.permute.xlu0 %2091
        %2093 = vrot.lane.b32.xlu0 %v2063, 117
        %v2094 = vpop.permute.xlu0 %2093
        %2095 = vrot.lane.b32.xlu0 %v2064, 117
        %v2096 = vpop.permute.xlu0 %2095
        %2097 = vrot.lane.b32.xlu0 %v2065, 117
        %v2098 = vpop.permute.xlu0 %2097
        %2099 = vrot.lane.b32.xlu0 %v2066, 117
        %v2100 = vpop.permute.xlu0 %2099
        %2101 = vrot.lane.b32.xlu0 %v2067, 117
        %v2102 = vpop.permute.xlu0 %2101
        %2103 = vrot.lane.b32.xlu0 %v2068, 117
        %v2104 = vpop.permute.xlu0 %2103
        %vm2105 = vcmask 957440
        %v2106 = vsel %vm2105, %v2082, %v2084
        %v2107 = vsel %vm2105, %v2084, %v2086
        %v2108 = vsel %vm2105, %v2088, %v2090
        %v2109 = vsel %vm2105, %v2090, %v2092
        %v2110 = vsel %vm2105, %v2094, %v2096
        %v2111 = vsel %vm2105, %v2096, %v2098
        %v2112 = vsel %vm2105, %v2100, %v2102
        %v2113 = vsel %vm2105, %v2102, %v2104
        %v2122 = vadd.f32 %v2029, %v2106
        %v2123 = vadd.f32 %v2030, %v2107
        %v2124 = vadd.f32 %v2031, %v2108
        %v2125 = vadd.f32 %v2032, %v2109
        %v2126 = vadd.f32 %v2033, %v2110
        %v2127 = vadd.f32 %v2034, %v2111
        %v2128 = vadd.f32 %v2035, %v2112
        %v2129 = vadd.f32 %v2036, %v2113
        %s2130 = scalar_lea.vmem %s4, 20
        %v2131 = vld [vmem:[%s2130] ss:$8 sm:$0x3]
        %v2133 = vlaneseq
        %v2134 = vshrl.u32 %v2133, 7
        %v2135 = vsub.s32 0, %v2134
        %v2136 = vrot.slane %v2131, %v2135
        %v2137 = vlaneseq
        %v2138 = vshrl.u32 %v2137, 7
        %v2139 = vsub.s32 1, %v2138
        %v2140 = vrot.slane %v2131, %v2139
        %2141 = vrot.lane.b32.xlu0 %v2136, 12
        %v2142 = vpop.permute.xlu0 %2141
        %2143 = vrot.lane.b32.xlu0 %v2140, 12
        %v2144 = vpop.permute.xlu0 %2143
        %vm2145 = vcmask 97280
        %v2146 = vsel %vm2145, %v2142, %v2144
        %v2150 = vmul.f32 %v1078, %v2142
        %v2151 = vmul.f32 %v1079, %v2146
        %v2152 = vmul.f32 %v1114, %v2144
        %v2153 = vmul.f32 %v1080, %v2142
        %v2154 = vmul.f32 %v1081, %v2146
        %v2155 = vmul.f32 %v1115, %v2144
        %v2156 = vmul.f32 %v1082, %v2142
        %v2157 = vmul.f32 %v1083, %v2146
        %v2158 = vmul.f32 %v1116, %v2144
        %v2159 = vmul.f32 %v1084, %v2142
        %v2160 = vmul.f32 %v1085, %v2146
        %v2161 = vmul.f32 %v1117, %v2144
        %2174 = vrot.lane.b32.xlu0 %v2150, 116
        %v2175 = vpop.permute.xlu0 %2174
        %2176 = vrot.lane.b32.xlu0 %v2151, 116
        %v2177 = vpop.permute.xlu0 %2176
        %2178 = vrot.lane.b32.xlu0 %v2152, 116
        %v2179 = vpop.permute.xlu0 %2178
        %2180 = vrot.lane.b32.xlu0 %v2153, 116
        %v2181 = vpop.permute.xlu0 %2180
        %2182 = vrot.lane.b32.xlu0 %v2154, 116
        %v2183 = vpop.permute.xlu0 %2182
        %2184 = vrot.lane.b32.xlu0 %v2155, 116
        %v2185 = vpop.permute.xlu0 %2184
        %2186 = vrot.lane.b32.xlu0 %v2156, 116
        %v2187 = vpop.permute.xlu0 %2186
        %2188 = vrot.lane.b32.xlu0 %v2157, 116
        %v2189 = vpop.permute.xlu0 %2188
        %2190 = vrot.lane.b32.xlu0 %v2158, 116
        %v2191 = vpop.permute.xlu0 %2190
        %2192 = vrot.lane.b32.xlu0 %v2159, 116
        %v2193 = vpop.permute.xlu0 %2192
        %2194 = vrot.lane.b32.xlu0 %v2160, 116
        %v2195 = vpop.permute.xlu0 %2194
        %2196 = vrot.lane.b32.xlu0 %v2161, 116
        %v2197 = vpop.permute.xlu0 %2196
        %vm2198 = vcmask 949248
        %v2199 = vsel %vm2198, %v2175, %v2177
        %v2200 = vsel %vm2198, %v2177, %v2179
        %v2201 = vsel %vm2198, %v2181, %v2183
        %v2202 = vsel %vm2198, %v2183, %v2185
        %v2203 = vsel %vm2198, %v2187, %v2189
        %v2204 = vsel %vm2198, %v2189, %v2191
        %v2205 = vsel %vm2198, %v2193, %v2195
        %v2206 = vsel %vm2198, %v2195, %v2197
        %v2215 = vadd.f32 %v2122, %v2199
        %v2216 = vadd.f32 %v2123, %v2200
        %v2217 = vadd.f32 %v2124, %v2201
        %v2218 = vadd.f32 %v2125, %v2202
        %v2219 = vadd.f32 %v2126, %v2203
        %v2220 = vadd.f32 %v2127, %v2204
        %v2221 = vadd.f32 %v2128, %v2205
        %v2222 = vadd.f32 %v2129, %v2206
        %s2223 = scalar_lea.vmem %s4, 21
        %v2224 = vld [vmem:[%s2223] ss:$8 sm:$0x3]
        %v2226 = vlaneseq
        %v2227 = vshrl.u32 %v2226, 7
        %v2228 = vsub.s32 0, %v2227
        %v2229 = vrot.slane %v2224, %v2228
        %v2230 = vlaneseq
        %v2231 = vshrl.u32 %v2230, 7
        %v2232 = vsub.s32 1, %v2231
        %v2233 = vrot.slane %v2224, %v2232
        %2234 = vrot.lane.b32.xlu0 %v2229, 13
        %v2235 = vpop.permute.xlu0 %2234
        %2236 = vrot.lane.b32.xlu0 %v2233, 13
        %v2237 = vpop.permute.xlu0 %2236
        %vm2238 = vcmask 105472
        %v2239 = vsel %vm2238, %v2235, %v2237
        %v2243 = vmul.f32 %v1078, %v2235
        %v2244 = vmul.f32 %v1079, %v2239
        %v2245 = vmul.f32 %v1114, %v2237
        %v2246 = vmul.f32 %v1080, %v2235
        %v2247 = vmul.f32 %v1081, %v2239
        %v2248 = vmul.f32 %v1115, %v2237
        %v2249 = vmul.f32 %v1082, %v2235
        %v2250 = vmul.f32 %v1083, %v2239
        %v2251 = vmul.f32 %v1116, %v2237
        %v2252 = vmul.f32 %v1084, %v2235
        %v2253 = vmul.f32 %v1085, %v2239
        %v2254 = vmul.f32 %v1117, %v2237
        %2267 = vrot.lane.b32.xlu0 %v2243, 115
        %v2268 = vpop.permute.xlu0 %2267
        %2269 = vrot.lane.b32.xlu0 %v2244, 115
        %v2270 = vpop.permute.xlu0 %2269
        %2271 = vrot.lane.b32.xlu0 %v2245, 115
        %v2272 = vpop.permute.xlu0 %2271
        %2273 = vrot.lane.b32.xlu0 %v2246, 115
        %v2274 = vpop.permute.xlu0 %2273
        %2275 = vrot.lane.b32.xlu0 %v2247, 115
        %v2276 = vpop.permute.xlu0 %2275
        %2277 = vrot.lane.b32.xlu0 %v2248, 115
        %v2278 = vpop.permute.xlu0 %2277
        %2279 = vrot.lane.b32.xlu0 %v2249, 115
        %v2280 = vpop.permute.xlu0 %2279
        %2281 = vrot.lane.b32.xlu0 %v2250, 115
        %v2282 = vpop.permute.xlu0 %2281
        %2283 = vrot.lane.b32.xlu0 %v2251, 115
        %v2284 = vpop.permute.xlu0 %2283
        %2285 = vrot.lane.b32.xlu0 %v2252, 115
        %v2286 = vpop.permute.xlu0 %2285
        %2287 = vrot.lane.b32.xlu0 %v2253, 115
        %v2288 = vpop.permute.xlu0 %2287
        %2289 = vrot.lane.b32.xlu0 %v2254, 115
        %v2290 = vpop.permute.xlu0 %2289
        %vm2291 = vcmask 941056
        %v2292 = vsel %vm2291, %v2268, %v2270
        %v2293 = vsel %vm2291, %v2270, %v2272
        %v2294 = vsel %vm2291, %v2274, %v2276
        %v2295 = vsel %vm2291, %v2276, %v2278
        %v2296 = vsel %vm2291, %v2280, %v2282
        %v2297 = vsel %vm2291, %v2282, %v2284
        %v2298 = vsel %vm2291, %v2286, %v2288
        %v2299 = vsel %vm2291, %v2288, %v2290
        %v2308 = vadd.f32 %v2215, %v2292
        %v2309 = vadd.f32 %v2216, %v2293
        %v2310 = vadd.f32 %v2217, %v2294
        %v2311 = vadd.f32 %v2218, %v2295
        %v2312 = vadd.f32 %v2219, %v2296
        %v2313 = vadd.f32 %v2220, %v2297
        %v2314 = vadd.f32 %v2221, %v2298
        %v2315 = vadd.f32 %v2222, %v2299
        %s2316 = scalar_lea.vmem %s4, 22
        %v2317 = vld [vmem:[%s2316] ss:$8 sm:$0x3]
        %v2319 = vlaneseq
        %v2320 = vshrl.u32 %v2319, 7
        %v2321 = vsub.s32 0, %v2320
        %v2322 = vrot.slane %v2317, %v2321
        %v2323 = vlaneseq
        %v2324 = vshrl.u32 %v2323, 7
        %v2325 = vsub.s32 1, %v2324
        %v2326 = vrot.slane %v2317, %v2325
        %2327 = vrot.lane.b32.xlu0 %v2322, 14
        %v2328 = vpop.permute.xlu0 %2327
        %2329 = vrot.lane.b32.xlu0 %v2326, 14
        %v2330 = vpop.permute.xlu0 %2329
        %vm2331 = vcmask 113664
        %v2332 = vsel %vm2331, %v2328, %v2330
        %v2336 = vmul.f32 %v1078, %v2328
        %v2337 = vmul.f32 %v1079, %v2332
        %v2338 = vmul.f32 %v1114, %v2330
        %v2339 = vmul.f32 %v1080, %v2328
        %v2340 = vmul.f32 %v1081, %v2332
        %v2341 = vmul.f32 %v1115, %v2330
        %v2342 = vmul.f32 %v1082, %v2328
        %v2343 = vmul.f32 %v1083, %v2332
        %v2344 = vmul.f32 %v1116, %v2330
        %v2345 = vmul.f32 %v1084, %v2328
        %v2346 = vmul.f32 %v1085, %v2332
        %v2347 = vmul.f32 %v1117, %v2330
        %2360 = vrot.lane.b32.xlu0 %v2336, 114
        %v2361 = vpop.permute.xlu0 %2360
        %2362 = vrot.lane.b32.xlu0 %v2337, 114
        %v2363 = vpop.permute.xlu0 %2362
        %2364 = vrot.lane.b32.xlu0 %v2338, 114
        %v2365 = vpop.permute.xlu0 %2364
        %2366 = vrot.lane.b32.xlu0 %v2339, 114
        %v2367 = vpop.permute.xlu0 %2366
        %2368 = vrot.lane.b32.xlu0 %v2340, 114
        %v2369 = vpop.permute.xlu0 %2368
        %2370 = vrot.lane.b32.xlu0 %v2341, 114
        %v2371 = vpop.permute.xlu0 %2370
        %2372 = vrot.lane.b32.xlu0 %v2342, 114
        %v2373 = vpop.permute.xlu0 %2372
        %2374 = vrot.lane.b32.xlu0 %v2343, 114
        %v2375 = vpop.permute.xlu0 %2374
        %2376 = vrot.lane.b32.xlu0 %v2344, 114
        %v2377 = vpop.permute.xlu0 %2376
        %2378 = vrot.lane.b32.xlu0 %v2345, 114
        %v2379 = vpop.permute.xlu0 %2378
        %2380 = vrot.lane.b32.xlu0 %v2346, 114
        %v2381 = vpop.permute.xlu0 %2380
        %2382 = vrot.lane.b32.xlu0 %v2347, 114
        %v2383 = vpop.permute.xlu0 %2382
        %vm2384 = vcmask 932864
        %v2385 = vsel %vm2384, %v2361, %v2363
        %v2386 = vsel %vm2384, %v2363, %v2365
        %v2387 = vsel %vm2384, %v2367, %v2369
        %v2388 = vsel %vm2384, %v2369, %v2371
        %v2389 = vsel %vm2384, %v2373, %v2375
        %v2390 = vsel %vm2384, %v2375, %v2377
        %v2391 = vsel %vm2384, %v2379, %v2381
        %v2392 = vsel %vm2384, %v2381, %v2383
        %v2401 = vadd.f32 %v2308, %v2385
        %v2402 = vadd.f32 %v2309, %v2386
        %v2403 = vadd.f32 %v2310, %v2387
        %v2404 = vadd.f32 %v2311, %v2388
        %v2405 = vadd.f32 %v2312, %v2389
        %v2406 = vadd.f32 %v2313, %v2390
        %v2407 = vadd.f32 %v2314, %v2391
        %v2408 = vadd.f32 %v2315, %v2392
        %s2409 = scalar_lea.vmem %s4, 23
        %v2410 = vld [vmem:[%s2409] ss:$8 sm:$0x3]
        %v2412 = vlaneseq
        %v2413 = vshrl.u32 %v2412, 7
        %v2414 = vsub.s32 0, %v2413
        %v2415 = vrot.slane %v2410, %v2414
        %v2416 = vlaneseq
        %v2417 = vshrl.u32 %v2416, 7
        %v2418 = vsub.s32 1, %v2417
        %v2419 = vrot.slane %v2410, %v2418
        %2420 = vrot.lane.b32.xlu0 %v2415, 15
        %v2421 = vpop.permute.xlu0 %2420
        %2422 = vrot.lane.b32.xlu0 %v2419, 15
        %v2423 = vpop.permute.xlu0 %2422
        %vm2424 = vcmask 121856
        %v2425 = vsel %vm2424, %v2421, %v2423
        %v2429 = vmul.f32 %v1078, %v2421
        %v2430 = vmul.f32 %v1079, %v2425
        %v2431 = vmul.f32 %v1114, %v2423
        %v2432 = vmul.f32 %v1080, %v2421
        %v2433 = vmul.f32 %v1081, %v2425
        %v2434 = vmul.f32 %v1115, %v2423
        %v2435 = vmul.f32 %v1082, %v2421
        %v2436 = vmul.f32 %v1083, %v2425
        %v2437 = vmul.f32 %v1116, %v2423
        %v2438 = vmul.f32 %v1084, %v2421
        %v2439 = vmul.f32 %v1085, %v2425
        %v2440 = vmul.f32 %v1117, %v2423
        %2453 = vrot.lane.b32.xlu0 %v2429, 113
        %v2454 = vpop.permute.xlu0 %2453
        %2455 = vrot.lane.b32.xlu0 %v2430, 113
        %v2456 = vpop.permute.xlu0 %2455
        %2457 = vrot.lane.b32.xlu0 %v2431, 113
        %v2458 = vpop.permute.xlu0 %2457
        %2459 = vrot.lane.b32.xlu0 %v2432, 113
        %v2460 = vpop.permute.xlu0 %2459
        %2461 = vrot.lane.b32.xlu0 %v2433, 113
        %v2462 = vpop.permute.xlu0 %2461
        %2463 = vrot.lane.b32.xlu0 %v2434, 113
        %v2464 = vpop.permute.xlu0 %2463
        %2465 = vrot.lane.b32.xlu0 %v2435, 113
        %v2466 = vpop.permute.xlu0 %2465
        %2467 = vrot.lane.b32.xlu0 %v2436, 113
        %v2468 = vpop.permute.xlu0 %2467
        %2469 = vrot.lane.b32.xlu0 %v2437, 113
        %v2470 = vpop.permute.xlu0 %2469
        %2471 = vrot.lane.b32.xlu0 %v2438, 113
        %v2472 = vpop.permute.xlu0 %2471
        %2473 = vrot.lane.b32.xlu0 %v2439, 113
        %v2474 = vpop.permute.xlu0 %2473
        %2475 = vrot.lane.b32.xlu0 %v2440, 113
        %v2476 = vpop.permute.xlu0 %2475
        %vm2477 = vcmask 924672
        %v2478 = vsel %vm2477, %v2454, %v2456
        %v2479 = vsel %vm2477, %v2456, %v2458
        %v2480 = vsel %vm2477, %v2460, %v2462
        %v2481 = vsel %vm2477, %v2462, %v2464
        %v2482 = vsel %vm2477, %v2466, %v2468
        %v2483 = vsel %vm2477, %v2468, %v2470
        %v2484 = vsel %vm2477, %v2472, %v2474
        %v2485 = vsel %vm2477, %v2474, %v2476
        %v2494 = vadd.f32 %v2401, %v2478
        %v2495 = vadd.f32 %v2402, %v2479
        %v2496 = vadd.f32 %v2403, %v2480
        %v2497 = vadd.f32 %v2404, %v2481
        %v2498 = vadd.f32 %v2405, %v2482
        %v2499 = vadd.f32 %v2406, %v2483
        %v2500 = vadd.f32 %v2407, %v2484
        %v2501 = vadd.f32 %v2408, %v2485
        %s2502 = scalar_lea.vmem %s4, 32
        %v2503 = vld [vmem:[%s2502] ss:$8 sm:$0x3]
        %v2505 = vlaneseq
        %v2506 = vshrl.u32 %v2505, 7
        %v2507 = vsub.s32 0, %v2506
        %v2508 = vrot.slane %v2503, %v2507
        %v2509 = vlaneseq
        %v2510 = vshrl.u32 %v2509, 7
        %v2511 = vsub.s32 1, %v2510
        %v2512 = vrot.slane %v2503, %v2511
        %2513 = vrot.lane.b32.xlu0 %v2508, 16
        %v2514 = vpop.permute.xlu0 %2513
        %2515 = vrot.lane.b32.xlu0 %v2512, 16
        %v2516 = vpop.permute.xlu0 %2515
        %vm2517 = vcmask 130048
        %v2518 = vsel %vm2517, %v2514, %v2516
        %v2522 = vmul.f32 %v1078, %v2514
        %v2523 = vmul.f32 %v1079, %v2518
        %v2524 = vmul.f32 %v1114, %v2516
        %v2525 = vmul.f32 %v1080, %v2514
        %v2526 = vmul.f32 %v1081, %v2518
        %v2527 = vmul.f32 %v1115, %v2516
        %v2528 = vmul.f32 %v1082, %v2514
        %v2529 = vmul.f32 %v1083, %v2518
        %v2530 = vmul.f32 %v1116, %v2516
        %v2531 = vmul.f32 %v1084, %v2514
        %v2532 = vmul.f32 %v1085, %v2518
        %v2533 = vmul.f32 %v1117, %v2516
        %2546 = vrot.lane.b32.xlu0 %v2522, 112
        %v2547 = vpop.permute.xlu0 %2546
        %2548 = vrot.lane.b32.xlu0 %v2523, 112
        %v2549 = vpop.permute.xlu0 %2548
        %2550 = vrot.lane.b32.xlu0 %v2524, 112
        %v2551 = vpop.permute.xlu0 %2550
        %2552 = vrot.lane.b32.xlu0 %v2525, 112
        %v2553 = vpop.permute.xlu0 %2552
        %2554 = vrot.lane.b32.xlu0 %v2526, 112
        %v2555 = vpop.permute.xlu0 %2554
        %2556 = vrot.lane.b32.xlu0 %v2527, 112
        %v2557 = vpop.permute.xlu0 %2556
        %2558 = vrot.lane.b32.xlu0 %v2528, 112
        %v2559 = vpop.permute.xlu0 %2558
        %2560 = vrot.lane.b32.xlu0 %v2529, 112
        %v2561 = vpop.permute.xlu0 %2560
        %2562 = vrot.lane.b32.xlu0 %v2530, 112
        %v2563 = vpop.permute.xlu0 %2562
        %2564 = vrot.lane.b32.xlu0 %v2531, 112
        %v2565 = vpop.permute.xlu0 %2564
        %2566 = vrot.lane.b32.xlu0 %v2532, 112
        %v2567 = vpop.permute.xlu0 %2566
        %2568 = vrot.lane.b32.xlu0 %v2533, 112
        %v2569 = vpop.permute.xlu0 %2568
        %vm2570 = vcmask 916480
        %v2571 = vsel %vm2570, %v2547, %v2549
        %v2572 = vsel %vm2570, %v2549, %v2551
        %v2573 = vsel %vm2570, %v2553, %v2555
        %v2574 = vsel %vm2570, %v2555, %v2557
        %v2575 = vsel %vm2570, %v2559, %v2561
        %v2576 = vsel %vm2570, %v2561, %v2563
        %v2577 = vsel %vm2570, %v2565, %v2567
        %v2578 = vsel %vm2570, %v2567, %v2569
        %v2587 = vadd.f32 %v2494, %v2571
        %v2588 = vadd.f32 %v2495, %v2572
        %v2589 = vadd.f32 %v2496, %v2573
        %v2590 = vadd.f32 %v2497, %v2574
        %v2591 = vadd.f32 %v2498, %v2575
        %v2592 = vadd.f32 %v2499, %v2576
        %v2593 = vadd.f32 %v2500, %v2577
        %v2594 = vadd.f32 %v2501, %v2578
        %s2595 = scalar_lea.vmem %s4, 33
        %v2596 = vld [vmem:[%s2595] ss:$8 sm:$0x3]
        %v2598 = vlaneseq
        %v2599 = vshrl.u32 %v2598, 7
        %v2600 = vsub.s32 0, %v2599
        %v2601 = vrot.slane %v2596, %v2600
        %v2602 = vlaneseq
        %v2603 = vshrl.u32 %v2602, 7
        %v2604 = vsub.s32 1, %v2603
        %v2605 = vrot.slane %v2596, %v2604
        %2606 = vrot.lane.b32.xlu0 %v2601, 17
        %v2607 = vpop.permute.xlu0 %2606
        %2608 = vrot.lane.b32.xlu0 %v2605, 17
        %v2609 = vpop.permute.xlu0 %2608
        %vm2610 = vcmask 138240
        %v2611 = vsel %vm2610, %v2607, %v2609
        %v2615 = vmul.f32 %v1078, %v2607
        %v2616 = vmul.f32 %v1079, %v2611
        %v2617 = vmul.f32 %v1114, %v2609
        %v2618 = vmul.f32 %v1080, %v2607
        %v2619 = vmul.f32 %v1081, %v2611
        %v2620 = vmul.f32 %v1115, %v2609
        %v2621 = vmul.f32 %v1082, %v2607
        %v2622 = vmul.f32 %v1083, %v2611
        %v2623 = vmul.f32 %v1116, %v2609
        %v2624 = vmul.f32 %v1084, %v2607
        %v2625 = vmul.f32 %v1085, %v2611
        %v2626 = vmul.f32 %v1117, %v2609
        %2639 = vrot.lane.b32.xlu0 %v2615, 111
        %v2640 = vpop.permute.xlu0 %2639
        %2641 = vrot.lane.b32.xlu0 %v2616, 111
        %v2642 = vpop.permute.xlu0 %2641
        %2643 = vrot.lane.b32.xlu0 %v2617, 111
        %v2644 = vpop.permute.xlu0 %2643
        %2645 = vrot.lane.b32.xlu0 %v2618, 111
        %v2646 = vpop.permute.xlu0 %2645
        %2647 = vrot.lane.b32.xlu0 %v2619, 111
        %v2648 = vpop.permute.xlu0 %2647
        %2649 = vrot.lane.b32.xlu0 %v2620, 111
        %v2650 = vpop.permute.xlu0 %2649
        %2651 = vrot.lane.b32.xlu0 %v2621, 111
        %v2652 = vpop.permute.xlu0 %2651
        %2653 = vrot.lane.b32.xlu0 %v2622, 111
        %v2654 = vpop.permute.xlu0 %2653
        %2655 = vrot.lane.b32.xlu0 %v2623, 111
        %v2656 = vpop.permute.xlu0 %2655
        %2657 = vrot.lane.b32.xlu0 %v2624, 111
        %v2658 = vpop.permute.xlu0 %2657
        %2659 = vrot.lane.b32.xlu0 %v2625, 111
        %v2660 = vpop.permute.xlu0 %2659
        %2661 = vrot.lane.b32.xlu0 %v2626, 111
        %v2662 = vpop.permute.xlu0 %2661
        %vm2663 = vcmask 908288
        %v2664 = vsel %vm2663, %v2640, %v2642
        %v2665 = vsel %vm2663, %v2642, %v2644
        %v2666 = vsel %vm2663, %v2646, %v2648
        %v2667 = vsel %vm2663, %v2648, %v2650
        %v2668 = vsel %vm2663, %v2652, %v2654
        %v2669 = vsel %vm2663, %v2654, %v2656
        %v2670 = vsel %vm2663, %v2658, %v2660
        %v2671 = vsel %vm2663, %v2660, %v2662
        %v2680 = vadd.f32 %v2587, %v2664
        %v2681 = vadd.f32 %v2588, %v2665
        %v2682 = vadd.f32 %v2589, %v2666
        %v2683 = vadd.f32 %v2590, %v2667
        %v2684 = vadd.f32 %v2591, %v2668
        %v2685 = vadd.f32 %v2592, %v2669
        %v2686 = vadd.f32 %v2593, %v2670
        %v2687 = vadd.f32 %v2594, %v2671
        %v2688 = vld [vmem:[%s5] sm:$0x3]
        %v2690 = vlaneseq
        %v2691 = vshrl.u32 %v2690, 7
        %v2692 = vsub.s32 0, %v2691
        %v2693 = vrot.slane %v2688, %v2692
        %v2694 = vlaneseq
        %v2695 = vshrl.u32 %v2694, 7
        %v2696 = vsub.s32 1, %v2695
        %v2697 = vrot.slane %v2688, %v2696
        %v2700 = vadd.f32 %v2680, %v2693
        %v2701 = vadd.f32 %v2681, %v2697
        %v2702 = vadd.f32 %v2682, %v2693
        %v2703 = vadd.f32 %v2683, %v2697
        %v2704 = vadd.f32 %v2684, %v2693
        %v2705 = vadd.f32 %v2685, %v2697
        %v2706 = vadd.f32 %v2686, %v2693
        %v2707 = vadd.f32 %v2687, %v2697
        %v2708 = vmax.f32 %v2700, 0.0
        %v2709 = vmax.f32 %v2701, 0.0
        %v2710 = vmax.f32 %v2702, 0.0
        %v2711 = vmax.f32 %v2703, 0.0
        %v2712 = vmax.f32 %v2704, 0.0
        %v2713 = vmax.f32 %v2705, 0.0
        %v2714 = vmax.f32 %v2706, 0.0
        %v2715 = vmax.f32 %v2707, 0.0
        %v2716 = vand.u32 2147483647, %v2700
        %v2717 = vand.u32 2147483647, %v2701
        %v2718 = vand.u32 2147483647, %v2702
        %v2719 = vand.u32 2147483647, %v2703
        %v2720 = vand.u32 2147483647, %v2704
        %v2721 = vand.u32 2147483647, %v2705
        %v2722 = vand.u32 2147483647, %v2706
        %v2723 = vand.u32 2147483647, %v2707
        %v2724 = vsub.f32 0.0, %v2716
        %v2725 = vsub.f32 0.0, %v2717
        %v2726 = vsub.f32 0.0, %v2718
        %v2727 = vsub.f32 0.0, %v2719
        %v2728 = vsub.f32 0.0, %v2720
        %v2729 = vsub.f32 0.0, %v2721
        %v2730 = vsub.f32 0.0, %v2722
        %v2731 = vsub.f32 0.0, %v2723
        %v2732 = vmul.f32 %v2724, 1.442695
        %v2733 = vpow.pop %v2732
        %v2734 = vmul.f32 %v2725, 1.442695
        %v2735 = vpow.pop %v2734
        %v2736 = vmul.f32 %v2726, 1.442695
        %v2737 = vpow.pop %v2736
        %v2738 = vmul.f32 %v2727, 1.442695
        %v2739 = vpow.pop %v2738
        %v2740 = vmul.f32 %v2728, 1.442695
        %v2741 = vpow.pop %v2740
        %v2742 = vmul.f32 %v2729, 1.442695
        %v2743 = vpow.pop %v2742
        %v2744 = vmul.f32 %v2730, 1.442695
        %v2745 = vpow.pop %v2744
        %v2746 = vmul.f32 %v2731, 1.442695
        %v2747 = vpow.pop %v2746
        %v2748 = vadd.f32 %v2733, 1.0
        %v2749 = vadd.f32 %v2735, 1.0
        %v2750 = vadd.f32 %v2737, 1.0
        %v2751 = vadd.f32 %v2739, 1.0
        %v2752 = vadd.f32 %v2741, 1.0
        %v2753 = vadd.f32 %v2743, 1.0
        %v2754 = vadd.f32 %v2745, 1.0
        %v2755 = vadd.f32 %v2747, 1.0
        %v2756 = vlog2.pop %v2748
        %v2757 = vmul.f32 %v2756, 0.6931472
        %v2758 = vlog2.pop %v2749
        %v2759 = vmul.f32 %v2758, 0.6931472
        %v2760 = vlog2.pop %v2750
        %v2761 = vmul.f32 %v2760, 0.6931472
        %v2762 = vlog2.pop %v2751
        %v2763 = vmul.f32 %v2762, 0.6931472
        %v2764 = vlog2.pop %v2752
        %v2765 = vmul.f32 %v2764, 0.6931472
        %v2766 = vlog2.pop %v2753
        %v2767 = vmul.f32 %v2766, 0.6931472
        %v2768 = vlog2.pop %v2754
        %v2769 = vmul.f32 %v2768, 0.6931472
        %v2770 = vlog2.pop %v2755
        %v2771 = vmul.f32 %v2770, 0.6931472
        %v2772 = vadd.f32 %v2708, %v2757
        %v2773 = vadd.f32 %v2709, %v2759
        %v2774 = vadd.f32 %v2710, %v2761
        %v2775 = vadd.f32 %v2711, %v2763
        %v2776 = vadd.f32 %v2712, %v2765
        %v2777 = vadd.f32 %v2713, %v2767
        %v2778 = vadd.f32 %v2714, %v2769
        %v2779 = vadd.f32 %v2715, %v2771
        %2780 = vst [vmem:[#allocation5] sm:$0xff] %v2772
        %2781 = vst [vmem:[#allocation5 + $0x8] sm:$0xff] %v2773
        %2782 = vst [vmem:[#allocation5 + $0x18] sm:$0xff] %v2774
        %2783 = vst [vmem:[#allocation5 + $0x20] sm:$0xff] %v2775
        %2784 = vst [vmem:[#allocation5 + $0x30] sm:$0xff] %v2776
        %2785 = vst [vmem:[#allocation5 + $0x38] sm:$0xff] %v2777
        %2786 = vst [vmem:[#allocation5 + $0x48] sm:$0xff] %v2778
        %2787 = vst [vmem:[#allocation5 + $0x50] sm:$0xff] %v2779
        %v2788 = vld [vmem:[#allocation5] sm:$0xff]
        %v2789 = vld [vmem:[#allocation5 + $0x8] sm:$0xff]
        %v2790 = vld [vmem:[#allocation5 + $0x18] sm:$0xff]
        %v2791 = vld [vmem:[#allocation5 + $0x20] sm:$0xff]
        %v2792 = vld [vmem:[#allocation5 + $0x30] sm:$0xff]
        %v2793 = vld [vmem:[#allocation5 + $0x38] sm:$0xff]
        %v2794 = vld [vmem:[#allocation5 + $0x48] sm:$0xff]
        %v2795 = vld [vmem:[#allocation5 + $0x50] sm:$0xff]
        %v2796 = vld [vmem:[#allocation5 + $0x10] sm:$0xff]
        %v2797 = vld [vmem:[#allocation5 + $0x28] sm:$0xff]
        %v2798 = vld [vmem:[#allocation5 + $0x40] sm:$0xff]
        %v2799 = vld [vmem:[#allocation5 + $0x58] sm:$0xff]
        %2812 = vrot.lane.b32.xlu0 %v2788, 127
        %v2813 = vpop.permute.xlu0 %2812
        %2814 = vrot.lane.b32.xlu0 %v2789, 127
        %v2815 = vpop.permute.xlu0 %2814
        %2816 = vrot.lane.b32.xlu0 %v2796, 127
        %v2817 = vpop.permute.xlu0 %2816
        %2818 = vrot.lane.b32.xlu0 %v2790, 127
        %v2819 = vpop.permute.xlu0 %2818
        %2820 = vrot.lane.b32.xlu0 %v2791, 127
        %v2821 = vpop.permute.xlu0 %2820
        %2822 = vrot.lane.b32.xlu0 %v2797, 127
        %v2823 = vpop.permute.xlu0 %2822
        %2824 = vrot.lane.b32.xlu0 %v2792, 127
        %v2825 = vpop.permute.xlu0 %2824
        %2826 = vrot.lane.b32.xlu0 %v2793, 127
        %v2827 = vpop.permute.xlu0 %2826
        %2828 = vrot.lane.b32.xlu0 %v2798, 127
        %v2829 = vpop.permute.xlu0 %2828
        %2830 = vrot.lane.b32.xlu0 %v2794, 127
        %v2831 = vpop.permute.xlu0 %2830
        %2832 = vrot.lane.b32.xlu0 %v2795, 127
        %v2833 = vpop.permute.xlu0 %2832
        %2834 = vrot.lane.b32.xlu0 %v2799, 127
        %v2835 = vpop.permute.xlu0 %2834
        %v2836 = vsel %vm793, %v2813, %v2815
        %v2837 = vsel %vm793, %v2815, %v2817
        %v2838 = vsel %vm793, %v2819, %v2821
        %v2839 = vsel %vm793, %v2821, %v2823
        %v2840 = vsel %vm793, %v2825, %v2827
        %v2841 = vsel %vm793, %v2827, %v2829
        %v2842 = vsel %vm793, %v2831, %v2833
        %v2843 = vsel %vm793, %v2833, %v2835
        %v2852 = vmax.f32 %v2788, %v2836
        %v2853 = vmax.f32 %v2789, %v2837
        %v2854 = vmax.f32 %v2790, %v2838
        %v2855 = vmax.f32 %v2791, %v2839
        %v2856 = vmax.f32 %v2792, %v2840
        %v2857 = vmax.f32 %v2793, %v2841
        %v2858 = vmax.f32 %v2794, %v2842
        %v2859 = vmax.f32 %v2795, %v2843
        %2860 = vrot.lane.b32.xlu0 %v2788, 126
        %v2861 = vpop.permute.xlu0 %2860
        %2862 = vrot.lane.b32.xlu0 %v2789, 126
        %v2863 = vpop.permute.xlu0 %2862
        %2864 = vrot.lane.b32.xlu0 %v2796, 126
        %v2865 = vpop.permute.xlu0 %2864
        %2866 = vrot.lane.b32.xlu0 %v2790, 126
        %v2867 = vpop.permute.xlu0 %2866
        %2868 = vrot.lane.b32.xlu0 %v2791, 126
        %v2869 = vpop.permute.xlu0 %2868
        %2870 = vrot.lane.b32.xlu0 %v2797, 126
        %v2871 = vpop.permute.xlu0 %2870
        %2872 = vrot.lane.b32.xlu0 %v2792, 126
        %v2873 = vpop.permute.xlu0 %2872
        %2874 = vrot.lane.b32.xlu0 %v2793, 126
        %v2875 = vpop.permute.xlu0 %2874
        %2876 = vrot.lane.b32.xlu0 %v2798, 126
        %v2877 = vpop.permute.xlu0 %2876
        %2878 = vrot.lane.b32.xlu0 %v2794, 126
        %v2879 = vpop.permute.xlu0 %2878
        %2880 = vrot.lane.b32.xlu0 %v2795, 126
        %v2881 = vpop.permute.xlu0 %2880
        %2882 = vrot.lane.b32.xlu0 %v2799, 126
        %v2883 = vpop.permute.xlu0 %2882
        %v2884 = vsel %vm804, %v2861, %v2863
        %v2885 = vsel %vm804, %v2863, %v2865
        %v2886 = vsel %vm804, %v2867, %v2869
        %v2887 = vsel %vm804, %v2869, %v2871
        %v2888 = vsel %vm804, %v2873, %v2875
        %v2889 = vsel %vm804, %v2875, %v2877
        %v2890 = vsel %vm804, %v2879, %v2881
        %v2891 = vsel %vm804, %v2881, %v2883
        %v2900 = vmax.f32 %v2852, %v2884
        %v2901 = vmax.f32 %v2853, %v2885
        %v2902 = vmax.f32 %v2854, %v2886
        %v2903 = vmax.f32 %v2855, %v2887
        %v2904 = vmax.f32 %v2856, %v2888
        %v2905 = vmax.f32 %v2857, %v2889
        %v2906 = vmax.f32 %v2858, %v2890
        %v2907 = vmax.f32 %v2859, %v2891
        %2908 = vrot.lane.b32.xlu0 %v2788, 125
        %v2909 = vpop.permute.xlu0 %2908
        %2910 = vrot.lane.b32.xlu0 %v2789, 125
        %v2911 = vpop.permute.xlu0 %2910
        %2912 = vrot.lane.b32.xlu0 %v2796, 125
        %v2913 = vpop.permute.xlu0 %2912
        %2914 = vrot.lane.b32.xlu0 %v2790, 125
        %v2915 = vpop.permute.xlu0 %2914
        %2916 = vrot.lane.b32.xlu0 %v2791, 125
        %v2917 = vpop.permute.xlu0 %2916
        %2918 = vrot.lane.b32.xlu0 %v2797, 125
        %v2919 = vpop.permute.xlu0 %2918
        %2920 = vrot.lane.b32.xlu0 %v2792, 125
        %v2921 = vpop.permute.xlu0 %2920
        %2922 = vrot.lane.b32.xlu0 %v2793, 125
        %v2923 = vpop.permute.xlu0 %2922
        %2924 = vrot.lane.b32.xlu0 %v2798, 125
        %v2925 = vpop.permute.xlu0 %2924
        %2926 = vrot.lane.b32.xlu0 %v2794, 125
        %v2927 = vpop.permute.xlu0 %2926
        %2928 = vrot.lane.b32.xlu0 %v2795, 125
        %v2929 = vpop.permute.xlu0 %2928
        %2930 = vrot.lane.b32.xlu0 %v2799, 125
        %v2931 = vpop.permute.xlu0 %2930
        %v2932 = vsel %vm815, %v2909, %v2911
        %v2933 = vsel %vm815, %v2911, %v2913
        %v2934 = vsel %vm815, %v2915, %v2917
        %v2935 = vsel %vm815, %v2917, %v2919
        %v2936 = vsel %vm815, %v2921, %v2923
        %v2937 = vsel %vm815, %v2923, %v2925
        %v2938 = vsel %vm815, %v2927, %v2929
        %v2939 = vsel %vm815, %v2929, %v2931
        %v2948 = vmax.f32 %v2900, %v2932
        %v2949 = vmax.f32 %v2901, %v2933
        %v2950 = vmax.f32 %v2902, %v2934
        %v2951 = vmax.f32 %v2903, %v2935
        %v2952 = vmax.f32 %v2904, %v2936
        %v2953 = vmax.f32 %v2905, %v2937
        %v2954 = vmax.f32 %v2906, %v2938
        %v2955 = vmax.f32 %v2907, %v2939
        %v2956 = vpack.c.bf16 %v2950, %v2948
        %v2957 = vpack.c.bf16 %v2951, %v2949
        %v2958 = vpack.c.bf16 %v2954, %v2952
        %v2959 = vpack.c.bf16 %v2955, %v2953
        %v2960 = vld [vmem:[%s6] sm:$0xf]
        %v2961 = vld [vmem:[%s6 + $0x4] sm:$0xf]
        %v2962 = vld [vmem:[%s6 + $0x8] sm:$0xf]
        %v2963 = vld [vmem:[%s6 + $0xc] sm:$0xf]
        %v2964 = vld [vmem:[%s6 + $0x10] sm:$0xf]
        %v2965 = vld [vmem:[%s6 + $0x14] sm:$0xf]
        %v2966 = vld [vmem:[%s6 + $0x18] sm:$0xf]
        %v2967 = vld [vmem:[%s6 + $0x1c] sm:$0xf]
        %v2968 = vld [vmem:[%s6 + $0x20] sm:$0xf]
        %v2969 = vld [vmem:[%s6 + $0x24] sm:$0xf]
        %v2970 = vld [vmem:[%s6 + $0x28] sm:$0xf]
        %v2971 = vld [vmem:[%s6 + $0x2c] sm:$0xf]
        %v2972 = vld [vmem:[%s6 + $0x30] sm:$0xf]
        %v2973 = vld [vmem:[%s6 + $0x34] sm:$0xf]
        %v2974 = vld [vmem:[%s6 + $0x38] sm:$0xf]
        %v2975 = vld [vmem:[%s6 + $0x3c] sm:$0xf]
        %v2976 = vld [vmem:[%s6 + $0x40] sm:$0xf]
        %v2977 = vld [vmem:[%s6 + $0x44] sm:$0xf]
        %v2978 = vld [vmem:[%s6 + $0x48] sm:$0xf]
        %v2979 = vld [vmem:[%s6 + $0x4c] sm:$0xf]
        %v2980 = vld [vmem:[%s6 + $0x50] sm:$0xf]
        %v2981 = vld [vmem:[%s6 + $0x54] sm:$0xf]
        %v2982 = vld [vmem:[%s6 + $0x58] sm:$0xf]
        %v2983 = vld [vmem:[%s6 + $0x5c] sm:$0xf]
        %v2984 = vld [vmem:[%s6 + $0x60] sm:$0xf]
        %v2985 = vld [vmem:[%s6 + $0x64] sm:$0xf]
        %v2986 = vld [vmem:[%s6 + $0x68] sm:$0xf]
        %v2987 = vld [vmem:[%s6 + $0x6c] sm:$0xf]
        %v2988 = vld [vmem:[%s6 + $0x70] sm:$0xf]
        %v2989 = vld [vmem:[%s6 + $0x74] sm:$0xf]
        %v2990 = vld [vmem:[%s6 + $0x78] sm:$0xf]
        %v2991 = vld [vmem:[%s6 + $0x7c] sm:$0xf]
        %v2992 = vld [vmem:[%s7] sm:$0x1]
        %v2994 = vlaneseq
        %v2995 = vshrl.u32 %v2994, 7
        %v2996 = vsub.s32 0, %v2995
        %v2997 = vrot.slane %v2992, %v2996
        %v3031 = vunpack.c.l.b16 %v2960
        %v3032 = vunpack.c.l.b16 %v2961
        %v3033 = vunpack.c.l.b16 %v2962
        %v3034 = vunpack.c.l.b16 %v2963
        %v3035 = vunpack.c.l.b16 %v2964
        %v3036 = vunpack.c.l.b16 %v2965
        %v3037 = vunpack.c.l.b16 %v2966
        %v3038 = vunpack.c.l.b16 %v2967
        %v3039 = vunpack.c.l.b16 %v2968
        %v3040 = vunpack.c.l.b16 %v2969
        %v3041 = vunpack.c.l.b16 %v2970
        %v3042 = vunpack.c.l.b16 %v2971
        %v3043 = vunpack.c.l.b16 %v2972
        %v3044 = vunpack.c.l.b16 %v2973
        %v3045 = vunpack.c.l.b16 %v2974
        %v3046 = vunpack.c.l.b16 %v2975
        %v3047 = vunpack.c.l.b16 %v2976
        %v3048 = vunpack.c.l.b16 %v2977
        %v3049 = vunpack.c.l.b16 %v2978
        %v3050 = vunpack.c.l.b16 %v2979
        %v3051 = vunpack.c.l.b16 %v2980
        %v3052 = vunpack.c.l.b16 %v2981
        %v3053 = vunpack.c.l.b16 %v2982
        %v3054 = vunpack.c.l.b16 %v2983
        %v3055 = vunpack.c.l.b16 %v2984
        %v3056 = vunpack.c.l.b16 %v2985
        %v3057 = vunpack.c.l.b16 %v2986
        %v3058 = vunpack.c.l.b16 %v2987
        %v3059 = vunpack.c.l.b16 %v2988
        %v3060 = vunpack.c.l.b16 %v2989
        %v3061 = vunpack.c.l.b16 %v2990
        %v3062 = vunpack.c.l.b16 %v2991
        %v3063 = vpack.c.b16 %v3032, %v3031
        %v3064 = vpack.c.b16 %v3034, %v3033
        %v3065 = vpack.c.b16 %v3036, %v3035
        %v3066 = vpack.c.b16 %v3038, %v3037
        %v3067 = vpack.c.b16 %v3040, %v3039
        %v3068 = vpack.c.b16 %v3042, %v3041
        %v3069 = vpack.c.b16 %v3044, %v3043
        %v3070 = vpack.c.b16 %v3046, %v3045
        %v3071 = vpack.c.b16 %v3048, %v3047
        %v3072 = vpack.c.b16 %v3050, %v3049
        %v3073 = vpack.c.b16 %v3052, %v3051
        %v3074 = vpack.c.b16 %v3054, %v3053
        %v3075 = vpack.c.b16 %v3056, %v3055
        %v3076 = vpack.c.b16 %v3058, %v3057
        %v3077 = vpack.c.b16 %v3060, %v3059
        %v3078 = vpack.c.b16 %v3062, %v3061
        %3095 = vmatprep.subr.bf16.mxu0 0
        %3096 = vmatpush1.bf16.msra.mxu0 %v3063
        %3097 = vmatprep.subr.bf16.mxu0 0
        %3098 = vmatpush1.bf16.msra.mxu0 %v3064
        %3099 = vmatprep.subr.bf16.mxu0 0
        %3100 = vmatpush1.bf16.msra.mxu0 %v3065
        %3101 = vmatprep.subr.bf16.mxu0 0
        %3102 = vmatpush1.bf16.msra.mxu0 %v3066
        %3103 = vmatprep.subr.bf16.mxu0 0
        %3104 = vmatpush1.bf16.msra.mxu0 %v3067
        %3105 = vmatprep.subr.bf16.mxu0 0
        %3106 = vmatpush1.bf16.msra.mxu0 %v3068
        %3107 = vmatprep.subr.bf16.mxu0 0
        %3108 = vmatpush1.bf16.msra.mxu0 %v3069
        %3109 = vmatprep.subr.bf16.mxu0 0
        %3110 = vmatpush1.bf16.msra.mxu0 %v3070
        %3111 = vmatprep.subr.bf16.mxu0 0
        %3112 = vmatpush1.bf16.msra.mxu0 %v3071
        %3113 = vmatprep.subr.bf16.mxu0 0
        %3114 = vmatpush1.bf16.msra.mxu0 %v3072
        %3115 = vmatprep.subr.bf16.mxu0 0
        %3116 = vmatpush1.bf16.msra.mxu0 %v3073
        %3117 = vmatprep.subr.bf16.mxu0 0
        %3118 = vmatpush1.bf16.msra.mxu0 %v3074
        %3119 = vmatprep.subr.bf16.mxu0 0
        %3120 = vmatpush1.bf16.msra.mxu0 %v3075
        %3121 = vmatprep.subr.bf16.mxu0 0
        %3122 = vmatpush1.bf16.msra.mxu0 %v3076
        %3123 = vmatprep.subr.bf16.mxu0 0
        %3124 = vmatpush1.bf16.msra.mxu0 %v3077
        %3125 = vmatprep.subr.bf16.mxu0 0
        %3126 = vmatpush1.bf16.msra.mxu0 %v3078
        %3127 = vmatprep.mubr.bf16.mxu0 %v2957
        %3128 = vmatmul.mubr.bf16.gmra.mrb[0].mxu0 %v2956
        %v3129 = vpop.f32.mrb[0].mxu0
        %v3130 = vadd.f32 %v2997, %v3129
        %v3131 = vpop.f32.mrb[0].mxu0
        %v3132 = vpop.f32.mrb[0].mxu0
        %v3133 = vadd.f32 %v2997, %v3132
        %v3134 = vpop.f32.mrb[0].mxu0
        %3135 = vmatprep.mubr.bf16.mxu0 %v2959
        %3136 = vmatmul.mubr.bf16.gmra.mrb[0].mxu0 %v2958
        %v3137 = vpop.f32.mrb[0].mxu0
        %v3138 = vadd.f32 %v2997, %v3137
        %v3139 = vpop.f32.mrb[0].mxu0
        %v3140 = vpop.f32.mrb[0].mxu0
        %v3141 = vadd.f32 %v2997, %v3140
        %v3142 = vpop.f32.mrb[0].mxu0
        %3143 = vdwg.mxu0
        %v3144 = vpack.c.bf16 %v3133, %v3130
        %v3145 = vpack.c.bf16 %v3141, %v3138
        %v3146 = vld [vmem:[%s8] sm:$0x3]
        %v3147 = vld [vmem:[%s9] sm:$0x1]
        %v3149 = vlaneseq
        %v3150 = vshrl.u32 %v3149, 7
        %v3151 = vsub.s32 0, %v3150
        %v3152 = vrot.slane %v3147, %v3151
        %v3155 = vsel %vm745, %v3144, 0
        %v3158 = vsel %vm745, %v3145, 0
        %vm3160 = vcmask 1041408
        %v3162 = vsel %vm3160, %v3146, 0
        %3164 = vmatprep.subr.bf16.mxu0 0
        %3165 = vmatpush1.bf16.msra.mxu0 %v3162
        %3166 = vmatprep.subr.bf16.mxu0 0
        %3167 = vmatpush1.bf16.msra.mxu0 0
        %3168 = vmatprep.subr.bf16.mxu0 0
        %3169 = vmatpush1.bf16.msra.mxu0 0
        %3170 = vmatprep.subr.bf16.mxu0 0
        %3171 = vmatpush1.bf16.msra.mxu0 0
        %3172 = vmatprep.subr.bf16.mxu0 0
        %3173 = vmatpush1.bf16.msra.mxu0 0
        %3174 = vmatprep.subr.bf16.mxu0 0
        %3175 = vmatpush1.bf16.msra.mxu0 0
        %3176 = vmatprep.subr.bf16.mxu0 0
        %3177 = vmatpush1.bf16.msra.mxu0 0
        %3178 = vmatprep.subr.bf16.mxu0 0
        %3179 = vmatpush1.bf16.msra.mxu0 0
        %3180 = vmatprep.subr.bf16.mxu0 0
        %3181 = vmatpush1.bf16.msra.mxu0 0
        %3182 = vmatprep.subr.bf16.mxu0 0
        %3183 = vmatpush1.bf16.msra.mxu0 0
        %3184 = vmatprep.subr.bf16.mxu0 0
        %3185 = vmatpush1.bf16.msra.mxu0 0
        %3186 = vmatprep.subr.bf16.mxu0 0
        %3187 = vmatpush1.bf16.msra.mxu0 0
        %3188 = vmatprep.subr.bf16.mxu0 0
        %3189 = vmatpush1.bf16.msra.mxu0 0
        %3190 = vmatprep.subr.bf16.mxu0 0
        %3191 = vmatpush1.bf16.msra.mxu0 0
        %3192 = vmatprep.subr.bf16.mxu0 0
        %3193 = vmatpush1.bf16.msra.mxu0 0
        %3194 = vmatprep.subr.bf16.mxu0 0
        %3195 = vmatpush1.bf16.msra.mxu0 0
        %3196 = vmatprep.mubr.bf16.mxu0 0
        %3197 = vmatmul.mubr.bf16.gmra.mrb[0].mxu0 %v3155
        %v3198 = vpop.f32.mrb[0].mxu0
        %v3199 = vadd.f32 %v3152, %v3198
        %v3200 = vpop.f32.mrb[0].mxu0
        %v3201 = vpop.f32.mrb[0].mxu0
        %v3202 = vadd.f32 %v3152, %v3201
        %v3203 = vpop.f32.mrb[0].mxu0
        %3204 = vmatprep.mubr.bf16.mxu0 0
        %3205 = vmatmul.mubr.bf16.gmra.mrb[0].mxu0 %v3158
        %v3206 = vpop.f32.mrb[0].mxu0
        %v3207 = vadd.f32 %v3152, %v3206
        %v3208 = vpop.f32.mrb[0].mxu0
        %v3209 = vpop.f32.mrb[0].mxu0
        %v3210 = vadd.f32 %v3152, %v3209
        %v3211 = vpop.f32.mrb[0].mxu0
        %3212 = vdwg.mxu0
        %v3213 = vmax.f32 %v3199, 0.0
        %v3214 = vmax.f32 %v3202, 0.0
        %v3215 = vmax.f32 %v3207, 0.0
        %v3216 = vmax.f32 %v3210, 0.0
        %v3217 = vand.u32 2147483647, %v3199
        %v3218 = vand.u32 2147483647, %v3202
        %v3219 = vand.u32 2147483647, %v3207
        %v3220 = vand.u32 2147483647, %v3210
        %v3221 = vsub.f32 0.0, %v3217
        %v3222 = vsub.f32 0.0, %v3218
        %v3223 = vsub.f32 0.0, %v3219
        %v3224 = vsub.f32 0.0, %v3220
        %v3225 = vmul.f32 %v3221, 1.442695
        %v3226 = vpow.pop %v3225
        %v3227 = vmul.f32 %v3222, 1.442695
        %v3228 = vpow.pop %v3227
        %v3229 = vmul.f32 %v3223, 1.442695
        %v3230 = vpow.pop %v3229
        %v3231 = vmul.f32 %v3224, 1.442695
        %v3232 = vpow.pop %v3231
        %v3233 = vadd.f32 %v3226, 1.0
        %v3234 = vadd.f32 %v3228, 1.0
        %v3235 = vadd.f32 %v3230, 1.0
        %v3236 = vadd.f32 %v3232, 1.0
        %v3237 = vlog2.pop %v3233
        %v3238 = vmul.f32 %v3237, 0.6931472
        %v3239 = vlog2.pop %v3234
        %v3240 = vmul.f32 %v3239, 0.6931472
        %v3241 = vlog2.pop %v3235
        %v3242 = vmul.f32 %v3241, 0.6931472
        %v3243 = vlog2.pop %v3236
        %v3244 = vmul.f32 %v3243, 0.6931472
        %v3245 = vadd.f32 %v3213, %v3238
        %v3246 = vadd.f32 %v3214, %v3240
        %v3247 = vadd.f32 %v3215, %v3242
        %v3248 = vadd.f32 %v3216, %v3244
        %v3249 = vld [vmem:[%s10] sm:$0xff]
        %v3251 = vcombine.high %v3249, %v3249
        %v3253 = vsel %vm745, %v3245, 0
        %v3256 = vsel %vm745, %v3246, 0
        %v3259 = vsel %vm745, %v3247, 0
        %v3262 = vsel %vm745, %v3248, 0
        %vm3264 = vcmask 1043456
        %v3265 = vsel %vm3264, %v3249, 0
        %v3267 = vsel %vm3264, %v3251, 0
        %3269 = vmatprep.subr.mxu0 %v3267
        %3270 = vmatpush1.msra.mxu0 %v3265
        %3271 = vmatprep.subr.mxu0 0.0
        %3272 = vmatpush1.msra.mxu0 0.0
        %3273 = vmatprep.subr.mxu0 0.0
        %3274 = vmatpush1.msra.mxu0 0.0
        %3275 = vmatprep.subr.mxu0 0.0
        %3276 = vmatpush1.msra.mxu0 0.0
        %3277 = vmatprep.subr.mxu0 0.0
        %3278 = vmatpush1.msra.mxu0 0.0
        %3279 = vmatprep.subr.mxu0 0.0
        %3280 = vmatpush1.msra.mxu0 0.0
        %3281 = vmatprep.subr.mxu0 0.0
        %3282 = vmatpush1.msra.mxu0 0.0
        %3283 = vmatprep.subr.mxu0 0.0
        %3284 = vmatpush1.msra.mxu0 0.0
        %3285 = vmatprep.subr.mxu0 0.0
        %3286 = vmatpush1.msra.mxu0 0.0
        %3287 = vmatprep.subr.mxu0 0.0
        %3288 = vmatpush1.msra.mxu0 0.0
        %3289 = vmatprep.subr.mxu0 0.0
        %3290 = vmatpush1.msra.mxu0 0.0
        %3291 = vmatprep.subr.mxu0 0.0
        %3292 = vmatpush1.msra.mxu0 0.0
        %3293 = vmatprep.subr.mxu0 0.0
        %3294 = vmatpush1.msra.mxu0 0.0
        %3295 = vmatprep.subr.mxu0 0.0
        %3296 = vmatpush1.msra.mxu0 0.0
        %3297 = vmatprep.subr.mxu0 0.0
        %3298 = vmatpush1.msra.mxu0 0.0
        %3299 = vmatprep.subr.mxu0 0.0
        %3300 = vmatpush1.msra.mxu0 0.0
        %3301 = vmatprep.subr.mxu0 0.0
        %3302 = vmatpush1.msra.mxu0 0.0
        %3303 = vmatprep.subr.mxu0 0.0
        %3304 = vmatpush1.msra.mxu0 0.0
        %3305 = vmatprep.subr.mxu0 0.0
        %3306 = vmatpush1.msra.mxu0 0.0
        %3307 = vmatprep.subr.mxu0 0.0
        %3308 = vmatpush1.msra.mxu0 0.0
        %3309 = vmatprep.subr.mxu0 0.0
        %3310 = vmatpush1.msra.mxu0 0.0
        %3311 = vmatprep.subr.mxu0 0.0
        %3312 = vmatpush1.msra.mxu0 0.0
        %3313 = vmatprep.subr.mxu0 0.0
        %3314 = vmatpush1.msra.mxu0 0.0
        %3315 = vmatprep.subr.mxu0 0.0
        %3316 = vmatpush1.msra.mxu0 0.0
        %3317 = vmatprep.subr.mxu0 0.0
        %3318 = vmatpush1.msra.mxu0 0.0
        %3319 = vmatprep.subr.mxu0 0.0
        %3320 = vmatpush1.msra.mxu0 0.0
        %3321 = vmatprep.subr.mxu0 0.0
        %3322 = vmatpush1.msra.mxu0 0.0
        %3323 = vmatprep.subr.mxu0 0.0
        %3324 = vmatpush1.msra.mxu0 0.0
        %3325 = vmatprep.subr.mxu0 0.0
        %3326 = vmatpush1.msra.mxu0 0.0
        %3327 = vmatprep.subr.mxu0 0.0
        %3328 = vmatpush1.msra.mxu0 0.0
        %3329 = vmatprep.subr.mxu0 0.0
        %3330 = vmatpush1.msra.mxu0 0.0
        %3331 = vmatprep.subr.mxu0 0.0
        %3332 = vmatpush1.msra.mxu0 0.0
        %3333 = vmatprep.mubr.f32.mxu0 0.0
        %3334 = vmatmul.mubr.f32.gmra.mrb[0].mxu0 %v3253
        %v3335 = vpop.f32.mrb[0].mxu0
        %v3336 = vadd.f32 0.0, %v3335
        %v3337 = vpop.f32.mrb[0].mxu0
        %v3338 = vadd.f32 0.0, %v3337
        %3339 = vmatprep.mubr.f32.mxu0 0.0
        %3340 = vmatmul.mubr.f32.gmra.mrb[0].mxu0 %v3256
        %v3341 = vpop.f32.mrb[0].mxu0
        %v3342 = vadd.f32 0.0, %v3341
        %v3343 = vpop.f32.mrb[0].mxu0
        %v3344 = vadd.f32 0.0, %v3343
        %3345 = vmatprep.mubr.f32.mxu0 0.0
        %3346 = vmatmul.mubr.f32.gmra.mrb[0].mxu0 %v3259
        %v3347 = vpop.f32.mrb[0].mxu0
        %v3348 = vadd.f32 0.0, %v3347
        %v3349 = vpop.f32.mrb[0].mxu0
        %v3350 = vadd.f32 0.0, %v3349
        %3351 = vmatprep.mubr.f32.mxu0 0.0
        %3352 = vmatmul.mubr.f32.gmra.mrb[0].mxu0 %v3262
        %v3353 = vpop.f32.mrb[0].mxu0
        %v3354 = vadd.f32 0.0, %v3353
        %v3355 = vpop.f32.mrb[0].mxu0
        %v3356 = vadd.f32 0.0, %v3355
        %3357 = vdwg.mxu0
        %v3358 = vmul.f32 %v995, %v3336
        %v3359 = vmul.f32 %v997, %v3338
        %v3360 = vmul.f32 %v1001, %v3342
        %v3361 = vmul.f32 %v1003, %v3344
        %v3362 = vmul.f32 %v1007, %v3348
        %v3363 = vmul.f32 %v1009, %v3350
        %v3364 = vmul.f32 %v1013, %v3354
        %v3365 = vmul.f32 %v1015, %v3356
        %s3366 = scalar_lea.vmem %s736, 2
        %v3367 = vld [vmem:[%s3366] sm:$0x3]
        %3369 = vrot.lane.b32.xlu0 %v3367, 4
        %v3370 = vpop.permute.xlu0 %3369
        %v3371 = vrot.slane %v3370, 7
        %v3372 = vsel %vm745, %v3371, %v3370
        %3374 = vst.msk [vmem:[#allocation2] sm:$0x7] %vm781, %v3372
        %v3375 = vld [vmem:[#allocation2] sm:$0x3]
        %3376 = vst.msk [vmem:[#allocation3] ss:$8 sm:$0x3] %vm785, %v3375
        %3377 = vst.msk [vmem:[#allocation3] ss:$8 sm:$0x0] %vm785, %v3375
        %v3378 = vld [vmem:[#allocation2] sm:$0x7]
        %3380 = vrot.lane.b32.xlu0 %v3378, 127
        %v3381 = vpop.permute.xlu0 %3380
        %v3382 = vrot.slane %v3381, 1
        %v3383 = vsel %vm793, %v3381, %v3382
        %3385 = vst.msk [vmem:[%s796] ss:$8 sm:$0x3] %vm785, %v3383
        %3386 = vst.msk [vmem:[%s796] ss:$8 sm:$0x0] %vm785, %v3383
        %v3387 = vld [vmem:[#allocation2] sm:$0x7]
        %3389 = vrot.lane.b32.xlu0 %v3387, 126
        %v3390 = vpop.permute.xlu0 %3389
        %v3391 = vrot.slane %v3390, 1
        %v3392 = vsel %vm804, %v3390, %v3391
        %3394 = vst.msk [vmem:[%s807] ss:$8 sm:$0x3] %vm785, %v3392
        %3395 = vst.msk [vmem:[%s807] ss:$8 sm:$0x0] %vm785, %v3392
        %v3396 = vld [vmem:[#allocation2] sm:$0x7]
        %3398 = vrot.lane.b32.xlu0 %v3396, 125
        %v3399 = vpop.permute.xlu0 %3398
        %v3400 = vrot.slane %v3399, 1
        %v3401 = vsel %vm815, %v3399, %v3400
        %3403 = vst.msk [vmem:[%s818] ss:$8 sm:$0x3] %vm785, %v3401
        %3404 = vst.msk [vmem:[%s818] ss:$8 sm:$0x0] %vm785, %v3401
        %v3405 = vld [vmem:[#allocation2] sm:$0x7]
        %3407 = vrot.lane.b32.xlu0 %v3405, 124
        %v3408 = vpop.permute.xlu0 %3407
        %v3409 = vrot.slane %v3408, 1
        %v3410 = vsel %vm826, %v3408, %v3409
        %3412 = vst.msk [vmem:[%s829] ss:$8 sm:$0x3] %vm785, %v3410
        %3413 = vst.msk [vmem:[%s829] ss:$8 sm:$0x0] %vm785, %v3410
        %v3414 = vld [vmem:[#allocation2] sm:$0x7]
        %3416 = vrot.lane.b32.xlu0 %v3414, 123
        %v3417 = vpop.permute.xlu0 %3416
        %v3418 = vrot.slane %v3417, 1
        %v3419 = vsel %vm837, %v3417, %v3418
        %3421 = vst.msk [vmem:[%s840] ss:$8 sm:$0x3] %vm785, %v3419
        %3422 = vst.msk [vmem:[%s840] ss:$8 sm:$0x0] %vm785, %v3419
        %v3423 = vld [vmem:[#allocation2] sm:$0x7]
        %3425 = vrot.lane.b32.xlu0 %v3423, 122
        %v3426 = vpop.permute.xlu0 %3425
        %v3427 = vrot.slane %v3426, 1
        %v3428 = vsel %vm848, %v3426, %v3427
        %3430 = vst.msk [vmem:[%s851] ss:$8 sm:$0x3] %vm785, %v3428
        %3431 = vst.msk [vmem:[%s851] ss:$8 sm:$0x0] %vm785, %v3428
        %v3432 = vld [vmem:[#allocation2] sm:$0x7]
        %3434 = vrot.lane.b32.xlu0 %v3432, 121
        %v3435 = vpop.permute.xlu0 %3434
        %v3436 = vrot.slane %v3435, 1
        %v3437 = vsel %vm859, %v3435, %v3436
        %3439 = vst.msk [vmem:[%s862] ss:$8 sm:$0x3] %vm785, %v3437
        %3440 = vst.msk [vmem:[%s862] ss:$8 sm:$0x0] %vm785, %v3437
        %v3441 = vld [vmem:[#allocation2] sm:$0x7]
        %3443 = vrot.lane.b32.xlu0 %v3441, 120
        %v3444 = vpop.permute.xlu0 %3443
        %v3445 = vrot.slane %v3444, 1
        %v3446 = vsel %vm870, %v3444, %v3445
        %3448 = vst.msk [vmem:[%s873] ss:$8 sm:$0x3] %vm785, %v3446
        %3449 = vst.msk [vmem:[%s873] ss:$8 sm:$0x0] %vm785, %v3446
        %v3450 = vld [vmem:[%s1] sm:$0xff]
        %v3451 = vld [vmem:[%s1 + $0x8] sm:$0xff]
        %v3452 = vld [vmem:[%s1 + $0x10] sm:$0xff]
        %v3453 = vld [vmem:[%s1 + $0x18] sm:$0xff]
        %v3454 = vld [vmem:[#allocation3] sm:$0xff]
        %v3455 = vld [vmem:[#allocation3 + $0x8] sm:$0xff]
        %v3456 = vld [vmem:[#allocation3 + $0x10] sm:$0x1]
        %v3457 = vld [vmem:[#allocation3 + $0x18] sm:$0x1]
        %v3458 = vld [vmem:[%s3] sm:$0xff]
        %v3459 = vld [vmem:[%s3 + $0x8] sm:$0xff]
        %v3460 = vld [vmem:[%s3 + $0x10] sm:$0xff]
        %v3461 = vld [vmem:[%s3 + $0x18] sm:$0xff]
        %3463 = vset.pattern.permute.xlu0 0
        %3464 = vperm.xlu0 %3463, %v3458
        %v3465 = vpop.permute.xlu0 %3464
        %3468 = vset.pattern.permute.xlu0 0
        %3469 = vperm.xlu0 %3468, %v3459
        %v3470 = vpop.permute.xlu0 %3469
        %3473 = vset.pattern.permute.xlu0 0
        %3474 = vperm.xlu0 %3473, %v3460
        %v3475 = vpop.permute.xlu0 %3474
        %3478 = vset.pattern.permute.xlu0 0
        %3479 = vperm.xlu0 %3478, %v3461
        %v3480 = vpop.permute.xlu0 %3479
        %v3483 = vsel %vm908, %v3450, 0
        %v3486 = vsel %vm908, %v3451, 0
        %v3489 = vsel %vm908, %v3452, 0
        %v3492 = vsel %vm908, %v3453, 0
        %v3495 = vsel %vm921, %v3456, 0
        %v3498 = vsel %vm921, %v3457, 0
        %3500 = vmatprep.subr.mxu0 %v3455
        %3501 = vmatpush1.msra.mxu0 %v3454
        %3502 = vmatprep.subr.mxu0 %v3498
        %3503 = vmatpush1.msra.mxu0 %v3495
        %3504 = vmatprep.subr.mxu0 0.0
        %3505 = vmatpush1.msra.mxu0 0.0
        %3506 = vmatprep.subr.mxu0 0.0
        %3507 = vmatpush1.msra.mxu0 0.0
        %3508 = vmatprep.subr.mxu0 0.0
        %3509 = vmatpush1.msra.mxu0 0.0
        %3510 = vmatprep.subr.mxu0 0.0
        %3511 = vmatpush1.msra.mxu0 0.0
        %3512 = vmatprep.subr.mxu0 0.0
        %3513 = vmatpush1.msra.mxu0 0.0
        %3514 = vmatprep.subr.mxu0 0.0
        %3515 = vmatpush1.msra.mxu0 0.0
        %3516 = vmatprep.subr.mxu0 0.0
        %3517 = vmatpush1.msra.mxu0 0.0
        %3518 = vmatprep.subr.mxu0 0.0
        %3519 = vmatpush1.msra.mxu0 0.0
        %3520 = vmatprep.subr.mxu0 0.0
        %3521 = vmatpush1.msra.mxu0 0.0
        %3522 = vmatprep.subr.mxu0 0.0
        %3523 = vmatpush1.msra.mxu0 0.0
        %3524 = vmatprep.subr.mxu0 0.0
        %3525 = vmatpush1.msra.mxu0 0.0
        %3526 = vmatprep.subr.mxu0 0.0
        %3527 = vmatpush1.msra.mxu0 0.0
        %3528 = vmatprep.subr.mxu0 0.0
        %3529 = vmatpush1.msra.mxu0 0.0
        %3530 = vmatprep.subr.mxu0 0.0
        %3531 = vmatpush1.msra.mxu0 0.0
        %3532 = vmatprep.subr.mxu0 0.0
        %3533 = vmatpush1.msra.mxu0 0.0
        %3534 = vmatprep.subr.mxu0 0.0
        %3535 = vmatpush1.msra.mxu0 0.0
        %3536 = vmatprep.subr.mxu0 0.0
        %3537 = vmatpush1.msra.mxu0 0.0
        %3538 = vmatprep.subr.mxu0 0.0
        %3539 = vmatpush1.msra.mxu0 0.0
        %3540 = vmatprep.subr.mxu0 0.0
        %3541 = vmatpush1.msra.mxu0 0.0
        %3542 = vmatprep.subr.mxu0 0.0
        %3543 = vmatpush1.msra.mxu0 0.0
        %3544 = vmatprep.subr.mxu0 0.0
        %3545 = vmatpush1.msra.mxu0 0.0
        %3546 = vmatprep.subr.mxu0 0.0
        %3547 = vmatpush1.msra.mxu0 0.0
        %3548 = vmatprep.subr.mxu0 0.0
        %3549 = vmatpush1.msra.mxu0 0.0
        %3550 = vmatprep.subr.mxu0 0.0
        %3551 = vmatpush1.msra.mxu0 0.0
        %3552 = vmatprep.subr.mxu0 0.0
        %3553 = vmatpush1.msra.mxu0 0.0
        %3554 = vmatprep.subr.mxu0 0.0
        %3555 = vmatpush1.msra.mxu0 0.0
        %3556 = vmatprep.subr.mxu0 0.0
        %3557 = vmatpush1.msra.mxu0 0.0
        %3558 = vmatprep.subr.mxu0 0.0
        %3559 = vmatpush1.msra.mxu0 0.0
        %3560 = vmatprep.subr.mxu0 0.0
        %3561 = vmatpush1.msra.mxu0 0.0
        %3562 = vmatprep.subr.mxu0 0.0
        %3563 = vmatpush1.msra.mxu0 0.0
        %3564 = vmatprep.mubr.f32.mxu0 0.0
        %3565 = vmatmul.mubr.f32.gmra.mrb[0].mxu0 %v3483
        %v3566 = vpop.f32.mrb[0].mxu0
        %v3567 = vadd.f32 %v3465, %v3566
        %v3568 = vpop.f32.mrb[0].mxu0
        %v3569 = vadd.f32 %v3465, %v3568
        %3570 = vmatprep.mubr.f32.mxu0 0.0
        %3571 = vmatmul.mubr.f32.gmra.mrb[0].mxu0 %v3486
        %v3572 = vpop.f32.mrb[0].mxu0
        %v3573 = vadd.f32 %v3470, %v3572
        %v3574 = vpop.f32.mrb[0].mxu0
        %v3575 = vadd.f32 %v3470, %v3574
        %3576 = vmatprep.mubr.f32.mxu0 0.0
        %3577 = vmatmul.mubr.f32.gmra.mrb[0].mxu0 %v3489
        %v3578 = vpop.f32.mrb[0].mxu0
        %v3579 = vadd.f32 %v3475, %v3578
        %v3580 = vpop.f32.mrb[0].mxu0
        %v3581 = vadd.f32 %v3475, %v3580
        %3582 = vmatprep.mubr.f32.mxu0 0.0
        %3583 = vmatmul.mubr.f32.gmra.mrb[0].mxu0 %v3492
        %v3584 = vpop.f32.mrb[0].mxu0
        %v3585 = vadd.f32 %v3480, %v3584
        %v3586 = vpop.f32.mrb[0].mxu0
        %v3587 = vadd.f32 %v3480, %v3586
        %3588 = vdwg.mxu0
        %v3589 = vand.u32 2147483647, %v3567
        %v3590 = vand.u32 2147483647, %v3569
        %v3591 = vand.u32 2147483647, %v3573
        %v3592 = vand.u32 2147483647, %v3575
        %v3593 = vand.u32 2147483647, %v3579
        %v3594 = vand.u32 2147483647, %v3581
        %v3595 = vand.u32 2147483647, %v3585
        %v3596 = vand.u32 2147483647, %v3587
        %3605 = vrot.lane.b32.xlu0 %v3589, 8
        %v3606 = vpop.permute.xlu0 %3605
        %3607 = vrot.lane.b32.xlu0 %v3590, 8
        %v3608 = vpop.permute.xlu0 %3607
        %3609 = vrot.lane.b32.xlu0 %v3591, 8
        %v3610 = vpop.permute.xlu0 %3609
        %3611 = vrot.lane.b32.xlu0 %v3592, 8
        %v3612 = vpop.permute.xlu0 %3611
        %3613 = vrot.lane.b32.xlu0 %v3593, 8
        %v3614 = vpop.permute.xlu0 %3613
        %3615 = vrot.lane.b32.xlu0 %v3594, 8
        %v3616 = vpop.permute.xlu0 %3615
        %3617 = vrot.lane.b32.xlu0 %v3595, 8
        %v3618 = vpop.permute.xlu0 %3617
        %3619 = vrot.lane.b32.xlu0 %v3596, 8
        %v3620 = vpop.permute.xlu0 %3619
        %v3621 = vsel %vm759, %v3606, %v3608
        %v3622 = vsel %vm759, %v3610, %v3612
        %v3623 = vsel %vm759, %v3614, %v3616
        %v3624 = vsel %vm759, %v3618, %v3620
        %3637 = vst.msk [vmem:[#allocation4] sm:$0xff] %vm1065, %v3606
        %3638 = vst [vmem:[#allocation4 + $0x8] sm:$0xff] %v3621
        %3639 = vst.msk [vmem:[#allocation4 + $0x10] sm:$0xff] %vm759, %v3608
        %3640 = vst.msk [vmem:[#allocation4 + $0x18] sm:$0xff] %vm1065, %v3610
        %3641 = vst [vmem:[#allocation4 + $0x20] sm:$0xff] %v3622
        %3642 = vst.msk [vmem:[#allocation4 + $0x28] sm:$0xff] %vm759, %v3612
        %3643 = vst.msk [vmem:[#allocation4 + $0x30] sm:$0xff] %vm1065, %v3614
        %3644 = vst [vmem:[#allocation4 + $0x38] sm:$0xff] %v3623
        %3645 = vst.msk [vmem:[#allocation4 + $0x40] sm:$0xff] %vm759, %v3616
        %3646 = vst.msk [vmem:[#allocation4 + $0x48] sm:$0xff] %vm1065, %v3618
        %3647 = vst [vmem:[#allocation4 + $0x50] sm:$0xff] %v3624
        %3648 = vst.msk [vmem:[#allocation4 + $0x58] sm:$0xff] %vm759, %v3620
        %v3649 = vld [vmem:[#allocation4] sm:$0xff]
        %v3650 = vld [vmem:[#allocation4 + $0x8] sm:$0xff]
        %v3651 = vld [vmem:[#allocation4 + $0x18] sm:$0xff]
        %v3652 = vld [vmem:[#allocation4 + $0x20] sm:$0xff]
        %v3653 = vld [vmem:[#allocation4 + $0x30] sm:$0xff]
        %v3654 = vld [vmem:[#allocation4 + $0x38] sm:$0xff]
        %v3655 = vld [vmem:[#allocation4 + $0x48] sm:$0xff]
        %v3656 = vld [vmem:[#allocation4 + $0x50] sm:$0xff]
        %v3657 = vld [vmem:[%s4] ss:$8 sm:$0x3]
        %v3659 = vlaneseq
        %v3660 = vshrl.u32 %v3659, 7
        %v3661 = vsub.s32 0, %v3660
        %v3662 = vrot.slane %v3657, %v3661
        %v3663 = vlaneseq
        %v3664 = vshrl.u32 %v3663, 7
        %v3665 = vsub.s32 1, %v3664
        %v3666 = vrot.slane %v3657, %v3665
        %v3669 = vmul.f32 %v3649, %v3662
        %v3670 = vmul.f32 %v3650, %v3666
        %v3671 = vmul.f32 %v3651, %v3662
        %v3672 = vmul.f32 %v3652, %v3666
        %v3673 = vmul.f32 %v3653, %v3662
        %v3674 = vmul.f32 %v3654, %v3666
        %v3675 = vmul.f32 %v3655, %v3662
        %v3676 = vmul.f32 %v3656, %v3666
        %v3677 = vadd.f32 %v3669, 0.0
        %v3678 = vadd.f32 %v3670, 0.0
        %v3679 = vadd.f32 %v3671, 0.0
        %v3680 = vadd.f32 %v3672, 0.0
        %v3681 = vadd.f32 %v3673, 0.0
        %v3682 = vadd.f32 %v3674, 0.0
        %v3683 = vadd.f32 %v3675, 0.0
        %v3684 = vadd.f32 %v3676, 0.0
        %v3685 = vld [vmem:[#allocation4 + $0x10] sm:$0xff]
        %v3686 = vld [vmem:[#allocation4 + $0x28] sm:$0xff]
        %v3687 = vld [vmem:[#allocation4 + $0x40] sm:$0xff]
        %v3688 = vld [vmem:[#allocation4 + $0x58] sm:$0xff]
        %v3689 = vld [vmem:[%s1118] ss:$8 sm:$0x3]
        %v3691 = vlaneseq
        %v3692 = vshrl.u32 %v3691, 7
        %v3693 = vsub.s32 0, %v3692
        %v3694 = vrot.slane %v3689, %v3693
        %v3695 = vlaneseq
        %v3696 = vshrl.u32 %v3695, 7
        %v3697 = vsub.s32 1, %v3696
        %v3698 = vrot.slane %v3689, %v3697
        %3699 = vrot.lane.b32.xlu0 %v3694, 1
        %v3700 = vpop.permute.xlu0 %3699
        %3701 = vrot.lane.b32.xlu0 %v3698, 1
        %v3702 = vpop.permute.xlu0 %3701
        %v3703 = vsel %vm1133, %v3700, %v3702
        %v3707 = vmul.f32 %v3649, %v3700
        %v3708 = vmul.f32 %v3650, %v3703
        %v3709 = vmul.f32 %v3685, %v3702
        %v3710 = vmul.f32 %v3651, %v3700
        %v3711 = vmul.f32 %v3652, %v3703
        %v3712 = vmul.f32 %v3686, %v3702
        %v3713 = vmul.f32 %v3653, %v3700
        %v3714 = vmul.f32 %v3654, %v3703
        %v3715 = vmul.f32 %v3687, %v3702
        %v3716 = vmul.f32 %v3655, %v3700
        %v3717 = vmul.f32 %v3656, %v3703
        %v3718 = vmul.f32 %v3688, %v3702
        %3731 = vrot.lane.b32.xlu0 %v3707, 127
        %v3732 = vpop.permute.xlu0 %3731
        %3733 = vrot.lane.b32.xlu0 %v3708, 127
        %v3734 = vpop.permute.xlu0 %3733
        %3735 = vrot.lane.b32.xlu0 %v3709, 127
        %v3736 = vpop.permute.xlu0 %3735
        %3737 = vrot.lane.b32.xlu0 %v3710, 127
        %v3738 = vpop.permute.xlu0 %3737
        %3739 = vrot.lane.b32.xlu0 %v3711, 127
        %v3740 = vpop.permute.xlu0 %3739
        %3741 = vrot.lane.b32.xlu0 %v3712, 127
        %v3742 = vpop.permute.xlu0 %3741
        %3743 = vrot.lane.b32.xlu0 %v3713, 127
        %v3744 = vpop.permute.xlu0 %3743
        %3745 = vrot.lane.b32.xlu0 %v3714, 127
        %v3746 = vpop.permute.xlu0 %3745
        %3747 = vrot.lane.b32.xlu0 %v3715, 127
        %v3748 = vpop.permute.xlu0 %3747
        %3749 = vrot.lane.b32.xlu0 %v3716, 127
        %v3750 = vpop.permute.xlu0 %3749
        %3751 = vrot.lane.b32.xlu0 %v3717, 127
        %v3752 = vpop.permute.xlu0 %3751
        %3753 = vrot.lane.b32.xlu0 %v3718, 127
        %v3754 = vpop.permute.xlu0 %3753
        %v3755 = vsel %vm793, %v3732, %v3734
        %v3756 = vsel %vm793, %v3734, %v3736
        %v3757 = vsel %vm793, %v3738, %v3740
        %v3758 = vsel %vm793, %v3740, %v3742
        %v3759 = vsel %vm793, %v3744, %v3746
        %v3760 = vsel %vm793, %v3746, %v3748
        %v3761 = vsel %vm793, %v3750, %v3752
        %v3762 = vsel %vm793, %v3752, %v3754
        %v3771 = vadd.f32 %v3677, %v3755
        %v3772 = vadd.f32 %v3678, %v3756
        %v3773 = vadd.f32 %v3679, %v3757
        %v3774 = vadd.f32 %v3680, %v3758
        %v3775 = vadd.f32 %v3681, %v3759
        %v3776 = vadd.f32 %v3682, %v3760
        %v3777 = vadd.f32 %v3683, %v3761
        %v3778 = vadd.f32 %v3684, %v3762
        %v3779 = vld [vmem:[%s1210] ss:$8 sm:$0x3]
        %v3781 = vlaneseq
        %v3782 = vshrl.u32 %v3781, 7
        %v3783 = vsub.s32 0, %v3782
        %v3784 = vrot.slane %v3779, %v3783
        %v3785 = vlaneseq
        %v3786 = vshrl.u32 %v3785, 7
        %v3787 = vsub.s32 1, %v3786
        %v3788 = vrot.slane %v3779, %v3787
        %3789 = vrot.lane.b32.xlu0 %v3784, 2
        %v3790 = vpop.permute.xlu0 %3789
        %3791 = vrot.lane.b32.xlu0 %v3788, 2
        %v3792 = vpop.permute.xlu0 %3791
        %v3793 = vsel %vm1225, %v3790, %v3792
        %v3797 = vmul.f32 %v3649, %v3790
        %v3798 = vmul.f32 %v3650, %v3793
        %v3799 = vmul.f32 %v3685, %v3792
        %v3800 = vmul.f32 %v3651, %v3790
        %v3801 = vmul.f32 %v3652, %v3793
        %v3802 = vmul.f32 %v3686, %v3792
        %v3803 = vmul.f32 %v3653, %v3790
        %v3804 = vmul.f32 %v3654, %v3793
        %v3805 = vmul.f32 %v3687, %v3792
        %v3806 = vmul.f32 %v3655, %v3790
        %v3807 = vmul.f32 %v3656, %v3793
        %v3808 = vmul.f32 %v3688, %v3792
        %3821 = vrot.lane.b32.xlu0 %v3797, 126
        %v3822 = vpop.permute.xlu0 %3821
        %3823 = vrot.lane.b32.xlu0 %v3798, 126
        %v3824 = vpop.permute.xlu0 %3823
        %3825 = vrot.lane.b32.xlu0 %v3799, 126
        %v3826 = vpop.permute.xlu0 %3825
        %3827 = vrot.lane.b32.xlu0 %v3800, 126
        %v3828 = vpop.permute.xlu0 %3827
        %3829 = vrot.lane.b32.xlu0 %v3801, 126
        %v3830 = vpop.permute.xlu0 %3829
        %3831 = vrot.lane.b32.xlu0 %v3802, 126
        %v3832 = vpop.permute.xlu0 %3831
        %3833 = vrot.lane.b32.xlu0 %v3803, 126
        %v3834 = vpop.permute.xlu0 %3833
        %3835 = vrot.lane.b32.xlu0 %v3804, 126
        %v3836 = vpop.permute.xlu0 %3835
        %3837 = vrot.lane.b32.xlu0 %v3805, 126
        %v3838 = vpop.permute.xlu0 %3837
        %3839 = vrot.lane.b32.xlu0 %v3806, 126
        %v3840 = vpop.permute.xlu0 %3839
        %3841 = vrot.lane.b32.xlu0 %v3807, 126
        %v3842 = vpop.permute.xlu0 %3841
        %3843 = vrot.lane.b32.xlu0 %v3808, 126
        %v3844 = vpop.permute.xlu0 %3843
        %v3845 = vsel %vm804, %v3822, %v3824
        %v3846 = vsel %vm804, %v3824, %v3826
        %v3847 = vsel %vm804, %v3828, %v3830
        %v3848 = vsel %vm804, %v3830, %v3832
        %v3849 = vsel %vm804, %v3834, %v3836
        %v3850 = vsel %vm804, %v3836, %v3838
        %v3851 = vsel %vm804, %v3840, %v3842
        %v3852 = vsel %vm804, %v3842, %v3844
        %v3861 = vadd.f32 %v3771, %v3845
        %v3862 = vadd.f32 %v3772, %v3846
        %v3863 = vadd.f32 %v3773, %v3847
        %v3864 = vadd.f32 %v3774, %v3848
        %v3865 = vadd.f32 %v3775, %v3849
        %v3866 = vadd.f32 %v3776, %v3850
        %v3867 = vadd.f32 %v3777, %v3851
        %v3868 = vadd.f32 %v3778, %v3852
        %v3869 = vld [vmem:[%s1302] ss:$8 sm:$0x3]
        %v3871 = vlaneseq
        %v3872 = vshrl.u32 %v3871, 7
        %v3873 = vsub.s32 0, %v3872
        %v3874 = vrot.slane %v3869, %v3873
        %v3875 = vlaneseq
        %v3876 = vshrl.u32 %v3875, 7
        %v3877 = vsub.s32 1, %v3876
        %v3878 = vrot.slane %v3869, %v3877
        %3879 = vrot.lane.b32.xlu0 %v3874, 3
        %v3880 = vpop.permute.xlu0 %3879
        %3881 = vrot.lane.b32.xlu0 %v3878, 3
        %v3882 = vpop.permute.xlu0 %3881
        %v3883 = vsel %vm1317, %v3880, %v3882
        %v3887 = vmul.f32 %v3649, %v3880
        %v3888 = vmul.f32 %v3650, %v3883
        %v3889 = vmul.f32 %v3685, %v3882
        %v3890 = vmul.f32 %v3651, %v3880
        %v3891 = vmul.f32 %v3652, %v3883
        %v3892 = vmul.f32 %v3686, %v3882
        %v3893 = vmul.f32 %v3653, %v3880
        %v3894 = vmul.f32 %v3654, %v3883
        %v3895 = vmul.f32 %v3687, %v3882
        %v3896 = vmul.f32 %v3655, %v3880
        %v3897 = vmul.f32 %v3656, %v3883
        %v3898 = vmul.f32 %v3688, %v3882
        %3911 = vrot.lane.b32.xlu0 %v3887, 125
        %v3912 = vpop.permute.xlu0 %3911
        %3913 = vrot.lane.b32.xlu0 %v3888, 125
        %v3914 = vpop.permute.xlu0 %3913
        %3915 = vrot.lane.b32.xlu0 %v3889, 125
        %v3916 = vpop.permute.xlu0 %3915
        %3917 = vrot.lane.b32.xlu0 %v3890, 125
        %v3918 = vpop.permute.xlu0 %3917
        %3919 = vrot.lane.b32.xlu0 %v3891, 125
        %v3920 = vpop.permute.xlu0 %3919
        %3921 = vrot.lane.b32.xlu0 %v3892, 125
        %v3922 = vpop.permute.xlu0 %3921
        %3923 = vrot.lane.b32.xlu0 %v3893, 125
        %v3924 = vpop.permute.xlu0 %3923
        %3925 = vrot.lane.b32.xlu0 %v3894, 125
        %v3926 = vpop.permute.xlu0 %3925
        %3927 = vrot.lane.b32.xlu0 %v3895, 125
        %v3928 = vpop.permute.xlu0 %3927
        %3929 = vrot.lane.b32.xlu0 %v3896, 125
        %v3930 = vpop.permute.xlu0 %3929
        %3931 = vrot.lane.b32.xlu0 %v3897, 125
        %v3932 = vpop.permute.xlu0 %3931
        %3933 = vrot.lane.b32.xlu0 %v3898, 125
        %v3934 = vpop.permute.xlu0 %3933
        %v3935 = vsel %vm815, %v3912, %v3914
        %v3936 = vsel %vm815, %v3914, %v3916
        %v3937 = vsel %vm815, %v3918, %v3920
        %v3938 = vsel %vm815, %v3920, %v3922
        %v3939 = vsel %vm815, %v3924, %v3926
        %v3940 = vsel %vm815, %v3926, %v3928
        %v3941 = vsel %vm815, %v3930, %v3932
        %v3942 = vsel %vm815, %v3932, %v3934
        %v3951 = vadd.f32 %v3861, %v3935
        %v3952 = vadd.f32 %v3862, %v3936
        %v3953 = vadd.f32 %v3863, %v3937
        %v3954 = vadd.f32 %v3864, %v3938
        %v3955 = vadd.f32 %v3865, %v3939
        %v3956 = vadd.f32 %v3866, %v3940
        %v3957 = vadd.f32 %v3867, %v3941
        %v3958 = vadd.f32 %v3868, %v3942
        %v3959 = vld [vmem:[%s1394] ss:$8 sm:$0x3]
        %v3961 = vlaneseq
        %v3962 = vshrl.u32 %v3961, 7
        %v3963 = vsub.s32 0, %v3962
        %v3964 = vrot.slane %v3959, %v3963
        %v3965 = vlaneseq
        %v3966 = vshrl.u32 %v3965, 7
        %v3967 = vsub.s32 1, %v3966
        %v3968 = vrot.slane %v3959, %v3967
        %3969 = vrot.lane.b32.xlu0 %v3964, 4
        %v3970 = vpop.permute.xlu0 %3969
        %3971 = vrot.lane.b32.xlu0 %v3968, 4
        %v3972 = vpop.permute.xlu0 %3971
        %v3973 = vsel %vm745, %v3970, %v3972
        %v3977 = vmul.f32 %v3649, %v3970
        %v3978 = vmul.f32 %v3650, %v3973
        %v3979 = vmul.f32 %v3685, %v3972
        %v3980 = vmul.f32 %v3651, %v3970
        %v3981 = vmul.f32 %v3652, %v3973
        %v3982 = vmul.f32 %v3686, %v3972
        %v3983 = vmul.f32 %v3653, %v3970
        %v3984 = vmul.f32 %v3654, %v3973
        %v3985 = vmul.f32 %v3687, %v3972
        %v3986 = vmul.f32 %v3655, %v3970
        %v3987 = vmul.f32 %v3656, %v3973
        %v3988 = vmul.f32 %v3688, %v3972
        %4001 = vrot.lane.b32.xlu0 %v3977, 124
        %v4002 = vpop.permute.xlu0 %4001
        %4003 = vrot.lane.b32.xlu0 %v3978, 124
        %v4004 = vpop.permute.xlu0 %4003
        %4005 = vrot.lane.b32.xlu0 %v3979, 124
        %v4006 = vpop.permute.xlu0 %4005
        %4007 = vrot.lane.b32.xlu0 %v3980, 124
        %v4008 = vpop.permute.xlu0 %4007
        %4009 = vrot.lane.b32.xlu0 %v3981, 124
        %v4010 = vpop.permute.xlu0 %4009
        %4011 = vrot.lane.b32.xlu0 %v3982, 124
        %v4012 = vpop.permute.xlu0 %4011
        %4013 = vrot.lane.b32.xlu0 %v3983, 124
        %v4014 = vpop.permute.xlu0 %4013
        %4015 = vrot.lane.b32.xlu0 %v3984, 124
        %v4016 = vpop.permute.xlu0 %4015
        %4017 = vrot.lane.b32.xlu0 %v3985, 124
        %v4018 = vpop.permute.xlu0 %4017
        %4019 = vrot.lane.b32.xlu0 %v3986, 124
        %v4020 = vpop.permute.xlu0 %4019
        %4021 = vrot.lane.b32.xlu0 %v3987, 124
        %v4022 = vpop.permute.xlu0 %4021
        %4023 = vrot.lane.b32.xlu0 %v3988, 124
        %v4024 = vpop.permute.xlu0 %4023
        %v4025 = vsel %vm826, %v4002, %v4004
        %v4026 = vsel %vm826, %v4004, %v4006
        %v4027 = vsel %vm826, %v4008, %v4010
        %v4028 = vsel %vm826, %v4010, %v4012
        %v4029 = vsel %vm826, %v4014, %v4016
        %v4030 = vsel %vm826, %v4016, %v4018
        %v4031 = vsel %vm826, %v4020, %v4022
        %v4032 = vsel %vm826, %v4022, %v4024
        %v4041 = vadd.f32 %v3951, %v4025
        %v4042 = vadd.f32 %v3952, %v4026
        %v4043 = vadd.f32 %v3953, %v4027
        %v4044 = vadd.f32 %v3954, %v4028
        %v4045 = vadd.f32 %v3955, %v4029
        %v4046 = vadd.f32 %v3956, %v4030
        %v4047 = vadd.f32 %v3957, %v4031
        %v4048 = vadd.f32 %v3958, %v4032
        %v4049 = vld [vmem:[%s1485] ss:$8 sm:$0x3]
        %v4051 = vlaneseq
        %v4052 = vshrl.u32 %v4051, 7
        %v4053 = vsub.s32 0, %v4052
        %v4054 = vrot.slane %v4049, %v4053
        %v4055 = vlaneseq
        %v4056 = vshrl.u32 %v4055, 7
        %v4057 = vsub.s32 1, %v4056
        %v4058 = vrot.slane %v4049, %v4057
        %4059 = vrot.lane.b32.xlu0 %v4054, 5
        %v4060 = vpop.permute.xlu0 %4059
        %4061 = vrot.lane.b32.xlu0 %v4058, 5
        %v4062 = vpop.permute.xlu0 %4061
        %v4063 = vsel %vm1500, %v4060, %v4062
        %v4067 = vmul.f32 %v3649, %v4060
        %v4068 = vmul.f32 %v3650, %v4063
        %v4069 = vmul.f32 %v3685, %v4062
        %v4070 = vmul.f32 %v3651, %v4060
        %v4071 = vmul.f32 %v3652, %v4063
        %v4072 = vmul.f32 %v3686, %v4062
        %v4073 = vmul.f32 %v3653, %v4060
        %v4074 = vmul.f32 %v3654, %v4063
        %v4075 = vmul.f32 %v3687, %v4062
        %v4076 = vmul.f32 %v3655, %v4060
        %v4077 = vmul.f32 %v3656, %v4063
        %v4078 = vmul.f32 %v3688, %v4062
        %4091 = vrot.lane.b32.xlu0 %v4067, 123
        %v4092 = vpop.permute.xlu0 %4091
        %4093 = vrot.lane.b32.xlu0 %v4068, 123
        %v4094 = vpop.permute.xlu0 %4093
        %4095 = vrot.lane.b32.xlu0 %v4069, 123
        %v4096 = vpop.permute.xlu0 %4095
        %4097 = vrot.lane.b32.xlu0 %v4070, 123
        %v4098 = vpop.permute.xlu0 %4097
        %4099 = vrot.lane.b32.xlu0 %v4071, 123
        %v4100 = vpop.permute.xlu0 %4099
        %4101 = vrot.lane.b32.xlu0 %v4072, 123
        %v4102 = vpop.permute.xlu0 %4101
        %4103 = vrot.lane.b32.xlu0 %v4073, 123
        %v4104 = vpop.permute.xlu0 %4103
        %4105 = vrot.lane.b32.xlu0 %v4074, 123
        %v4106 = vpop.permute.xlu0 %4105
        %4107 = vrot.lane.b32.xlu0 %v4075, 123
        %v4108 = vpop.permute.xlu0 %4107
        %4109 = vrot.lane.b32.xlu0 %v4076, 123
        %v4110 = vpop.permute.xlu0 %4109
        %4111 = vrot.lane.b32.xlu0 %v4077, 123
        %v4112 = vpop.permute.xlu0 %4111
        %4113 = vrot.lane.b32.xlu0 %v4078, 123
        %v4114 = vpop.permute.xlu0 %4113
        %v4115 = vsel %vm837, %v4092, %v4094
        %v4116 = vsel %vm837, %v4094, %v4096
        %v4117 = vsel %vm837, %v4098, %v4100
        %v4118 = vsel %vm837, %v4100, %v4102
        %v4119 = vsel %vm837, %v4104, %v4106
        %v4120 = vsel %vm837, %v4106, %v4108
        %v4121 = vsel %vm837, %v4110, %v4112
        %v4122 = vsel %vm837, %v4112, %v4114
        %v4131 = vadd.f32 %v4041, %v4115
        %v4132 = vadd.f32 %v4042, %v4116
        %v4133 = vadd.f32 %v4043, %v4117
        %v4134 = vadd.f32 %v4044, %v4118
        %v4135 = vadd.f32 %v4045, %v4119
        %v4136 = vadd.f32 %v4046, %v4120
        %v4137 = vadd.f32 %v4047, %v4121
        %v4138 = vadd.f32 %v4048, %v4122
        %v4139 = vld [vmem:[%s1577] ss:$8 sm:$0x3]
        %v4141 = vlaneseq
        %v4142 = vshrl.u32 %v4141, 7
        %v4143 = vsub.s32 0, %v4142
        %v4144 = vrot.slane %v4139, %v4143
        %v4145 = vlaneseq
        %v4146 = vshrl.u32 %v4145, 7
        %v4147 = vsub.s32 1, %v4146
        %v4148 = vrot.slane %v4139, %v4147
        %4149 = vrot.lane.b32.xlu0 %v4144, 6
        %v4150 = vpop.permute.xlu0 %4149
        %4151 = vrot.lane.b32.xlu0 %v4148, 6
        %v4152 = vpop.permute.xlu0 %4151
        %v4153 = vsel %vm1592, %v4150, %v4152
        %v4157 = vmul.f32 %v3649, %v4150
        %v4158 = vmul.f32 %v3650, %v4153
        %v4159 = vmul.f32 %v3685, %v4152
        %v4160 = vmul.f32 %v3651, %v4150
        %v4161 = vmul.f32 %v3652, %v4153
        %v4162 = vmul.f32 %v3686, %v4152
        %v4163 = vmul.f32 %v3653, %v4150
        %v4164 = vmul.f32 %v3654, %v4153
        %v4165 = vmul.f32 %v3687, %v4152
        %v4166 = vmul.f32 %v3655, %v4150
        %v4167 = vmul.f32 %v3656, %v4153
        %v4168 = vmul.f32 %v3688, %v4152
        %4181 = vrot.lane.b32.xlu0 %v4157, 122
        %v4182 = vpop.permute.xlu0 %4181
        %4183 = vrot.lane.b32.xlu0 %v4158, 122
        %v4184 = vpop.permute.xlu0 %4183
        %4185 = vrot.lane.b32.xlu0 %v4159, 122
        %v4186 = vpop.permute.xlu0 %4185
        %4187 = vrot.lane.b32.xlu0 %v4160, 122
        %v4188 = vpop.permute.xlu0 %4187
        %4189 = vrot.lane.b32.xlu0 %v4161, 122
        %v4190 = vpop.permute.xlu0 %4189
        %4191 = vrot.lane.b32.xlu0 %v4162, 122
        %v4192 = vpop.permute.xlu0 %4191
        %4193 = vrot.lane.b32.xlu0 %v4163, 122
        %v4194 = vpop.permute.xlu0 %4193
        %4195 = vrot.lane.b32.xlu0 %v4164, 122
        %v4196 = vpop.permute.xlu0 %4195
        %4197 = vrot.lane.b32.xlu0 %v4165, 122
        %v4198 = vpop.permute.xlu0 %4197
        %4199 = vrot.lane.b32.xlu0 %v4166, 122
        %v4200 = vpop.permute.xlu0 %4199
        %4201 = vrot.lane.b32.xlu0 %v4167, 122
        %v4202 = vpop.permute.xlu0 %4201
        %4203 = vrot.lane.b32.xlu0 %v4168, 122
        %v4204 = vpop.permute.xlu0 %4203
        %v4205 = vsel %vm848, %v4182, %v4184
        %v4206 = vsel %vm848, %v4184, %v4186
        %v4207 = vsel %vm848, %v4188, %v4190
        %v4208 = vsel %vm848, %v4190, %v4192
        %v4209 = vsel %vm848, %v4194, %v4196
        %v4210 = vsel %vm848, %v4196, %v4198
        %v4211 = vsel %vm848, %v4200, %v4202
        %v4212 = vsel %vm848, %v4202, %v4204
        %v4221 = vadd.f32 %v4131, %v4205
        %v4222 = vadd.f32 %v4132, %v4206
        %v4223 = vadd.f32 %v4133, %v4207
        %v4224 = vadd.f32 %v4134, %v4208
        %v4225 = vadd.f32 %v4135, %v4209
        %v4226 = vadd.f32 %v4136, %v4210
        %v4227 = vadd.f32 %v4137, %v4211
        %v4228 = vadd.f32 %v4138, %v4212
        %v4229 = vld [vmem:[%s1669] ss:$8 sm:$0x3]
        %v4231 = vlaneseq
        %v4232 = vshrl.u32 %v4231, 7
        %v4233 = vsub.s32 0, %v4232
        %v4234 = vrot.slane %v4229, %v4233
        %v4235 = vlaneseq
        %v4236 = vshrl.u32 %v4235, 7
        %v4237 = vsub.s32 1, %v4236
        %v4238 = vrot.slane %v4229, %v4237
        %4239 = vrot.lane.b32.xlu0 %v4234, 7
        %v4240 = vpop.permute.xlu0 %4239
        %4241 = vrot.lane.b32.xlu0 %v4238, 7
        %v4242 = vpop.permute.xlu0 %4241
        %v4243 = vsel %vm1684, %v4240, %v4242
        %v4247 = vmul.f32 %v3649, %v4240
        %v4248 = vmul.f32 %v3650, %v4243
        %v4249 = vmul.f32 %v3685, %v4242
        %v4250 = vmul.f32 %v3651, %v4240
        %v4251 = vmul.f32 %v3652, %v4243
        %v4252 = vmul.f32 %v3686, %v4242
        %v4253 = vmul.f32 %v3653, %v4240
        %v4254 = vmul.f32 %v3654, %v4243
        %v4255 = vmul.f32 %v3687, %v4242
        %v4256 = vmul.f32 %v3655, %v4240
        %v4257 = vmul.f32 %v3656, %v4243
        %v4258 = vmul.f32 %v3688, %v4242
        %4271 = vrot.lane.b32.xlu0 %v4247, 121
        %v4272 = vpop.permute.xlu0 %4271
        %4273 = vrot.lane.b32.xlu0 %v4248, 121
        %v4274 = vpop.permute.xlu0 %4273
        %4275 = vrot.lane.b32.xlu0 %v4249, 121
        %v4276 = vpop.permute.xlu0 %4275
        %4277 = vrot.lane.b32.xlu0 %v4250, 121
        %v4278 = vpop.permute.xlu0 %4277
        %4279 = vrot.lane.b32.xlu0 %v4251, 121
        %v4280 = vpop.permute.xlu0 %4279
        %4281 = vrot.lane.b32.xlu0 %v4252, 121
        %v4282 = vpop.permute.xlu0 %4281
        %4283 = vrot.lane.b32.xlu0 %v4253, 121
        %v4284 = vpop.permute.xlu0 %4283
        %4285 = vrot.lane.b32.xlu0 %v4254, 121
        %v4286 = vpop.permute.xlu0 %4285
        %4287 = vrot.lane.b32.xlu0 %v4255, 121
        %v4288 = vpop.permute.xlu0 %4287
        %4289 = vrot.lane.b32.xlu0 %v4256, 121
        %v4290 = vpop.permute.xlu0 %4289
        %4291 = vrot.lane.b32.xlu0 %v4257, 121
        %v4292 = vpop.permute.xlu0 %4291
        %4293 = vrot.lane.b32.xlu0 %v4258, 121
        %v4294 = vpop.permute.xlu0 %4293
        %v4295 = vsel %vm859, %v4272, %v4274
        %v4296 = vsel %vm859, %v4274, %v4276
        %v4297 = vsel %vm859, %v4278, %v4280
        %v4298 = vsel %vm859, %v4280, %v4282
        %v4299 = vsel %vm859, %v4284, %v4286
        %v4300 = vsel %vm859, %v4286, %v4288
        %v4301 = vsel %vm859, %v4290, %v4292
        %v4302 = vsel %vm859, %v4292, %v4294
        %v4311 = vadd.f32 %v4221, %v4295
        %v4312 = vadd.f32 %v4222, %v4296
        %v4313 = vadd.f32 %v4223, %v4297
        %v4314 = vadd.f32 %v4224, %v4298
        %v4315 = vadd.f32 %v4225, %v4299
        %v4316 = vadd.f32 %v4226, %v4300
        %v4317 = vadd.f32 %v4227, %v4301
        %v4318 = vadd.f32 %v4228, %v4302
        %v4319 = vld [vmem:[%s1761] ss:$8 sm:$0x3]
        %v4321 = vlaneseq
        %v4322 = vshrl.u32 %v4321, 7
        %v4323 = vsub.s32 0, %v4322
        %v4324 = vrot.slane %v4319, %v4323
        %v4325 = vlaneseq
        %v4326 = vshrl.u32 %v4325, 7
        %v4327 = vsub.s32 1, %v4326
        %v4328 = vrot.slane %v4319, %v4327
        %4329 = vrot.lane.b32.xlu0 %v4324, 8
        %v4330 = vpop.permute.xlu0 %4329
        %4331 = vrot.lane.b32.xlu0 %v4328, 8
        %v4332 = vpop.permute.xlu0 %4331
        %v4333 = vsel %vm759, %v4330, %v4332
        %v4337 = vmul.f32 %v3649, %v4330
        %v4338 = vmul.f32 %v3650, %v4333
        %v4339 = vmul.f32 %v3685, %v4332
        %v4340 = vmul.f32 %v3651, %v4330
        %v4341 = vmul.f32 %v3652, %v4333
        %v4342 = vmul.f32 %v3686, %v4332
        %v4343 = vmul.f32 %v3653, %v4330
        %v4344 = vmul.f32 %v3654, %v4333
        %v4345 = vmul.f32 %v3687, %v4332
        %v4346 = vmul.f32 %v3655, %v4330
        %v4347 = vmul.f32 %v3656, %v4333
        %v4348 = vmul.f32 %v3688, %v4332
        %4361 = vrot.lane.b32.xlu0 %v4337, 120
        %v4362 = vpop.permute.xlu0 %4361
        %4363 = vrot.lane.b32.xlu0 %v4338, 120
        %v4364 = vpop.permute.xlu0 %4363
        %4365 = vrot.lane.b32.xlu0 %v4339, 120
        %v4366 = vpop.permute.xlu0 %4365
        %4367 = vrot.lane.b32.xlu0 %v4340, 120
        %v4368 = vpop.permute.xlu0 %4367
        %4369 = vrot.lane.b32.xlu0 %v4341, 120
        %v4370 = vpop.permute.xlu0 %4369
        %4371 = vrot.lane.b32.xlu0 %v4342, 120
        %v4372 = vpop.permute.xlu0 %4371
        %4373 = vrot.lane.b32.xlu0 %v4343, 120
        %v4374 = vpop.permute.xlu0 %4373
        %4375 = vrot.lane.b32.xlu0 %v4344, 120
        %v4376 = vpop.permute.xlu0 %4375
        %4377 = vrot.lane.b32.xlu0 %v4345, 120
        %v4378 = vpop.permute.xlu0 %4377
        %4379 = vrot.lane.b32.xlu0 %v4346, 120
        %v4380 = vpop.permute.xlu0 %4379
        %4381 = vrot.lane.b32.xlu0 %v4347, 120
        %v4382 = vpop.permute.xlu0 %4381
        %4383 = vrot.lane.b32.xlu0 %v4348, 120
        %v4384 = vpop.permute.xlu0 %4383
        %v4385 = vsel %vm870, %v4362, %v4364
        %v4386 = vsel %vm870, %v4364, %v4366
        %v4387 = vsel %vm870, %v4368, %v4370
        %v4388 = vsel %vm870, %v4370, %v4372
        %v4389 = vsel %vm870, %v4374, %v4376
        %v4390 = vsel %vm870, %v4376, %v4378
        %v4391 = vsel %vm870, %v4380, %v4382
        %v4392 = vsel %vm870, %v4382, %v4384
        %v4401 = vadd.f32 %v4311, %v4385
        %v4402 = vadd.f32 %v4312, %v4386
        %v4403 = vadd.f32 %v4313, %v4387
        %v4404 = vadd.f32 %v4314, %v4388
        %v4405 = vadd.f32 %v4315, %v4389
        %v4406 = vadd.f32 %v4316, %v4390
        %v4407 = vadd.f32 %v4317, %v4391
        %v4408 = vadd.f32 %v4318, %v4392
        %v4409 = vld [vmem:[%s1852] ss:$8 sm:$0x3]
        %v4411 = vlaneseq
        %v4412 = vshrl.u32 %v4411, 7
        %v4413 = vsub.s32 0, %v4412
        %v4414 = vrot.slane %v4409, %v4413
        %v4415 = vlaneseq
        %v4416 = vshrl.u32 %v4415, 7
        %v4417 = vsub.s32 1, %v4416
        %v4418 = vrot.slane %v4409, %v4417
        %4419 = vrot.lane.b32.xlu0 %v4414, 9
        %v4420 = vpop.permute.xlu0 %4419
        %4421 = vrot.lane.b32.xlu0 %v4418, 9
        %v4422 = vpop.permute.xlu0 %4421
        %v4423 = vsel %vm908, %v4420, %v4422
        %v4427 = vmul.f32 %v3649, %v4420
        %v4428 = vmul.f32 %v3650, %v4423
        %v4429 = vmul.f32 %v3685, %v4422
        %v4430 = vmul.f32 %v3651, %v4420
        %v4431 = vmul.f32 %v3652, %v4423
        %v4432 = vmul.f32 %v3686, %v4422
        %v4433 = vmul.f32 %v3653, %v4420
        %v4434 = vmul.f32 %v3654, %v4423
        %v4435 = vmul.f32 %v3687, %v4422
        %v4436 = vmul.f32 %v3655, %v4420
        %v4437 = vmul.f32 %v3656, %v4423
        %v4438 = vmul.f32 %v3688, %v4422
        %4451 = vrot.lane.b32.xlu0 %v4427, 119
        %v4452 = vpop.permute.xlu0 %4451
        %4453 = vrot.lane.b32.xlu0 %v4428, 119
        %v4454 = vpop.permute.xlu0 %4453
        %4455 = vrot.lane.b32.xlu0 %v4429, 119
        %v4456 = vpop.permute.xlu0 %4455
        %4457 = vrot.lane.b32.xlu0 %v4430, 119
        %v4458 = vpop.permute.xlu0 %4457
        %4459 = vrot.lane.b32.xlu0 %v4431, 119
        %v4460 = vpop.permute.xlu0 %4459
        %4461 = vrot.lane.b32.xlu0 %v4432, 119
        %v4462 = vpop.permute.xlu0 %4461
        %4463 = vrot.lane.b32.xlu0 %v4433, 119
        %v4464 = vpop.permute.xlu0 %4463
        %4465 = vrot.lane.b32.xlu0 %v4434, 119
        %v4466 = vpop.permute.xlu0 %4465
        %4467 = vrot.lane.b32.xlu0 %v4435, 119
        %v4468 = vpop.permute.xlu0 %4467
        %4469 = vrot.lane.b32.xlu0 %v4436, 119
        %v4470 = vpop.permute.xlu0 %4469
        %4471 = vrot.lane.b32.xlu0 %v4437, 119
        %v4472 = vpop.permute.xlu0 %4471
        %4473 = vrot.lane.b32.xlu0 %v4438, 119
        %v4474 = vpop.permute.xlu0 %4473
        %v4475 = vsel %vm1919, %v4452, %v4454
        %v4476 = vsel %vm1919, %v4454, %v4456
        %v4477 = vsel %vm1919, %v4458, %v4460
        %v4478 = vsel %vm1919, %v4460, %v4462
        %v4479 = vsel %vm1919, %v4464, %v4466
        %v4480 = vsel %vm1919, %v4466, %v4468
        %v4481 = vsel %vm1919, %v4470, %v4472
        %v4482 = vsel %vm1919, %v4472, %v4474
        %v4491 = vadd.f32 %v4401, %v4475
        %v4492 = vadd.f32 %v4402, %v4476
        %v4493 = vadd.f32 %v4403, %v4477
        %v4494 = vadd.f32 %v4404, %v4478
        %v4495 = vadd.f32 %v4405, %v4479
        %v4496 = vadd.f32 %v4406, %v4480
        %v4497 = vadd.f32 %v4407, %v4481
        %v4498 = vadd.f32 %v4408, %v4482
        %v4499 = vld [vmem:[%s1944] ss:$8 sm:$0x3]
        %v4501 = vlaneseq
        %v4502 = vshrl.u32 %v4501, 7
        %v4503 = vsub.s32 0, %v4502
        %v4504 = vrot.slane %v4499, %v4503
        %v4505 = vlaneseq
        %v4506 = vshrl.u32 %v4505, 7
        %v4507 = vsub.s32 1, %v4506
        %v4508 = vrot.slane %v4499, %v4507
        %4509 = vrot.lane.b32.xlu0 %v4504, 10
        %v4510 = vpop.permute.xlu0 %4509
        %4511 = vrot.lane.b32.xlu0 %v4508, 10
        %v4512 = vpop.permute.xlu0 %4511
        %v4513 = vsel %vm1959, %v4510, %v4512
        %v4517 = vmul.f32 %v3649, %v4510
        %v4518 = vmul.f32 %v3650, %v4513
        %v4519 = vmul.f32 %v3685, %v4512
        %v4520 = vmul.f32 %v3651, %v4510
        %v4521 = vmul.f32 %v3652, %v4513
        %v4522 = vmul.f32 %v3686, %v4512
        %v4523 = vmul.f32 %v3653, %v4510
        %v4524 = vmul.f32 %v3654, %v4513
        %v4525 = vmul.f32 %v3687, %v4512
        %v4526 = vmul.f32 %v3655, %v4510
        %v4527 = vmul.f32 %v3656, %v4513
        %v4528 = vmul.f32 %v3688, %v4512
        %4541 = vrot.lane.b32.xlu0 %v4517, 118
        %v4542 = vpop.permute.xlu0 %4541
        %4543 = vrot.lane.b32.xlu0 %v4518, 118
        %v4544 = vpop.permute.xlu0 %4543
        %4545 = vrot.lane.b32.xlu0 %v4519, 118
        %v4546 = vpop.permute.xlu0 %4545
        %4547 = vrot.lane.b32.xlu0 %v4520, 118
        %v4548 = vpop.permute.xlu0 %4547
        %4549 = vrot.lane.b32.xlu0 %v4521, 118
        %v4550 = vpop.permute.xlu0 %4549
        %4551 = vrot.lane.b32.xlu0 %v4522, 118
        %v4552 = vpop.permute.xlu0 %4551
        %4553 = vrot.lane.b32.xlu0 %v4523, 118
        %v4554 = vpop.permute.xlu0 %4553
        %4555 = vrot.lane.b32.xlu0 %v4524, 118
        %v4556 = vpop.permute.xlu0 %4555
        %4557 = vrot.lane.b32.xlu0 %v4525, 118
        %v4558 = vpop.permute.xlu0 %4557
        %4559 = vrot.lane.b32.xlu0 %v4526, 118
        %v4560 = vpop.permute.xlu0 %4559
        %4561 = vrot.lane.b32.xlu0 %v4527, 118
        %v4562 = vpop.permute.xlu0 %4561
        %4563 = vrot.lane.b32.xlu0 %v4528, 118
        %v4564 = vpop.permute.xlu0 %4563
        %v4565 = vsel %vm2012, %v4542, %v4544
        %v4566 = vsel %vm2012, %v4544, %v4546
        %v4567 = vsel %vm2012, %v4548, %v4550
        %v4568 = vsel %vm2012, %v4550, %v4552
        %v4569 = vsel %vm2012, %v4554, %v4556
        %v4570 = vsel %vm2012, %v4556, %v4558
        %v4571 = vsel %vm2012, %v4560, %v4562
        %v4572 = vsel %vm2012, %v4562, %v4564
        %v4581 = vadd.f32 %v4491, %v4565
        %v4582 = vadd.f32 %v4492, %v4566
        %v4583 = vadd.f32 %v4493, %v4567
        %v4584 = vadd.f32 %v4494, %v4568
        %v4585 = vadd.f32 %v4495, %v4569
        %v4586 = vadd.f32 %v4496, %v4570
        %v4587 = vadd.f32 %v4497, %v4571
        %v4588 = vadd.f32 %v4498, %v4572
        %v4589 = vld [vmem:[%s2037] ss:$8 sm:$0x3]
        %v4591 = vlaneseq
        %v4592 = vshrl.u32 %v4591, 7
        %v4593 = vsub.s32 0, %v4592
        %v4594 = vrot.slane %v4589, %v4593
        %v4595 = vlaneseq
        %v4596 = vshrl.u32 %v4595, 7
        %v4597 = vsub.s32 1, %v4596
        %v4598 = vrot.slane %v4589, %v4597
        %4599 = vrot.lane.b32.xlu0 %v4594, 11
        %v4600 = vpop.permute.xlu0 %4599
        %4601 = vrot.lane.b32.xlu0 %v4598, 11
        %v4602 = vpop.permute.xlu0 %4601
        %v4603 = vsel %vm2052, %v4600, %v4602
        %v4607 = vmul.f32 %v3649, %v4600
        %v4608 = vmul.f32 %v3650, %v4603
        %v4609 = vmul.f32 %v3685, %v4602
        %v4610 = vmul.f32 %v3651, %v4600
        %v4611 = vmul.f32 %v3652, %v4603
        %v4612 = vmul.f32 %v3686, %v4602
        %v4613 = vmul.f32 %v3653, %v4600
        %v4614 = vmul.f32 %v3654, %v4603
        %v4615 = vmul.f32 %v3687, %v4602
        %v4616 = vmul.f32 %v3655, %v4600
        %v4617 = vmul.f32 %v3656, %v4603
        %v4618 = vmul.f32 %v3688, %v4602
        %4631 = vrot.lane.b32.xlu0 %v4607, 117
        %v4632 = vpop.permute.xlu0 %4631
        %4633 = vrot.lane.b32.xlu0 %v4608, 117
        %v4634 = vpop.permute.xlu0 %4633
        %4635 = vrot.lane.b32.xlu0 %v4609, 117
        %v4636 = vpop.permute.xlu0 %4635
        %4637 = vrot.lane.b32.xlu0 %v4610, 117
        %v4638 = vpop.permute.xlu0 %4637
        %4639 = vrot.lane.b32.xlu0 %v4611, 117
        %v4640 = vpop.permute.xlu0 %4639
        %4641 = vrot.lane.b32.xlu0 %v4612, 117
        %v4642 = vpop.permute.xlu0 %4641
        %4643 = vrot.lane.b32.xlu0 %v4613, 117
        %v4644 = vpop.permute.xlu0 %4643
        %4645 = vrot.lane.b32.xlu0 %v4614, 117
        %v4646 = vpop.permute.xlu0 %4645
        %4647 = vrot.lane.b32.xlu0 %v4615, 117
        %v4648 = vpop.permute.xlu0 %4647
        %4649 = vrot.lane.b32.xlu0 %v4616, 117
        %v4650 = vpop.permute.xlu0 %4649
        %4651 = vrot.lane.b32.xlu0 %v4617, 117
        %v4652 = vpop.permute.xlu0 %4651
        %4653 = vrot.lane.b32.xlu0 %v4618, 117
        %v4654 = vpop.permute.xlu0 %4653
        %v4655 = vsel %vm2105, %v4632, %v4634
        %v4656 = vsel %vm2105, %v4634, %v4636
        %v4657 = vsel %vm2105, %v4638, %v4640
        %v4658 = vsel %vm2105, %v4640, %v4642
        %v4659 = vsel %vm2105, %v4644, %v4646
        %v4660 = vsel %vm2105, %v4646, %v4648
        %v4661 = vsel %vm2105, %v4650, %v4652
        %v4662 = vsel %vm2105, %v4652, %v4654
        %v4671 = vadd.f32 %v4581, %v4655
        %v4672 = vadd.f32 %v4582, %v4656
        %v4673 = vadd.f32 %v4583, %v4657
        %v4674 = vadd.f32 %v4584, %v4658
        %v4675 = vadd.f32 %v4585, %v4659
        %v4676 = vadd.f32 %v4586, %v4660
        %v4677 = vadd.f32 %v4587, %v4661
        %v4678 = vadd.f32 %v4588, %v4662
        %v4679 = vld [vmem:[%s2130] ss:$8 sm:$0x3]
        %v4681 = vlaneseq
        %v4682 = vshrl.u32 %v4681, 7
        %v4683 = vsub.s32 0, %v4682
        %v4684 = vrot.slane %v4679, %v4683
        %v4685 = vlaneseq
        %v4686 = vshrl.u32 %v4685, 7
        %v4687 = vsub.s32 1, %v4686
        %v4688 = vrot.slane %v4679, %v4687
        %4689 = vrot.lane.b32.xlu0 %v4684, 12
        %v4690 = vpop.permute.xlu0 %4689
        %4691 = vrot.lane.b32.xlu0 %v4688, 12
        %v4692 = vpop.permute.xlu0 %4691
        %v4693 = vsel %vm2145, %v4690, %v4692
        %v4697 = vmul.f32 %v3649, %v4690
        %v4698 = vmul.f32 %v3650, %v4693
        %v4699 = vmul.f32 %v3685, %v4692
        %v4700 = vmul.f32 %v3651, %v4690
        %v4701 = vmul.f32 %v3652, %v4693
        %v4702 = vmul.f32 %v3686, %v4692
        %v4703 = vmul.f32 %v3653, %v4690
        %v4704 = vmul.f32 %v3654, %v4693
        %v4705 = vmul.f32 %v3687, %v4692
        %v4706 = vmul.f32 %v3655, %v4690
        %v4707 = vmul.f32 %v3656, %v4693
        %v4708 = vmul.f32 %v3688, %v4692
        %4721 = vrot.lane.b32.xlu0 %v4697, 116
        %v4722 = vpop.permute.xlu0 %4721
        %4723 = vrot.lane.b32.xlu0 %v4698, 116
        %v4724 = vpop.permute.xlu0 %4723
        %4725 = vrot.lane.b32.xlu0 %v4699, 116
        %v4726 = vpop.permute.xlu0 %4725
        %4727 = vrot.lane.b32.xlu0 %v4700, 116
        %v4728 = vpop.permute.xlu0 %4727
        %4729 = vrot.lane.b32.xlu0 %v4701, 116
        %v4730 = vpop.permute.xlu0 %4729
        %4731 = vrot.lane.b32.xlu0 %v4702, 116
        %v4732 = vpop.permute.xlu0 %4731
        %4733 = vrot.lane.b32.xlu0 %v4703, 116
        %v4734 = vpop.permute.xlu0 %4733
        %4735 = vrot.lane.b32.xlu0 %v4704, 116
        %v4736 = vpop.permute.xlu0 %4735
        %4737 = vrot.lane.b32.xlu0 %v4705, 116
        %v4738 = vpop.permute.xlu0 %4737
        %4739 = vrot.lane.b32.xlu0 %v4706, 116
        %v4740 = vpop.permute.xlu0 %4739
        %4741 = vrot.lane.b32.xlu0 %v4707, 116
        %v4742 = vpop.permute.xlu0 %4741
        %4743 = vrot.lane.b32.xlu0 %v4708, 116
        %v4744 = vpop.permute.xlu0 %4743
        %v4745 = vsel %vm2198, %v4722, %v4724
        %v4746 = vsel %vm2198, %v4724, %v4726
        %v4747 = vsel %vm2198, %v4728, %v4730
        %v4748 = vsel %vm2198, %v4730, %v4732
        %v4749 = vsel %vm2198, %v4734, %v4736
        %v4750 = vsel %vm2198, %v4736, %v4738
        %v4751 = vsel %vm2198, %v4740, %v4742
        %v4752 = vsel %vm2198, %v4742, %v4744
        %v4761 = vadd.f32 %v4671, %v4745
        %v4762 = vadd.f32 %v4672, %v4746
        %v4763 = vadd.f32 %v4673, %v4747
        %v4764 = vadd.f32 %v4674, %v4748
        %v4765 = vadd.f32 %v4675, %v4749
        %v4766 = vadd.f32 %v4676, %v4750
        %v4767 = vadd.f32 %v4677, %v4751
        %v4768 = vadd.f32 %v4678, %v4752
        %v4769 = vld [vmem:[%s2223] ss:$8 sm:$0x3]
        %v4771 = vlaneseq
        %v4772 = vshrl.u32 %v4771, 7
        %v4773 = vsub.s32 0, %v4772
        %v4774 = vrot.slane %v4769, %v4773
        %v4775 = vlaneseq
        %v4776 = vshrl.u32 %v4775, 7
        %v4777 = vsub.s32 1, %v4776
        %v4778 = vrot.slane %v4769, %v4777
        %4779 = vrot.lane.b32.xlu0 %v4774, 13
        %v4780 = vpop.permute.xlu0 %4779
        %4781 = vrot.lane.b32.xlu0 %v4778, 13
        %v4782 = vpop.permute.xlu0 %4781
        %v4783 = vsel %vm2238, %v4780, %v4782
        %v4787 = vmul.f32 %v3649, %v4780
        %v4788 = vmul.f32 %v3650, %v4783
        %v4789 = vmul.f32 %v3685, %v4782
        %v4790 = vmul.f32 %v3651, %v4780
        %v4791 = vmul.f32 %v3652, %v4783
        %v4792 = vmul.f32 %v3686, %v4782
        %v4793 = vmul.f32 %v3653, %v4780
        %v4794 = vmul.f32 %v3654, %v4783
        %v4795 = vmul.f32 %v3687, %v4782
        %v4796 = vmul.f32 %v3655, %v4780
        %v4797 = vmul.f32 %v3656, %v4783
        %v4798 = vmul.f32 %v3688, %v4782
        %4811 = vrot.lane.b32.xlu0 %v4787, 115
        %v4812 = vpop.permute.xlu0 %4811
        %4813 = vrot.lane.b32.xlu0 %v4788, 115
        %v4814 = vpop.permute.xlu0 %4813
        %4815 = vrot.lane.b32.xlu0 %v4789, 115
        %v4816 = vpop.permute.xlu0 %4815
        %4817 = vrot.lane.b32.xlu0 %v4790, 115
        %v4818 = vpop.permute.xlu0 %4817
        %4819 = vrot.lane.b32.xlu0 %v4791, 115
        %v4820 = vpop.permute.xlu0 %4819
        %4821 = vrot.lane.b32.xlu0 %v4792, 115
        %v4822 = vpop.permute.xlu0 %4821
        %4823 = vrot.lane.b32.xlu0 %v4793, 115
        %v4824 = vpop.permute.xlu0 %4823
        %4825 = vrot.lane.b32.xlu0 %v4794, 115
        %v4826 = vpop.permute.xlu0 %4825
        %4827 = vrot.lane.b32.xlu0 %v4795, 115
        %v4828 = vpop.permute.xlu0 %4827
        %4829 = vrot.lane.b32.xlu0 %v4796, 115
        %v4830 = vpop.permute.xlu0 %4829
        %4831 = vrot.lane.b32.xlu0 %v4797, 115
        %v4832 = vpop.permute.xlu0 %4831
        %4833 = vrot.lane.b32.xlu0 %v4798, 115
        %v4834 = vpop.permute.xlu0 %4833
        %v4835 = vsel %vm2291, %v4812, %v4814
        %v4836 = vsel %vm2291, %v4814, %v4816
        %v4837 = vsel %vm2291, %v4818, %v4820
        %v4838 = vsel %vm2291, %v4820, %v4822
        %v4839 = vsel %vm2291, %v4824, %v4826
        %v4840 = vsel %vm2291, %v4826, %v4828
        %v4841 = vsel %vm2291, %v4830, %v4832
        %v4842 = vsel %vm2291, %v4832, %v4834
        %v4851 = vadd.f32 %v4761, %v4835
        %v4852 = vadd.f32 %v4762, %v4836
        %v4853 = vadd.f32 %v4763, %v4837
        %v4854 = vadd.f32 %v4764, %v4838
        %v4855 = vadd.f32 %v4765, %v4839
        %v4856 = vadd.f32 %v4766, %v4840
        %v4857 = vadd.f32 %v4767, %v4841
        %v4858 = vadd.f32 %v4768, %v4842
        %v4859 = vld [vmem:[%s2316] ss:$8 sm:$0x3]
        %v4861 = vlaneseq
        %v4862 = vshrl.u32 %v4861, 7
        %v4863 = vsub.s32 0, %v4862
        %v4864 = vrot.slane %v4859, %v4863
        %v4865 = vlaneseq
        %v4866 = vshrl.u32 %v4865, 7
        %v4867 = vsub.s32 1, %v4866
        %v4868 = vrot.slane %v4859, %v4867
        %4869 = vrot.lane.b32.xlu0 %v4864, 14
        %v4870 = vpop.permute.xlu0 %4869
        %4871 = vrot.lane.b32.xlu0 %v4868, 14
        %v4872 = vpop.permute.xlu0 %4871
        %v4873 = vsel %vm2331, %v4870, %v4872
        %v4877 = vmul.f32 %v3649, %v4870
        %v4878 = vmul.f32 %v3650, %v4873
        %v4879 = vmul.f32 %v3685, %v4872
        %v4880 = vmul.f32 %v3651, %v4870
        %v4881 = vmul.f32 %v3652, %v4873
        %v4882 = vmul.f32 %v3686, %v4872
        %v4883 = vmul.f32 %v3653, %v4870
        %v4884 = vmul.f32 %v3654, %v4873
        %v4885 = vmul.f32 %v3687, %v4872
        %v4886 = vmul.f32 %v3655, %v4870
        %v4887 = vmul.f32 %v3656, %v4873
        %v4888 = vmul.f32 %v3688, %v4872
        %4901 = vrot.lane.b32.xlu0 %v4877, 114
        %v4902 = vpop.permute.xlu0 %4901
        %4903 = vrot.lane.b32.xlu0 %v4878, 114
        %v4904 = vpop.permute.xlu0 %4903
        %4905 = vrot.lane.b32.xlu0 %v4879, 114
        %v4906 = vpop.permute.xlu0 %4905
        %4907 = vrot.lane.b32.xlu0 %v4880, 114
        %v4908 = vpop.permute.xlu0 %4907
        %4909 = vrot.lane.b32.xlu0 %v4881, 114
        %v4910 = vpop.permute.xlu0 %4909
        %4911 = vrot.lane.b32.xlu0 %v4882, 114
        %v4912 = vpop.permute.xlu0 %4911
        %4913 = vrot.lane.b32.xlu0 %v4883, 114
        %v4914 = vpop.permute.xlu0 %4913
        %4915 = vrot.lane.b32.xlu0 %v4884, 114
        %v4916 = vpop.permute.xlu0 %4915
        %4917 = vrot.lane.b32.xlu0 %v4885, 114
        %v4918 = vpop.permute.xlu0 %4917
        %4919 = vrot.lane.b32.xlu0 %v4886, 114
        %v4920 = vpop.permute.xlu0 %4919
        %4921 = vrot.lane.b32.xlu0 %v4887, 114
        %v4922 = vpop.permute.xlu0 %4921
        %4923 = vrot.lane.b32.xlu0 %v4888, 114
        %v4924 = vpop.permute.xlu0 %4923
        %v4925 = vsel %vm2384, %v4902, %v4904
        %v4926 = vsel %vm2384, %v4904, %v4906
        %v4927 = vsel %vm2384, %v4908, %v4910
        %v4928 = vsel %vm2384, %v4910, %v4912
        %v4929 = vsel %vm2384, %v4914, %v4916
        %v4930 = vsel %vm2384, %v4916, %v4918
        %v4931 = vsel %vm2384, %v4920, %v4922
        %v4932 = vsel %vm2384, %v4922, %v4924
        %v4941 = vadd.f32 %v4851, %v4925
        %v4942 = vadd.f32 %v4852, %v4926
        %v4943 = vadd.f32 %v4853, %v4927
        %v4944 = vadd.f32 %v4854, %v4928
        %v4945 = vadd.f32 %v4855, %v4929
        %v4946 = vadd.f32 %v4856, %v4930
        %v4947 = vadd.f32 %v4857, %v4931
        %v4948 = vadd.f32 %v4858, %v4932
        %v4949 = vld [vmem:[%s2409] ss:$8 sm:$0x3]
        %v4951 = vlaneseq
        %v4952 = vshrl.u32 %v4951, 7
        %v4953 = vsub.s32 0, %v4952
        %v4954 = vrot.slane %v4949, %v4953
        %v4955 = vlaneseq
        %v4956 = vshrl.u32 %v4955, 7
        %v4957 = vsub.s32 1, %v4956
        %v4958 = vrot.slane %v4949, %v4957
        %4959 = vrot.lane.b32.xlu0 %v4954, 15
        %v4960 = vpop.permute.xlu0 %4959
        %4961 = vrot.lane.b32.xlu0 %v4958, 15
        %v4962 = vpop.permute.xlu0 %4961
        %v4963 = vsel %vm2424, %v4960, %v4962
        %v4967 = vmul.f32 %v3649, %v4960
        %v4968 = vmul.f32 %v3650, %v4963
        %v4969 = vmul.f32 %v3685, %v4962
        %v4970 = vmul.f32 %v3651, %v4960
        %v4971 = vmul.f32 %v3652, %v4963
        %v4972 = vmul.f32 %v3686, %v4962
        %v4973 = vmul.f32 %v3653, %v4960
        %v4974 = vmul.f32 %v3654, %v4963
        %v4975 = vmul.f32 %v3687, %v4962
        %v4976 = vmul.f32 %v3655, %v4960
        %v4977 = vmul.f32 %v3656, %v4963
        %v4978 = vmul.f32 %v3688, %v4962
        %4991 = vrot.lane.b32.xlu0 %v4967, 113
        %v4992 = vpop.permute.xlu0 %4991
        %4993 = vrot.lane.b32.xlu0 %v4968, 113
        %v4994 = vpop.permute.xlu0 %4993
        %4995 = vrot.lane.b32.xlu0 %v4969, 113
        %v4996 = vpop.permute.xlu0 %4995
        %4997 = vrot.lane.b32.xlu0 %v4970, 113
        %v4998 = vpop.permute.xlu0 %4997
        %4999 = vrot.lane.b32.xlu0 %v4971, 113
        %v5000 = vpop.permute.xlu0 %4999
        %5001 = vrot.lane.b32.xlu0 %v4972, 113
        %v5002 = vpop.permute.xlu0 %5001
        %5003 = vrot.lane.b32.xlu0 %v4973, 113
        %v5004 = vpop.permute.xlu0 %5003
        %5005 = vrot.lane.b32.xlu0 %v4974, 113
        %v5006 = vpop.permute.xlu0 %5005
        %5007 = vrot.lane.b32.xlu0 %v4975, 113
        %v5008 = vpop.permute.xlu0 %5007
        %5009 = vrot.lane.b32.xlu0 %v4976, 113
        %v5010 = vpop.permute.xlu0 %5009
        %5011 = vrot.lane.b32.xlu0 %v4977, 113
        %v5012 = vpop.permute.xlu0 %5011
        %5013 = vrot.lane.b32.xlu0 %v4978, 113
        %v5014 = vpop.permute.xlu0 %5013
        %v5015 = vsel %vm2477, %v4992, %v4994
        %v5016 = vsel %vm2477, %v4994, %v4996
        %v5017 = vsel %vm2477, %v4998, %v5000
        %v5018 = vsel %vm2477, %v5000, %v5002
        %v5019 = vsel %vm2477, %v5004, %v5006
        %v5020 = vsel %vm2477, %v5006, %v5008
        %v5021 = vsel %vm2477, %v5010, %v5012
        %v5022 = vsel %vm2477, %v5012, %v5014
        %v5031 = vadd.f32 %v4941, %v5015
        %v5032 = vadd.f32 %v4942, %v5016
        %v5033 = vadd.f32 %v4943, %v5017
        %v5034 = vadd.f32 %v4944, %v5018
        %v5035 = vadd.f32 %v4945, %v5019
        %v5036 = vadd.f32 %v4946, %v5020
        %v5037 = vadd.f32 %v4947, %v5021
        %v5038 = vadd.f32 %v4948, %v5022
        %v5039 = vld [vmem:[%s2502] ss:$8 sm:$0x3]
        %v5041 = vlaneseq
        %v5042 = vshrl.u32 %v5041, 7
        %v5043 = vsub.s32 0, %v5042
        %v5044 = vrot.slane %v5039, %v5043
        %v5045 = vlaneseq
        %v5046 = vshrl.u32 %v5045, 7
        %v5047 = vsub.s32 1, %v5046
        %v5048 = vrot.slane %v5039, %v5047
        %5049 = vrot.lane.b32.xlu0 %v5044, 16
        %v5050 = vpop.permute.xlu0 %5049
        %5051 = vrot.lane.b32.xlu0 %v5048, 16
        %v5052 = vpop.permute.xlu0 %5051
        %v5053 = vsel %vm2517, %v5050, %v5052
        %v5057 = vmul.f32 %v3649, %v5050
        %v5058 = vmul.f32 %v3650, %v5053
        %v5059 = vmul.f32 %v3685, %v5052
        %v5060 = vmul.f32 %v3651, %v5050
        %v5061 = vmul.f32 %v3652, %v5053
        %v5062 = vmul.f32 %v3686, %v5052
        %v5063 = vmul.f32 %v3653, %v5050
        %v5064 = vmul.f32 %v3654, %v5053
        %v5065 = vmul.f32 %v3687, %v5052
        %v5066 = vmul.f32 %v3655, %v5050
        %v5067 = vmul.f32 %v3656, %v5053
        %v5068 = vmul.f32 %v3688, %v5052
        %5081 = vrot.lane.b32.xlu0 %v5057, 112
        %v5082 = vpop.permute.xlu0 %5081
        %5083 = vrot.lane.b32.xlu0 %v5058, 112
        %v5084 = vpop.permute.xlu0 %5083
        %5085 = vrot.lane.b32.xlu0 %v5059, 112
        %v5086 = vpop.permute.xlu0 %5085
        %5087 = vrot.lane.b32.xlu0 %v5060, 112
        %v5088 = vpop.permute.xlu0 %5087
        %5089 = vrot.lane.b32.xlu0 %v5061, 112
        %v5090 = vpop.permute.xlu0 %5089
        %5091 = vrot.lane.b32.xlu0 %v5062, 112
        %v5092 = vpop.permute.xlu0 %5091
        %5093 = vrot.lane.b32.xlu0 %v5063, 112
        %v5094 = vpop.permute.xlu0 %5093
        %5095 = vrot.lane.b32.xlu0 %v5064, 112
        %v5096 = vpop.permute.xlu0 %5095
        %5097 = vrot.lane.b32.xlu0 %v5065, 112
        %v5098 = vpop.permute.xlu0 %5097
        %5099 = vrot.lane.b32.xlu0 %v5066, 112
        %v5100 = vpop.permute.xlu0 %5099
        %5101 = vrot.lane.b32.xlu0 %v5067, 112
        %v5102 = vpop.permute.xlu0 %5101
        %5103 = vrot.lane.b32.xlu0 %v5068, 112
        %v5104 = vpop.permute.xlu0 %5103
        %v5105 = vsel %vm2570, %v5082, %v5084
        %v5106 = vsel %vm2570, %v5084, %v5086
        %v5107 = vsel %vm2570, %v5088, %v5090
        %v5108 = vsel %vm2570, %v5090, %v5092
        %v5109 = vsel %vm2570, %v5094, %v5096
        %v5110 = vsel %vm2570, %v5096, %v5098
        %v5111 = vsel %vm2570, %v5100, %v5102
        %v5112 = vsel %vm2570, %v5102, %v5104
        %v5121 = vadd.f32 %v5031, %v5105
        %v5122 = vadd.f32 %v5032, %v5106
        %v5123 = vadd.f32 %v5033, %v5107
        %v5124 = vadd.f32 %v5034, %v5108
        %v5125 = vadd.f32 %v5035, %v5109
        %v5126 = vadd.f32 %v5036, %v5110
        %v5127 = vadd.f32 %v5037, %v5111
        %v5128 = vadd.f32 %v5038, %v5112
        %v5129 = vld [vmem:[%s2595] ss:$8 sm:$0x3]
        %v5131 = vlaneseq
        %v5132 = vshrl.u32 %v5131, 7
        %v5133 = vsub.s32 0, %v5132
        %v5134 = vrot.slane %v5129, %v5133
        %v5135 = vlaneseq
        %v5136 = vshrl.u32 %v5135, 7
        %v5137 = vsub.s32 1, %v5136
        %v5138 = vrot.slane %v5129, %v5137
        %5139 = vrot.lane.b32.xlu0 %v5134, 17
        %v5140 = vpop.permute.xlu0 %5139
        %5141 = vrot.lane.b32.xlu0 %v5138, 17
        %v5142 = vpop.permute.xlu0 %5141
        %v5143 = vsel %vm2610, %v5140, %v5142
        %v5147 = vmul.f32 %v3649, %v5140
        %v5148 = vmul.f32 %v3650, %v5143
        %v5149 = vmul.f32 %v3685, %v5142
        %v5150 = vmul.f32 %v3651, %v5140
        %v5151 = vmul.f32 %v3652, %v5143
        %v5152 = vmul.f32 %v3686, %v5142
        %v5153 = vmul.f32 %v3653, %v5140
        %v5154 = vmul.f32 %v3654, %v5143
        %v5155 = vmul.f32 %v3687, %v5142
        %v5156 = vmul.f32 %v3655, %v5140
        %v5157 = vmul.f32 %v3656, %v5143
        %v5158 = vmul.f32 %v3688, %v5142
        %5171 = vrot.lane.b32.xlu0 %v5147, 111
        %v5172 = vpop.permute.xlu0 %5171
        %5173 = vrot.lane.b32.xlu0 %v5148, 111
        %v5174 = vpop.permute.xlu0 %5173
        %5175 = vrot.lane.b32.xlu0 %v5149, 111
        %v5176 = vpop.permute.xlu0 %5175
        %5177 = vrot.lane.b32.xlu0 %v5150, 111
        %v5178 = vpop.permute.xlu0 %5177
        %5179 = vrot.lane.b32.xlu0 %v5151, 111
        %v5180 = vpop.permute.xlu0 %5179
        %5181 = vrot.lane.b32.xlu0 %v5152, 111
        %v5182 = vpop.permute.xlu0 %5181
        %5183 = vrot.lane.b32.xlu0 %v5153, 111
        %v5184 = vpop.permute.xlu0 %5183
        %5185 = vrot.lane.b32.xlu0 %v5154, 111
        %v5186 = vpop.permute.xlu0 %5185
        %5187 = vrot.lane.b32.xlu0 %v5155, 111
        %v5188 = vpop.permute.xlu0 %5187
        %5189 = vrot.lane.b32.xlu0 %v5156, 111
        %v5190 = vpop.permute.xlu0 %5189
        %5191 = vrot.lane.b32.xlu0 %v5157, 111
        %v5192 = vpop.permute.xlu0 %5191
        %5193 = vrot.lane.b32.xlu0 %v5158, 111
        %v5194 = vpop.permute.xlu0 %5193
        %v5195 = vsel %vm2663, %v5172, %v5174
        %v5196 = vsel %vm2663, %v5174, %v5176
        %v5197 = vsel %vm2663, %v5178, %v5180
        %v5198 = vsel %vm2663, %v5180, %v5182
        %v5199 = vsel %vm2663, %v5184, %v5186
        %v5200 = vsel %vm2663, %v5186, %v5188
        %v5201 = vsel %vm2663, %v5190, %v5192
        %v5202 = vsel %vm2663, %v5192, %v5194
        %v5211 = vadd.f32 %v5121, %v5195
        %v5212 = vadd.f32 %v5122, %v5196
        %v5213 = vadd.f32 %v5123, %v5197
        %v5214 = vadd.f32 %v5124, %v5198
        %v5215 = vadd.f32 %v5125, %v5199
        %v5216 = vadd.f32 %v5126, %v5200
        %v5217 = vadd.f32 %v5127, %v5201
        %v5218 = vadd.f32 %v5128, %v5202
        %v5219 = vld [vmem:[%s5] sm:$0x3]
        %v5221 = vlaneseq
        %v5222 = vshrl.u32 %v5221, 7
        %v5223 = vsub.s32 0, %v5222
        %v5224 = vrot.slane %v5219, %v5223
        %v5225 = vlaneseq
        %v5226 = vshrl.u32 %v5225, 7
        %v5227 = vsub.s32 1, %v5226
        %v5228 = vrot.slane %v5219, %v5227
        %v5231 = vadd.f32 %v5211, %v5224
        %v5232 = vadd.f32 %v5212, %v5228
        %v5233 = vadd.f32 %v5213, %v5224
        %v5234 = vadd.f32 %v5214, %v5228
        %v5235 = vadd.f32 %v5215, %v5224
        %v5236 = vadd.f32 %v5216, %v5228
        %v5237 = vadd.f32 %v5217, %v5224
        %v5238 = vadd.f32 %v5218, %v5228
        %v5239 = vmax.f32 %v5231, 0.0
        %v5240 = vmax.f32 %v5232, 0.0
        %v5241 = vmax.f32 %v5233, 0.0
        %v5242 = vmax.f32 %v5234, 0.0
        %v5243 = vmax.f32 %v5235, 0.0
        %v5244 = vmax.f32 %v5236, 0.0
        %v5245 = vmax.f32 %v5237, 0.0
        %v5246 = vmax.f32 %v5238, 0.0
        %v5247 = vand.u32 2147483647, %v5231
        %v5248 = vand.u32 2147483647, %v5232
        %v5249 = vand.u32 2147483647, %v5233
        %v5250 = vand.u32 2147483647, %v5234
        %v5251 = vand.u32 2147483647, %v5235
        %v5252 = vand.u32 2147483647, %v5236
        %v5253 = vand.u32 2147483647, %v5237
        %v5254 = vand.u32 2147483647, %v5238
        %v5255 = vsub.f32 0.0, %v5247
        %v5256 = vsub.f32 0.0, %v5248
        %v5257 = vsub.f32 0.0, %v5249
        %v5258 = vsub.f32 0.0, %v5250
        %v5259 = vsub.f32 0.0, %v5251
        %v5260 = vsub.f32 0.0, %v5252
        %v5261 = vsub.f32 0.0, %v5253
        %v5262 = vsub.f32 0.0, %v5254
        %v5263 = vmul.f32 %v5255, 1.442695
        %v5264 = vpow.pop %v5263
        %v5265 = vmul.f32 %v5256, 1.442695
        %v5266 = vpow.pop %v5265
        %v5267 = vmul.f32 %v5257, 1.442695
        %v5268 = vpow.pop %v5267
        %v5269 = vmul.f32 %v5258, 1.442695
        %v5270 = vpow.pop %v5269
        %v5271 = vmul.f32 %v5259, 1.442695
        %v5272 = vpow.pop %v5271
        %v5273 = vmul.f32 %v5260, 1.442695
        %v5274 = vpow.pop %v5273
        %v5275 = vmul.f32 %v5261, 1.442695
        %v5276 = vpow.pop %v5275
        %v5277 = vmul.f32 %v5262, 1.442695
        %v5278 = vpow.pop %v5277
        %v5279 = vadd.f32 %v5264, 1.0
        %v5280 = vadd.f32 %v5266, 1.0
        %v5281 = vadd.f32 %v5268, 1.0
        %v5282 = vadd.f32 %v5270, 1.0
        %v5283 = vadd.f32 %v5272, 1.0
        %v5284 = vadd.f32 %v5274, 1.0
        %v5285 = vadd.f32 %v5276, 1.0
        %v5286 = vadd.f32 %v5278, 1.0
        %v5287 = vlog2.pop %v5279
        %v5288 = vmul.f32 %v5287, 0.6931472
        %v5289 = vlog2.pop %v5280
        %v5290 = vmul.f32 %v5289, 0.6931472
        %v5291 = vlog2.pop %v5281
        %v5292 = vmul.f32 %v5291, 0.6931472
        %v5293 = vlog2.pop %v5282
        %v5294 = vmul.f32 %v5293, 0.6931472
        %v5295 = vlog2.pop %v5283
        %v5296 = vmul.f32 %v5295, 0.6931472
        %v5297 = vlog2.pop %v5284
        %v5298 = vmul.f32 %v5297, 0.6931472
        %v5299 = vlog2.pop %v5285
        %v5300 = vmul.f32 %v5299, 0.6931472
        %v5301 = vlog2.pop %v5286
        %v5302 = vmul.f32 %v5301, 0.6931472
        %v5303 = vadd.f32 %v5239, %v5288
        %v5304 = vadd.f32 %v5240, %v5290
        %v5305 = vadd.f32 %v5241, %v5292
        %v5306 = vadd.f32 %v5242, %v5294
        %v5307 = vadd.f32 %v5243, %v5296
        %v5308 = vadd.f32 %v5244, %v5298
        %v5309 = vadd.f32 %v5245, %v5300
        %v5310 = vadd.f32 %v5246, %v5302
        %5311 = vst [vmem:[#allocation5] sm:$0xff] %v5303
        %5312 = vst [vmem:[#allocation5 + $0x8] sm:$0xff] %v5304
        %5313 = vst [vmem:[#allocation5 + $0x18] sm:$0xff] %v5305
        %5314 = vst [vmem:[#allocation5 + $0x20] sm:$0xff] %v5306
        %5315 = vst [vmem:[#allocation5 + $0x30] sm:$0xff] %v5307
        %5316 = vst [vmem:[#allocation5 + $0x38] sm:$0xff] %v5308
        %5317 = vst [vmem:[#allocation5 + $0x48] sm:$0xff] %v5309
        %5318 = vst [vmem:[#allocation5 + $0x50] sm:$0xff] %v5310
        %v5319 = vld [vmem:[#allocation5] sm:$0xff]
        %v5320 = vld [vmem:[#allocation5 + $0x8] sm:$0xff]
        %v5321 = vld [vmem:[#allocation5 + $0x18] sm:$0xff]
        %v5322 = vld [vmem:[#allocation5 + $0x20] sm:$0xff]
        %v5323 = vld [vmem:[#allocation5 + $0x30] sm:$0xff]
        %v5324 = vld [vmem:[#allocation5 + $0x38] sm:$0xff]
        %v5325 = vld [vmem:[#allocation5 + $0x48] sm:$0xff]
        %v5326 = vld [vmem:[#allocation5 + $0x50] sm:$0xff]
        %v5327 = vld [vmem:[#allocation5 + $0x10] sm:$0xff]
        %v5328 = vld [vmem:[#allocation5 + $0x28] sm:$0xff]
        %v5329 = vld [vmem:[#allocation5 + $0x40] sm:$0xff]
        %v5330 = vld [vmem:[#allocation5 + $0x58] sm:$0xff]
        %5343 = vrot.lane.b32.xlu0 %v5319, 127
        %v5344 = vpop.permute.xlu0 %5343
        %5345 = vrot.lane.b32.xlu0 %v5320, 127
        %v5346 = vpop.permute.xlu0 %5345
        %5347 = vrot.lane.b32.xlu0 %v5327, 127
        %v5348 = vpop.permute.xlu0 %5347
        %5349 = vrot.lane.b32.xlu0 %v5321, 127
        %v5350 = vpop.permute.xlu0 %5349
        %5351 = vrot.lane.b32.xlu0 %v5322, 127
        %v5352 = vpop.permute.xlu0 %5351
        %5353 = vrot.lane.b32.xlu0 %v5328, 127
        %v5354 = vpop.permute.xlu0 %5353
        %5355 = vrot.lane.b32.xlu0 %v5323, 127
        %v5356 = vpop.permute.xlu0 %5355
        %5357 = vrot.lane.b32.xlu0 %v5324, 127
        %v5358 = vpop.permute.xlu0 %5357
        %5359 = vrot.lane.b32.xlu0 %v5329, 127
        %v5360 = vpop.permute.xlu0 %5359
        %5361 = vrot.lane.b32.xlu0 %v5325, 127
        %v5362 = vpop.permute.xlu0 %5361
        %5363 = vrot.lane.b32.xlu0 %v5326, 127
        %v5364 = vpop.permute.xlu0 %5363
        %5365 = vrot.lane.b32.xlu0 %v5330, 127
        %v5366 = vpop.permute.xlu0 %5365
        %v5367 = vsel %vm793, %v5344, %v5346
        %v5368 = vsel %vm793, %v5346, %v5348
        %v5369 = vsel %vm793, %v5350, %v5352
        %v5370 = vsel %vm793, %v5352, %v5354
        %v5371 = vsel %vm793, %v5356, %v5358
        %v5372 = vsel %vm793, %v5358, %v5360
        %v5373 = vsel %vm793, %v5362, %v5364
        %v5374 = vsel %vm793, %v5364, %v5366
        %v5383 = vmax.f32 %v5319, %v5367
        %v5384 = vmax.f32 %v5320, %v5368
        %v5385 = vmax.f32 %v5321, %v5369
        %v5386 = vmax.f32 %v5322, %v5370
        %v5387 = vmax.f32 %v5323, %v5371
        %v5388 = vmax.f32 %v5324, %v5372
        %v5389 = vmax.f32 %v5325, %v5373
        %v5390 = vmax.f32 %v5326, %v5374
        %5391 = vrot.lane.b32.xlu0 %v5319, 126
        %v5392 = vpop.permute.xlu0 %5391
        %5393 = vrot.lane.b32.xlu0 %v5320, 126
        %v5394 = vpop.permute.xlu0 %5393
        %5395 = vrot.lane.b32.xlu0 %v5327, 126
        %v5396 = vpop.permute.xlu0 %5395
        %5397 = vrot.lane.b32.xlu0 %v5321, 126
        %v5398 = vpop.permute.xlu0 %5397
        %5399 = vrot.lane.b32.xlu0 %v5322, 126
        %v5400 = vpop.permute.xlu0 %5399
        %5401 = vrot.lane.b32.xlu0 %v5328, 126
        %v5402 = vpop.permute.xlu0 %5401
        %5403 = vrot.lane.b32.xlu0 %v5323, 126
        %v5404 = vpop.permute.xlu0 %5403
        %5405 = vrot.lane.b32.xlu0 %v5324, 126
        %v5406 = vpop.permute.xlu0 %5405
        %5407 = vrot.lane.b32.xlu0 %v5329, 126
        %v5408 = vpop.permute.xlu0 %5407
        %5409 = vrot.lane.b32.xlu0 %v5325, 126
        %v5410 = vpop.permute.xlu0 %5409
        %5411 = vrot.lane.b32.xlu0 %v5326, 126
        %v5412 = vpop.permute.xlu0 %5411
        %5413 = vrot.lane.b32.xlu0 %v5330, 126
        %v5414 = vpop.permute.xlu0 %5413
        %v5415 = vsel %vm804, %v5392, %v5394
        %v5416 = vsel %vm804, %v5394, %v5396
        %v5417 = vsel %vm804, %v5398, %v5400
        %v5418 = vsel %vm804, %v5400, %v5402
        %v5419 = vsel %vm804, %v5404, %v5406
        %v5420 = vsel %vm804, %v5406, %v5408
        %v5421 = vsel %vm804, %v5410, %v5412
        %v5422 = vsel %vm804, %v5412, %v5414
        %v5431 = vmax.f32 %v5383, %v5415
        %v5432 = vmax.f32 %v5384, %v5416
        %v5433 = vmax.f32 %v5385, %v5417
        %v5434 = vmax.f32 %v5386, %v5418
        %v5435 = vmax.f32 %v5387, %v5419
        %v5436 = vmax.f32 %v5388, %v5420
        %v5437 = vmax.f32 %v5389, %v5421
        %v5438 = vmax.f32 %v5390, %v5422
        %5439 = vrot.lane.b32.xlu0 %v5319, 125
        %v5440 = vpop.permute.xlu0 %5439
        %5441 = vrot.lane.b32.xlu0 %v5320, 125
        %v5442 = vpop.permute.xlu0 %5441
        %5443 = vrot.lane.b32.xlu0 %v5327, 125
        %v5444 = vpop.permute.xlu0 %5443
        %5445 = vrot.lane.b32.xlu0 %v5321, 125
        %v5446 = vpop.permute.xlu0 %5445
        %5447 = vrot.lane.b32.xlu0 %v5322, 125
        %v5448 = vpop.permute.xlu0 %5447
        %5449 = vrot.lane.b32.xlu0 %v5328, 125
        %v5450 = vpop.permute.xlu0 %5449
        %5451 = vrot.lane.b32.xlu0 %v5323, 125
        %v5452 = vpop.permute.xlu0 %5451
        %5453 = vrot.lane.b32.xlu0 %v5324, 125
        %v5454 = vpop.permute.xlu0 %5453
        %5455 = vrot.lane.b32.xlu0 %v5329, 125
        %v5456 = vpop.permute.xlu0 %5455
        %5457 = vrot.lane.b32.xlu0 %v5325, 125
        %v5458 = vpop.permute.xlu0 %5457
        %5459 = vrot.lane.b32.xlu0 %v5326, 125
        %v5460 = vpop.permute.xlu0 %5459
        %5461 = vrot.lane.b32.xlu0 %v5330, 125
        %v5462 = vpop.permute.xlu0 %5461
        %v5463 = vsel %vm815, %v5440, %v5442
        %v5464 = vsel %vm815, %v5442, %v5444
        %v5465 = vsel %vm815, %v5446, %v5448
        %v5466 = vsel %vm815, %v5448, %v5450
        %v5467 = vsel %vm815, %v5452, %v5454
        %v5468 = vsel %vm815, %v5454, %v5456
        %v5469 = vsel %vm815, %v5458, %v5460
        %v5470 = vsel %vm815, %v5460, %v5462
        %v5479 = vmax.f32 %v5431, %v5463
        %v5480 = vmax.f32 %v5432, %v5464
        %v5481 = vmax.f32 %v5433, %v5465
        %v5482 = vmax.f32 %v5434, %v5466
        %v5483 = vmax.f32 %v5435, %v5467
        %v5484 = vmax.f32 %v5436, %v5468
        %v5485 = vmax.f32 %v5437, %v5469
        %v5486 = vmax.f32 %v5438, %v5470
        %v5487 = vpack.c.bf16 %v5481, %v5479
        %v5488 = vpack.c.bf16 %v5482, %v5480
        %v5489 = vpack.c.bf16 %v5485, %v5483
        %v5490 = vpack.c.bf16 %v5486, %v5484
        %v5491 = vld [vmem:[%s6] sm:$0xf]
        %v5492 = vld [vmem:[%s6 + $0x4] sm:$0xf]
        %v5493 = vld [vmem:[%s6 + $0x8] sm:$0xf]
        %v5494 = vld [vmem:[%s6 + $0xc] sm:$0xf]
        %v5495 = vld [vmem:[%s6 + $0x10] sm:$0xf]
        %v5496 = vld [vmem:[%s6 + $0x14] sm:$0xf]
        %v5497 = vld [vmem:[%s6 + $0x18] sm:$0xf]
        %v5498 = vld [vmem:[%s6 + $0x1c] sm:$0xf]
        %v5499 = vld [vmem:[%s6 + $0x20] sm:$0xf]
        %v5500 = vld [vmem:[%s6 + $0x24] sm:$0xf]
        %v5501 = vld [vmem:[%s6 + $0x28] sm:$0xf]
        %v5502 = vld [vmem:[%s6 + $0x2c] sm:$0xf]
        %v5503 = vld [vmem:[%s6 + $0x30] sm:$0xf]
        %v5504 = vld [vmem:[%s6 + $0x34] sm:$0xf]
        %v5505 = vld [vmem:[%s6 + $0x38] sm:$0xf]
        %v5506 = vld [vmem:[%s6 + $0x3c] sm:$0xf]
        %v5507 = vld [vmem:[%s6 + $0x40] sm:$0xf]
        %v5508 = vld [vmem:[%s6 + $0x44] sm:$0xf]
        %v5509 = vld [vmem:[%s6 + $0x48] sm:$0xf]
        %v5510 = vld [vmem:[%s6 + $0x4c] sm:$0xf]
        %v5511 = vld [vmem:[%s6 + $0x50] sm:$0xf]
        %v5512 = vld [vmem:[%s6 + $0x54] sm:$0xf]
        %v5513 = vld [vmem:[%s6 + $0x58] sm:$0xf]
        %v5514 = vld [vmem:[%s6 + $0x5c] sm:$0xf]
        %v5515 = vld [vmem:[%s6 + $0x60] sm:$0xf]
        %v5516 = vld [vmem:[%s6 + $0x64] sm:$0xf]
        %v5517 = vld [vmem:[%s6 + $0x68] sm:$0xf]
        %v5518 = vld [vmem:[%s6 + $0x6c] sm:$0xf]
        %v5519 = vld [vmem:[%s6 + $0x70] sm:$0xf]
        %v5520 = vld [vmem:[%s6 + $0x74] sm:$0xf]
        %v5521 = vld [vmem:[%s6 + $0x78] sm:$0xf]
        %v5522 = vld [vmem:[%s6 + $0x7c] sm:$0xf]
        %v5523 = vld [vmem:[%s7] sm:$0x1]
        %v5525 = vlaneseq
        %v5526 = vshrl.u32 %v5525, 7
        %v5527 = vsub.s32 0, %v5526
        %v5528 = vrot.slane %v5523, %v5527
        %v5562 = vunpack.c.l.b16 %v5491
        %v5563 = vunpack.c.l.b16 %v5492
        %v5564 = vunpack.c.l.b16 %v5493
        %v5565 = vunpack.c.l.b16 %v5494
        %v5566 = vunpack.c.l.b16 %v5495
        %v5567 = vunpack.c.l.b16 %v5496
        %v5568 = vunpack.c.l.b16 %v5497
        %v5569 = vunpack.c.l.b16 %v5498
        %v5570 = vunpack.c.l.b16 %v5499
        %v5571 = vunpack.c.l.b16 %v5500
        %v5572 = vunpack.c.l.b16 %v5501
        %v5573 = vunpack.c.l.b16 %v5502
        %v5574 = vunpack.c.l.b16 %v5503
        %v5575 = vunpack.c.l.b16 %v5504
        %v5576 = vunpack.c.l.b16 %v5505
        %v5577 = vunpack.c.l.b16 %v5506
        %v5578 = vunpack.c.l.b16 %v5507
        %v5579 = vunpack.c.l.b16 %v5508
        %v5580 = vunpack.c.l.b16 %v5509
        %v5581 = vunpack.c.l.b16 %v5510
        %v5582 = vunpack.c.l.b16 %v5511
        %v5583 = vunpack.c.l.b16 %v5512
        %v5584 = vunpack.c.l.b16 %v5513
        %v5585 = vunpack.c.l.b16 %v5514
        %v5586 = vunpack.c.l.b16 %v5515
        %v5587 = vunpack.c.l.b16 %v5516
        %v5588 = vunpack.c.l.b16 %v5517
        %v5589 = vunpack.c.l.b16 %v5518
        %v5590 = vunpack.c.l.b16 %v5519
        %v5591 = vunpack.c.l.b16 %v5520
        %v5592 = vunpack.c.l.b16 %v5521
        %v5593 = vunpack.c.l.b16 %v5522
        %v5594 = vpack.c.b16 %v5563, %v5562
        %v5595 = vpack.c.b16 %v5565, %v5564
        %v5596 = vpack.c.b16 %v5567, %v5566
        %v5597 = vpack.c.b16 %v5569, %v5568
        %v5598 = vpack.c.b16 %v5571, %v5570
        %v5599 = vpack.c.b16 %v5573, %v5572
        %v5600 = vpack.c.b16 %v5575, %v5574
        %v5601 = vpack.c.b16 %v5577, %v5576
        %v5602 = vpack.c.b16 %v5579, %v5578
        %v5603 = vpack.c.b16 %v5581, %v5580
        %v5604 = vpack.c.b16 %v5583, %v5582
        %v5605 = vpack.c.b16 %v5585, %v5584
        %v5606 = vpack.c.b16 %v5587, %v5586
        %v5607 = vpack.c.b16 %v5589, %v5588
        %v5608 = vpack.c.b16 %v5591, %v5590
        %v5609 = vpack.c.b16 %v5593, %v5592
        %5626 = vmatprep.subr.bf16.mxu0 0
        %5627 = vmatpush1.bf16.msra.mxu0 %v5594
        %5628 = vmatprep.subr.bf16.mxu0 0
        %5629 = vmatpush1.bf16.msra.mxu0 %v5595
        %5630 = vmatprep.subr.bf16.mxu0 0
        %5631 = vmatpush1.bf16.msra.mxu0 %v5596
        %5632 = vmatprep.subr.bf16.mxu0 0
        %5633 = vmatpush1.bf16.msra.mxu0 %v5597
        %5634 = vmatprep.subr.bf16.mxu0 0
        %5635 = vmatpush1.bf16.msra.mxu0 %v5598
        %5636 = vmatprep.subr.bf16.mxu0 0
        %5637 = vmatpush1.bf16.msra.mxu0 %v5599
        %5638 = vmatprep.subr.bf16.mxu0 0
        %5639 = vmatpush1.bf16.msra.mxu0 %v5600
        %5640 = vmatprep.subr.bf16.mxu0 0
        %5641 = vmatpush1.bf16.msra.mxu0 %v5601
        %5642 = vmatprep.subr.bf16.mxu0 0
        %5643 = vmatpush1.bf16.msra.mxu0 %v5602
        %5644 = vmatprep.subr.bf16.mxu0 0
        %5645 = vmatpush1.bf16.msra.mxu0 %v5603
        %5646 = vmatprep.subr.bf16.mxu0 0
        %5647 = vmatpush1.bf16.msra.mxu0 %v5604
        %5648 = vmatprep.subr.bf16.mxu0 0
        %5649 = vmatpush1.bf16.msra.mxu0 %v5605
        %5650 = vmatprep.subr.bf16.mxu0 0
        %5651 = vmatpush1.bf16.msra.mxu0 %v5606
        %5652 = vmatprep.subr.bf16.mxu0 0
        %5653 = vmatpush1.bf16.msra.mxu0 %v5607
        %5654 = vmatprep.subr.bf16.mxu0 0
        %5655 = vmatpush1.bf16.msra.mxu0 %v5608
        %5656 = vmatprep.subr.bf16.mxu0 0
        %5657 = vmatpush1.bf16.msra.mxu0 %v5609
        %5658 = vmatprep.mubr.bf16.mxu0 %v5488
        %5659 = vmatmul.mubr.bf16.gmra.mrb[0].mxu0 %v5487
        %v5660 = vpop.f32.mrb[0].mxu0
        %v5661 = vadd.f32 %v5528, %v5660
        %v5662 = vpop.f32.mrb[0].mxu0
        %v5663 = vpop.f32.mrb[0].mxu0
        %v5664 = vadd.f32 %v5528, %v5663
        %v5665 = vpop.f32.mrb[0].mxu0
        %5666 = vmatprep.mubr.bf16.mxu0 %v5490
        %5667 = vmatmul.mubr.bf16.gmra.mrb[0].mxu0 %v5489
        %v5668 = vpop.f32.mrb[0].mxu0
        %v5669 = vadd.f32 %v5528, %v5668
        %v5670 = vpop.f32.mrb[0].mxu0
        %v5671 = vpop.f32.mrb[0].mxu0
        %v5672 = vadd.f32 %v5528, %v5671
        %v5673 = vpop.f32.mrb[0].mxu0
        %5674 = vdwg.mxu0
        %v5675 = vpack.c.bf16 %v5664, %v5661
        %v5676 = vpack.c.bf16 %v5672, %v5669
        %v5677 = vld [vmem:[%s8] sm:$0x3]
        %v5678 = vld [vmem:[%s9] sm:$0x1]
        %v5680 = vlaneseq
        %v5681 = vshrl.u32 %v5680, 7
        %v5682 = vsub.s32 0, %v5681
        %v5683 = vrot.slane %v5678, %v5682
        %v5686 = vsel %vm745, %v5675, 0
        %v5689 = vsel %vm745, %v5676, 0
        %v5692 = vsel %vm3160, %v5677, 0
        %5694 = vmatprep.subr.bf16.mxu0 0
        %5695 = vmatpush1.bf16.msra.mxu0 %v5692
        %5696 = vmatprep.subr.bf16.mxu0 0
        %5697 = vmatpush1.bf16.msra.mxu0 0
        %5698 = vmatprep.subr.bf16.mxu0 0
        %5699 = vmatpush1.bf16.msra.mxu0 0
        %5700 = vmatprep.subr.bf16.mxu0 0
        %5701 = vmatpush1.bf16.msra.mxu0 0
        %5702 = vmatprep.subr.bf16.mxu0 0
        %5703 = vmatpush1.bf16.msra.mxu0 0
        %5704 = vmatprep.subr.bf16.mxu0 0
        %5705 = vmatpush1.bf16.msra.mxu0 0
        %5706 = vmatprep.subr.bf16.mxu0 0
        %5707 = vmatpush1.bf16.msra.mxu0 0
        %5708 = vmatprep.subr.bf16.mxu0 0
        %5709 = vmatpush1.bf16.msra.mxu0 0
        %5710 = vmatprep.subr.bf16.mxu0 0
        %5711 = vmatpush1.bf16.msra.mxu0 0
        %5712 = vmatprep.subr.bf16.mxu0 0
        %5713 = vmatpush1.bf16.msra.mxu0 0
        %5714 = vmatprep.subr.bf16.mxu0 0
        %5715 = vmatpush1.bf16.msra.mxu0 0
        %5716 = vmatprep.subr.bf16.mxu0 0
        %5717 = vmatpush1.bf16.msra.mxu0 0
        %5718 = vmatprep.subr.bf16.mxu0 0
        %5719 = vmatpush1.bf16.msra.mxu0 0
        %5720 = vmatprep.subr.bf16.mxu0 0
        %5721 = vmatpush1.bf16.msra.mxu0 0
        %5722 = vmatprep.subr.bf16.mxu0 0
        %5723 = vmatpush1.bf16.msra.mxu0 0
        %5724 = vmatprep.subr.bf16.mxu0 0
        %5725 = vmatpush1.bf16.msra.mxu0 0
        %5726 = vmatprep.mubr.bf16.mxu0 0
        %5727 = vmatmul.mubr.bf16.gmra.mrb[0].mxu0 %v5686
        %v5728 = vpop.f32.mrb[0].mxu0
        %v5729 = vadd.f32 %v5683, %v5728
        %v5730 = vpop.f32.mrb[0].mxu0
        %v5731 = vpop.f32.mrb[0].mxu0
        %v5732 = vadd.f32 %v5683, %v5731
        %v5733 = vpop.f32.mrb[0].mxu0
        %5734 = vmatprep.mubr.bf16.mxu0 0
        %5735 = vmatmul.mubr.bf16.gmra.mrb[0].mxu0 %v5689
        %v5736 = vpop.f32.mrb[0].mxu0
        %v5737 = vadd.f32 %v5683, %v5736
        %v5738 = vpop.f32.mrb[0].mxu0
        %v5739 = vpop.f32.mrb[0].mxu0
        %v5740 = vadd.f32 %v5683, %v5739
        %v5741 = vpop.f32.mrb[0].mxu0
        %5742 = vdwg.mxu0
        %v5743 = vmax.f32 %v5729, 0.0
        %v5744 = vmax.f32 %v5732, 0.0
        %v5745 = vmax.f32 %v5737, 0.0
        %v5746 = vmax.f32 %v5740, 0.0
        %v5747 = vand.u32 2147483647, %v5729
        %v5748 = vand.u32 2147483647, %v5732
        %v5749 = vand.u32 2147483647, %v5737
        %v5750 = vand.u32 2147483647, %v5740
        %v5751 = vsub.f32 0.0, %v5747
        %v5752 = vsub.f32 0.0, %v5748
        %v5753 = vsub.f32 0.0, %v5749
        %v5754 = vsub.f32 0.0, %v5750
        %v5755 = vmul.f32 %v5751, 1.442695
        %v5756 = vpow.pop %v5755
        %v5757 = vmul.f32 %v5752, 1.442695
        %v5758 = vpow.pop %v5757
        %v5759 = vmul.f32 %v5753, 1.442695
        %v5760 = vpow.pop %v5759
        %v5761 = vmul.f32 %v5754, 1.442695
        %v5762 = vpow.pop %v5761
        %v5763 = vadd.f32 %v5756, 1.0
        %v5764 = vadd.f32 %v5758, 1.0
        %v5765 = vadd.f32 %v5760, 1.0
        %v5766 = vadd.f32 %v5762, 1.0
        %v5767 = vlog2.pop %v5763
        %v5768 = vmul.f32 %v5767, 0.6931472
        %v5769 = vlog2.pop %v5764
        %v5770 = vmul.f32 %v5769, 0.6931472
        %v5771 = vlog2.pop %v5765
        %v5772 = vmul.f32 %v5771, 0.6931472
        %v5773 = vlog2.pop %v5766
        %v5774 = vmul.f32 %v5773, 0.6931472
        %v5775 = vadd.f32 %v5743, %v5768
        %v5776 = vadd.f32 %v5744, %v5770
        %v5777 = vadd.f32 %v5745, %v5772
        %v5778 = vadd.f32 %v5746, %v5774
        %v5779 = vld [vmem:[%s10] sm:$0xff]
        %v5781 = vcombine.high %v5779, %v5779
        %v5783 = vsel %vm745, %v5775, 0
        %v5786 = vsel %vm745, %v5776, 0
        %v5789 = vsel %vm745, %v5777, 0
        %v5792 = vsel %vm745, %v5778, 0
        %v5794 = vsel %vm3264, %v5779, 0
        %v5796 = vsel %vm3264, %v5781, 0
        %5798 = vmatprep.subr.mxu0 %v5796
        %5799 = vmatpush1.msra.mxu0 %v5794
        %5800 = vmatprep.subr.mxu0 0.0
        %5801 = vmatpush1.msra.mxu0 0.0
        %5802 = vmatprep.subr.mxu0 0.0
        %5803 = vmatpush1.msra.mxu0 0.0
        %5804 = vmatprep.subr.mxu0 0.0
        %5805 = vmatpush1.msra.mxu0 0.0
        %5806 = vmatprep.subr.mxu0 0.0
        %5807 = vmatpush1.msra.mxu0 0.0
        %5808 = vmatprep.subr.mxu0 0.0
        %5809 = vmatpush1.msra.mxu0 0.0
        %5810 = vmatprep.subr.mxu0 0.0
        %5811 = vmatpush1.msra.mxu0 0.0
        %5812 = vmatprep.subr.mxu0 0.0
        %5813 = vmatpush1.msra.mxu0 0.0
        %5814 = vmatprep.subr.mxu0 0.0
        %5815 = vmatpush1.msra.mxu0 0.0
        %5816 = vmatprep.subr.mxu0 0.0
        %5817 = vmatpush1.msra.mxu0 0.0
        %5818 = vmatprep.subr.mxu0 0.0
        %5819 = vmatpush1.msra.mxu0 0.0
        %5820 = vmatprep.subr.mxu0 0.0
        %5821 = vmatpush1.msra.mxu0 0.0
        %5822 = vmatprep.subr.mxu0 0.0
        %5823 = vmatpush1.msra.mxu0 0.0
        %5824 = vmatprep.subr.mxu0 0.0
        %5825 = vmatpush1.msra.mxu0 0.0
        %5826 = vmatprep.subr.mxu0 0.0
        %5827 = vmatpush1.msra.mxu0 0.0
        %5828 = vmatprep.subr.mxu0 0.0
        %5829 = vmatpush1.msra.mxu0 0.0
        %5830 = vmatprep.subr.mxu0 0.0
        %5831 = vmatpush1.msra.mxu0 0.0
        %5832 = vmatprep.subr.mxu0 0.0
        %5833 = vmatpush1.msra.mxu0 0.0
        %5834 = vmatprep.subr.mxu0 0.0
        %5835 = vmatpush1.msra.mxu0 0.0
        %5836 = vmatprep.subr.mxu0 0.0
        %5837 = vmatpush1.msra.mxu0 0.0
        %5838 = vmatprep.subr.mxu0 0.0
        %5839 = vmatpush1.msra.mxu0 0.0
        %5840 = vmatprep.subr.mxu0 0.0
        %5841 = vmatpush1.msra.mxu0 0.0
        %5842 = vmatprep.subr.mxu0 0.0
        %5843 = vmatpush1.msra.mxu0 0.0
        %5844 = vmatprep.subr.mxu0 0.0
        %5845 = vmatpush1.msra.mxu0 0.0
        %5846 = vmatprep.subr.mxu0 0.0
        %5847 = vmatpush1.msra.mxu0 0.0
        %5848 = vmatprep.subr.mxu0 0.0
        %5849 = vmatpush1.msra.mxu0 0.0
        %5850 = vmatprep.subr.mxu0 0.0
        %5851 = vmatpush1.msra.mxu0 0.0
        %5852 = vmatprep.subr.mxu0 0.0
        %5853 = vmatpush1.msra.mxu0 0.0
        %5854 = vmatprep.subr.mxu0 0.0
        %5855 = vmatpush1.msra.mxu0 0.0
        %5856 = vmatprep.subr.mxu0 0.0
        %5857 = vmatpush1.msra.mxu0 0.0
        %5858 = vmatprep.subr.mxu0 0.0
        %5859 = vmatpush1.msra.mxu0 0.0
        %5860 = vmatprep.subr.mxu0 0.0
        %5861 = vmatpush1.msra.mxu0 0.0
        %5862 = vmatprep.mubr.f32.mxu0 0.0
        %5863 = vmatmul.mubr.f32.gmra.mrb[0].mxu0 %v5783
        %v5864 = vpop.f32.mrb[0].mxu0
        %v5865 = vadd.f32 0.0, %v5864
        %v5866 = vpop.f32.mrb[0].mxu0
        %v5867 = vadd.f32 0.0, %v5866
        %5868 = vmatprep.mubr.f32.mxu0 0.0
        %5869 = vmatmul.mubr.f32.gmra.mrb[0].mxu0 %v5786
        %v5870 = vpop.f32.mrb[0].mxu0
        %v5871 = vadd.f32 0.0, %v5870
        %v5872 = vpop.f32.mrb[0].mxu0
        %v5873 = vadd.f32 0.0, %v5872
        %5874 = vmatprep.mubr.f32.mxu0 0.0
        %5875 = vmatmul.mubr.f32.gmra.mrb[0].mxu0 %v5789
        %v5876 = vpop.f32.mrb[0].mxu0
        %v5877 = vadd.f32 0.0, %v5876
        %v5878 = vpop.f32.mrb[0].mxu0
        %v5879 = vadd.f32 0.0, %v5878
        %5880 = vmatprep.mubr.f32.mxu0 0.0
        %5881 = vmatmul.mubr.f32.gmra.mrb[0].mxu0 %v5792
        %v5882 = vpop.f32.mrb[0].mxu0
        %v5883 = vadd.f32 0.0, %v5882
        %v5884 = vpop.f32.mrb[0].mxu0
        %v5885 = vadd.f32 0.0, %v5884
        %5886 = vdwg.mxu0
        %v5887 = vmul.f32 %v3567, %v5865
        %v5888 = vmul.f32 %v3569, %v5867
        %v5889 = vmul.f32 %v3573, %v5871
        %v5890 = vmul.f32 %v3575, %v5873
        %v5891 = vmul.f32 %v3579, %v5877
        %v5892 = vmul.f32 %v3581, %v5879
        %v5893 = vmul.f32 %v3585, %v5883
        %v5894 = vmul.f32 %v3587, %v5885
        %v5895 = vld [vmem:[%s11] sm:$0xf]
        %v5896 = vld [vmem:[%s11 + $0x4] sm:$0xf]
        %v5897 = vld [vmem:[%s11 + $0x8] sm:$0xf]
        %v5898 = vld [vmem:[%s11 + $0xc] sm:$0xf]
        %v5899 = vpack.c.bf16 %v3360, %v3358
        %v5900 = vpack.c.bf16 %v3361, %v3359
        %v5901 = vpack.c.bf16 %v5889, %v5887
        %v5902 = vpack.c.bf16 %v5890, %v5888
        %v5903 = vpack.c.bf16 %v3364, %v3362
        %v5904 = vpack.c.bf16 %v3365, %v3363
        %v5905 = vpack.c.bf16 %v5893, %v5891
        %v5906 = vpack.c.bf16 %v5894, %v5892
        %v5907 = vld [vmem:[%s12] sm:$0xff]
        %v5908 = vld [vmem:[%s12 + $0x8] sm:$0xff]
        %v5909 = vld [vmem:[%s12 + $0x10] sm:$0xff]
        %v5910 = vld [vmem:[%s12 + $0x18] sm:$0xff]
        %5912 = vset.pattern.permute.xlu0 0
        %5913 = vperm.xlu0 %5912, %v5907
        %v5914 = vpop.permute.xlu0 %5913
        %5917 = vset.pattern.permute.xlu0 0
        %5918 = vperm.xlu0 %5917, %v5908
        %v5919 = vpop.permute.xlu0 %5918
        %5922 = vset.pattern.permute.xlu0 0
        %5923 = vperm.xlu0 %5922, %v5909
        %v5924 = vpop.permute.xlu0 %5923
        %5927 = vset.pattern.permute.xlu0 0
        %5928 = vperm.xlu0 %5927, %v5910
        %v5929 = vpop.permute.xlu0 %5928
        %v5935 = vunpack.c.l.b16 %v5895
        %v5936 = vunpack.c.l.b16 %v5896
        %v5937 = vunpack.c.l.b16 %v5897
        %v5938 = vunpack.c.l.b16 %v5898
        %v5939 = vpack.c.b16 %v5936, %v5935
        %v5940 = vpack.c.b16 %v5938, %v5937
        %vm5941 = vcmask 261120
        %v5943 = vsel %vm5941, %v5939, 0
        %v5946 = vsel %vm5941, %v5940, 0
        %5948 = vmatprep.subr.bf16.mxu0 %v5900
        %5949 = vmatpush1.bf16.msra.mxu0 %v5899
        %5950 = vmatprep.subr.bf16.mxu0 %v5904
        %5951 = vmatpush1.bf16.msra.mxu0 %v5903
        %5952 = vmatprep.subr.bf16.mxu0 0
        %5953 = vmatpush1.bf16.msra.mxu0 0
        %5954 = vmatprep.subr.bf16.mxu0 0
        %5955 = vmatpush1.bf16.msra.mxu0 0
        %5956 = vmatprep.subr.bf16.mxu0 0
        %5957 = vmatpush1.bf16.msra.mxu0 0
        %5958 = vmatprep.subr.bf16.mxu0 0
        %5959 = vmatpush1.bf16.msra.mxu0 0
        %5960 = vmatprep.subr.bf16.mxu0 0
        %5961 = vmatpush1.bf16.msra.mxu0 0
        %5962 = vmatprep.subr.bf16.mxu0 0
        %5963 = vmatpush1.bf16.msra.mxu0 0
        %5964 = vmatprep.subr.bf16.mxu0 0
        %5965 = vmatpush1.bf16.msra.mxu0 0
        %5966 = vmatprep.subr.bf16.mxu0 0
        %5967 = vmatpush1.bf16.msra.mxu0 0
        %5968 = vmatprep.subr.bf16.mxu0 0
        %5969 = vmatpush1.bf16.msra.mxu0 0
        %5970 = vmatprep.subr.bf16.mxu0 0
        %5971 = vmatpush1.bf16.msra.mxu0 0
        %5972 = vmatprep.subr.bf16.mxu0 0
        %5973 = vmatpush1.bf16.msra.mxu0 0
        %5974 = vmatprep.subr.bf16.mxu0 0
        %5975 = vmatpush1.bf16.msra.mxu0 0
        %5976 = vmatprep.subr.bf16.mxu0 0
        %5977 = vmatpush1.bf16.msra.mxu0 0
        %5978 = vmatprep.subr.bf16.mxu0 0
        %5979 = vmatpush1.bf16.msra.mxu0 0
        %5980 = vmatprep.mubr.bf16.mxu0 0
        %5981 = vmatmul.mubr.bf16.gmra.mrb[0].mxu0 %v5943
        %v5982 = vpop.f32.mrb[0].mxu0
        %v5983 = vadd.f32 %v5914, %v5982
        %v5984 = vpop.f32.mrb[0].mxu0
        %v5985 = vadd.f32 %v5914, %v5984
        %v5986 = vpop.f32.mrb[0].mxu0
        %v5987 = vadd.f32 %v5919, %v5986
        %v5988 = vpop.f32.mrb[0].mxu0
        %v5989 = vadd.f32 %v5919, %v5988
        %5990 = vmatprep.mubr.bf16.mxu0 0
        %5991 = vmatmul.mubr.bf16.gmra.mrb[0].mxu0 %v5946
        %v5992 = vpop.f32.mrb[0].mxu0
        %v5993 = vadd.f32 %v5924, %v5992
        %v5994 = vpop.f32.mrb[0].mxu0
        %v5995 = vadd.f32 %v5924, %v5994
        %v5996 = vpop.f32.mrb[0].mxu0
        %v5997 = vadd.f32 %v5929, %v5996
        %v5998 = vpop.f32.mrb[0].mxu0
        %v5999 = vadd.f32 %v5929, %v5998
        %6000 = vdwg.mxu0
        %6001 = vmatprep.subr.bf16.mxu0 %v5902
        %6002 = vmatpush1.bf16.msra.mxu0 %v5901
        %6003 = vmatprep.subr.bf16.mxu0 %v5906
        %6004 = vmatpush1.bf16.msra.mxu0 %v5905
        %6005 = vmatprep.subr.bf16.mxu0 0
        %6006 = vmatpush1.bf16.msra.mxu0 0
        %6007 = vmatprep.subr.bf16.mxu0 0
        %6008 = vmatpush1.bf16.msra.mxu0 0
        %6009 = vmatprep.subr.bf16.mxu0 0
        %6010 = vmatpush1.bf16.msra.mxu0 0
        %6011 = vmatprep.subr.bf16.mxu0 0
        %6012 = vmatpush1.bf16.msra.mxu0 0
        %6013 = vmatprep.subr.bf16.mxu0 0
        %6014 = vmatpush1.bf16.msra.mxu0 0
        %6015 = vmatprep.subr.bf16.mxu0 0
        %6016 = vmatpush1.bf16.msra.mxu0 0
        %6017 = vmatprep.subr.bf16.mxu0 0
        %6018 = vmatpush1.bf16.msra.mxu0 0
        %6019 = vmatprep.subr.bf16.mxu0 0
        %6020 = vmatpush1.bf16.msra.mxu0 0
        %6021 = vmatprep.subr.bf16.mxu0 0
        %6022 = vmatpush1.bf16.msra.mxu0 0
        %6023 = vmatprep.subr.bf16.mxu0 0
        %6024 = vmatpush1.bf16.msra.mxu0 0
        %6025 = vmatprep.subr.bf16.mxu0 0
        %6026 = vmatpush1.bf16.msra.mxu0 0
        %6027 = vmatprep.subr.bf16.mxu0 0
        %6028 = vmatpush1.bf16.msra.mxu0 0
        %6029 = vmatprep.subr.bf16.mxu0 0
        %6030 = vmatpush1.bf16.msra.mxu0 0
        %6031 = vmatprep.subr.bf16.mxu0 0
        %6032 = vmatpush1.bf16.msra.mxu0 0
        %6033 = vmatprep.mubr.bf16.mxu0 0
        %6034 = vmatmul.mubr.bf16.gmra.mrb[0].mxu0 %v5943
        %v6035 = vpop.f32.mrb[0].mxu0
        %v6036 = vadd.f32 %v5914, %v6035
        %v6037 = vpop.f32.mrb[0].mxu0
        %v6038 = vadd.f32 %v5914, %v6037
        %v6039 = vpop.f32.mrb[0].mxu0
        %v6040 = vadd.f32 %v5919, %v6039
        %v6041 = vpop.f32.mrb[0].mxu0
        %v6042 = vadd.f32 %v5919, %v6041
        %6043 = vmatprep.mubr.bf16.mxu0 0
        %6044 = vmatmul.mubr.bf16.gmra.mrb[0].mxu0 %v5946
        %v6045 = vpop.f32.mrb[0].mxu0
        %v6046 = vadd.f32 %v5924, %v6045
        %v6047 = vpop.f32.mrb[0].mxu0
        %v6048 = vadd.f32 %v5924, %v6047
        %v6049 = vpop.f32.mrb[0].mxu0
        %v6050 = vadd.f32 %v5929, %v6049
        %v6051 = vpop.f32.mrb[0].mxu0
        %v6052 = vadd.f32 %v5929, %v6051
        %6053 = vdwg.mxu0
        %v6054 = vmax.f32 %v5983, 0.0
        %v6055 = vmax.f32 %v5985, 0.0
        %v6056 = vmax.f32 %v6036, 0.0
        %v6057 = vmax.f32 %v6038, 0.0
        %v6058 = vmax.f32 %v5987, 0.0
        %v6059 = vmax.f32 %v5989, 0.0
        %v6060 = vmax.f32 %v6040, 0.0
        %v6061 = vmax.f32 %v6042, 0.0
        %v6062 = vmax.f32 %v5993, 0.0
        %v6063 = vmax.f32 %v5995, 0.0
        %v6064 = vmax.f32 %v6046, 0.0
        %v6065 = vmax.f32 %v6048, 0.0
        %v6066 = vmax.f32 %v5997, 0.0
        %v6067 = vmax.f32 %v5999, 0.0
        %v6068 = vmax.f32 %v6050, 0.0
        %v6069 = vmax.f32 %v6052, 0.0
        %v6070 = vld [vmem:[%s13] sm:$0xf]
        %v6071 = vld [vmem:[%s13 + $0x4] sm:$0xf]
        %v6072 = vpack.c.bf16 %v6058, %v6054
        %v6073 = vpack.c.bf16 %v6059, %v6055
        %v6074 = vpack.c.bf16 %v6060, %v6056
        %v6075 = vpack.c.bf16 %v6061, %v6057
        %v6076 = vpack.c.bf16 %v6066, %v6062
        %v6077 = vpack.c.bf16 %v6067, %v6063
        %v6078 = vpack.c.bf16 %v6068, %v6064
        %v6079 = vpack.c.bf16 %v6069, %v6065
        %v6080 = vld [vmem:[%s14] sm:$0xff]
        %v6081 = vld [vmem:[%s14 + $0x8] sm:$0xff]
        %6083 = vset.pattern.permute.xlu0 0
        %6084 = vperm.xlu0 %6083, %v6080
        %v6085 = vpop.permute.xlu0 %6084
        %6088 = vset.pattern.permute.xlu0 0
        %6089 = vperm.xlu0 %6088, %v6081
        %v6090 = vpop.permute.xlu0 %6089
        %v6094 = vunpack.c.l.b16 %v6070
        %v6095 = vunpack.c.l.b16 %v6071
        %v6096 = vpack.c.b16 %v6095, %v6094
        %v6098 = vsel %vm5941, %v6096, 0
        %6100 = vmatprep.subr.bf16.mxu0 %v6073
        %6101 = vmatpush1.bf16.msra.mxu0 %v6072
        %6102 = vmatprep.subr.bf16.mxu0 %v6077
        %6103 = vmatpush1.bf16.msra.mxu0 %v6076
        %6104 = vmatprep.subr.bf16.mxu0 0
        %6105 = vmatpush1.bf16.msra.mxu0 0
        %6106 = vmatprep.subr.bf16.mxu0 0
        %6107 = vmatpush1.bf16.msra.mxu0 0
        %6108 = vmatprep.subr.bf16.mxu0 0
        %6109 = vmatpush1.bf16.msra.mxu0 0
        %6110 = vmatprep.subr.bf16.mxu0 0
        %6111 = vmatpush1.bf16.msra.mxu0 0
        %6112 = vmatprep.subr.bf16.mxu0 0
        %6113 = vmatpush1.bf16.msra.mxu0 0
        %6114 = vmatprep.subr.bf16.mxu0 0
        %6115 = vmatpush1.bf16.msra.mxu0 0
        %6116 = vmatprep.subr.bf16.mxu0 0
        %6117 = vmatpush1.bf16.msra.mxu0 0
        %6118 = vmatprep.subr.bf16.mxu0 0
        %6119 = vmatpush1.bf16.msra.mxu0 0
        %6120 = vmatprep.subr.bf16.mxu0 0
        %6121 = vmatpush1.bf16.msra.mxu0 0
        %6122 = vmatprep.subr.bf16.mxu0 0
        %6123 = vmatpush1.bf16.msra.mxu0 0
        %6124 = vmatprep.subr.bf16.mxu0 0
        %6125 = vmatpush1.bf16.msra.mxu0 0
        %6126 = vmatprep.subr.bf16.mxu0 0
        %6127 = vmatpush1.bf16.msra.mxu0 0
        %6128 = vmatprep.subr.bf16.mxu0 0
        %6129 = vmatpush1.bf16.msra.mxu0 0
        %6130 = vmatprep.subr.bf16.mxu0 0
        %6131 = vmatpush1.bf16.msra.mxu0 0
        %6132 = vmatprep.mubr.bf16.mxu0 0
        %6133 = vmatmul.mubr.bf16.gmra.mrb[0].mxu0 %v6098
        %v6134 = vpop.f32.mrb[0].mxu0
        %v6135 = vadd.f32 %v6085, %v6134
        %v6136 = vpop.f32.mrb[0].mxu0
        %v6137 = vadd.f32 %v6085, %v6136
        %v6138 = vpop.f32.mrb[0].mxu0
        %v6139 = vadd.f32 %v6090, %v6138
        %v6140 = vpop.f32.mrb[0].mxu0
        %v6141 = vadd.f32 %v6090, %v6140
        %6142 = vdwg.mxu0
        %6143 = vmatprep.subr.bf16.mxu0 %v6075
        %6144 = vmatpush1.bf16.msra.mxu0 %v6074
        %6145 = vmatprep.subr.bf16.mxu0 %v6079
        %6146 = vmatpush1.bf16.msra.mxu0 %v6078
        %6147 = vmatprep.subr.bf16.mxu0 0
        %6148 = vmatpush1.bf16.msra.mxu0 0
        %6149 = vmatprep.subr.bf16.mxu0 0
        %6150 = vmatpush1.bf16.msra.mxu0 0
        %6151 = vmatprep.subr.bf16.mxu0 0
        %6152 = vmatpush1.bf16.msra.mxu0 0
        %6153 = vmatprep.subr.bf16.mxu0 0
        %6154 = vmatpush1.bf16.msra.mxu0 0
        %6155 = vmatprep.subr.bf16.mxu0 0
        %6156 = vmatpush1.bf16.msra.mxu0 0
        %6157 = vmatprep.subr.bf16.mxu0 0
        %6158 = vmatpush1.bf16.msra.mxu0 0
        %6159 = vmatprep.subr.bf16.mxu0 0
        %6160 = vmatpush1.bf16.msra.mxu0 0
        %6161 = vmatprep.subr.bf16.mxu0 0
        %6162 = vmatpush1.bf16.msra.mxu0 0
        %6163 = vmatprep.subr.bf16.mxu0 0
        %6164 = vmatpush1.bf16.msra.mxu0 0
        %6165 = vmatprep.subr.bf16.mxu0 0
        %6166 = vmatpush1.bf16.msra.mxu0 0
        %6167 = vmatprep.subr.bf16.mxu0 0
        %6168 = vmatpush1.bf16.msra.mxu0 0
        %6169 = vmatprep.subr.bf16.mxu0 0
        %6170 = vmatpush1.bf16.msra.mxu0 0
        %6171 = vmatprep.subr.bf16.mxu0 0
        %6172 = vmatpush1.bf16.msra.mxu0 0
        %6173 = vmatprep.subr.bf16.mxu0 0
        %6174 = vmatpush1.bf16.msra.mxu0 0
        %6175 = vmatprep.mubr.bf16.mxu0 0
        %6176 = vmatmul.mubr.bf16.gmra.mrb[0].mxu0 %v6098
        %v6177 = vpop.f32.mrb[0].mxu0
        %v6178 = vadd.f32 %v6085, %v6177
        %v6179 = vpop.f32.mrb[0].mxu0
        %v6180 = vadd.f32 %v6085, %v6179
        %v6181 = vpop.f32.mrb[0].mxu0
        %v6182 = vadd.f32 %v6090, %v6181
        %v6183 = vpop.f32.mrb[0].mxu0
        %v6184 = vadd.f32 %v6090, %v6183
        %6185 = vdwg.mxu0
        %v6186 = vmax.f32 %v6135, 0.0
        %v6187 = vmax.f32 %v6137, 0.0
        %v6188 = vmax.f32 %v6178, 0.0
        %v6189 = vmax.f32 %v6180, 0.0
        %v6190 = vmax.f32 %v6139, 0.0
        %v6191 = vmax.f32 %v6141, 0.0
        %v6192 = vmax.f32 %v6182, 0.0
        %v6193 = vmax.f32 %v6184, 0.0
        %v6194 = vld [vmem:[%s15] sm:$0xf]
        %v6195 = vld [vmem:[%s15 + $0x4] sm:$0xf]
        %v6196 = vpack.c.bf16 %v6190, %v6186
        %v6197 = vpack.c.bf16 %v6191, %v6187
        %v6198 = vpack.c.bf16 %v6192, %v6188
        %v6199 = vpack.c.bf16 %v6193, %v6189
        %v6200 = vld [vmem:[%s16] sm:$0xff]
        %v6201 = vld [vmem:[%s16 + $0x8] sm:$0xff]
        %6203 = vset.pattern.permute.xlu0 0
        %6204 = vperm.xlu0 %6203, %v6200
        %v6205 = vpop.permute.xlu0 %6204
        %6208 = vset.pattern.permute.xlu0 0
        %6209 = vperm.xlu0 %6208, %v6201
        %v6210 = vpop.permute.xlu0 %6209
        %v6214 = vunpack.c.l.b16 %v6194
        %v6215 = vunpack.c.l.b16 %v6195
        %v6216 = vpack.c.b16 %v6215, %v6214
        %v6218 = vsel %vm2517, %v6216, 0
        %6220 = vmatprep.subr.bf16.mxu0 %v6197
        %6221 = vmatpush1.bf16.msra.mxu0 %v6196
        %6222 = vmatprep.subr.bf16.mxu0 0
        %6223 = vmatpush1.bf16.msra.mxu0 0
        %6224 = vmatprep.subr.bf16.mxu0 0
        %6225 = vmatpush1.bf16.msra.mxu0 0
        %6226 = vmatprep.subr.bf16.mxu0 0
        %6227 = vmatpush1.bf16.msra.mxu0 0
        %6228 = vmatprep.subr.bf16.mxu0 0
        %6229 = vmatpush1.bf16.msra.mxu0 0
        %6230 = vmatprep.subr.bf16.mxu0 0
        %6231 = vmatpush1.bf16.msra.mxu0 0
        %6232 = vmatprep.subr.bf16.mxu0 0
        %6233 = vmatpush1.bf16.msra.mxu0 0
        %6234 = vmatprep.subr.bf16.mxu0 0
        %6235 = vmatpush1.bf16.msra.mxu0 0
        %6236 = vmatprep.subr.bf16.mxu0 0
        %6237 = vmatpush1.bf16.msra.mxu0 0
        %6238 = vmatprep.subr.bf16.mxu0 0
        %6239 = vmatpush1.bf16.msra.mxu0 0
        %6240 = vmatprep.subr.bf16.mxu0 0
        %6241 = vmatpush1.bf16.msra.mxu0 0
        %6242 = vmatprep.subr.bf16.mxu0 0
        %6243 = vmatpush1.bf16.msra.mxu0 0
        %6244 = vmatprep.subr.bf16.mxu0 0
        %6245 = vmatpush1.bf16.msra.mxu0 0
        %6246 = vmatprep.subr.bf16.mxu0 0
        %6247 = vmatpush1.bf16.msra.mxu0 0
        %6248 = vmatprep.subr.bf16.mxu0 0
        %6249 = vmatpush1.bf16.msra.mxu0 0
        %6250 = vmatprep.subr.bf16.mxu0 0
        %6251 = vmatpush1.bf16.msra.mxu0 0
        %6252 = vmatprep.mubr.bf16.mxu0 0
        %6253 = vmatmul.mubr.bf16.gmra.mrb[0].mxu0 %v6218
        %v6254 = vpop.f32.mrb[0].mxu0
        %v6255 = vadd.f32 %v6205, %v6254
        %v6256 = vpop.f32.mrb[0].mxu0
        %v6257 = vadd.f32 %v6205, %v6256
        %v6258 = vpop.f32.mrb[0].mxu0
        %v6259 = vadd.f32 %v6210, %v6258
        %v6260 = vpop.f32.mrb[0].mxu0
        %v6261 = vadd.f32 %v6210, %v6260
        %6262 = vdwg.mxu0
        %6263 = vmatprep.subr.bf16.mxu0 %v6199
        %6264 = vmatpush1.bf16.msra.mxu0 %v6198
        %6265 = vmatprep.subr.bf16.mxu0 0
        %6266 = vmatpush1.bf16.msra.mxu0 0
        %6267 = vmatprep.subr.bf16.mxu0 0
        %6268 = vmatpush1.bf16.msra.mxu0 0
        %6269 = vmatprep.subr.bf16.mxu0 0
        %6270 = vmatpush1.bf16.msra.mxu0 0
        %6271 = vmatprep.subr.bf16.mxu0 0
        %6272 = vmatpush1.bf16.msra.mxu0 0
        %6273 = vmatprep.subr.bf16.mxu0 0
        %6274 = vmatpush1.bf16.msra.mxu0 0
        %6275 = vmatprep.subr.bf16.mxu0 0
        %6276 = vmatpush1.bf16.msra.mxu0 0
        %6277 = vmatprep.subr.bf16.mxu0 0
        %6278 = vmatpush1.bf16.msra.mxu0 0
        %6279 = vmatprep.subr.bf16.mxu0 0
        %6280 = vmatpush1.bf16.msra.mxu0 0
        %6281 = vmatprep.subr.bf16.mxu0 0
        %6282 = vmatpush1.bf16.msra.mxu0 0
        %6283 = vmatprep.subr.bf16.mxu0 0
        %6284 = vmatpush1.bf16.msra.mxu0 0
        %6285 = vmatprep.subr.bf16.mxu0 0
        %6286 = vmatpush1.bf16.msra.mxu0 0
        %6287 = vmatprep.subr.bf16.mxu0 0
        %6288 = vmatpush1.bf16.msra.mxu0 0
        %6289 = vmatprep.subr.bf16.mxu0 0
        %6290 = vmatpush1.bf16.msra.mxu0 0
        %6291 = vmatprep.subr.bf16.mxu0 0
        %6292 = vmatpush1.bf16.msra.mxu0 0
        %6293 = vmatprep.subr.bf16.mxu0 0
        %6294 = vmatpush1.bf16.msra.mxu0 0
        %6295 = vmatprep.mubr.bf16.mxu0 0
        %6296 = vmatmul.mubr.bf16.gmra.mrb[0].mxu0 %v6218
        %v6297 = vpop.f32.mrb[0].mxu0
        %v6298 = vadd.f32 %v6205, %v6297
        %v6299 = vpop.f32.mrb[0].mxu0
        %v6300 = vadd.f32 %v6205, %v6299
        %v6301 = vpop.f32.mrb[0].mxu0
        %v6302 = vadd.f32 %v6210, %v6301
        %v6303 = vpop.f32.mrb[0].mxu0
        %v6304 = vadd.f32 %v6210, %v6303
        %6305 = vdwg.mxu0
        %v6306 = vmax.f32 %v6255, 0.0
        %v6307 = vmax.f32 %v6257, 0.0
        %v6308 = vmax.f32 %v6298, 0.0
        %v6309 = vmax.f32 %v6300, 0.0
        %v6310 = vmax.f32 %v6259, 0.0
        %v6311 = vmax.f32 %v6261, 0.0
        %v6312 = vmax.f32 %v6302, 0.0
        %v6313 = vmax.f32 %v6304, 0.0
        %v6314 = vld [vmem:[%s17] sm:$0xf]
        %v6315 = vld [vmem:[%s17 + $0x4] sm:$0xf]
        %v6316 = vpack.c.bf16 %v6310, %v6306
        %v6317 = vpack.c.bf16 %v6311, %v6307
        %v6318 = vpack.c.bf16 %v6312, %v6308
        %v6319 = vpack.c.bf16 %v6313, %v6309
        %v6320 = vld [vmem:[%s18] sm:$0xff]
        %v6321 = vld [vmem:[%s18 + $0x8] sm:$0xff]
        %6323 = vset.pattern.permute.xlu0 0
        %6324 = vperm.xlu0 %6323, %v6320
        %v6325 = vpop.permute.xlu0 %6324
        %6328 = vset.pattern.permute.xlu0 0
        %6329 = vperm.xlu0 %6328, %v6321
        %v6330 = vpop.permute.xlu0 %6329
        %v6334 = vunpack.c.l.b16 %v6314
        %v6335 = vunpack.c.l.b16 %v6315
        %v6336 = vpack.c.b16 %v6335, %v6334
        %v6338 = vsel %vm2517, %v6336, 0
        %6340 = vmatprep.subr.bf16.mxu0 %v6317
        %6341 = vmatpush1.bf16.msra.mxu0 %v6316
        %6342 = vmatprep.subr.bf16.mxu0 0
        %6343 = vmatpush1.bf16.msra.mxu0 0
        %6344 = vmatprep.subr.bf16.mxu0 0
        %6345 = vmatpush1.bf16.msra.mxu0 0
        %6346 = vmatprep.subr.bf16.mxu0 0
        %6347 = vmatpush1.bf16.msra.mxu0 0
        %6348 = vmatprep.subr.bf16.mxu0 0
        %6349 = vmatpush1.bf16.msra.mxu0 0
        %6350 = vmatprep.subr.bf16.mxu0 0
        %6351 = vmatpush1.bf16.msra.mxu0 0
        %6352 = vmatprep.subr.bf16.mxu0 0
        %6353 = vmatpush1.bf16.msra.mxu0 0
        %6354 = vmatprep.subr.bf16.mxu0 0
        %6355 = vmatpush1.bf16.msra.mxu0 0
        %6356 = vmatprep.subr.bf16.mxu0 0
        %6357 = vmatpush1.bf16.msra.mxu0 0
        %6358 = vmatprep.subr.bf16.mxu0 0
        %6359 = vmatpush1.bf16.msra.mxu0 0
        %6360 = vmatprep.subr.bf16.mxu0 0
        %6361 = vmatpush1.bf16.msra.mxu0 0
        %6362 = vmatprep.subr.bf16.mxu0 0
        %6363 = vmatpush1.bf16.msra.mxu0 0
        %6364 = vmatprep.subr.bf16.mxu0 0
        %6365 = vmatpush1.bf16.msra.mxu0 0
        %6366 = vmatprep.subr.bf16.mxu0 0
        %6367 = vmatpush1.bf16.msra.mxu0 0
        %6368 = vmatprep.subr.bf16.mxu0 0
        %6369 = vmatpush1.bf16.msra.mxu0 0
        %6370 = vmatprep.subr.bf16.mxu0 0
        %6371 = vmatpush1.bf16.msra.mxu0 0
        %6372 = vmatprep.mubr.bf16.mxu0 0
        %6373 = vmatmul.mubr.bf16.gmra.mrb[0].mxu0 %v6338
        %v6374 = vpop.f32.mrb[0].mxu0
        %v6375 = vadd.f32 %v6325, %v6374
        %v6376 = vpop.f32.mrb[0].mxu0
        %v6377 = vadd.f32 %v6325, %v6376
        %v6378 = vpop.f32.mrb[0].mxu0
        %v6379 = vadd.f32 %v6330, %v6378
        %v6380 = vpop.f32.mrb[0].mxu0
        %v6381 = vadd.f32 %v6330, %v6380
        %6382 = vdwg.mxu0
        %6383 = vmatprep.subr.bf16.mxu0 %v6319
        %6384 = vmatpush1.bf16.msra.mxu0 %v6318
        %6385 = vmatprep.subr.bf16.mxu0 0
        %6386 = vmatpush1.bf16.msra.mxu0 0
        %6387 = vmatprep.subr.bf16.mxu0 0
        %6388 = vmatpush1.bf16.msra.mxu0 0
        %6389 = vmatprep.subr.bf16.mxu0 0
        %6390 = vmatpush1.bf16.msra.mxu0 0
        %6391 = vmatprep.subr.bf16.mxu0 0
        %6392 = vmatpush1.bf16.msra.mxu0 0
        %6393 = vmatprep.subr.bf16.mxu0 0
        %6394 = vmatpush1.bf16.msra.mxu0 0
        %6395 = vmatprep.subr.bf16.mxu0 0
        %6396 = vmatpush1.bf16.msra.mxu0 0
        %6397 = vmatprep.subr.bf16.mxu0 0
        %6398 = vmatpush1.bf16.msra.mxu0 0
        %6399 = vmatprep.subr.bf16.mxu0 0
        %6400 = vmatpush1.bf16.msra.mxu0 0
        %6401 = vmatprep.subr.bf16.mxu0 0
        %6402 = vmatpush1.bf16.msra.mxu0 0
        %6403 = vmatprep.subr.bf16.mxu0 0
        %6404 = vmatpush1.bf16.msra.mxu0 0
        %6405 = vmatprep.subr.bf16.mxu0 0
        %6406 = vmatpush1.bf16.msra.mxu0 0
        %6407 = vmatprep.subr.bf16.mxu0 0
        %6408 = vmatpush1.bf16.msra.mxu0 0
        %6409 = vmatprep.subr.bf16.mxu0 0
        %6410 = vmatpush1.bf16.msra.mxu0 0
        %6411 = vmatprep.subr.bf16.mxu0 0
        %6412 = vmatpush1.bf16.msra.mxu0 0
        %6413 = vmatprep.subr.bf16.mxu0 0
        %6414 = vmatpush1.bf16.msra.mxu0 0
        %6415 = vmatprep.mubr.bf16.mxu0 0
        %6416 = vmatmul.mubr.bf16.gmra.mrb[0].mxu0 %v6338
        %v6417 = vpop.f32.mrb[0].mxu0
        %v6418 = vadd.f32 %v6325, %v6417
        %v6419 = vpop.f32.mrb[0].mxu0
        %v6420 = vadd.f32 %v6325, %v6419
        %v6421 = vpop.f32.mrb[0].mxu0
        %v6422 = vadd.f32 %v6330, %v6421
        %v6423 = vpop.f32.mrb[0].mxu0
        %v6424 = vadd.f32 %v6330, %v6423
        %6425 = vdwg.mxu0
        %v6426 = vmax.f32 %v6375, 0.0
        %v6427 = vmax.f32 %v6377, 0.0
        %v6428 = vmax.f32 %v6418, 0.0
        %v6429 = vmax.f32 %v6420, 0.0
        %v6430 = vmax.f32 %v6379, 0.0
        %v6431 = vmax.f32 %v6381, 0.0
        %v6432 = vmax.f32 %v6422, 0.0
        %v6433 = vmax.f32 %v6424, 0.0
        %v6434 = vld [vmem:[%s19] sm:$0xf]
        %v6435 = vld [vmem:[%s19 + $0x4] sm:$0xf]
        %v6436 = vld [vmem:[%s19 + $0x8] sm:$0xf]
        %v6437 = vld [vmem:[%s19 + $0xc] sm:$0xf]
        %v6438 = vpack.c.bf16 %v6430, %v6426
        %v6439 = vpack.c.bf16 %v6431, %v6427
        %v6440 = vpack.c.bf16 %v6432, %v6428
        %v6441 = vpack.c.bf16 %v6433, %v6429
        %v6442 = vld [vmem:[%s20] sm:$0xff]
        %v6443 = vld [vmem:[%s20 + $0x8] sm:$0xff]
        %v6444 = vld [vmem:[%s20 + $0x10] sm:$0xff]
        %v6445 = vld [vmem:[%s20 + $0x18] sm:$0xff]
        %6447 = vset.pattern.permute.xlu0 0
        %6448 = vperm.xlu0 %6447, %v6442
        %v6449 = vpop.permute.xlu0 %6448
        %6452 = vset.pattern.permute.xlu0 0
        %6453 = vperm.xlu0 %6452, %v6443
        %v6454 = vpop.permute.xlu0 %6453
        %6457 = vset.pattern.permute.xlu0 0
        %6458 = vperm.xlu0 %6457, %v6444
        %v6459 = vpop.permute.xlu0 %6458
        %6462 = vset.pattern.permute.xlu0 0
        %6463 = vperm.xlu0 %6462, %v6445
        %v6464 = vpop.permute.xlu0 %6463
        %v6470 = vunpack.c.l.b16 %v6434
        %v6471 = vunpack.c.l.b16 %v6435
        %v6472 = vunpack.c.l.b16 %v6436
        %v6473 = vunpack.c.l.b16 %v6437
        %v6474 = vpack.c.b16 %v6471, %v6470
        %v6475 = vpack.c.b16 %v6473, %v6472
        %v6477 = vsel %vm2517, %v6474, 0
        %v6480 = vsel %vm2517, %v6475, 0
        %6482 = vmatprep.subr.bf16.mxu0 %v6439
        %6483 = vmatpush1.bf16.msra.mxu0 %v6438
        %6484 = vmatprep.subr.bf16.mxu0 0
        %6485 = vmatpush1.bf16.msra.mxu0 0
        %6486 = vmatprep.subr.bf16.mxu0 0
        %6487 = vmatpush1.bf16.msra.mxu0 0
        %6488 = vmatprep.subr.bf16.mxu0 0
        %6489 = vmatpush1.bf16.msra.mxu0 0
        %6490 = vmatprep.subr.bf16.mxu0 0
        %6491 = vmatpush1.bf16.msra.mxu0 0
        %6492 = vmatprep.subr.bf16.mxu0 0
        %6493 = vmatpush1.bf16.msra.mxu0 0
        %6494 = vmatprep.subr.bf16.mxu0 0
        %6495 = vmatpush1.bf16.msra.mxu0 0
        %6496 = vmatprep.subr.bf16.mxu0 0
        %6497 = vmatpush1.bf16.msra.mxu0 0
        %6498 = vmatprep.subr.bf16.mxu0 0
        %6499 = vmatpush1.bf16.msra.mxu0 0
        %6500 = vmatprep.subr.bf16.mxu0 0
        %6501 = vmatpush1.bf16.msra.mxu0 0
        %6502 = vmatprep.subr.bf16.mxu0 0
        %6503 = vmatpush1.bf16.msra.mxu0 0
        %6504 = vmatprep.subr.bf16.mxu0 0
        %6505 = vmatpush1.bf16.msra.mxu0 0
        %6506 = vmatprep.subr.bf16.mxu0 0
        %6507 = vmatpush1.bf16.msra.mxu0 0
        %6508 = vmatprep.subr.bf16.mxu0 0
        %6509 = vmatpush1.bf16.msra.mxu0 0
        %6510 = vmatprep.subr.bf16.mxu0 0
        %6511 = vmatpush1.bf16.msra.mxu0 0
        %6512 = vmatprep.subr.bf16.mxu0 0
        %6513 = vmatpush1.bf16.msra.mxu0 0
        %6514 = vmatprep.mubr.bf16.mxu0 0
        %6515 = vmatmul.mubr.bf16.gmra.mrb[0].mxu0 %v6477
        %v6516 = vpop.f32.mrb[0].mxu0
        %v6517 = vadd.f32 %v6449, %v6516
        %v6518 = vpop.f32.mrb[0].mxu0
        %v6519 = vadd.f32 %v6449, %v6518
        %v6520 = vpop.f32.mrb[0].mxu0
        %v6521 = vadd.f32 %v6454, %v6520
        %v6522 = vpop.f32.mrb[0].mxu0
        %v6523 = vadd.f32 %v6454, %v6522
        %6524 = vmatprep.mubr.bf16.mxu0 0
        %6525 = vmatmul.mubr.bf16.gmra.mrb[0].mxu0 %v6480
        %v6526 = vpop.f32.mrb[0].mxu0
        %v6527 = vadd.f32 %v6459, %v6526
        %v6528 = vpop.f32.mrb[0].mxu0
        %v6529 = vadd.f32 %v6459, %v6528
        %v6530 = vpop.f32.mrb[0].mxu0
        %v6531 = vadd.f32 %v6464, %v6530
        %v6532 = vpop.f32.mrb[0].mxu0
        %v6533 = vadd.f32 %v6464, %v6532
        %6534 = vdwg.mxu0
        %6535 = vmatprep.subr.bf16.mxu0 %v6441
        %6536 = vmatpush1.bf16.msra.mxu0 %v6440
        %6537 = vmatprep.subr.bf16.mxu0 0
        %6538 = vmatpush1.bf16.msra.mxu0 0
        %6539 = vmatprep.subr.bf16.mxu0 0
        %6540 = vmatpush1.bf16.msra.mxu0 0
        %6541 = vmatprep.subr.bf16.mxu0 0
        %6542 = vmatpush1.bf16.msra.mxu0 0
        %6543 = vmatprep.subr.bf16.mxu0 0
        %6544 = vmatpush1.bf16.msra.mxu0 0
        %6545 = vmatprep.subr.bf16.mxu0 0
        %6546 = vmatpush1.bf16.msra.mxu0 0
        %6547 = vmatprep.subr.bf16.mxu0 0
        %6548 = vmatpush1.bf16.msra.mxu0 0
        %6549 = vmatprep.subr.bf16.mxu0 0
        %6550 = vmatpush1.bf16.msra.mxu0 0
        %6551 = vmatprep.subr.bf16.mxu0 0
        %6552 = vmatpush1.bf16.msra.mxu0 0
        %6553 = vmatprep.subr.bf16.mxu0 0
        %6554 = vmatpush1.bf16.msra.mxu0 0
        %6555 = vmatprep.subr.bf16.mxu0 0
        %6556 = vmatpush1.bf16.msra.mxu0 0
        %6557 = vmatprep.subr.bf16.mxu0 0
        %6558 = vmatpush1.bf16.msra.mxu0 0
        %6559 = vmatprep.subr.bf16.mxu0 0
        %6560 = vmatpush1.bf16.msra.mxu0 0
        %6561 = vmatprep.subr.bf16.mxu0 0
        %6562 = vmatpush1.bf16.msra.mxu0 0
        %6563 = vmatprep.subr.bf16.mxu0 0
        %6564 = vmatpush1.bf16.msra.mxu0 0
        %6565 = vmatprep.subr.bf16.mxu0 0
        %6566 = vmatpush1.bf16.msra.mxu0 0
        %6567 = vmatprep.mubr.bf16.mxu0 0
        %6568 = vmatmul.mubr.bf16.gmra.mrb[0].mxu0 %v6477
        %v6569 = vpop.f32.mrb[0].mxu0
        %v6570 = vadd.f32 %v6449, %v6569
        %v6571 = vpop.f32.mrb[0].mxu0
        %v6572 = vadd.f32 %v6449, %v6571
        %v6573 = vpop.f32.mrb[0].mxu0
        %v6574 = vadd.f32 %v6454, %v6573
        %v6575 = vpop.f32.mrb[0].mxu0
        %v6576 = vadd.f32 %v6454, %v6575
        %6577 = vmatprep.mubr.bf16.mxu0 0
        %6578 = vmatmul.mubr.bf16.gmra.mrb[0].mxu0 %v6480
        %v6579 = vpop.f32.mrb[0].mxu0
        %v6580 = vadd.f32 %v6459, %v6579
        %v6581 = vpop.f32.mrb[0].mxu0
        %v6582 = vadd.f32 %v6459, %v6581
        %v6583 = vpop.f32.mrb[0].mxu0
        %v6584 = vadd.f32 %v6464, %v6583
        %v6585 = vpop.f32.mrb[0].mxu0
        %v6586 = vadd.f32 %v6464, %v6585
        %6587 = vdwg.mxu0
        %v6588 = vld [vmem:[%s21] sm:$0xff]
        %v6589 = vld [vmem:[%s21 + $0x8] sm:$0xff]
        %v6590 = vld [vmem:[%s21 + $0x10] sm:$0xff]
        %v6591 = vld [vmem:[%s21 + $0x18] sm:$0xff]
        %6593 = vset.pattern.permute.xlu0 0
        %6594 = vperm.xlu0 %6593, %v6588
        %v6595 = vpop.permute.xlu0 %6594
        %6598 = vset.pattern.permute.xlu0 0
        %6599 = vperm.xlu0 %6598, %v6589
        %v6600 = vpop.permute.xlu0 %6599
        %6603 = vset.pattern.permute.xlu0 0
        %6604 = vperm.xlu0 %6603, %v6590
        %v6605 = vpop.permute.xlu0 %6604
        %6608 = vset.pattern.permute.xlu0 0
        %6609 = vperm.xlu0 %6608, %v6591
        %v6610 = vpop.permute.xlu0 %6609
        %v6612 = vmul.f32 %v6595, %v6517
        %v6613 = vmul.f32 %v6595, %v6519
        %v6614 = vmul.f32 %v6595, %v6570
        %v6615 = vmul.f32 %v6595, %v6572
        %v6616 = vmul.f32 %v6600, %v6521
        %v6617 = vmul.f32 %v6600, %v6523
        %v6618 = vmul.f32 %v6600, %v6574
        %v6619 = vmul.f32 %v6600, %v6576
        %v6620 = vmul.f32 %v6605, %v6527
        %v6621 = vmul.f32 %v6605, %v6529
        %v6622 = vmul.f32 %v6605, %v6580
        %v6623 = vmul.f32 %v6605, %v6582
        %v6624 = vmul.f32 %v6610, %v6531
        %v6625 = vmul.f32 %v6610, %v6533
        %v6626 = vmul.f32 %v6610, %v6584
        %v6627 = vmul.f32 %v6610, %v6586
        %v6628 = vld [vmem:[%s22] sm:$0xff]
        %v6629 = vld [vmem:[%s22 + $0x8] sm:$0xff]
        %v6630 = vld [vmem:[%s22 + $0x10] sm:$0xff]
        %v6631 = vld [vmem:[%s22 + $0x18] sm:$0xff]
        %6633 = vset.pattern.permute.xlu0 0
        %6634 = vperm.xlu0 %6633, %v6628
        %v6635 = vpop.permute.xlu0 %6634
        %6638 = vset.pattern.permute.xlu0 0
        %6639 = vperm.xlu0 %6638, %v6629
        %v6640 = vpop.permute.xlu0 %6639
        %6643 = vset.pattern.permute.xlu0 0
        %6644 = vperm.xlu0 %6643, %v6630
        %v6645 = vpop.permute.xlu0 %6644
        %6648 = vset.pattern.permute.xlu0 0
        %6649 = vperm.xlu0 %6648, %v6631
        %v6650 = vpop.permute.xlu0 %6649
        %v6652 = vadd.f32 %v6612, %v6635
        %v6653 = vadd.f32 %v6613, %v6635
        %v6654 = vadd.f32 %v6614, %v6635
        %v6655 = vadd.f32 %v6615, %v6635
        %v6656 = vadd.f32 %v6616, %v6640
        %v6657 = vadd.f32 %v6617, %v6640
        %v6658 = vadd.f32 %v6618, %v6640
        %v6659 = vadd.f32 %v6619, %v6640
        %v6660 = vadd.f32 %v6620, %v6645
        %v6661 = vadd.f32 %v6621, %v6645
        %v6662 = vadd.f32 %v6622, %v6645
        %v6663 = vadd.f32 %v6623, %v6645
        %v6664 = vadd.f32 %v6624, %v6650
        %v6665 = vadd.f32 %v6625, %v6650
        %v6666 = vadd.f32 %v6626, %v6650
        %v6667 = vadd.f32 %v6627, %v6650
        %v6668 = vld [vmem:[%s23] sm:$0xff]
        %v6669 = vld [vmem:[%s23 + $0x8] sm:$0xff]
        %v6670 = vld [vmem:[%s23 + $0x10] sm:$0xff]
        %v6671 = vld [vmem:[%s23 + $0x18] sm:$0xff]
        %v6672 = vsub.f32 %v6517, -0.2
        %v6673 = vsub.f32 %v6519, -0.2
        %v6674 = vsub.f32 %v6570, -0.2
        %v6675 = vsub.f32 %v6572, -0.2
        %v6676 = vsub.f32 %v6521, -0.2
        %v6677 = vsub.f32 %v6523, -0.2
        %v6678 = vsub.f32 %v6574, -0.2
        %v6679 = vsub.f32 %v6576, -0.2
        %v6680 = vsub.f32 %v6527, -0.2
        %v6681 = vsub.f32 %v6529, -0.2
        %v6682 = vsub.f32 %v6580, -0.2
        %v6683 = vsub.f32 %v6582, -0.2
        %v6684 = vsub.f32 %v6531, -0.2
        %v6685 = vsub.f32 %v6533, -0.2
        %v6686 = vsub.f32 %v6584, -0.2
        %v6687 = vsub.f32 %v6586, -0.2
        %v6688 = vmax.f32 %v6672, 0.0
        %v6689 = vmax.f32 %v6673, 0.0
        %v6690 = vmax.f32 %v6674, 0.0
        %v6691 = vmax.f32 %v6675, 0.0
        %v6692 = vmax.f32 %v6676, 0.0
        %v6693 = vmax.f32 %v6677, 0.0
        %v6694 = vmax.f32 %v6678, 0.0
        %v6695 = vmax.f32 %v6679, 0.0
        %v6696 = vmax.f32 %v6680, 0.0
        %v6697 = vmax.f32 %v6681, 0.0
        %v6698 = vmax.f32 %v6682, 0.0
        %v6699 = vmax.f32 %v6683, 0.0
        %v6700 = vmax.f32 %v6684, 0.0
        %v6701 = vmax.f32 %v6685, 0.0
        %v6702 = vmax.f32 %v6686, 0.0
        %v6703 = vmax.f32 %v6687, 0.0
        %6705 = vset.pattern.permute.xlu0 0
        %6706 = vperm.xlu0 %6705, %v6668
        %v6707 = vpop.permute.xlu0 %6706
        %6710 = vset.pattern.permute.xlu0 0
        %6711 = vperm.xlu0 %6710, %v6669
        %v6712 = vpop.permute.xlu0 %6711
        %6715 = vset.pattern.permute.xlu0 0
        %6716 = vperm.xlu0 %6715, %v6670
        %v6717 = vpop.permute.xlu0 %6716
        %6720 = vset.pattern.permute.xlu0 0
        %6721 = vperm.xlu0 %6720, %v6671
        %v6722 = vpop.permute.xlu0 %6721
        %v6724 = vmul.f32 %v6707, %v6688
        %v6725 = vmul.f32 %v6707, %v6689
        %v6726 = vmul.f32 %v6707, %v6690
        %v6727 = vmul.f32 %v6707, %v6691
        %v6728 = vmul.f32 %v6712, %v6692
        %v6729 = vmul.f32 %v6712, %v6693
        %v6730 = vmul.f32 %v6712, %v6694
        %v6731 = vmul.f32 %v6712, %v6695
        %v6732 = vmul.f32 %v6717, %v6696
        %v6733 = vmul.f32 %v6717, %v6697
        %v6734 = vmul.f32 %v6717, %v6698
        %v6735 = vmul.f32 %v6717, %v6699
        %v6736 = vmul.f32 %v6722, %v6700
        %v6737 = vmul.f32 %v6722, %v6701
        %v6738 = vmul.f32 %v6722, %v6702
        %v6739 = vmul.f32 %v6722, %v6703
        %v6740 = vadd.f32 %v6652, %v6724
        %v6741 = vadd.f32 %v6653, %v6725
        %v6742 = vadd.f32 %v6654, %v6726
        %v6743 = vadd.f32 %v6655, %v6727
        %v6744 = vadd.f32 %v6656, %v6728
        %v6745 = vadd.f32 %v6657, %v6729
        %v6746 = vadd.f32 %v6658, %v6730
        %v6747 = vadd.f32 %v6659, %v6731
        %v6748 = vadd.f32 %v6660, %v6732
        %v6749 = vadd.f32 %v6661, %v6733
        %v6750 = vadd.f32 %v6662, %v6734
        %v6751 = vadd.f32 %v6663, %v6735
        %v6752 = vadd.f32 %v6664, %v6736
        %v6753 = vadd.f32 %v6665, %v6737
        %v6754 = vadd.f32 %v6666, %v6738
        %v6755 = vadd.f32 %v6667, %v6739
        %v6756 = vsub.f32 %v6517, -0.18333334
        %v6757 = vsub.f32 %v6519, -0.18333334
        %v6758 = vsub.f32 %v6570, -0.18333334
        %v6759 = vsub.f32 %v6572, -0.18333334
        %v6760 = vsub.f32 %v6521, -0.18333334
        %v6761 = vsub.f32 %v6523, -0.18333334
        %v6762 = vsub.f32 %v6574, -0.18333334
        %v6763 = vsub.f32 %v6576, -0.18333334
        %v6764 = vsub.f32 %v6527, -0.18333334
        %v6765 = vsub.f32 %v6529, -0.18333334
        %v6766 = vsub.f32 %v6580, -0.18333334
        %v6767 = vsub.f32 %v6582, -0.18333334
        %v6768 = vsub.f32 %v6531, -0.18333334
        %v6769 = vsub.f32 %v6533, -0.18333334
        %v6770 = vsub.f32 %v6584, -0.18333334
        %v6771 = vsub.f32 %v6586, -0.18333334
        %v6772 = vmax.f32 %v6756, 0.0
        %v6773 = vmax.f32 %v6757, 0.0
        %v6774 = vmax.f32 %v6758, 0.0
        %v6775 = vmax.f32 %v6759, 0.0
        %v6776 = vmax.f32 %v6760, 0.0
        %v6777 = vmax.f32 %v6761, 0.0
        %v6778 = vmax.f32 %v6762, 0.0
        %v6779 = vmax.f32 %v6763, 0.0
        %v6780 = vmax.f32 %v6764, 0.0
        %v6781 = vmax.f32 %v6765, 0.0
        %v6782 = vmax.f32 %v6766, 0.0
        %v6783 = vmax.f32 %v6767, 0.0
        %v6784 = vmax.f32 %v6768, 0.0
        %v6785 = vmax.f32 %v6769, 0.0
        %v6786 = vmax.f32 %v6770, 0.0
        %v6787 = vmax.f32 %v6771, 0.0
        %6788 = vset.pattern.permute.xlu0 1
        %6789 = vperm.xlu0 %6788, %v6668
        %v6790 = vpop.permute.xlu0 %6789
        %6792 = vset.pattern.permute.xlu0 1
        %6793 = vperm.xlu0 %6792, %v6669
        %v6794 = vpop.permute.xlu0 %6793
        %6796 = vset.pattern.permute.xlu0 1
        %6797 = vperm.xlu0 %6796, %v6670
        %v6798 = vpop.permute.xlu0 %6797
        %6800 = vset.pattern.permute.xlu0 1
        %6801 = vperm.xlu0 %6800, %v6671
        %v6802 = vpop.permute.xlu0 %6801
        %v6804 = vmul.f32 %v6790, %v6772
        %v6805 = vmul.f32 %v6790, %v6773
        %v6806 = vmul.f32 %v6790, %v6774
        %v6807 = vmul.f32 %v6790, %v6775
        %v6808 = vmul.f32 %v6794, %v6776
        %v6809 = vmul.f32 %v6794, %v6777
        %v6810 = vmul.f32 %v6794, %v6778
        %v6811 = vmul.f32 %v6794, %v6779
        %v6812 = vmul.f32 %v6798, %v6780
        %v6813 = vmul.f32 %v6798, %v6781
        %v6814 = vmul.f32 %v6798, %v6782
        %v6815 = vmul.f32 %v6798, %v6783
        %v6816 = vmul.f32 %v6802, %v6784
        %v6817 = vmul.f32 %v6802, %v6785
        %v6818 = vmul.f32 %v6802, %v6786
        %v6819 = vmul.f32 %v6802, %v6787
        %v6820 = vadd.f32 %v6740, %v6804
        %v6821 = vadd.f32 %v6741, %v6805
        %v6822 = vadd.f32 %v6742, %v6806
        %v6823 = vadd.f32 %v6743, %v6807
        %v6824 = vadd.f32 %v6744, %v6808
        %v6825 = vadd.f32 %v6745, %v6809
        %v6826 = vadd.f32 %v6746, %v6810
        %v6827 = vadd.f32 %v6747, %v6811
        %v6828 = vadd.f32 %v6748, %v6812
        %v6829 = vadd.f32 %v6749, %v6813
        %v6830 = vadd.f32 %v6750, %v6814
        %v6831 = vadd.f32 %v6751, %v6815
        %v6832 = vadd.f32 %v6752, %v6816
        %v6833 = vadd.f32 %v6753, %v6817
        %v6834 = vadd.f32 %v6754, %v6818
        %v6835 = vadd.f32 %v6755, %v6819
        %v6836 = vsub.f32 %v6517, -0.16666667
        %v6837 = vsub.f32 %v6519, -0.16666667
        %v6838 = vsub.f32 %v6570, -0.16666667
        %v6839 = vsub.f32 %v6572, -0.16666667
        %v6840 = vsub.f32 %v6521, -0.16666667
        %v6841 = vsub.f32 %v6523, -0.16666667
        %v6842 = vsub.f32 %v6574, -0.16666667
        %v6843 = vsub.f32 %v6576, -0.16666667
        %v6844 = vsub.f32 %v6527, -0.16666667
        %v6845 = vsub.f32 %v6529, -0.16666667
        %v6846 = vsub.f32 %v6580, -0.16666667
        %v6847 = vsub.f32 %v6582, -0.16666667
        %v6848 = vsub.f32 %v6531, -0.16666667
        %v6849 = vsub.f32 %v6533, -0.16666667
        %v6850 = vsub.f32 %v6584, -0.16666667
        %v6851 = vsub.f32 %v6586, -0.16666667
        %v6852 = vmax.f32 %v6836, 0.0
        %v6853 = vmax.f32 %v6837, 0.0
        %v6854 = vmax.f32 %v6838, 0.0
        %v6855 = vmax.f32 %v6839, 0.0
        %v6856 = vmax.f32 %v6840, 0.0
        %v6857 = vmax.f32 %v6841, 0.0
        %v6858 = vmax.f32 %v6842, 0.0
        %v6859 = vmax.f32 %v6843, 0.0
        %v6860 = vmax.f32 %v6844, 0.0
        %v6861 = vmax.f32 %v6845, 0.0
        %v6862 = vmax.f32 %v6846, 0.0
        %v6863 = vmax.f32 %v6847, 0.0
        %v6864 = vmax.f32 %v6848, 0.0
        %v6865 = vmax.f32 %v6849, 0.0
        %v6866 = vmax.f32 %v6850, 0.0
        %v6867 = vmax.f32 %v6851, 0.0
        %6868 = vset.pattern.permute.xlu0 2
        %6869 = vperm.xlu0 %6868, %v6668
        %v6870 = vpop.permute.xlu0 %6869
        %6872 = vset.pattern.permute.xlu0 2
        %6873 = vperm.xlu0 %6872, %v6669
        %v6874 = vpop.permute.xlu0 %6873
        %6876 = vset.pattern.permute.xlu0 2
        %6877 = vperm.xlu0 %6876, %v6670
        %v6878 = vpop.permute.xlu0 %6877
        %6880 = vset.pattern.permute.xlu0 2
        %6881 = vperm.xlu0 %6880, %v6671
        %v6882 = vpop.permute.xlu0 %6881
        %v6884 = vmul.f32 %v6870, %v6852
        %v6885 = vmul.f32 %v6870, %v6853
        %v6886 = vmul.f32 %v6870, %v6854
        %v6887 = vmul.f32 %v6870, %v6855
        %v6888 = vmul.f32 %v6874, %v6856
        %v6889 = vmul.f32 %v6874, %v6857
        %v6890 = vmul.f32 %v6874, %v6858
        %v6891 = vmul.f32 %v6874, %v6859
        %v6892 = vmul.f32 %v6878, %v6860
        %v6893 = vmul.f32 %v6878, %v6861
        %v6894 = vmul.f32 %v6878, %v6862
        %v6895 = vmul.f32 %v6878, %v6863
        %v6896 = vmul.f32 %v6882, %v6864
        %v6897 = vmul.f32 %v6882, %v6865
        %v6898 = vmul.f32 %v6882, %v6866
        %v6899 = vmul.f32 %v6882, %v6867
        %v6900 = vadd.f32 %v6820, %v6884
        %v6901 = vadd.f32 %v6821, %v6885
        %v6902 = vadd.f32 %v6822, %v6886
        %v6903 = vadd.f32 %v6823, %v6887
        %v6904 = vadd.f32 %v6824, %v6888
        %v6905 = vadd.f32 %v6825, %v6889
        %v6906 = vadd.f32 %v6826, %v6890
        %v6907 = vadd.f32 %v6827, %v6891
        %v6908 = vadd.f32 %v6828, %v6892
        %v6909 = vadd.f32 %v6829, %v6893
        %v6910 = vadd.f32 %v6830, %v6894
        %v6911 = vadd.f32 %v6831, %v6895
        %v6912 = vadd.f32 %v6832, %v6896
        %v6913 = vadd.f32 %v6833, %v6897
        %v6914 = vadd.f32 %v6834, %v6898
        %v6915 = vadd.f32 %v6835, %v6899
        %v6916 = vsub.f32 %v6517, -0.15
        %v6917 = vsub.f32 %v6519, -0.15
        %v6918 = vsub.f32 %v6570, -0.15
        %v6919 = vsub.f32 %v6572, -0.15
        %v6920 = vsub.f32 %v6521, -0.15
        %v6921 = vsub.f32 %v6523, -0.15
        %v6922 = vsub.f32 %v6574, -0.15
        %v6923 = vsub.f32 %v6576, -0.15
        %v6924 = vsub.f32 %v6527, -0.15
        %v6925 = vsub.f32 %v6529, -0.15
        %v6926 = vsub.f32 %v6580, -0.15
        %v6927 = vsub.f32 %v6582, -0.15
        %v6928 = vsub.f32 %v6531, -0.15
        %v6929 = vsub.f32 %v6533, -0.15
        %v6930 = vsub.f32 %v6584, -0.15
        %v6931 = vsub.f32 %v6586, -0.15
        %v6932 = vmax.f32 %v6916, 0.0
        %v6933 = vmax.f32 %v6917, 0.0
        %v6934 = vmax.f32 %v6918, 0.0
        %v6935 = vmax.f32 %v6919, 0.0
        %v6936 = vmax.f32 %v6920, 0.0
        %v6937 = vmax.f32 %v6921, 0.0
        %v6938 = vmax.f32 %v6922, 0.0
        %v6939 = vmax.f32 %v6923, 0.0
        %v6940 = vmax.f32 %v6924, 0.0
        %v6941 = vmax.f32 %v6925, 0.0
        %v6942 = vmax.f32 %v6926, 0.0
        %v6943 = vmax.f32 %v6927, 0.0
        %v6944 = vmax.f32 %v6928, 0.0
        %v6945 = vmax.f32 %v6929, 0.0
        %v6946 = vmax.f32 %v6930, 0.0
        %v6947 = vmax.f32 %v6931, 0.0
        %6948 = vset.pattern.permute.xlu0 3
        %6949 = vperm.xlu0 %6948, %v6668
        %v6950 = vpop.permute.xlu0 %6949
        %6952 = vset.pattern.permute.xlu0 3
        %6953 = vperm.xlu0 %6952, %v6669
        %v6954 = vpop.permute.xlu0 %6953
        %6956 = vset.pattern.permute.xlu0 3
        %6957 = vperm.xlu0 %6956, %v6670
        %v6958 = vpop.permute.xlu0 %6957
        %6960 = vset.pattern.permute.xlu0 3
        %6961 = vperm.xlu0 %6960, %v6671
        %v6962 = vpop.permute.xlu0 %6961
        %v6964 = vmul.f32 %v6950, %v6932
        %v6965 = vmul.f32 %v6950, %v6933
        %v6966 = vmul.f32 %v6950, %v6934
        %v6967 = vmul.f32 %v6950, %v6935
        %v6968 = vmul.f32 %v6954, %v6936
        %v6969 = vmul.f32 %v6954, %v6937
        %v6970 = vmul.f32 %v6954, %v6938
        %v6971 = vmul.f32 %v6954, %v6939
        %v6972 = vmul.f32 %v6958, %v6940
        %v6973 = vmul.f32 %v6958, %v6941
        %v6974 = vmul.f32 %v6958, %v6942
        %v6975 = vmul.f32 %v6958, %v6943
        %v6976 = vmul.f32 %v6962, %v6944
        %v6977 = vmul.f32 %v6962, %v6945
        %v6978 = vmul.f32 %v6962, %v6946
        %v6979 = vmul.f32 %v6962, %v6947
        %v6980 = vadd.f32 %v6900, %v6964
        %v6981 = vadd.f32 %v6901, %v6965
        %v6982 = vadd.f32 %v6902, %v6966
        %v6983 = vadd.f32 %v6903, %v6967
        %v6984 = vadd.f32 %v6904, %v6968
        %v6985 = vadd.f32 %v6905, %v6969
        %v6986 = vadd.f32 %v6906, %v6970
        %v6987 = vadd.f32 %v6907, %v6971
        %v6988 = vadd.f32 %v6908, %v6972
        %v6989 = vadd.f32 %v6909, %v6973
        %v6990 = vadd.f32 %v6910, %v6974
        %v6991 = vadd.f32 %v6911, %v6975
        %v6992 = vadd.f32 %v6912, %v6976
        %v6993 = vadd.f32 %v6913, %v6977
        %v6994 = vadd.f32 %v6914, %v6978
        %v6995 = vadd.f32 %v6915, %v6979
        %v6996 = vsub.f32 %v6517, -0.13333334
        %v6997 = vsub.f32 %v6519, -0.13333334
        %v6998 = vsub.f32 %v6570, -0.13333334
        %v6999 = vsub.f32 %v6572, -0.13333334
        %v7000 = vsub.f32 %v6521, -0.13333334
        %v7001 = vsub.f32 %v6523, -0.13333334
        %v7002 = vsub.f32 %v6574, -0.13333334
        %v7003 = vsub.f32 %v6576, -0.13333334
        %v7004 = vsub.f32 %v6527, -0.13333334
        %v7005 = vsub.f32 %v6529, -0.13333334
        %v7006 = vsub.f32 %v6580, -0.13333334
        %v7007 = vsub.f32 %v6582, -0.13333334
        %v7008 = vsub.f32 %v6531, -0.13333334
        %v7009 = vsub.f32 %v6533, -0.13333334
        %v7010 = vsub.f32 %v6584, -0.13333334
        %v7011 = vsub.f32 %v6586, -0.13333334
        %v7012 = vmax.f32 %v6996, 0.0
        %v7013 = vmax.f32 %v6997, 0.0
        %v7014 = vmax.f32 %v6998, 0.0
        %v7015 = vmax.f32 %v6999, 0.0
        %v7016 = vmax.f32 %v7000, 0.0
        %v7017 = vmax.f32 %v7001, 0.0
        %v7018 = vmax.f32 %v7002, 0.0
        %v7019 = vmax.f32 %v7003, 0.0
        %v7020 = vmax.f32 %v7004, 0.0
        %v7021 = vmax.f32 %v7005, 0.0
        %v7022 = vmax.f32 %v7006, 0.0
        %v7023 = vmax.f32 %v7007, 0.0
        %v7024 = vmax.f32 %v7008, 0.0
        %v7025 = vmax.f32 %v7009, 0.0
        %v7026 = vmax.f32 %v7010, 0.0
        %v7027 = vmax.f32 %v7011, 0.0
        %7028 = vset.pattern.permute.xlu0 4
        %7029 = vperm.xlu0 %7028, %v6668
        %v7030 = vpop.permute.xlu0 %7029
        %7032 = vset.pattern.permute.xlu0 4
        %7033 = vperm.xlu0 %7032, %v6669
        %v7034 = vpop.permute.xlu0 %7033
        %7036 = vset.pattern.permute.xlu0 4
        %7037 = vperm.xlu0 %7036, %v6670
        %v7038 = vpop.permute.xlu0 %7037
        %7040 = vset.pattern.permute.xlu0 4
        %7041 = vperm.xlu0 %7040, %v6671
        %v7042 = vpop.permute.xlu0 %7041
        %v7044 = vmul.f32 %v7030, %v7012
        %v7045 = vmul.f32 %v7030, %v7013
        %v7046 = vmul.f32 %v7030, %v7014
        %v7047 = vmul.f32 %v7030, %v7015
        %v7048 = vmul.f32 %v7034, %v7016
        %v7049 = vmul.f32 %v7034, %v7017
        %v7050 = vmul.f32 %v7034, %v7018
        %v7051 = vmul.f32 %v7034, %v7019
        %v7052 = vmul.f32 %v7038, %v7020
        %v7053 = vmul.f32 %v7038, %v7021
        %v7054 = vmul.f32 %v7038, %v7022
        %v7055 = vmul.f32 %v7038, %v7023
        %v7056 = vmul.f32 %v7042, %v7024
        %v7057 = vmul.f32 %v7042, %v7025
        %v7058 = vmul.f32 %v7042, %v7026
        %v7059 = vmul.f32 %v7042, %v7027
        %v7060 = vadd.f32 %v6980, %v7044
        %v7061 = vadd.f32 %v6981, %v7045
        %v7062 = vadd.f32 %v6982, %v7046
        %v7063 = vadd.f32 %v6983, %v7047
        %v7064 = vadd.f32 %v6984, %v7048
        %v7065 = vadd.f32 %v6985, %v7049
        %v7066 = vadd.f32 %v6986, %v7050
        %v7067 = vadd.f32 %v6987, %v7051
        %v7068 = vadd.f32 %v6988, %v7052
        %v7069 = vadd.f32 %v6989, %v7053
        %v7070 = vadd.f32 %v6990, %v7054
        %v7071 = vadd.f32 %v6991, %v7055
        %v7072 = vadd.f32 %v6992, %v7056
        %v7073 = vadd.f32 %v6993, %v7057
        %v7074 = vadd.f32 %v6994, %v7058
        %v7075 = vadd.f32 %v6995, %v7059
        %v7076 = vsub.f32 %v6517, -0.11666667
        %v7077 = vsub.f32 %v6519, -0.11666667
        %v7078 = vsub.f32 %v6570, -0.11666667
        %v7079 = vsub.f32 %v6572, -0.11666667
        %v7080 = vsub.f32 %v6521, -0.11666667
        %v7081 = vsub.f32 %v6523, -0.11666667
        %v7082 = vsub.f32 %v6574, -0.11666667
        %v7083 = vsub.f32 %v6576, -0.11666667
        %v7084 = vsub.f32 %v6527, -0.11666667
        %v7085 = vsub.f32 %v6529, -0.11666667
        %v7086 = vsub.f32 %v6580, -0.11666667
        %v7087 = vsub.f32 %v6582, -0.11666667
        %v7088 = vsub.f32 %v6531, -0.11666667
        %v7089 = vsub.f32 %v6533, -0.11666667
        %v7090 = vsub.f32 %v6584, -0.11666667
        %v7091 = vsub.f32 %v6586, -0.11666667
        %v7092 = vmax.f32 %v7076, 0.0
        %v7093 = vmax.f32 %v7077, 0.0
        %v7094 = vmax.f32 %v7078, 0.0
        %v7095 = vmax.f32 %v7079, 0.0
        %v7096 = vmax.f32 %v7080, 0.0
        %v7097 = vmax.f32 %v7081, 0.0
        %v7098 = vmax.f32 %v7082, 0.0
        %v7099 = vmax.f32 %v7083, 0.0
        %v7100 = vmax.f32 %v7084, 0.0
        %v7101 = vmax.f32 %v7085, 0.0
        %v7102 = vmax.f32 %v7086, 0.0
        %v7103 = vmax.f32 %v7087, 0.0
        %v7104 = vmax.f32 %v7088, 0.0
        %v7105 = vmax.f32 %v7089, 0.0
        %v7106 = vmax.f32 %v7090, 0.0
        %v7107 = vmax.f32 %v7091, 0.0
        %7108 = vset.pattern.permute.xlu0 5
        %7109 = vperm.xlu0 %7108, %v6668
        %v7110 = vpop.permute.xlu0 %7109
        %7112 = vset.pattern.permute.xlu0 5
        %7113 = vperm.xlu0 %7112, %v6669
        %v7114 = vpop.permute.xlu0 %7113
        %7116 = vset.pattern.permute.xlu0 5
        %7117 = vperm.xlu0 %7116, %v6670
        %v7118 = vpop.permute.xlu0 %7117
        %7120 = vset.pattern.permute.xlu0 5
        %7121 = vperm.xlu0 %7120, %v6671
        %v7122 = vpop.permute.xlu0 %7121
        %v7124 = vmul.f32 %v7110, %v7092
        %v7125 = vmul.f32 %v7110, %v7093
        %v7126 = vmul.f32 %v7110, %v7094
        %v7127 = vmul.f32 %v7110, %v7095
        %v7128 = vmul.f32 %v7114, %v7096
        %v7129 = vmul.f32 %v7114, %v7097
        %v7130 = vmul.f32 %v7114, %v7098
        %v7131 = vmul.f32 %v7114, %v7099
        %v7132 = vmul.f32 %v7118, %v7100
        %v7133 = vmul.f32 %v7118, %v7101
        %v7134 = vmul.f32 %v7118, %v7102
        %v7135 = vmul.f32 %v7118, %v7103
        %v7136 = vmul.f32 %v7122, %v7104
        %v7137 = vmul.f32 %v7122, %v7105
        %v7138 = vmul.f32 %v7122, %v7106
        %v7139 = vmul.f32 %v7122, %v7107
        %v7140 = vadd.f32 %v7060, %v7124
        %v7141 = vadd.f32 %v7061, %v7125
        %v7142 = vadd.f32 %v7062, %v7126
        %v7143 = vadd.f32 %v7063, %v7127
        %v7144 = vadd.f32 %v7064, %v7128
        %v7145 = vadd.f32 %v7065, %v7129
        %v7146 = vadd.f32 %v7066, %v7130
        %v7147 = vadd.f32 %v7067, %v7131
        %v7148 = vadd.f32 %v7068, %v7132
        %v7149 = vadd.f32 %v7069, %v7133
        %v7150 = vadd.f32 %v7070, %v7134
        %v7151 = vadd.f32 %v7071, %v7135
        %v7152 = vadd.f32 %v7072, %v7136
        %v7153 = vadd.f32 %v7073, %v7137
        %v7154 = vadd.f32 %v7074, %v7138
        %v7155 = vadd.f32 %v7075, %v7139
        %v7156 = vsub.f32 %v6517, -0.1
        %v7157 = vsub.f32 %v6519, -0.1
        %v7158 = vsub.f32 %v6570, -0.1
        %v7159 = vsub.f32 %v6572, -0.1
        %v7160 = vsub.f32 %v6521, -0.1
        %v7161 = vsub.f32 %v6523, -0.1
        %v7162 = vsub.f32 %v6574, -0.1
        %v7163 = vsub.f32 %v6576, -0.1
        %v7164 = vsub.f32 %v6527, -0.1
        %v7165 = vsub.f32 %v6529, -0.1
        %v7166 = vsub.f32 %v6580, -0.1
        %v7167 = vsub.f32 %v6582, -0.1
        %v7168 = vsub.f32 %v6531, -0.1
        %v7169 = vsub.f32 %v6533, -0.1
        %v7170 = vsub.f32 %v6584, -0.1
        %v7171 = vsub.f32 %v6586, -0.1
        %v7172 = vmax.f32 %v7156, 0.0
        %v7173 = vmax.f32 %v7157, 0.0
        %v7174 = vmax.f32 %v7158, 0.0
        %v7175 = vmax.f32 %v7159, 0.0
        %v7176 = vmax.f32 %v7160, 0.0
        %v7177 = vmax.f32 %v7161, 0.0
        %v7178 = vmax.f32 %v7162, 0.0
        %v7179 = vmax.f32 %v7163, 0.0
        %v7180 = vmax.f32 %v7164, 0.0
        %v7181 = vmax.f32 %v7165, 0.0
        %v7182 = vmax.f32 %v7166, 0.0
        %v7183 = vmax.f32 %v7167, 0.0
        %v7184 = vmax.f32 %v7168, 0.0
        %v7185 = vmax.f32 %v7169, 0.0
        %v7186 = vmax.f32 %v7170, 0.0
        %v7187 = vmax.f32 %v7171, 0.0
        %7188 = vset.pattern.permute.xlu0 6
        %7189 = vperm.xlu0 %7188, %v6668
        %v7190 = vpop.permute.xlu0 %7189
        %7192 = vset.pattern.permute.xlu0 6
        %7193 = vperm.xlu0 %7192, %v6669
        %v7194 = vpop.permute.xlu0 %7193
        %7196 = vset.pattern.permute.xlu0 6
        %7197 = vperm.xlu0 %7196, %v6670
        %v7198 = vpop.permute.xlu0 %7197
        %7200 = vset.pattern.permute.xlu0 6
        %7201 = vperm.xlu0 %7200, %v6671
        %v7202 = vpop.permute.xlu0 %7201
        %v7204 = vmul.f32 %v7190, %v7172
        %v7205 = vmul.f32 %v7190, %v7173
        %v7206 = vmul.f32 %v7190, %v7174
        %v7207 = vmul.f32 %v7190, %v7175
        %v7208 = vmul.f32 %v7194, %v7176
        %v7209 = vmul.f32 %v7194, %v7177
        %v7210 = vmul.f32 %v7194, %v7178
        %v7211 = vmul.f32 %v7194, %v7179
        %v7212 = vmul.f32 %v7198, %v7180
        %v7213 = vmul.f32 %v7198, %v7181
        %v7214 = vmul.f32 %v7198, %v7182
        %v7215 = vmul.f32 %v7198, %v7183
        %v7216 = vmul.f32 %v7202, %v7184
        %v7217 = vmul.f32 %v7202, %v7185
        %v7218 = vmul.f32 %v7202, %v7186
        %v7219 = vmul.f32 %v7202, %v7187
        %v7220 = vadd.f32 %v7140, %v7204
        %v7221 = vadd.f32 %v7141, %v7205
        %v7222 = vadd.f32 %v7142, %v7206
        %v7223 = vadd.f32 %v7143, %v7207
        %v7224 = vadd.f32 %v7144, %v7208
        %v7225 = vadd.f32 %v7145, %v7209
        %v7226 = vadd.f32 %v7146, %v7210
        %v7227 = vadd.f32 %v7147, %v7211
        %v7228 = vadd.f32 %v7148, %v7212
        %v7229 = vadd.f32 %v7149, %v7213
        %v7230 = vadd.f32 %v7150, %v7214
        %v7231 = vadd.f32 %v7151, %v7215
        %v7232 = vadd.f32 %v7152, %v7216
        %v7233 = vadd.f32 %v7153, %v7217
        %v7234 = vadd.f32 %v7154, %v7218
        %v7235 = vadd.f32 %v7155, %v7219
        %v7236 = vsub.f32 %v6517, -0.083333336
        %v7237 = vsub.f32 %v6519, -0.083333336
        %v7238 = vsub.f32 %v6570, -0.083333336
        %v7239 = vsub.f32 %v6572, -0.083333336
        %v7240 = vsub.f32 %v6521, -0.083333336
        %v7241 = vsub.f32 %v6523, -0.083333336
        %v7242 = vsub.f32 %v6574, -0.083333336
        %v7243 = vsub.f32 %v6576, -0.083333336
        %v7244 = vsub.f32 %v6527, -0.083333336
        %v7245 = vsub.f32 %v6529, -0.083333336
        %v7246 = vsub.f32 %v6580, -0.083333336
        %v7247 = vsub.f32 %v6582, -0.083333336
        %v7248 = vsub.f32 %v6531, -0.083333336
        %v7249 = vsub.f32 %v6533, -0.083333336
        %v7250 = vsub.f32 %v6584, -0.083333336
        %v7251 = vsub.f32 %v6586, -0.083333336
        %v7252 = vmax.f32 %v7236, 0.0
        %v7253 = vmax.f32 %v7237, 0.0
        %v7254 = vmax.f32 %v7238, 0.0
        %v7255 = vmax.f32 %v7239, 0.0
        %v7256 = vmax.f32 %v7240, 0.0
        %v7257 = vmax.f32 %v7241, 0.0
        %v7258 = vmax.f32 %v7242, 0.0
        %v7259 = vmax.f32 %v7243, 0.0
        %v7260 = vmax.f32 %v7244, 0.0
        %v7261 = vmax.f32 %v7245, 0.0
        %v7262 = vmax.f32 %v7246, 0.0
        %v7263 = vmax.f32 %v7247, 0.0
        %v7264 = vmax.f32 %v7248, 0.0
        %v7265 = vmax.f32 %v7249, 0.0
        %v7266 = vmax.f32 %v7250, 0.0
        %v7267 = vmax.f32 %v7251, 0.0
        %7268 = vset.pattern.permute.xlu0 7
        %7269 = vperm.xlu0 %7268, %v6668
        %v7270 = vpop.permute.xlu0 %7269
        %7272 = vset.pattern.permute.xlu0 7
        %7273 = vperm.xlu0 %7272, %v6669
        %v7274 = vpop.permute.xlu0 %7273
        %7276 = vset.pattern.permute.xlu0 7
        %7277 = vperm.xlu0 %7276, %v6670
        %v7278 = vpop.permute.xlu0 %7277
        %7280 = vset.pattern.permute.xlu0 7
        %7281 = vperm.xlu0 %7280, %v6671
        %v7282 = vpop.permute.xlu0 %7281
        %v7284 = vmul.f32 %v7270, %v7252
        %v7285 = vmul.f32 %v7270, %v7253
        %v7286 = vmul.f32 %v7270, %v7254
        %v7287 = vmul.f32 %v7270, %v7255
        %v7288 = vmul.f32 %v7274, %v7256
        %v7289 = vmul.f32 %v7274, %v7257
        %v7290 = vmul.f32 %v7274, %v7258
        %v7291 = vmul.f32 %v7274, %v7259
        %v7292 = vmul.f32 %v7278, %v7260
        %v7293 = vmul.f32 %v7278, %v7261
        %v7294 = vmul.f32 %v7278, %v7262
        %v7295 = vmul.f32 %v7278, %v7263
        %v7296 = vmul.f32 %v7282, %v7264
        %v7297 = vmul.f32 %v7282, %v7265
        %v7298 = vmul.f32 %v7282, %v7266
        %v7299 = vmul.f32 %v7282, %v7267
        %v7300 = vadd.f32 %v7220, %v7284
        %v7301 = vadd.f32 %v7221, %v7285
        %v7302 = vadd.f32 %v7222, %v7286
        %v7303 = vadd.f32 %v7223, %v7287
        %v7304 = vadd.f32 %v7224, %v7288
        %v7305 = vadd.f32 %v7225, %v7289
        %v7306 = vadd.f32 %v7226, %v7290
        %v7307 = vadd.f32 %v7227, %v7291
        %v7308 = vadd.f32 %v7228, %v7292
        %v7309 = vadd.f32 %v7229, %v7293
        %v7310 = vadd.f32 %v7230, %v7294
        %v7311 = vadd.f32 %v7231, %v7295
        %v7312 = vadd.f32 %v7232, %v7296
        %v7313 = vadd.f32 %v7233, %v7297
        %v7314 = vadd.f32 %v7234, %v7298
        %v7315 = vadd.f32 %v7235, %v7299
        %v7316 = vsub.f32 %v6517, -0.06666667
        %v7317 = vsub.f32 %v6519, -0.06666667
        %v7318 = vsub.f32 %v6570, -0.06666667
        %v7319 = vsub.f32 %v6572, -0.06666667
        %v7320 = vsub.f32 %v6521, -0.06666667
        %v7321 = vsub.f32 %v6523, -0.06666667
        %v7322 = vsub.f32 %v6574, -0.06666667
        %v7323 = vsub.f32 %v6576, -0.06666667
        %v7324 = vsub.f32 %v6527, -0.06666667
        %v7325 = vsub.f32 %v6529, -0.06666667
        %v7326 = vsub.f32 %v6580, -0.06666667
        %v7327 = vsub.f32 %v6582, -0.06666667
        %v7328 = vsub.f32 %v6531, -0.06666667
        %v7329 = vsub.f32 %v6533, -0.06666667
        %v7330 = vsub.f32 %v6584, -0.06666667
        %v7331 = vsub.f32 %v6586, -0.06666667
        %v7332 = vmax.f32 %v7316, 0.0
        %v7333 = vmax.f32 %v7317, 0.0
        %v7334 = vmax.f32 %v7318, 0.0
        %v7335 = vmax.f32 %v7319, 0.0
        %v7336 = vmax.f32 %v7320, 0.0
        %v7337 = vmax.f32 %v7321, 0.0
        %v7338 = vmax.f32 %v7322, 0.0
        %v7339 = vmax.f32 %v7323, 0.0
        %v7340 = vmax.f32 %v7324, 0.0
        %v7341 = vmax.f32 %v7325, 0.0
        %v7342 = vmax.f32 %v7326, 0.0
        %v7343 = vmax.f32 %v7327, 0.0
        %v7344 = vmax.f32 %v7328, 0.0
        %v7345 = vmax.f32 %v7329, 0.0
        %v7346 = vmax.f32 %v7330, 0.0
        %v7347 = vmax.f32 %v7331, 0.0
        %7348 = vset.pattern.permute.xlu0 8
        %7349 = vperm.xlu0 %7348, %v6668
        %v7350 = vpop.permute.xlu0 %7349
        %7352 = vset.pattern.permute.xlu0 8
        %7353 = vperm.xlu0 %7352, %v6669
        %v7354 = vpop.permute.xlu0 %7353
        %7356 = vset.pattern.permute.xlu0 8
        %7357 = vperm.xlu0 %7356, %v6670
        %v7358 = vpop.permute.xlu0 %7357
        %7360 = vset.pattern.permute.xlu0 8
        %7361 = vperm.xlu0 %7360, %v6671
        %v7362 = vpop.permute.xlu0 %7361
        %v7364 = vmul.f32 %v7350, %v7332
        %v7365 = vmul.f32 %v7350, %v7333
        %v7366 = vmul.f32 %v7350, %v7334
        %v7367 = vmul.f32 %v7350, %v7335
        %v7368 = vmul.f32 %v7354, %v7336
        %v7369 = vmul.f32 %v7354, %v7337
        %v7370 = vmul.f32 %v7354, %v7338
        %v7371 = vmul.f32 %v7354, %v7339
        %v7372 = vmul.f32 %v7358, %v7340
        %v7373 = vmul.f32 %v7358, %v7341
        %v7374 = vmul.f32 %v7358, %v7342
        %v7375 = vmul.f32 %v7358, %v7343
        %v7376 = vmul.f32 %v7362, %v7344
        %v7377 = vmul.f32 %v7362, %v7345
        %v7378 = vmul.f32 %v7362, %v7346
        %v7379 = vmul.f32 %v7362, %v7347
        %v7380 = vadd.f32 %v7300, %v7364
        %v7381 = vadd.f32 %v7301, %v7365
        %v7382 = vadd.f32 %v7302, %v7366
        %v7383 = vadd.f32 %v7303, %v7367
        %v7384 = vadd.f32 %v7304, %v7368
        %v7385 = vadd.f32 %v7305, %v7369
        %v7386 = vadd.f32 %v7306, %v7370
        %v7387 = vadd.f32 %v7307, %v7371
        %v7388 = vadd.f32 %v7308, %v7372
        %v7389 = vadd.f32 %v7309, %v7373
        %v7390 = vadd.f32 %v7310, %v7374
        %v7391 = vadd.f32 %v7311, %v7375
        %v7392 = vadd.f32 %v7312, %v7376
        %v7393 = vadd.f32 %v7313, %v7377
        %v7394 = vadd.f32 %v7314, %v7378
        %v7395 = vadd.f32 %v7315, %v7379
        %v7396 = vsub.f32 %v6517, -0.05
        %v7397 = vsub.f32 %v6519, -0.05
        %v7398 = vsub.f32 %v6570, -0.05
        %v7399 = vsub.f32 %v6572, -0.05
        %v7400 = vsub.f32 %v6521, -0.05
        %v7401 = vsub.f32 %v6523, -0.05
        %v7402 = vsub.f32 %v6574, -0.05
        %v7403 = vsub.f32 %v6576, -0.05
        %v7404 = vsub.f32 %v6527, -0.05
        %v7405 = vsub.f32 %v6529, -0.05
        %v7406 = vsub.f32 %v6580, -0.05
        %v7407 = vsub.f32 %v6582, -0.05
        %v7408 = vsub.f32 %v6531, -0.05
        %v7409 = vsub.f32 %v6533, -0.05
        %v7410 = vsub.f32 %v6584, -0.05
        %v7411 = vsub.f32 %v6586, -0.05
        %v7412 = vmax.f32 %v7396, 0.0
        %v7413 = vmax.f32 %v7397, 0.0
        %v7414 = vmax.f32 %v7398, 0.0
        %v7415 = vmax.f32 %v7399, 0.0
        %v7416 = vmax.f32 %v7400, 0.0
        %v7417 = vmax.f32 %v7401, 0.0
        %v7418 = vmax.f32 %v7402, 0.0
        %v7419 = vmax.f32 %v7403, 0.0
        %v7420 = vmax.f32 %v7404, 0.0
        %v7421 = vmax.f32 %v7405, 0.0
        %v7422 = vmax.f32 %v7406, 0.0
        %v7423 = vmax.f32 %v7407, 0.0
        %v7424 = vmax.f32 %v7408, 0.0
        %v7425 = vmax.f32 %v7409, 0.0
        %v7426 = vmax.f32 %v7410, 0.0
        %v7427 = vmax.f32 %v7411, 0.0
        %7428 = vset.pattern.permute.xlu0 9
        %7429 = vperm.xlu0 %7428, %v6668
        %v7430 = vpop.permute.xlu0 %7429
        %7432 = vset.pattern.permute.xlu0 9
        %7433 = vperm.xlu0 %7432, %v6669
        %v7434 = vpop.permute.xlu0 %7433
        %7436 = vset.pattern.permute.xlu0 9
        %7437 = vperm.xlu0 %7436, %v6670
        %v7438 = vpop.permute.xlu0 %7437
        %7440 = vset.pattern.permute.xlu0 9
        %7441 = vperm.xlu0 %7440, %v6671
        %v7442 = vpop.permute.xlu0 %7441
        %v7444 = vmul.f32 %v7430, %v7412
        %v7445 = vmul.f32 %v7430, %v7413
        %v7446 = vmul.f32 %v7430, %v7414
        %v7447 = vmul.f32 %v7430, %v7415
        %v7448 = vmul.f32 %v7434, %v7416
        %v7449 = vmul.f32 %v7434, %v7417
        %v7450 = vmul.f32 %v7434, %v7418
        %v7451 = vmul.f32 %v7434, %v7419
        %v7452 = vmul.f32 %v7438, %v7420
        %v7453 = vmul.f32 %v7438, %v7421
        %v7454 = vmul.f32 %v7438, %v7422
        %v7455 = vmul.f32 %v7438, %v7423
        %v7456 = vmul.f32 %v7442, %v7424
        %v7457 = vmul.f32 %v7442, %v7425
        %v7458 = vmul.f32 %v7442, %v7426
        %v7459 = vmul.f32 %v7442, %v7427
        %v7460 = vadd.f32 %v7380, %v7444
        %v7461 = vadd.f32 %v7381, %v7445
        %v7462 = vadd.f32 %v7382, %v7446
        %v7463 = vadd.f32 %v7383, %v7447
        %v7464 = vadd.f32 %v7384, %v7448
        %v7465 = vadd.f32 %v7385, %v7449
        %v7466 = vadd.f32 %v7386, %v7450
        %v7467 = vadd.f32 %v7387, %v7451
        %v7468 = vadd.f32 %v7388, %v7452
        %v7469 = vadd.f32 %v7389, %v7453
        %v7470 = vadd.f32 %v7390, %v7454
        %v7471 = vadd.f32 %v7391, %v7455
        %v7472 = vadd.f32 %v7392, %v7456
        %v7473 = vadd.f32 %v7393, %v7457
        %v7474 = vadd.f32 %v7394, %v7458
        %v7475 = vadd.f32 %v7395, %v7459
        %v7476 = vsub.f32 %v6517, -0.033333335
        %v7477 = vsub.f32 %v6519, -0.033333335
        %v7478 = vsub.f32 %v6570, -0.033333335
        %v7479 = vsub.f32 %v6572, -0.033333335
        %v7480 = vsub.f32 %v6521, -0.033333335
        %v7481 = vsub.f32 %v6523, -0.033333335
        %v7482 = vsub.f32 %v6574, -0.033333335
        %v7483 = vsub.f32 %v6576, -0.033333335
        %v7484 = vsub.f32 %v6527, -0.033333335
        %v7485 = vsub.f32 %v6529, -0.033333335
        %v7486 = vsub.f32 %v6580, -0.033333335
        %v7487 = vsub.f32 %v6582, -0.033333335
        %v7488 = vsub.f32 %v6531, -0.033333335
        %v7489 = vsub.f32 %v6533, -0.033333335
        %v7490 = vsub.f32 %v6584, -0.033333335
        %v7491 = vsub.f32 %v6586, -0.033333335
        %v7492 = vmax.f32 %v7476, 0.0
        %v7493 = vmax.f32 %v7477, 0.0
        %v7494 = vmax.f32 %v7478, 0.0
        %v7495 = vmax.f32 %v7479, 0.0
        %v7496 = vmax.f32 %v7480, 0.0
        %v7497 = vmax.f32 %v7481, 0.0
        %v7498 = vmax.f32 %v7482, 0.0
        %v7499 = vmax.f32 %v7483, 0.0
        %v7500 = vmax.f32 %v7484, 0.0
        %v7501 = vmax.f32 %v7485, 0.0
        %v7502 = vmax.f32 %v7486, 0.0
        %v7503 = vmax.f32 %v7487, 0.0
        %v7504 = vmax.f32 %v7488, 0.0
        %v7505 = vmax.f32 %v7489, 0.0
        %v7506 = vmax.f32 %v7490, 0.0
        %v7507 = vmax.f32 %v7491, 0.0
        %7508 = vset.pattern.permute.xlu0 10
        %7509 = vperm.xlu0 %7508, %v6668
        %v7510 = vpop.permute.xlu0 %7509
        %7512 = vset.pattern.permute.xlu0 10
        %7513 = vperm.xlu0 %7512, %v6669
        %v7514 = vpop.permute.xlu0 %7513
        %7516 = vset.pattern.permute.xlu0 10
        %7517 = vperm.xlu0 %7516, %v6670
        %v7518 = vpop.permute.xlu0 %7517
        %7520 = vset.pattern.permute.xlu0 10
        %7521 = vperm.xlu0 %7520, %v6671
        %v7522 = vpop.permute.xlu0 %7521
        %v7524 = vmul.f32 %v7510, %v7492
        %v7525 = vmul.f32 %v7510, %v7493
        %v7526 = vmul.f32 %v7510, %v7494
        %v7527 = vmul.f32 %v7510, %v7495
        %v7528 = vmul.f32 %v7514, %v7496
        %v7529 = vmul.f32 %v7514, %v7497
        %v7530 = vmul.f32 %v7514, %v7498
        %v7531 = vmul.f32 %v7514, %v7499
        %v7532 = vmul.f32 %v7518, %v7500
        %v7533 = vmul.f32 %v7518, %v7501
        %v7534 = vmul.f32 %v7518, %v7502
        %v7535 = vmul.f32 %v7518, %v7503
        %v7536 = vmul.f32 %v7522, %v7504
        %v7537 = vmul.f32 %v7522, %v7505
        %v7538 = vmul.f32 %v7522, %v7506
        %v7539 = vmul.f32 %v7522, %v7507
        %v7540 = vadd.f32 %v7460, %v7524
        %v7541 = vadd.f32 %v7461, %v7525
        %v7542 = vadd.f32 %v7462, %v7526
        %v7543 = vadd.f32 %v7463, %v7527
        %v7544 = vadd.f32 %v7464, %v7528
        %v7545 = vadd.f32 %v7465, %v7529
        %v7546 = vadd.f32 %v7466, %v7530
        %v7547 = vadd.f32 %v7467, %v7531
        %v7548 = vadd.f32 %v7468, %v7532
        %v7549 = vadd.f32 %v7469, %v7533
        %v7550 = vadd.f32 %v7470, %v7534
        %v7551 = vadd.f32 %v7471, %v7535
        %v7552 = vadd.f32 %v7472, %v7536
        %v7553 = vadd.f32 %v7473, %v7537
        %v7554 = vadd.f32 %v7474, %v7538
        %v7555 = vadd.f32 %v7475, %v7539
        %v7556 = vsub.f32 %v6517, -0.016666668
        %v7557 = vsub.f32 %v6519, -0.016666668
        %v7558 = vsub.f32 %v6570, -0.016666668
        %v7559 = vsub.f32 %v6572, -0.016666668
        %v7560 = vsub.f32 %v6521, -0.016666668
        %v7561 = vsub.f32 %v6523, -0.016666668
        %v7562 = vsub.f32 %v6574, -0.016666668
        %v7563 = vsub.f32 %v6576, -0.016666668
        %v7564 = vsub.f32 %v6527, -0.016666668
        %v7565 = vsub.f32 %v6529, -0.016666668
        %v7566 = vsub.f32 %v6580, -0.016666668
        %v7567 = vsub.f32 %v6582, -0.016666668
        %v7568 = vsub.f32 %v6531, -0.016666668
        %v7569 = vsub.f32 %v6533, -0.016666668
        %v7570 = vsub.f32 %v6584, -0.016666668
        %v7571 = vsub.f32 %v6586, -0.016666668
        %v7572 = vmax.f32 %v7556, 0.0
        %v7573 = vmax.f32 %v7557, 0.0
        %v7574 = vmax.f32 %v7558, 0.0
        %v7575 = vmax.f32 %v7559, 0.0
        %v7576 = vmax.f32 %v7560, 0.0
        %v7577 = vmax.f32 %v7561, 0.0
        %v7578 = vmax.f32 %v7562, 0.0
        %v7579 = vmax.f32 %v7563, 0.0
        %v7580 = vmax.f32 %v7564, 0.0
        %v7581 = vmax.f32 %v7565, 0.0
        %v7582 = vmax.f32 %v7566, 0.0
        %v7583 = vmax.f32 %v7567, 0.0
        %v7584 = vmax.f32 %v7568, 0.0
        %v7585 = vmax.f32 %v7569, 0.0
        %v7586 = vmax.f32 %v7570, 0.0
        %v7587 = vmax.f32 %v7571, 0.0
        %7588 = vset.pattern.permute.xlu0 11
        %7589 = vperm.xlu0 %7588, %v6668
        %v7590 = vpop.permute.xlu0 %7589
        %7592 = vset.pattern.permute.xlu0 11
        %7593 = vperm.xlu0 %7592, %v6669
        %v7594 = vpop.permute.xlu0 %7593
        %7596 = vset.pattern.permute.xlu0 11
        %7597 = vperm.xlu0 %7596, %v6670
        %v7598 = vpop.permute.xlu0 %7597
        %7600 = vset.pattern.permute.xlu0 11
        %7601 = vperm.xlu0 %7600, %v6671
        %v7602 = vpop.permute.xlu0 %7601
        %v7604 = vmul.f32 %v7590, %v7572
        %v7605 = vmul.f32 %v7590, %v7573
        %v7606 = vmul.f32 %v7590, %v7574
        %v7607 = vmul.f32 %v7590, %v7575
        %v7608 = vmul.f32 %v7594, %v7576
        %v7609 = vmul.f32 %v7594, %v7577
        %v7610 = vmul.f32 %v7594, %v7578
        %v7611 = vmul.f32 %v7594, %v7579
        %v7612 = vmul.f32 %v7598, %v7580
        %v7613 = vmul.f32 %v7598, %v7581
        %v7614 = vmul.f32 %v7598, %v7582
        %v7615 = vmul.f32 %v7598, %v7583
        %v7616 = vmul.f32 %v7602, %v7584
        %v7617 = vmul.f32 %v7602, %v7585
        %v7618 = vmul.f32 %v7602, %v7586
        %v7619 = vmul.f32 %v7602, %v7587
        %v7620 = vadd.f32 %v7540, %v7604
        %v7621 = vadd.f32 %v7541, %v7605
        %v7622 = vadd.f32 %v7542, %v7606
        %v7623 = vadd.f32 %v7543, %v7607
        %v7624 = vadd.f32 %v7544, %v7608
        %v7625 = vadd.f32 %v7545, %v7609
        %v7626 = vadd.f32 %v7546, %v7610
        %v7627 = vadd.f32 %v7547, %v7611
        %v7628 = vadd.f32 %v7548, %v7612
        %v7629 = vadd.f32 %v7549, %v7613
        %v7630 = vadd.f32 %v7550, %v7614
        %v7631 = vadd.f32 %v7551, %v7615
        %v7632 = vadd.f32 %v7552, %v7616
        %v7633 = vadd.f32 %v7553, %v7617
        %v7634 = vadd.f32 %v7554, %v7618
        %v7635 = vadd.f32 %v7555, %v7619
        %v7636 = vsub.f32 %v6517, 2.7755576e-17
        %v7637 = vsub.f32 %v6519, 2.7755576e-17
        %v7638 = vsub.f32 %v6570, 2.7755576e-17
        %v7639 = vsub.f32 %v6572, 2.7755576e-17
        %v7640 = vsub.f32 %v6521, 2.7755576e-17
        %v7641 = vsub.f32 %v6523, 2.7755576e-17
        %v7642 = vsub.f32 %v6574, 2.7755576e-17
        %v7643 = vsub.f32 %v6576, 2.7755576e-17
        %v7644 = vsub.f32 %v6527, 2.7755576e-17
        %v7645 = vsub.f32 %v6529, 2.7755576e-17
        %v7646 = vsub.f32 %v6580, 2.7755576e-17
        %v7647 = vsub.f32 %v6582, 2.7755576e-17
        %v7648 = vsub.f32 %v6531, 2.7755576e-17
        %v7649 = vsub.f32 %v6533, 2.7755576e-17
        %v7650 = vsub.f32 %v6584, 2.7755576e-17
        %v7651 = vsub.f32 %v6586, 2.7755576e-17
        %v7652 = vmax.f32 %v7636, 0.0
        %v7653 = vmax.f32 %v7637, 0.0
        %v7654 = vmax.f32 %v7638, 0.0
        %v7655 = vmax.f32 %v7639, 0.0
        %v7656 = vmax.f32 %v7640, 0.0
        %v7657 = vmax.f32 %v7641, 0.0
        %v7658 = vmax.f32 %v7642, 0.0
        %v7659 = vmax.f32 %v7643, 0.0
        %v7660 = vmax.f32 %v7644, 0.0
        %v7661 = vmax.f32 %v7645, 0.0
        %v7662 = vmax.f32 %v7646, 0.0
        %v7663 = vmax.f32 %v7647, 0.0
        %v7664 = vmax.f32 %v7648, 0.0
        %v7665 = vmax.f32 %v7649, 0.0
        %v7666 = vmax.f32 %v7650, 0.0
        %v7667 = vmax.f32 %v7651, 0.0
        %7668 = vset.pattern.permute.xlu0 12
        %7669 = vperm.xlu0 %7668, %v6668
        %v7670 = vpop.permute.xlu0 %7669
        %7672 = vset.pattern.permute.xlu0 12
        %7673 = vperm.xlu0 %7672, %v6669
        %v7674 = vpop.permute.xlu0 %7673
        %7676 = vset.pattern.permute.xlu0 12
        %7677 = vperm.xlu0 %7676, %v6670
        %v7678 = vpop.permute.xlu0 %7677
        %7680 = vset.pattern.permute.xlu0 12
        %7681 = vperm.xlu0 %7680, %v6671
        %v7682 = vpop.permute.xlu0 %7681
        %v7684 = vmul.f32 %v7670, %v7652
        %v7685 = vmul.f32 %v7670, %v7653
        %v7686 = vmul.f32 %v7670, %v7654
        %v7687 = vmul.f32 %v7670, %v7655
        %v7688 = vmul.f32 %v7674, %v7656
        %v7689 = vmul.f32 %v7674, %v7657
        %v7690 = vmul.f32 %v7674, %v7658
        %v7691 = vmul.f32 %v7674, %v7659
        %v7692 = vmul.f32 %v7678, %v7660
        %v7693 = vmul.f32 %v7678, %v7661
        %v7694 = vmul.f32 %v7678, %v7662
        %v7695 = vmul.f32 %v7678, %v7663
        %v7696 = vmul.f32 %v7682, %v7664
        %v7697 = vmul.f32 %v7682, %v7665
        %v7698 = vmul.f32 %v7682, %v7666
        %v7699 = vmul.f32 %v7682, %v7667
        %v7700 = vadd.f32 %v7620, %v7684
        %v7701 = vadd.f32 %v7621, %v7685
        %v7702 = vadd.f32 %v7622, %v7686
        %v7703 = vadd.f32 %v7623, %v7687
        %v7704 = vadd.f32 %v7624, %v7688
        %v7705 = vadd.f32 %v7625, %v7689
        %v7706 = vadd.f32 %v7626, %v7690
        %v7707 = vadd.f32 %v7627, %v7691
        %v7708 = vadd.f32 %v7628, %v7692
        %v7709 = vadd.f32 %v7629, %v7693
        %v7710 = vadd.f32 %v7630, %v7694
        %v7711 = vadd.f32 %v7631, %v7695
        %v7712 = vadd.f32 %v7632, %v7696
        %v7713 = vadd.f32 %v7633, %v7697
        %v7714 = vadd.f32 %v7634, %v7698
        %v7715 = vadd.f32 %v7635, %v7699
        %v7716 = vsub.f32 %v6517, 0.016666668
        %v7717 = vsub.f32 %v6519, 0.016666668
        %v7718 = vsub.f32 %v6570, 0.016666668
        %v7719 = vsub.f32 %v6572, 0.016666668
        %v7720 = vsub.f32 %v6521, 0.016666668
        %v7721 = vsub.f32 %v6523, 0.016666668
        %v7722 = vsub.f32 %v6574, 0.016666668
        %v7723 = vsub.f32 %v6576, 0.016666668
        %v7724 = vsub.f32 %v6527, 0.016666668
        %v7725 = vsub.f32 %v6529, 0.016666668
        %v7726 = vsub.f32 %v6580, 0.016666668
        %v7727 = vsub.f32 %v6582, 0.016666668
        %v7728 = vsub.f32 %v6531, 0.016666668
        %v7729 = vsub.f32 %v6533, 0.016666668
        %v7730 = vsub.f32 %v6584, 0.016666668
        %v7731 = vsub.f32 %v6586, 0.016666668
        %v7732 = vmax.f32 %v7716, 0.0
        %v7733 = vmax.f32 %v7717, 0.0
        %v7734 = vmax.f32 %v7718, 0.0
        %v7735 = vmax.f32 %v7719, 0.0
        %v7736 = vmax.f32 %v7720, 0.0
        %v7737 = vmax.f32 %v7721, 0.0
        %v7738 = vmax.f32 %v7722, 0.0
        %v7739 = vmax.f32 %v7723, 0.0
        %v7740 = vmax.f32 %v7724, 0.0
        %v7741 = vmax.f32 %v7725, 0.0
        %v7742 = vmax.f32 %v7726, 0.0
        %v7743 = vmax.f32 %v7727, 0.0
        %v7744 = vmax.f32 %v7728, 0.0
        %v7745 = vmax.f32 %v7729, 0.0
        %v7746 = vmax.f32 %v7730, 0.0
        %v7747 = vmax.f32 %v7731, 0.0
        %7748 = vset.pattern.permute.xlu0 13
        %7749 = vperm.xlu0 %7748, %v6668
        %v7750 = vpop.permute.xlu0 %7749
        %7752 = vset.pattern.permute.xlu0 13
        %7753 = vperm.xlu0 %7752, %v6669
        %v7754 = vpop.permute.xlu0 %7753
        %7756 = vset.pattern.permute.xlu0 13
        %7757 = vperm.xlu0 %7756, %v6670
        %v7758 = vpop.permute.xlu0 %7757
        %7760 = vset.pattern.permute.xlu0 13
        %7761 = vperm.xlu0 %7760, %v6671
        %v7762 = vpop.permute.xlu0 %7761
        %v7764 = vmul.f32 %v7750, %v7732
        %v7765 = vmul.f32 %v7750, %v7733
        %v7766 = vmul.f32 %v7750, %v7734
        %v7767 = vmul.f32 %v7750, %v7735
        %v7768 = vmul.f32 %v7754, %v7736
        %v7769 = vmul.f32 %v7754, %v7737
        %v7770 = vmul.f32 %v7754, %v7738
        %v7771 = vmul.f32 %v7754, %v7739
        %v7772 = vmul.f32 %v7758, %v7740
        %v7773 = vmul.f32 %v7758, %v7741
        %v7774 = vmul.f32 %v7758, %v7742
        %v7775 = vmul.f32 %v7758, %v7743
        %v7776 = vmul.f32 %v7762, %v7744
        %v7777 = vmul.f32 %v7762, %v7745
        %v7778 = vmul.f32 %v7762, %v7746
        %v7779 = vmul.f32 %v7762, %v7747
        %v7780 = vadd.f32 %v7700, %v7764
        %v7781 = vadd.f32 %v7701, %v7765
        %v7782 = vadd.f32 %v7702, %v7766
        %v7783 = vadd.f32 %v7703, %v7767
        %v7784 = vadd.f32 %v7704, %v7768
        %v7785 = vadd.f32 %v7705, %v7769
        %v7786 = vadd.f32 %v7706, %v7770
        %v7787 = vadd.f32 %v7707, %v7771
        %v7788 = vadd.f32 %v7708, %v7772
        %v7789 = vadd.f32 %v7709, %v7773
        %v7790 = vadd.f32 %v7710, %v7774
        %v7791 = vadd.f32 %v7711, %v7775
        %v7792 = vadd.f32 %v7712, %v7776
        %v7793 = vadd.f32 %v7713, %v7777
        %v7794 = vadd.f32 %v7714, %v7778
        %v7795 = vadd.f32 %v7715, %v7779
        %v7796 = vsub.f32 %v6517, 0.033333335
        %v7797 = vsub.f32 %v6519, 0.033333335
        %v7798 = vsub.f32 %v6570, 0.033333335
        %v7799 = vsub.f32 %v6572, 0.033333335
        %v7800 = vsub.f32 %v6521, 0.033333335
        %v7801 = vsub.f32 %v6523, 0.033333335
        %v7802 = vsub.f32 %v6574, 0.033333335
        %v7803 = vsub.f32 %v6576, 0.033333335
        %v7804 = vsub.f32 %v6527, 0.033333335
        %v7805 = vsub.f32 %v6529, 0.033333335
        %v7806 = vsub.f32 %v6580, 0.033333335
        %v7807 = vsub.f32 %v6582, 0.033333335
        %v7808 = vsub.f32 %v6531, 0.033333335
        %v7809 = vsub.f32 %v6533, 0.033333335
        %v7810 = vsub.f32 %v6584, 0.033333335
        %v7811 = vsub.f32 %v6586, 0.033333335
        %v7812 = vmax.f32 %v7796, 0.0
        %v7813 = vmax.f32 %v7797, 0.0
        %v7814 = vmax.f32 %v7798, 0.0
        %v7815 = vmax.f32 %v7799, 0.0
        %v7816 = vmax.f32 %v7800, 0.0
        %v7817 = vmax.f32 %v7801, 0.0
        %v7818 = vmax.f32 %v7802, 0.0
        %v7819 = vmax.f32 %v7803, 0.0
        %v7820 = vmax.f32 %v7804, 0.0
        %v7821 = vmax.f32 %v7805, 0.0
        %v7822 = vmax.f32 %v7806, 0.0
        %v7823 = vmax.f32 %v7807, 0.0
        %v7824 = vmax.f32 %v7808, 0.0
        %v7825 = vmax.f32 %v7809, 0.0
        %v7826 = vmax.f32 %v7810, 0.0
        %v7827 = vmax.f32 %v7811, 0.0
        %7828 = vset.pattern.permute.xlu0 14
        %7829 = vperm.xlu0 %7828, %v6668
        %v7830 = vpop.permute.xlu0 %7829
        %7832 = vset.pattern.permute.xlu0 14
        %7833 = vperm.xlu0 %7832, %v6669
        %v7834 = vpop.permute.xlu0 %7833
        %7836 = vset.pattern.permute.xlu0 14
        %7837 = vperm.xlu0 %7836, %v6670
        %v7838 = vpop.permute.xlu0 %7837
        %7840 = vset.pattern.permute.xlu0 14
        %7841 = vperm.xlu0 %7840, %v6671
        %v7842 = vpop.permute.xlu0 %7841
        %v7844 = vmul.f32 %v7830, %v7812
        %v7845 = vmul.f32 %v7830, %v7813
        %v7846 = vmul.f32 %v7830, %v7814
        %v7847 = vmul.f32 %v7830, %v7815
        %v7848 = vmul.f32 %v7834, %v7816
        %v7849 = vmul.f32 %v7834, %v7817
        %v7850 = vmul.f32 %v7834, %v7818
        %v7851 = vmul.f32 %v7834, %v7819
        %v7852 = vmul.f32 %v7838, %v7820
        %v7853 = vmul.f32 %v7838, %v7821
        %v7854 = vmul.f32 %v7838, %v7822
        %v7855 = vmul.f32 %v7838, %v7823
        %v7856 = vmul.f32 %v7842, %v7824
        %v7857 = vmul.f32 %v7842, %v7825
        %v7858 = vmul.f32 %v7842, %v7826
        %v7859 = vmul.f32 %v7842, %v7827
        %v7860 = vadd.f32 %v7780, %v7844
        %v7861 = vadd.f32 %v7781, %v7845
        %v7862 = vadd.f32 %v7782, %v7846
        %v7863 = vadd.f32 %v7783, %v7847
        %v7864 = vadd.f32 %v7784, %v7848
        %v7865 = vadd.f32 %v7785, %v7849
        %v7866 = vadd.f32 %v7786, %v7850
        %v7867 = vadd.f32 %v7787, %v7851
        %v7868 = vadd.f32 %v7788, %v7852
        %v7869 = vadd.f32 %v7789, %v7853
        %v7870 = vadd.f32 %v7790, %v7854
        %v7871 = vadd.f32 %v7791, %v7855
        %v7872 = vadd.f32 %v7792, %v7856
        %v7873 = vadd.f32 %v7793, %v7857
        %v7874 = vadd.f32 %v7794, %v7858
        %v7875 = vadd.f32 %v7795, %v7859
        %v7876 = vsub.f32 %v6517, 0.05
        %v7877 = vsub.f32 %v6519, 0.05
        %v7878 = vsub.f32 %v6570, 0.05
        %v7879 = vsub.f32 %v6572, 0.05
        %v7880 = vsub.f32 %v6521, 0.05
        %v7881 = vsub.f32 %v6523, 0.05
        %v7882 = vsub.f32 %v6574, 0.05
        %v7883 = vsub.f32 %v6576, 0.05
        %v7884 = vsub.f32 %v6527, 0.05
        %v7885 = vsub.f32 %v6529, 0.05
        %v7886 = vsub.f32 %v6580, 0.05
        %v7887 = vsub.f32 %v6582, 0.05
        %v7888 = vsub.f32 %v6531, 0.05
        %v7889 = vsub.f32 %v6533, 0.05
        %v7890 = vsub.f32 %v6584, 0.05
        %v7891 = vsub.f32 %v6586, 0.05
        %v7892 = vmax.f32 %v7876, 0.0
        %v7893 = vmax.f32 %v7877, 0.0
        %v7894 = vmax.f32 %v7878, 0.0
        %v7895 = vmax.f32 %v7879, 0.0
        %v7896 = vmax.f32 %v7880, 0.0
        %v7897 = vmax.f32 %v7881, 0.0
        %v7898 = vmax.f32 %v7882, 0.0
        %v7899 = vmax.f32 %v7883, 0.0
        %v7900 = vmax.f32 %v7884, 0.0
        %v7901 = vmax.f32 %v7885, 0.0
        %v7902 = vmax.f32 %v7886, 0.0
        %v7903 = vmax.f32 %v7887, 0.0
        %v7904 = vmax.f32 %v7888, 0.0
        %v7905 = vmax.f32 %v7889, 0.0
        %v7906 = vmax.f32 %v7890, 0.0
        %v7907 = vmax.f32 %v7891, 0.0
        %7908 = vset.pattern.permute.xlu0 15
        %7909 = vperm.xlu0 %7908, %v6668
        %v7910 = vpop.permute.xlu0 %7909
        %7912 = vset.pattern.permute.xlu0 15
        %7913 = vperm.xlu0 %7912, %v6669
        %v7914 = vpop.permute.xlu0 %7913
        %7916 = vset.pattern.permute.xlu0 15
        %7917 = vperm.xlu0 %7916, %v6670
        %v7918 = vpop.permute.xlu0 %7917
        %7920 = vset.pattern.permute.xlu0 15
        %7921 = vperm.xlu0 %7920, %v6671
        %v7922 = vpop.permute.xlu0 %7921
        %v7924 = vmul.f32 %v7910, %v7892
        %v7925 = vmul.f32 %v7910, %v7893
        %v7926 = vmul.f32 %v7910, %v7894
        %v7927 = vmul.f32 %v7910, %v7895
        %v7928 = vmul.f32 %v7914, %v7896
        %v7929 = vmul.f32 %v7914, %v7897
        %v7930 = vmul.f32 %v7914, %v7898
        %v7931 = vmul.f32 %v7914, %v7899
        %v7932 = vmul.f32 %v7918, %v7900
        %v7933 = vmul.f32 %v7918, %v7901
        %v7934 = vmul.f32 %v7918, %v7902
        %v7935 = vmul.f32 %v7918, %v7903
        %v7936 = vmul.f32 %v7922, %v7904
        %v7937 = vmul.f32 %v7922, %v7905
        %v7938 = vmul.f32 %v7922, %v7906
        %v7939 = vmul.f32 %v7922, %v7907
        %v7940 = vadd.f32 %v7860, %v7924
        %v7941 = vadd.f32 %v7861, %v7925
        %v7942 = vadd.f32 %v7862, %v7926
        %v7943 = vadd.f32 %v7863, %v7927
        %v7944 = vadd.f32 %v7864, %v7928
        %v7945 = vadd.f32 %v7865, %v7929
        %v7946 = vadd.f32 %v7866, %v7930
        %v7947 = vadd.f32 %v7867, %v7931
        %v7948 = vadd.f32 %v7868, %v7932
        %v7949 = vadd.f32 %v7869, %v7933
        %v7950 = vadd.f32 %v7870, %v7934
        %v7951 = vadd.f32 %v7871, %v7935
        %v7952 = vadd.f32 %v7872, %v7936
        %v7953 = vadd.f32 %v7873, %v7937
        %v7954 = vadd.f32 %v7874, %v7938
        %v7955 = vadd.f32 %v7875, %v7939
        %v7956 = vsub.f32 %v6517, 0.06666667
        %v7957 = vsub.f32 %v6519, 0.06666667
        %v7958 = vsub.f32 %v6570, 0.06666667
        %v7959 = vsub.f32 %v6572, 0.06666667
        %v7960 = vsub.f32 %v6521, 0.06666667
        %v7961 = vsub.f32 %v6523, 0.06666667
        %v7962 = vsub.f32 %v6574, 0.06666667
        %v7963 = vsub.f32 %v6576, 0.06666667
        %v7964 = vsub.f32 %v6527, 0.06666667
        %v7965 = vsub.f32 %v6529, 0.06666667
        %v7966 = vsub.f32 %v6580, 0.06666667
        %v7967 = vsub.f32 %v6582, 0.06666667
        %v7968 = vsub.f32 %v6531, 0.06666667
        %v7969 = vsub.f32 %v6533, 0.06666667
        %v7970 = vsub.f32 %v6584, 0.06666667
        %v7971 = vsub.f32 %v6586, 0.06666667
        %v7972 = vmax.f32 %v7956, 0.0
        %v7973 = vmax.f32 %v7957, 0.0
        %v7974 = vmax.f32 %v7958, 0.0
        %v7975 = vmax.f32 %v7959, 0.0
        %v7976 = vmax.f32 %v7960, 0.0
        %v7977 = vmax.f32 %v7961, 0.0
        %v7978 = vmax.f32 %v7962, 0.0
        %v7979 = vmax.f32 %v7963, 0.0
        %v7980 = vmax.f32 %v7964, 0.0
        %v7981 = vmax.f32 %v7965, 0.0
        %v7982 = vmax.f32 %v7966, 0.0
        %v7983 = vmax.f32 %v7967, 0.0
        %v7984 = vmax.f32 %v7968, 0.0
        %v7985 = vmax.f32 %v7969, 0.0
        %v7986 = vmax.f32 %v7970, 0.0
        %v7987 = vmax.f32 %v7971, 0.0
        %7988 = vset.pattern.permute.xlu0 16
        %7989 = vperm.xlu0 %7988, %v6668
        %v7990 = vpop.permute.xlu0 %7989
        %7992 = vset.pattern.permute.xlu0 16
        %7993 = vperm.xlu0 %7992, %v6669
        %v7994 = vpop.permute.xlu0 %7993
        %7996 = vset.pattern.permute.xlu0 16
        %7997 = vperm.xlu0 %7996, %v6670
        %v7998 = vpop.permute.xlu0 %7997
        %8000 = vset.pattern.permute.xlu0 16
        %8001 = vperm.xlu0 %8000, %v6671
        %v8002 = vpop.permute.xlu0 %8001
        %v8004 = vmul.f32 %v7990, %v7972
        %v8005 = vmul.f32 %v7990, %v7973
        %v8006 = vmul.f32 %v7990, %v7974
        %v8007 = vmul.f32 %v7990, %v7975
        %v8008 = vmul.f32 %v7994, %v7976
        %v8009 = vmul.f32 %v7994, %v7977
        %v8010 = vmul.f32 %v7994, %v7978
        %v8011 = vmul.f32 %v7994, %v7979
        %v8012 = vmul.f32 %v7998, %v7980
        %v8013 = vmul.f32 %v7998, %v7981
        %v8014 = vmul.f32 %v7998, %v7982
        %v8015 = vmul.f32 %v7998, %v7983
        %v8016 = vmul.f32 %v8002, %v7984
        %v8017 = vmul.f32 %v8002, %v7985
        %v8018 = vmul.f32 %v8002, %v7986
        %v8019 = vmul.f32 %v8002, %v7987
        %v8020 = vadd.f32 %v7940, %v8004
        %v8021 = vadd.f32 %v7941, %v8005
        %v8022 = vadd.f32 %v7942, %v8006
        %v8023 = vadd.f32 %v7943, %v8007
        %v8024 = vadd.f32 %v7944, %v8008
        %v8025 = vadd.f32 %v7945, %v8009
        %v8026 = vadd.f32 %v7946, %v8010
        %v8027 = vadd.f32 %v7947, %v8011
        %v8028 = vadd.f32 %v7948, %v8012
        %v8029 = vadd.f32 %v7949, %v8013
        %v8030 = vadd.f32 %v7950, %v8014
        %v8031 = vadd.f32 %v7951, %v8015
        %v8032 = vadd.f32 %v7952, %v8016
        %v8033 = vadd.f32 %v7953, %v8017
        %v8034 = vadd.f32 %v7954, %v8018
        %v8035 = vadd.f32 %v7955, %v8019
        %v8036 = vsub.f32 %v6517, 0.083333336
        %v8037 = vsub.f32 %v6519, 0.083333336
        %v8038 = vsub.f32 %v6570, 0.083333336
        %v8039 = vsub.f32 %v6572, 0.083333336
        %v8040 = vsub.f32 %v6521, 0.083333336
        %v8041 = vsub.f32 %v6523, 0.083333336
        %v8042 = vsub.f32 %v6574, 0.083333336
        %v8043 = vsub.f32 %v6576, 0.083333336
        %v8044 = vsub.f32 %v6527, 0.083333336
        %v8045 = vsub.f32 %v6529, 0.083333336
        %v8046 = vsub.f32 %v6580, 0.083333336
        %v8047 = vsub.f32 %v6582, 0.083333336
        %v8048 = vsub.f32 %v6531, 0.083333336
        %v8049 = vsub.f32 %v6533, 0.083333336
        %v8050 = vsub.f32 %v6584, 0.083333336
        %v8051 = vsub.f32 %v6586, 0.083333336
        %v8052 = vmax.f32 %v8036, 0.0
        %v8053 = vmax.f32 %v8037, 0.0
        %v8054 = vmax.f32 %v8038, 0.0
        %v8055 = vmax.f32 %v8039, 0.0
        %v8056 = vmax.f32 %v8040, 0.0
        %v8057 = vmax.f32 %v8041, 0.0
        %v8058 = vmax.f32 %v8042, 0.0
        %v8059 = vmax.f32 %v8043, 0.0
        %v8060 = vmax.f32 %v8044, 0.0
        %v8061 = vmax.f32 %v8045, 0.0
        %v8062 = vmax.f32 %v8046, 0.0
        %v8063 = vmax.f32 %v8047, 0.0
        %v8064 = vmax.f32 %v8048, 0.0
        %v8065 = vmax.f32 %v8049, 0.0
        %v8066 = vmax.f32 %v8050, 0.0
        %v8067 = vmax.f32 %v8051, 0.0
        %8068 = vset.pattern.permute.xlu0 17
        %8069 = vperm.xlu0 %8068, %v6668
        %v8070 = vpop.permute.xlu0 %8069
        %8072 = vset.pattern.permute.xlu0 17
        %8073 = vperm.xlu0 %8072, %v6669
        %v8074 = vpop.permute.xlu0 %8073
        %8076 = vset.pattern.permute.xlu0 17
        %8077 = vperm.xlu0 %8076, %v6670
        %v8078 = vpop.permute.xlu0 %8077
        %8080 = vset.pattern.permute.xlu0 17
        %8081 = vperm.xlu0 %8080, %v6671
        %v8082 = vpop.permute.xlu0 %8081
        %v8084 = vmul.f32 %v8070, %v8052
        %v8085 = vmul.f32 %v8070, %v8053
        %v8086 = vmul.f32 %v8070, %v8054
        %v8087 = vmul.f32 %v8070, %v8055
        %v8088 = vmul.f32 %v8074, %v8056
        %v8089 = vmul.f32 %v8074, %v8057
        %v8090 = vmul.f32 %v8074, %v8058
        %v8091 = vmul.f32 %v8074, %v8059
        %v8092 = vmul.f32 %v8078, %v8060
        %v8093 = vmul.f32 %v8078, %v8061
        %v8094 = vmul.f32 %v8078, %v8062
        %v8095 = vmul.f32 %v8078, %v8063
        %v8096 = vmul.f32 %v8082, %v8064
        %v8097 = vmul.f32 %v8082, %v8065
        %v8098 = vmul.f32 %v8082, %v8066
        %v8099 = vmul.f32 %v8082, %v8067
        %v8100 = vadd.f32 %v8020, %v8084
        %v8101 = vadd.f32 %v8021, %v8085
        %v8102 = vadd.f32 %v8022, %v8086
        %v8103 = vadd.f32 %v8023, %v8087
        %v8104 = vadd.f32 %v8024, %v8088
        %v8105 = vadd.f32 %v8025, %v8089
        %v8106 = vadd.f32 %v8026, %v8090
        %v8107 = vadd.f32 %v8027, %v8091
        %v8108 = vadd.f32 %v8028, %v8092
        %v8109 = vadd.f32 %v8029, %v8093
        %v8110 = vadd.f32 %v8030, %v8094
        %v8111 = vadd.f32 %v8031, %v8095
        %v8112 = vadd.f32 %v8032, %v8096
        %v8113 = vadd.f32 %v8033, %v8097
        %v8114 = vadd.f32 %v8034, %v8098
        %v8115 = vadd.f32 %v8035, %v8099
        %v8116 = vsub.f32 %v6517, 0.1
        %v8117 = vsub.f32 %v6519, 0.1
        %v8118 = vsub.f32 %v6570, 0.1
        %v8119 = vsub.f32 %v6572, 0.1
        %v8120 = vsub.f32 %v6521, 0.1
        %v8121 = vsub.f32 %v6523, 0.1
        %v8122 = vsub.f32 %v6574, 0.1
        %v8123 = vsub.f32 %v6576, 0.1
        %v8124 = vsub.f32 %v6527, 0.1
        %v8125 = vsub.f32 %v6529, 0.1
        %v8126 = vsub.f32 %v6580, 0.1
        %v8127 = vsub.f32 %v6582, 0.1
        %v8128 = vsub.f32 %v6531, 0.1
        %v8129 = vsub.f32 %v6533, 0.1
        %v8130 = vsub.f32 %v6584, 0.1
        %v8131 = vsub.f32 %v6586, 0.1
        %v8132 = vmax.f32 %v8116, 0.0
        %v8133 = vmax.f32 %v8117, 0.0
        %v8134 = vmax.f32 %v8118, 0.0
        %v8135 = vmax.f32 %v8119, 0.0
        %v8136 = vmax.f32 %v8120, 0.0
        %v8137 = vmax.f32 %v8121, 0.0
        %v8138 = vmax.f32 %v8122, 0.0
        %v8139 = vmax.f32 %v8123, 0.0
        %v8140 = vmax.f32 %v8124, 0.0
        %v8141 = vmax.f32 %v8125, 0.0
        %v8142 = vmax.f32 %v8126, 0.0
        %v8143 = vmax.f32 %v8127, 0.0
        %v8144 = vmax.f32 %v8128, 0.0
        %v8145 = vmax.f32 %v8129, 0.0
        %v8146 = vmax.f32 %v8130, 0.0
        %v8147 = vmax.f32 %v8131, 0.0
        %8148 = vset.pattern.permute.xlu0 18
        %8149 = vperm.xlu0 %8148, %v6668
        %v8150 = vpop.permute.xlu0 %8149
        %8152 = vset.pattern.permute.xlu0 18
        %8153 = vperm.xlu0 %8152, %v6669
        %v8154 = vpop.permute.xlu0 %8153
        %8156 = vset.pattern.permute.xlu0 18
        %8157 = vperm.xlu0 %8156, %v6670
        %v8158 = vpop.permute.xlu0 %8157
        %8160 = vset.pattern.permute.xlu0 18
        %8161 = vperm.xlu0 %8160, %v6671
        %v8162 = vpop.permute.xlu0 %8161
        %v8164 = vmul.f32 %v8150, %v8132
        %v8165 = vmul.f32 %v8150, %v8133
        %v8166 = vmul.f32 %v8150, %v8134
        %v8167 = vmul.f32 %v8150, %v8135
        %v8168 = vmul.f32 %v8154, %v8136
        %v8169 = vmul.f32 %v8154, %v8137
        %v8170 = vmul.f32 %v8154, %v8138
        %v8171 = vmul.f32 %v8154, %v8139
        %v8172 = vmul.f32 %v8158, %v8140
        %v8173 = vmul.f32 %v8158, %v8141
        %v8174 = vmul.f32 %v8158, %v8142
        %v8175 = vmul.f32 %v8158, %v8143
        %v8176 = vmul.f32 %v8162, %v8144
        %v8177 = vmul.f32 %v8162, %v8145
        %v8178 = vmul.f32 %v8162, %v8146
        %v8179 = vmul.f32 %v8162, %v8147
        %v8180 = vadd.f32 %v8100, %v8164
        %v8181 = vadd.f32 %v8101, %v8165
        %v8182 = vadd.f32 %v8102, %v8166
        %v8183 = vadd.f32 %v8103, %v8167
        %v8184 = vadd.f32 %v8104, %v8168
        %v8185 = vadd.f32 %v8105, %v8169
        %v8186 = vadd.f32 %v8106, %v8170
        %v8187 = vadd.f32 %v8107, %v8171
        %v8188 = vadd.f32 %v8108, %v8172
        %v8189 = vadd.f32 %v8109, %v8173
        %v8190 = vadd.f32 %v8110, %v8174
        %v8191 = vadd.f32 %v8111, %v8175
        %v8192 = vadd.f32 %v8112, %v8176
        %v8193 = vadd.f32 %v8113, %v8177
        %v8194 = vadd.f32 %v8114, %v8178
        %v8195 = vadd.f32 %v8115, %v8179
        %v8196 = vsub.f32 %v6517, 0.11666667
        %v8197 = vsub.f32 %v6519, 0.11666667
        %v8198 = vsub.f32 %v6570, 0.11666667
        %v8199 = vsub.f32 %v6572, 0.11666667
        %v8200 = vsub.f32 %v6521, 0.11666667
        %v8201 = vsub.f32 %v6523, 0.11666667
        %v8202 = vsub.f32 %v6574, 0.11666667
        %v8203 = vsub.f32 %v6576, 0.11666667
        %v8204 = vsub.f32 %v6527, 0.11666667
        %v8205 = vsub.f32 %v6529, 0.11666667
        %v8206 = vsub.f32 %v6580, 0.11666667
        %v8207 = vsub.f32 %v6582, 0.11666667
        %v8208 = vsub.f32 %v6531, 0.11666667
        %v8209 = vsub.f32 %v6533, 0.11666667
        %v8210 = vsub.f32 %v6584, 0.11666667
        %v8211 = vsub.f32 %v6586, 0.11666667
        %v8212 = vmax.f32 %v8196, 0.0
        %v8213 = vmax.f32 %v8197, 0.0
        %v8214 = vmax.f32 %v8198, 0.0
        %v8215 = vmax.f32 %v8199, 0.0
        %v8216 = vmax.f32 %v8200, 0.0
        %v8217 = vmax.f32 %v8201, 0.0
        %v8218 = vmax.f32 %v8202, 0.0
        %v8219 = vmax.f32 %v8203, 0.0
        %v8220 = vmax.f32 %v8204, 0.0
        %v8221 = vmax.f32 %v8205, 0.0
        %v8222 = vmax.f32 %v8206, 0.0
        %v8223 = vmax.f32 %v8207, 0.0
        %v8224 = vmax.f32 %v8208, 0.0
        %v8225 = vmax.f32 %v8209, 0.0
        %v8226 = vmax.f32 %v8210, 0.0
        %v8227 = vmax.f32 %v8211, 0.0
        %8228 = vset.pattern.permute.xlu0 19
        %8229 = vperm.xlu0 %8228, %v6668
        %v8230 = vpop.permute.xlu0 %8229
        %8232 = vset.pattern.permute.xlu0 19
        %8233 = vperm.xlu0 %8232, %v6669
        %v8234 = vpop.permute.xlu0 %8233
        %8236 = vset.pattern.permute.xlu0 19
        %8237 = vperm.xlu0 %8236, %v6670
        %v8238 = vpop.permute.xlu0 %8237
        %8240 = vset.pattern.permute.xlu0 19
        %8241 = vperm.xlu0 %8240, %v6671
        %v8242 = vpop.permute.xlu0 %8241
        %v8244 = vmul.f32 %v8230, %v8212
        %v8245 = vmul.f32 %v8230, %v8213
        %v8246 = vmul.f32 %v8230, %v8214
        %v8247 = vmul.f32 %v8230, %v8215
        %v8248 = vmul.f32 %v8234, %v8216
        %v8249 = vmul.f32 %v8234, %v8217
        %v8250 = vmul.f32 %v8234, %v8218
        %v8251 = vmul.f32 %v8234, %v8219
        %v8252 = vmul.f32 %v8238, %v8220
        %v8253 = vmul.f32 %v8238, %v8221
        %v8254 = vmul.f32 %v8238, %v8222
        %v8255 = vmul.f32 %v8238, %v8223
        %v8256 = vmul.f32 %v8242, %v8224
        %v8257 = vmul.f32 %v8242, %v8225
        %v8258 = vmul.f32 %v8242, %v8226
        %v8259 = vmul.f32 %v8242, %v8227
        %v8260 = vadd.f32 %v8180, %v8244
        %v8261 = vadd.f32 %v8181, %v8245
        %v8262 = vadd.f32 %v8182, %v8246
        %v8263 = vadd.f32 %v8183, %v8247
        %v8264 = vadd.f32 %v8184, %v8248
        %v8265 = vadd.f32 %v8185, %v8249
        %v8266 = vadd.f32 %v8186, %v8250
        %v8267 = vadd.f32 %v8187, %v8251
        %v8268 = vadd.f32 %v8188, %v8252
        %v8269 = vadd.f32 %v8189, %v8253
        %v8270 = vadd.f32 %v8190, %v8254
        %v8271 = vadd.f32 %v8191, %v8255
        %v8272 = vadd.f32 %v8192, %v8256
        %v8273 = vadd.f32 %v8193, %v8257
        %v8274 = vadd.f32 %v8194, %v8258
        %v8275 = vadd.f32 %v8195, %v8259
        %v8276 = vsub.f32 %v6517, 0.13333334
        %v8277 = vsub.f32 %v6519, 0.13333334
        %v8278 = vsub.f32 %v6570, 0.13333334
        %v8279 = vsub.f32 %v6572, 0.13333334
        %v8280 = vsub.f32 %v6521, 0.13333334
        %v8281 = vsub.f32 %v6523, 0.13333334
        %v8282 = vsub.f32 %v6574, 0.13333334
        %v8283 = vsub.f32 %v6576, 0.13333334
        %v8284 = vsub.f32 %v6527, 0.13333334
        %v8285 = vsub.f32 %v6529, 0.13333334
        %v8286 = vsub.f32 %v6580, 0.13333334
        %v8287 = vsub.f32 %v6582, 0.13333334
        %v8288 = vsub.f32 %v6531, 0.13333334
        %v8289 = vsub.f32 %v6533, 0.13333334
        %v8290 = vsub.f32 %v6584, 0.13333334
        %v8291 = vsub.f32 %v6586, 0.13333334
        %v8292 = vmax.f32 %v8276, 0.0
        %v8293 = vmax.f32 %v8277, 0.0
        %v8294 = vmax.f32 %v8278, 0.0
        %v8295 = vmax.f32 %v8279, 0.0
        %v8296 = vmax.f32 %v8280, 0.0
        %v8297 = vmax.f32 %v8281, 0.0
        %v8298 = vmax.f32 %v8282, 0.0
        %v8299 = vmax.f32 %v8283, 0.0
        %v8300 = vmax.f32 %v8284, 0.0
        %v8301 = vmax.f32 %v8285, 0.0
        %v8302 = vmax.f32 %v8286, 0.0
        %v8303 = vmax.f32 %v8287, 0.0
        %v8304 = vmax.f32 %v8288, 0.0
        %v8305 = vmax.f32 %v8289, 0.0
        %v8306 = vmax.f32 %v8290, 0.0
        %v8307 = vmax.f32 %v8291, 0.0
        %8308 = vset.pattern.permute.xlu0 20
        %8309 = vperm.xlu0 %8308, %v6668
        %v8310 = vpop.permute.xlu0 %8309
        %8312 = vset.pattern.permute.xlu0 20
        %8313 = vperm.xlu0 %8312, %v6669
        %v8314 = vpop.permute.xlu0 %8313
        %8316 = vset.pattern.permute.xlu0 20
        %8317 = vperm.xlu0 %8316, %v6670
        %v8318 = vpop.permute.xlu0 %8317
        %8320 = vset.pattern.permute.xlu0 20
        %8321 = vperm.xlu0 %8320, %v6671
        %v8322 = vpop.permute.xlu0 %8321
        %v8324 = vmul.f32 %v8310, %v8292
        %v8325 = vmul.f32 %v8310, %v8293
        %v8326 = vmul.f32 %v8310, %v8294
        %v8327 = vmul.f32 %v8310, %v8295
        %v8328 = vmul.f32 %v8314, %v8296
        %v8329 = vmul.f32 %v8314, %v8297
        %v8330 = vmul.f32 %v8314, %v8298
        %v8331 = vmul.f32 %v8314, %v8299
        %v8332 = vmul.f32 %v8318, %v8300
        %v8333 = vmul.f32 %v8318, %v8301
        %v8334 = vmul.f32 %v8318, %v8302
        %v8335 = vmul.f32 %v8318, %v8303
        %v8336 = vmul.f32 %v8322, %v8304
        %v8337 = vmul.f32 %v8322, %v8305
        %v8338 = vmul.f32 %v8322, %v8306
        %v8339 = vmul.f32 %v8322, %v8307
        %v8340 = vadd.f32 %v8260, %v8324
        %v8341 = vadd.f32 %v8261, %v8325
        %v8342 = vadd.f32 %v8262, %v8326
        %v8343 = vadd.f32 %v8263, %v8327
        %v8344 = vadd.f32 %v8264, %v8328
        %v8345 = vadd.f32 %v8265, %v8329
        %v8346 = vadd.f32 %v8266, %v8330
        %v8347 = vadd.f32 %v8267, %v8331
        %v8348 = vadd.f32 %v8268, %v8332
        %v8349 = vadd.f32 %v8269, %v8333
        %v8350 = vadd.f32 %v8270, %v8334
        %v8351 = vadd.f32 %v8271, %v8335
        %v8352 = vadd.f32 %v8272, %v8336
        %v8353 = vadd.f32 %v8273, %v8337
        %v8354 = vadd.f32 %v8274, %v8338
        %v8355 = vadd.f32 %v8275, %v8339
        %v8356 = vsub.f32 %v6517, 0.15
        %v8357 = vsub.f32 %v6519, 0.15
        %v8358 = vsub.f32 %v6570, 0.15
        %v8359 = vsub.f32 %v6572, 0.15
        %v8360 = vsub.f32 %v6521, 0.15
        %v8361 = vsub.f32 %v6523, 0.15
        %v8362 = vsub.f32 %v6574, 0.15
        %v8363 = vsub.f32 %v6576, 0.15
        %v8364 = vsub.f32 %v6527, 0.15
        %v8365 = vsub.f32 %v6529, 0.15
        %v8366 = vsub.f32 %v6580, 0.15
        %v8367 = vsub.f32 %v6582, 0.15
        %v8368 = vsub.f32 %v6531, 0.15
        %v8369 = vsub.f32 %v6533, 0.15
        %v8370 = vsub.f32 %v6584, 0.15
        %v8371 = vsub.f32 %v6586, 0.15
        %v8372 = vmax.f32 %v8356, 0.0
        %v8373 = vmax.f32 %v8357, 0.0
        %v8374 = vmax.f32 %v8358, 0.0
        %v8375 = vmax.f32 %v8359, 0.0
        %v8376 = vmax.f32 %v8360, 0.0
        %v8377 = vmax.f32 %v8361, 0.0
        %v8378 = vmax.f32 %v8362, 0.0
        %v8379 = vmax.f32 %v8363, 0.0
        %v8380 = vmax.f32 %v8364, 0.0
        %v8381 = vmax.f32 %v8365, 0.0
        %v8382 = vmax.f32 %v8366, 0.0
        %v8383 = vmax.f32 %v8367, 0.0
        %v8384 = vmax.f32 %v8368, 0.0
        %v8385 = vmax.f32 %v8369, 0.0
        %v8386 = vmax.f32 %v8370, 0.0
        %v8387 = vmax.f32 %v8371, 0.0
        %8388 = vset.pattern.permute.xlu0 21
        %8389 = vperm.xlu0 %8388, %v6668
        %v8390 = vpop.permute.xlu0 %8389
        %8392 = vset.pattern.permute.xlu0 21
        %8393 = vperm.xlu0 %8392, %v6669
        %v8394 = vpop.permute.xlu0 %8393
        %8396 = vset.pattern.permute.xlu0 21
        %8397 = vperm.xlu0 %8396, %v6670
        %v8398 = vpop.permute.xlu0 %8397
        %8400 = vset.pattern.permute.xlu0 21
        %8401 = vperm.xlu0 %8400, %v6671
        %v8402 = vpop.permute.xlu0 %8401
        %v8404 = vmul.f32 %v8390, %v8372
        %v8405 = vmul.f32 %v8390, %v8373
        %v8406 = vmul.f32 %v8390, %v8374
        %v8407 = vmul.f32 %v8390, %v8375
        %v8408 = vmul.f32 %v8394, %v8376
        %v8409 = vmul.f32 %v8394, %v8377
        %v8410 = vmul.f32 %v8394, %v8378
        %v8411 = vmul.f32 %v8394, %v8379
        %v8412 = vmul.f32 %v8398, %v8380
        %v8413 = vmul.f32 %v8398, %v8381
        %v8414 = vmul.f32 %v8398, %v8382
        %v8415 = vmul.f32 %v8398, %v8383
        %v8416 = vmul.f32 %v8402, %v8384
        %v8417 = vmul.f32 %v8402, %v8385
        %v8418 = vmul.f32 %v8402, %v8386
        %v8419 = vmul.f32 %v8402, %v8387
        %v8420 = vadd.f32 %v8340, %v8404
        %v8421 = vadd.f32 %v8341, %v8405
        %v8422 = vadd.f32 %v8342, %v8406
        %v8423 = vadd.f32 %v8343, %v8407
        %v8424 = vadd.f32 %v8344, %v8408
        %v8425 = vadd.f32 %v8345, %v8409
        %v8426 = vadd.f32 %v8346, %v8410
        %v8427 = vadd.f32 %v8347, %v8411
        %v8428 = vadd.f32 %v8348, %v8412
        %v8429 = vadd.f32 %v8349, %v8413
        %v8430 = vadd.f32 %v8350, %v8414
        %v8431 = vadd.f32 %v8351, %v8415
        %v8432 = vadd.f32 %v8352, %v8416
        %v8433 = vadd.f32 %v8353, %v8417
        %v8434 = vadd.f32 %v8354, %v8418
        %v8435 = vadd.f32 %v8355, %v8419
        %v8436 = vsub.f32 %v6517, 0.16666667
        %v8437 = vsub.f32 %v6519, 0.16666667
        %v8438 = vsub.f32 %v6570, 0.16666667
        %v8439 = vsub.f32 %v6572, 0.16666667
        %v8440 = vsub.f32 %v6521, 0.16666667
        %v8441 = vsub.f32 %v6523, 0.16666667
        %v8442 = vsub.f32 %v6574, 0.16666667
        %v8443 = vsub.f32 %v6576, 0.16666667
        %v8444 = vsub.f32 %v6527, 0.16666667
        %v8445 = vsub.f32 %v6529, 0.16666667
        %v8446 = vsub.f32 %v6580, 0.16666667
        %v8447 = vsub.f32 %v6582, 0.16666667
        %v8448 = vsub.f32 %v6531, 0.16666667
        %v8449 = vsub.f32 %v6533, 0.16666667
        %v8450 = vsub.f32 %v6584, 0.16666667
        %v8451 = vsub.f32 %v6586, 0.16666667
        %v8452 = vmax.f32 %v8436, 0.0
        %v8453 = vmax.f32 %v8437, 0.0
        %v8454 = vmax.f32 %v8438, 0.0
        %v8455 = vmax.f32 %v8439, 0.0
        %v8456 = vmax.f32 %v8440, 0.0
        %v8457 = vmax.f32 %v8441, 0.0
        %v8458 = vmax.f32 %v8442, 0.0
        %v8459 = vmax.f32 %v8443, 0.0
        %v8460 = vmax.f32 %v8444, 0.0
        %v8461 = vmax.f32 %v8445, 0.0
        %v8462 = vmax.f32 %v8446, 0.0
        %v8463 = vmax.f32 %v8447, 0.0
        %v8464 = vmax.f32 %v8448, 0.0
        %v8465 = vmax.f32 %v8449, 0.0
        %v8466 = vmax.f32 %v8450, 0.0
        %v8467 = vmax.f32 %v8451, 0.0
        %8468 = vset.pattern.permute.xlu0 22
        %8469 = vperm.xlu0 %8468, %v6668
        %v8470 = vpop.permute.xlu0 %8469
        %8472 = vset.pattern.permute.xlu0 22
        %8473 = vperm.xlu0 %8472, %v6669
        %v8474 = vpop.permute.xlu0 %8473
        %8476 = vset.pattern.permute.xlu0 22
        %8477 = vperm.xlu0 %8476, %v6670
        %v8478 = vpop.permute.xlu0 %8477
        %8480 = vset.pattern.permute.xlu0 22
        %8481 = vperm.xlu0 %8480, %v6671
        %v8482 = vpop.permute.xlu0 %8481
        %v8484 = vmul.f32 %v8470, %v8452
        %v8485 = vmul.f32 %v8470, %v8453
        %v8486 = vmul.f32 %v8470, %v8454
        %v8487 = vmul.f32 %v8470, %v8455
        %v8488 = vmul.f32 %v8474, %v8456
        %v8489 = vmul.f32 %v8474, %v8457
        %v8490 = vmul.f32 %v8474, %v8458
        %v8491 = vmul.f32 %v8474, %v8459
        %v8492 = vmul.f32 %v8478, %v8460
        %v8493 = vmul.f32 %v8478, %v8461
        %v8494 = vmul.f32 %v8478, %v8462
        %v8495 = vmul.f32 %v8478, %v8463
        %v8496 = vmul.f32 %v8482, %v8464
        %v8497 = vmul.f32 %v8482, %v8465
        %v8498 = vmul.f32 %v8482, %v8466
        %v8499 = vmul.f32 %v8482, %v8467
        %v8500 = vadd.f32 %v8420, %v8484
        %v8501 = vadd.f32 %v8421, %v8485
        %v8502 = vadd.f32 %v8422, %v8486
        %v8503 = vadd.f32 %v8423, %v8487
        %v8504 = vadd.f32 %v8424, %v8488
        %v8505 = vadd.f32 %v8425, %v8489
        %v8506 = vadd.f32 %v8426, %v8490
        %v8507 = vadd.f32 %v8427, %v8491
        %v8508 = vadd.f32 %v8428, %v8492
        %v8509 = vadd.f32 %v8429, %v8493
        %v8510 = vadd.f32 %v8430, %v8494
        %v8511 = vadd.f32 %v8431, %v8495
        %v8512 = vadd.f32 %v8432, %v8496
        %v8513 = vadd.f32 %v8433, %v8497
        %v8514 = vadd.f32 %v8434, %v8498
        %v8515 = vadd.f32 %v8435, %v8499
        %v8516 = vsub.f32 %v6517, 0.18333334
        %v8517 = vsub.f32 %v6519, 0.18333334
        %v8518 = vsub.f32 %v6570, 0.18333334
        %v8519 = vsub.f32 %v6572, 0.18333334
        %v8520 = vsub.f32 %v6521, 0.18333334
        %v8521 = vsub.f32 %v6523, 0.18333334
        %v8522 = vsub.f32 %v6574, 0.18333334
        %v8523 = vsub.f32 %v6576, 0.18333334
        %v8524 = vsub.f32 %v6527, 0.18333334
        %v8525 = vsub.f32 %v6529, 0.18333334
        %v8526 = vsub.f32 %v6580, 0.18333334
        %v8527 = vsub.f32 %v6582, 0.18333334
        %v8528 = vsub.f32 %v6531, 0.18333334
        %v8529 = vsub.f32 %v6533, 0.18333334
        %v8530 = vsub.f32 %v6584, 0.18333334
        %v8531 = vsub.f32 %v6586, 0.18333334
        %v8532 = vmax.f32 %v8516, 0.0
        %v8533 = vmax.f32 %v8517, 0.0
        %v8534 = vmax.f32 %v8518, 0.0
        %v8535 = vmax.f32 %v8519, 0.0
        %v8536 = vmax.f32 %v8520, 0.0
        %v8537 = vmax.f32 %v8521, 0.0
        %v8538 = vmax.f32 %v8522, 0.0
        %v8539 = vmax.f32 %v8523, 0.0
        %v8540 = vmax.f32 %v8524, 0.0
        %v8541 = vmax.f32 %v8525, 0.0
        %v8542 = vmax.f32 %v8526, 0.0
        %v8543 = vmax.f32 %v8527, 0.0
        %v8544 = vmax.f32 %v8528, 0.0
        %v8545 = vmax.f32 %v8529, 0.0
        %v8546 = vmax.f32 %v8530, 0.0
        %v8547 = vmax.f32 %v8531, 0.0
        %8548 = vset.pattern.permute.xlu0 23
        %8549 = vperm.xlu0 %8548, %v6668
        %v8550 = vpop.permute.xlu0 %8549
        %8552 = vset.pattern.permute.xlu0 23
        %8553 = vperm.xlu0 %8552, %v6669
        %v8554 = vpop.permute.xlu0 %8553
        %8556 = vset.pattern.permute.xlu0 23
        %8557 = vperm.xlu0 %8556, %v6670
        %v8558 = vpop.permute.xlu0 %8557
        %8560 = vset.pattern.permute.xlu0 23
        %8561 = vperm.xlu0 %8560, %v6671
        %v8562 = vpop.permute.xlu0 %8561
        %v8564 = vmul.f32 %v8550, %v8532
        %v8565 = vmul.f32 %v8550, %v8533
        %v8566 = vmul.f32 %v8550, %v8534
        %v8567 = vmul.f32 %v8550, %v8535
        %v8568 = vmul.f32 %v8554, %v8536
        %v8569 = vmul.f32 %v8554, %v8537
        %v8570 = vmul.f32 %v8554, %v8538
        %v8571 = vmul.f32 %v8554, %v8539
        %v8572 = vmul.f32 %v8558, %v8540
        %v8573 = vmul.f32 %v8558, %v8541
        %v8574 = vmul.f32 %v8558, %v8542
        %v8575 = vmul.f32 %v8558, %v8543
        %v8576 = vmul.f32 %v8562, %v8544
        %v8577 = vmul.f32 %v8562, %v8545
        %v8578 = vmul.f32 %v8562, %v8546
        %v8579 = vmul.f32 %v8562, %v8547
        %v8580 = vadd.f32 %v8500, %v8564
        %v8581 = vadd.f32 %v8501, %v8565
        %v8582 = vadd.f32 %v8502, %v8566
        %v8583 = vadd.f32 %v8503, %v8567
        %v8584 = vadd.f32 %v8504, %v8568
        %v8585 = vadd.f32 %v8505, %v8569
        %v8586 = vadd.f32 %v8506, %v8570
        %v8587 = vadd.f32 %v8507, %v8571
        %v8588 = vadd.f32 %v8508, %v8572
        %v8589 = vadd.f32 %v8509, %v8573
        %v8590 = vadd.f32 %v8510, %v8574
        %v8591 = vadd.f32 %v8511, %v8575
        %v8592 = vadd.f32 %v8512, %v8576
        %v8593 = vadd.f32 %v8513, %v8577
        %v8594 = vadd.f32 %v8514, %v8578
        %v8595 = vadd.f32 %v8515, %v8579
        %v8596 = vsub.f32 %v6517, 0.2
        %v8597 = vsub.f32 %v6519, 0.2
        %v8598 = vsub.f32 %v6570, 0.2
        %v8599 = vsub.f32 %v6572, 0.2
        %v8600 = vsub.f32 %v6521, 0.2
        %v8601 = vsub.f32 %v6523, 0.2
        %v8602 = vsub.f32 %v6574, 0.2
        %v8603 = vsub.f32 %v6576, 0.2
        %v8604 = vsub.f32 %v6527, 0.2
        %v8605 = vsub.f32 %v6529, 0.2
        %v8606 = vsub.f32 %v6580, 0.2
        %v8607 = vsub.f32 %v6582, 0.2
        %v8608 = vsub.f32 %v6531, 0.2
        %v8609 = vsub.f32 %v6533, 0.2
        %v8610 = vsub.f32 %v6584, 0.2
        %v8611 = vsub.f32 %v6586, 0.2
        %v8612 = vmax.f32 %v8596, 0.0
        %v8613 = vmax.f32 %v8597, 0.0
        %v8614 = vmax.f32 %v8598, 0.0
        %v8615 = vmax.f32 %v8599, 0.0
        %v8616 = vmax.f32 %v8600, 0.0
        %v8617 = vmax.f32 %v8601, 0.0
        %v8618 = vmax.f32 %v8602, 0.0
        %v8619 = vmax.f32 %v8603, 0.0
        %v8620 = vmax.f32 %v8604, 0.0
        %v8621 = vmax.f32 %v8605, 0.0
        %v8622 = vmax.f32 %v8606, 0.0
        %v8623 = vmax.f32 %v8607, 0.0
        %v8624 = vmax.f32 %v8608, 0.0
        %v8625 = vmax.f32 %v8609, 0.0
        %v8626 = vmax.f32 %v8610, 0.0
        %v8627 = vmax.f32 %v8611, 0.0
        %8628 = vset.pattern.permute.xlu0 24
        %8629 = vperm.xlu0 %8628, %v6668
        %v8630 = vpop.permute.xlu0 %8629
        %8632 = vset.pattern.permute.xlu0 24
        %8633 = vperm.xlu0 %8632, %v6669
        %v8634 = vpop.permute.xlu0 %8633
        %8636 = vset.pattern.permute.xlu0 24
        %8637 = vperm.xlu0 %8636, %v6670
        %v8638 = vpop.permute.xlu0 %8637
        %8640 = vset.pattern.permute.xlu0 24
        %8641 = vperm.xlu0 %8640, %v6671
        %v8642 = vpop.permute.xlu0 %8641
        %v8644 = vmul.f32 %v8630, %v8612
        %v8645 = vmul.f32 %v8630, %v8613
        %v8646 = vmul.f32 %v8630, %v8614
        %v8647 = vmul.f32 %v8630, %v8615
        %v8648 = vmul.f32 %v8634, %v8616
        %v8649 = vmul.f32 %v8634, %v8617
        %v8650 = vmul.f32 %v8634, %v8618
        %v8651 = vmul.f32 %v8634, %v8619
        %v8652 = vmul.f32 %v8638, %v8620
        %v8653 = vmul.f32 %v8638, %v8621
        %v8654 = vmul.f32 %v8638, %v8622
        %v8655 = vmul.f32 %v8638, %v8623
        %v8656 = vmul.f32 %v8642, %v8624
        %v8657 = vmul.f32 %v8642, %v8625
        %v8658 = vmul.f32 %v8642, %v8626
        %v8659 = vmul.f32 %v8642, %v8627
        %v8660 = vadd.f32 %v8580, %v8644
        %v8661 = vadd.f32 %v8581, %v8645
        %v8662 = vadd.f32 %v8582, %v8646
        %v8663 = vadd.f32 %v8583, %v8647
        %v8664 = vadd.f32 %v8584, %v8648
        %v8665 = vadd.f32 %v8585, %v8649
        %v8666 = vadd.f32 %v8586, %v8650
        %v8667 = vadd.f32 %v8587, %v8651
        %v8668 = vadd.f32 %v8588, %v8652
        %v8669 = vadd.f32 %v8589, %v8653
        %v8670 = vadd.f32 %v8590, %v8654
        %v8671 = vadd.f32 %v8591, %v8655
        %v8672 = vadd.f32 %v8592, %v8656
        %v8673 = vadd.f32 %v8593, %v8657
        %v8674 = vadd.f32 %v8594, %v8658
        %v8675 = vadd.f32 %v8595, %v8659
        %8684 = vrot.lane.b32.xlu0 %v8660, 4
        %v8685 = vpop.permute.xlu0 %8684
        %8686 = vrot.lane.b32.xlu0 %v8661, 4
        %v8687 = vpop.permute.xlu0 %8686
        %8688 = vrot.lane.b32.xlu0 %v8664, 4
        %v8689 = vpop.permute.xlu0 %8688
        %8690 = vrot.lane.b32.xlu0 %v8665, 4
        %v8691 = vpop.permute.xlu0 %8690
        %8692 = vrot.lane.b32.xlu0 %v8668, 4
        %v8693 = vpop.permute.xlu0 %8692
        %8694 = vrot.lane.b32.xlu0 %v8669, 4
        %v8695 = vpop.permute.xlu0 %8694
        %8696 = vrot.lane.b32.xlu0 %v8672, 4
        %v8697 = vpop.permute.xlu0 %8696
        %8698 = vrot.lane.b32.xlu0 %v8673, 4
        %v8699 = vpop.permute.xlu0 %8698
        %v8700 = vsel %vm745, %v8685, %v8687
        %v8701 = vsel %vm745, %v8689, %v8691
        %v8702 = vsel %vm745, %v8693, %v8695
        %v8703 = vsel %vm745, %v8697, %v8699
        %vm8716 = vcmask 1047584
        %8717 = vst.msk [vmem:[#allocation6] sm:$0xff] %vm8716, %v8685
        %8718 = vst [vmem:[#allocation6 + $0x8] sm:$0xff] %v8700
        %8719 = vst.msk [vmem:[#allocation6 + $0x10] sm:$0xff] %vm745, %v8687
        %8720 = vst.msk [vmem:[#allocation6 + $0x18] sm:$0xff] %vm8716, %v8689
        %8721 = vst [vmem:[#allocation6 + $0x20] sm:$0xff] %v8701
        %8722 = vst.msk [vmem:[#allocation6 + $0x28] sm:$0xff] %vm745, %v8691
        %8723 = vst.msk [vmem:[#allocation6 + $0x30] sm:$0xff] %vm8716, %v8693
        %8724 = vst [vmem:[#allocation6 + $0x38] sm:$0xff] %v8702
        %8725 = vst.msk [vmem:[#allocation6 + $0x40] sm:$0xff] %vm745, %v8695
        %8726 = vst.msk [vmem:[#allocation6 + $0x48] sm:$0xff] %vm8716, %v8697
        %8727 = vst [vmem:[#allocation6 + $0x50] sm:$0xff] %v8703
        %8728 = vst.msk [vmem:[#allocation6 + $0x58] sm:$0xff] %vm745, %v8699
        %v8729 = vld [vmem:[%s2] sm:$0xff]
        %v8730 = vld [vmem:[%s2 + $0x8] sm:$0x1]
        %v8731 = vld [vmem:[#allocation6] sm:$0xff]
        %v8732 = vld [vmem:[#allocation6 + $0x8] sm:$0xff]
        %v8733 = vld [vmem:[#allocation6 + $0x10] sm:$0xff]
        %v8734 = vld [vmem:[#allocation6 + $0x18] sm:$0xff]
        %v8735 = vld [vmem:[#allocation6 + $0x20] sm:$0xff]
        %v8736 = vld [vmem:[#allocation6 + $0x28] sm:$0xff]
        %v8737 = vld [vmem:[#allocation6 + $0x30] sm:$0xff]
        %v8738 = vld [vmem:[#allocation6 + $0x38] sm:$0xff]
        %v8739 = vld [vmem:[#allocation6 + $0x40] sm:$0xff]
        %v8740 = vld [vmem:[#allocation6 + $0x48] sm:$0xff]
        %v8741 = vld [vmem:[#allocation6 + $0x50] sm:$0xff]
        %v8742 = vld [vmem:[#allocation6 + $0x58] sm:$0xff]
        %v8744 = vsel %vm5941, %v8729, 0
        %v8747 = vsel %vm5941, %v8730, 0
        %8749 = vmatprep.subr.mxu0 %v8732
        %8750 = vmatpush1.msra.mxu0 %v8731
        %8751 = vmatprep.subr.mxu0 %v8735
        %8752 = vmatpush1.msra.mxu0 %v8734
        %8753 = vmatprep.subr.mxu0 %v8738
        %8754 = vmatpush1.msra.mxu0 %v8737
        %8755 = vmatprep.subr.mxu0 %v8741
        %8756 = vmatpush1.msra.mxu0 %v8740
        %8757 = vmatprep.subr.mxu0 0.0
        %8758 = vmatpush1.msra.mxu0 0.0
        %8759 = vmatprep.subr.mxu0 0.0
        %8760 = vmatpush1.msra.mxu0 0.0
        %8761 = vmatprep.subr.mxu0 0.0
        %8762 = vmatpush1.msra.mxu0 0.0
        %8763 = vmatprep.subr.mxu0 0.0
        %8764 = vmatpush1.msra.mxu0 0.0
        %8765 = vmatprep.subr.mxu0 0.0
        %8766 = vmatpush1.msra.mxu0 0.0
        %8767 = vmatprep.subr.mxu0 0.0
        %8768 = vmatpush1.msra.mxu0 0.0
        %8769 = vmatprep.subr.mxu0 0.0
        %8770 = vmatpush1.msra.mxu0 0.0
        %8771 = vmatprep.subr.mxu0 0.0
        %8772 = vmatpush1.msra.mxu0 0.0
        %8773 = vmatprep.subr.mxu0 0.0
        %8774 = vmatpush1.msra.mxu0 0.0
        %8775 = vmatprep.subr.mxu0 0.0
        %8776 = vmatpush1.msra.mxu0 0.0
        %8777 = vmatprep.subr.mxu0 0.0
        %8778 = vmatpush1.msra.mxu0 0.0
        %8779 = vmatprep.subr.mxu0 0.0
        %8780 = vmatpush1.msra.mxu0 0.0
        %8781 = vmatprep.subr.mxu0 0.0
        %8782 = vmatpush1.msra.mxu0 0.0
        %8783 = vmatprep.subr.mxu0 0.0
        %8784 = vmatpush1.msra.mxu0 0.0
        %8785 = vmatprep.subr.mxu0 0.0
        %8786 = vmatpush1.msra.mxu0 0.0
        %8787 = vmatprep.subr.mxu0 0.0
        %8788 = vmatpush1.msra.mxu0 0.0
        %8789 = vmatprep.subr.mxu0 0.0
        %8790 = vmatpush1.msra.mxu0 0.0
        %8791 = vmatprep.subr.mxu0 0.0
        %8792 = vmatpush1.msra.mxu0 0.0
        %8793 = vmatprep.subr.mxu0 0.0
        %8794 = vmatpush1.msra.mxu0 0.0
        %8795 = vmatprep.subr.mxu0 0.0
        %8796 = vmatpush1.msra.mxu0 0.0
        %8797 = vmatprep.subr.mxu0 0.0
        %8798 = vmatpush1.msra.mxu0 0.0
        %8799 = vmatprep.subr.mxu0 0.0
        %8800 = vmatpush1.msra.mxu0 0.0
        %8801 = vmatprep.subr.mxu0 0.0
        %8802 = vmatpush1.msra.mxu0 0.0
        %8803 = vmatprep.subr.mxu0 0.0
        %8804 = vmatpush1.msra.mxu0 0.0
        %8805 = vmatprep.subr.mxu0 0.0
        %8806 = vmatpush1.msra.mxu0 0.0
        %8807 = vmatprep.subr.mxu0 0.0
        %8808 = vmatpush1.msra.mxu0 0.0
        %8809 = vmatprep.subr.mxu0 0.0
        %8810 = vmatpush1.msra.mxu0 0.0
        %8811 = vmatprep.subr.mxu0 0.0
        %8812 = vmatpush1.msra.mxu0 0.0
        %8813 = vmatprep.mubr.f32.mxu0 0.0
        %8814 = vmatmul.mubr.f32.gmra.mrb[0].mxu0 %v8744
        %v8815 = vpop.f32.mrb[0].mxu0
        %v8816 = vadd.f32 0.0, %v8815
        %v8817 = vpop.f32.mrb[0].mxu0
        %v8818 = vadd.f32 0.0, %v8817
        %8819 = vmatprep.mubr.f32.mxu0 0.0
        %8820 = vmatmul.mubr.f32.gmra.mrb[0].mxu0 %v8747
        %v8821 = vpop.f32.mrb[0].mxu0
        %v8822 = vadd.f32 0.0, %v8821
        %v8823 = vpop.f32.mrb[0].mxu0
        %v8824 = vadd.f32 0.0, %v8823
        %8825 = vdwg.mxu0
        %8826 = vmatprep.subr.mxu0 0.0
        %8827 = vmatpush1.msra.mxu0 %v8733
        %8828 = vmatprep.subr.mxu0 0.0
        %8829 = vmatpush1.msra.mxu0 %v8736
        %8830 = vmatprep.subr.mxu0 0.0
        %8831 = vmatpush1.msra.mxu0 %v8739
        %8832 = vmatprep.subr.mxu0 0.0
        %8833 = vmatpush1.msra.mxu0 %v8742
        %8834 = vmatprep.subr.mxu0 0.0
        %8835 = vmatpush1.msra.mxu0 0.0
        %8836 = vmatprep.subr.mxu0 0.0
        %8837 = vmatpush1.msra.mxu0 0.0
        %8838 = vmatprep.subr.mxu0 0.0
        %8839 = vmatpush1.msra.mxu0 0.0
        %8840 = vmatprep.subr.mxu0 0.0
        %8841 = vmatpush1.msra.mxu0 0.0
        %8842 = vmatprep.subr.mxu0 0.0
        %8843 = vmatpush1.msra.mxu0 0.0
        %8844 = vmatprep.subr.mxu0 0.0
        %8845 = vmatpush1.msra.mxu0 0.0
        %8846 = vmatprep.subr.mxu0 0.0
        %8847 = vmatpush1.msra.mxu0 0.0
        %8848 = vmatprep.subr.mxu0 0.0
        %8849 = vmatpush1.msra.mxu0 0.0
        %8850 = vmatprep.subr.mxu0 0.0
        %8851 = vmatpush1.msra.mxu0 0.0
        %8852 = vmatprep.subr.mxu0 0.0
        %8853 = vmatpush1.msra.mxu0 0.0
        %8854 = vmatprep.subr.mxu0 0.0
        %8855 = vmatpush1.msra.mxu0 0.0
        %8856 = vmatprep.subr.mxu0 0.0
        %8857 = vmatpush1.msra.mxu0 0.0
        %8858 = vmatprep.subr.mxu0 0.0
        %8859 = vmatpush1.msra.mxu0 0.0
        %8860 = vmatprep.subr.mxu0 0.0
        %8861 = vmatpush1.msra.mxu0 0.0
        %8862 = vmatprep.subr.mxu0 0.0
        %8863 = vmatpush1.msra.mxu0 0.0
        %8864 = vmatprep.subr.mxu0 0.0
        %8865 = vmatpush1.msra.mxu0 0.0
        %8866 = vmatprep.subr.mxu0 0.0
        %8867 = vmatpush1.msra.mxu0 0.0
        %8868 = vmatprep.subr.mxu0 0.0
        %8869 = vmatpush1.msra.mxu0 0.0
        %8870 = vmatprep.subr.mxu0 0.0
        %8871 = vmatpush1.msra.mxu0 0.0
        %8872 = vmatprep.subr.mxu0 0.0
        %8873 = vmatpush1.msra.mxu0 0.0
        %8874 = vmatprep.subr.mxu0 0.0
        %8875 = vmatpush1.msra.mxu0 0.0
        %8876 = vmatprep.subr.mxu0 0.0
        %8877 = vmatpush1.msra.mxu0 0.0
        %8878 = vmatprep.subr.mxu0 0.0
        %8879 = vmatpush1.msra.mxu0 0.0
        %8880 = vmatprep.subr.mxu0 0.0
        %8881 = vmatpush1.msra.mxu0 0.0
        %8882 = vmatprep.subr.mxu0 0.0
        %8883 = vmatpush1.msra.mxu0 0.0
        %8884 = vmatprep.subr.mxu0 0.0
        %8885 = vmatpush1.msra.mxu0 0.0
        %8886 = vmatprep.subr.mxu0 0.0
        %8887 = vmatpush1.msra.mxu0 0.0
        %8888 = vmatprep.subr.mxu0 0.0
        %8889 = vmatpush1.msra.mxu0 0.0
        %8890 = vmatprep.mubr.f32.mxu0 0.0
        %8891 = vmatmul.mubr.f32.gmra.mrb[0].mxu0 %v8744
        %v8892 = vpop.f32.mrb[0].mxu0
        %v8893 = vadd.f32 0.0, %v8892
        %v8894 = vpop.f32.mrb[0].mxu0
        %8895 = vmatprep.mubr.f32.mxu0 0.0
        %8896 = vmatmul.mubr.f32.gmra.mrb[0].mxu0 %v8747
        %v8897 = vpop.f32.mrb[0].mxu0
        %v8898 = vadd.f32 0.0, %v8897
        %v8899 = vpop.f32.mrb[0].mxu0
        %8900 = vdwg.mxu0
        %8901 = vst [vmem:[#allocation7] sm:$0xff] %v8816
        %8902 = vst [vmem:[#allocation7 + $0x8] sm:$0xff] %v8818
        %8903 = vst.msk [vmem:[#allocation7 + $0x10] sm:$0xff] %vm759, %v8893
        %8904 = vst [vmem:[#allocation7 + $0x18] sm:$0x1] %v8822
        %8905 = vst [vmem:[#allocation7 + $0x20] sm:$0x1] %v8824
        %vm8906 = vcmask 57344
        %8907 = vst.msk [vmem:[#allocation7 + $0x28] sm:$0x1] %vm8906, %v8898
        %v8908 = vld [vmem:[#allocation7] ss:$8 sm:$0x7]
        %v8909 = vadd.f32 %v8908, 0.0
        %s8910 = scalar_lea.vmem [#allocation7], 1
        %v8911 = vld [vmem:[%s8910] ss:$8 sm:$0x7]
        %8913 = vrot.lane.b32.xlu0 %v8911, 1
        %v8914 = vpop.permute.xlu0 %8913
        %v8915 = vrot.slane %v8914, 7
        %v8916 = vsel %vm1133, %v8915, %v8914
        %v8918 = vadd.f32 %v8909, %v8916
        %s8919 = scalar_lea.vmem [#allocation7], 2
        %v8920 = vld [vmem:[%s8919] ss:$8 sm:$0x7]
        %8922 = vrot.lane.b32.xlu0 %v8920, 2
        %v8923 = vpop.permute.xlu0 %8922
        %v8924 = vrot.slane %v8923, 7
        %v8925 = vsel %vm1225, %v8924, %v8923
        %v8927 = vadd.f32 %v8918, %v8925
        %s8928 = scalar_lea.vmem [#allocation7], 3
        %v8929 = vld [vmem:[%s8928] ss:$8 sm:$0x7]
        %8931 = vrot.lane.b32.xlu0 %v8929, 3
        %v8932 = vpop.permute.xlu0 %8931
        %v8933 = vrot.slane %v8932, 7
        %v8934 = vsel %vm1317, %v8933, %v8932
        %v8936 = vadd.f32 %v8927, %v8934
        %s8937 = scalar_lea.vmem [#allocation7], 4
        %v8938 = vld [vmem:[%s8937] ss:$8 sm:$0x7]
        %8940 = vrot.lane.b32.xlu0 %v8938, 4
        %v8941 = vpop.permute.xlu0 %8940
        %v8942 = vrot.slane %v8941, 7
        %v8943 = vsel %vm745, %v8942, %v8941
        %v8945 = vadd.f32 %v8936, %v8943
        %s8946 = scalar_lea.vmem [#allocation7], 5
        %v8947 = vld [vmem:[%s8946] ss:$8 sm:$0x7]
        %8949 = vrot.lane.b32.xlu0 %v8947, 5
        %v8950 = vpop.permute.xlu0 %8949
        %v8951 = vrot.slane %v8950, 7
        %v8952 = vsel %vm1500, %v8951, %v8950
        %v8954 = vadd.f32 %v8945, %v8952
        %s8955 = scalar_lea.vmem [#allocation7], 6
        %v8956 = vld [vmem:[%s8955] ss:$8 sm:$0x7]
        %8958 = vrot.lane.b32.xlu0 %v8956, 6
        %v8959 = vpop.permute.xlu0 %8958
        %v8960 = vrot.slane %v8959, 7
        %v8961 = vsel %vm1592, %v8960, %v8959
        %v8963 = vadd.f32 %v8954, %v8961
        %s8964 = scalar_lea.vmem [#allocation7], 7
        %v8965 = vld [vmem:[%s8964] ss:$8 sm:$0x7]
        %8967 = vrot.lane.b32.xlu0 %v8965, 7
        %v8968 = vpop.permute.xlu0 %8967
        %v8969 = vrot.slane %v8968, 7
        %v8970 = vsel %vm1684, %v8969, %v8968
        %v8972 = vadd.f32 %v8963, %v8970
        %s8973 = scalar_lea.vmem [#allocation7], 24
        %v8974 = vld [vmem:[%s8973] ss:$8 sm:$0x3]
        %8976 = vrot.lane.b32.xlu0 %v8974, 8
        %v8977 = vpop.permute.xlu0 %8976
        %v8978 = vrot.slane %v8977, 7
        %v8979 = vsel %vm759, %v8978, %v8977
        %v8981 = vadd.f32 %v8972, %v8979
        %8983 = vrot.lane.b32.xlu0 %v8981, 120
        %v8984 = vpop.permute.xlu0 %8983
        %v8985 = vrot.slane %v8984, 1
        %v8986 = vsel %vm870, %v8984, %v8985
        %8988 = vst.msk [vmem:[%s731] sm:$0x3] %vm785, %v8986
        %8997 = vrot.lane.b32.xlu0 %v8662, 4
        %v8998 = vpop.permute.xlu0 %8997
        %8999 = vrot.lane.b32.xlu0 %v8663, 4
        %v9000 = vpop.permute.xlu0 %8999
        %9001 = vrot.lane.b32.xlu0 %v8666, 4
        %v9002 = vpop.permute.xlu0 %9001
        %9003 = vrot.lane.b32.xlu0 %v8667, 4
        %v9004 = vpop.permute.xlu0 %9003
        %9005 = vrot.lane.b32.xlu0 %v8670, 4
        %v9006 = vpop.permute.xlu0 %9005
        %9007 = vrot.lane.b32.xlu0 %v8671, 4
        %v9008 = vpop.permute.xlu0 %9007
        %9009 = vrot.lane.b32.xlu0 %v8674, 4
        %v9010 = vpop.permute.xlu0 %9009
        %9011 = vrot.lane.b32.xlu0 %v8675, 4
        %v9012 = vpop.permute.xlu0 %9011
        %v9013 = vsel %vm745, %v8998, %v9000
        %v9014 = vsel %vm745, %v9002, %v9004
        %v9015 = vsel %vm745, %v9006, %v9008
        %v9016 = vsel %vm745, %v9010, %v9012
        %9029 = vst.msk [vmem:[#allocation6] sm:$0xff] %vm8716, %v8998
        %9030 = vst [vmem:[#allocation6 + $0x8] sm:$0xff] %v9013
        %9031 = vst.msk [vmem:[#allocation6 + $0x10] sm:$0xff] %vm745, %v9000
        %9032 = vst.msk [vmem:[#allocation6 + $0x18] sm:$0xff] %vm8716, %v9002
        %9033 = vst [vmem:[#allocation6 + $0x20] sm:$0xff] %v9014
        %9034 = vst.msk [vmem:[#allocation6 + $0x28] sm:$0xff] %vm745, %v9004
        %9035 = vst.msk [vmem:[#allocation6 + $0x30] sm:$0xff] %vm8716, %v9006
        %9036 = vst [vmem:[#allocation6 + $0x38] sm:$0xff] %v9015
        %9037 = vst.msk [vmem:[#allocation6 + $0x40] sm:$0xff] %vm745, %v9008
        %9038 = vst.msk [vmem:[#allocation6 + $0x48] sm:$0xff] %vm8716, %v9010
        %9039 = vst [vmem:[#allocation6 + $0x50] sm:$0xff] %v9016
        %9040 = vst.msk [vmem:[#allocation6 + $0x58] sm:$0xff] %vm745, %v9012
        %v9041 = vld [vmem:[%s2] sm:$0xff]
        %v9042 = vld [vmem:[%s2 + $0x8] sm:$0x1]
        %v9043 = vld [vmem:[#allocation6] sm:$0xff]
        %v9044 = vld [vmem:[#allocation6 + $0x8] sm:$0xff]
        %v9045 = vld [vmem:[#allocation6 + $0x10] sm:$0xff]
        %v9046 = vld [vmem:[#allocation6 + $0x18] sm:$0xff]
        %v9047 = vld [vmem:[#allocation6 + $0x20] sm:$0xff]
        %v9048 = vld [vmem:[#allocation6 + $0x28] sm:$0xff]
        %v9049 = vld [vmem:[#allocation6 + $0x30] sm:$0xff]
        %v9050 = vld [vmem:[#allocation6 + $0x38] sm:$0xff]
        %v9051 = vld [vmem:[#allocation6 + $0x40] sm:$0xff]
        %v9052 = vld [vmem:[#allocation6 + $0x48] sm:$0xff]
        %v9053 = vld [vmem:[#allocation6 + $0x50] sm:$0xff]
        %v9054 = vld [vmem:[#allocation6 + $0x58] sm:$0xff]
        %v9056 = vsel %vm5941, %v9041, 0
        %v9059 = vsel %vm5941, %v9042, 0
        %9061 = vmatprep.subr.mxu0 %v9044
        %9062 = vmatpush1.msra.mxu0 %v9043
        %9063 = vmatprep.subr.mxu0 %v9047
        %9064 = vmatpush1.msra.mxu0 %v9046
        %9065 = vmatprep.subr.mxu0 %v9050
        %9066 = vmatpush1.msra.mxu0 %v9049
        %9067 = vmatprep.subr.mxu0 %v9053
        %9068 = vmatpush1.msra.mxu0 %v9052
        %9069 = vmatprep.subr.mxu0 0.0
        %9070 = vmatpush1.msra.mxu0 0.0
        %9071 = vmatprep.subr.mxu0 0.0
        %9072 = vmatpush1.msra.mxu0 0.0
        %9073 = vmatprep.subr.mxu0 0.0
        %9074 = vmatpush1.msra.mxu0 0.0
        %9075 = vmatprep.subr.mxu0 0.0
        %9076 = vmatpush1.msra.mxu0 0.0
        %9077 = vmatprep.subr.mxu0 0.0
        %9078 = vmatpush1.msra.mxu0 0.0
        %9079 = vmatprep.subr.mxu0 0.0
        %9080 = vmatpush1.msra.mxu0 0.0
        %9081 = vmatprep.subr.mxu0 0.0
        %9082 = vmatpush1.msra.mxu0 0.0
        %9083 = vmatprep.subr.mxu0 0.0
        %9084 = vmatpush1.msra.mxu0 0.0
        %9085 = vmatprep.subr.mxu0 0.0
        %9086 = vmatpush1.msra.mxu0 0.0
        %9087 = vmatprep.subr.mxu0 0.0
        %9088 = vmatpush1.msra.mxu0 0.0
        %9089 = vmatprep.subr.mxu0 0.0
        %9090 = vmatpush1.msra.mxu0 0.0
        %9091 = vmatprep.subr.mxu0 0.0
        %9092 = vmatpush1.msra.mxu0 0.0
        %9093 = vmatprep.subr.mxu0 0.0
        %9094 = vmatpush1.msra.mxu0 0.0
        %9095 = vmatprep.subr.mxu0 0.0
        %9096 = vmatpush1.msra.mxu0 0.0
        %9097 = vmatprep.subr.mxu0 0.0
        %9098 = vmatpush1.msra.mxu0 0.0
        %9099 = vmatprep.subr.mxu0 0.0
        %9100 = vmatpush1.msra.mxu0 0.0
        %9101 = vmatprep.subr.mxu0 0.0
        %9102 = vmatpush1.msra.mxu0 0.0
        %9103 = vmatprep.subr.mxu0 0.0
        %9104 = vmatpush1.msra.mxu0 0.0
        %9105 = vmatprep.subr.mxu0 0.0
        %9106 = vmatpush1.msra.mxu0 0.0
        %9107 = vmatprep.subr.mxu0 0.0
        %9108 = vmatpush1.msra.mxu0 0.0
        %9109 = vmatprep.subr.mxu0 0.0
        %9110 = vmatpush1.msra.mxu0 0.0
        %9111 = vmatprep.subr.mxu0 0.0
        %9112 = vmatpush1.msra.mxu0 0.0
        %9113 = vmatprep.subr.mxu0 0.0
        %9114 = vmatpush1.msra.mxu0 0.0
        %9115 = vmatprep.subr.mxu0 0.0
        %9116 = vmatpush1.msra.mxu0 0.0
        %9117 = vmatprep.subr.mxu0 0.0
        %9118 = vmatpush1.msra.mxu0 0.0
        %9119 = vmatprep.subr.mxu0 0.0
        %9120 = vmatpush1.msra.mxu0 0.0
        %9121 = vmatprep.subr.mxu0 0.0
        %9122 = vmatpush1.msra.mxu0 0.0
        %9123 = vmatprep.subr.mxu0 0.0
        %9124 = vmatpush1.msra.mxu0 0.0
        %9125 = vmatprep.mubr.f32.mxu0 0.0
        %9126 = vmatmul.mubr.f32.gmra.mrb[0].mxu0 %v9056
        %v9127 = vpop.f32.mrb[0].mxu0
        %v9128 = vadd.f32 0.0, %v9127
        %v9129 = vpop.f32.mrb[0].mxu0
        %v9130 = vadd.f32 0.0, %v9129
        %9131 = vmatprep.mubr.f32.mxu0 0.0
        %9132 = vmatmul.mubr.f32.gmra.mrb[0].mxu0 %v9059
        %v9133 = vpop.f32.mrb[0].mxu0
        %v9134 = vadd.f32 0.0, %v9133
        %v9135 = vpop.f32.mrb[0].mxu0
        %v9136 = vadd.f32 0.0, %v9135
        %9137 = vdwg.mxu0
        %9138 = vmatprep.subr.mxu0 0.0
        %9139 = vmatpush1.msra.mxu0 %v9045
        %9140 = vmatprep.subr.mxu0 0.0
        %9141 = vmatpush1.msra.mxu0 %v9048
        %9142 = vmatprep.subr.mxu0 0.0
        %9143 = vmatpush1.msra.mxu0 %v9051
        %9144 = vmatprep.subr.mxu0 0.0
        %9145 = vmatpush1.msra.mxu0 %v9054
        %9146 = vmatprep.subr.mxu0 0.0
        %9147 = vmatpush1.msra.mxu0 0.0
        %9148 = vmatprep.subr.mxu0 0.0
        %9149 = vmatpush1.msra.mxu0 0.0
        %9150 = vmatprep.subr.mxu0 0.0
        %9151 = vmatpush1.msra.mxu0 0.0
        %9152 = vmatprep.subr.mxu0 0.0
        %9153 = vmatpush1.msra.mxu0 0.0
        %9154 = vmatprep.subr.mxu0 0.0
        %9155 = vmatpush1.msra.mxu0 0.0
        %9156 = vmatprep.subr.mxu0 0.0
        %9157 = vmatpush1.msra.mxu0 0.0
        %9158 = vmatprep.subr.mxu0 0.0
        %9159 = vmatpush1.msra.mxu0 0.0
        %9160 = vmatprep.subr.mxu0 0.0
        %9161 = vmatpush1.msra.mxu0 0.0
        %9162 = vmatprep.subr.mxu0 0.0
        %9163 = vmatpush1.msra.mxu0 0.0
        %9164 = vmatprep.subr.mxu0 0.0
        %9165 = vmatpush1.msra.mxu0 0.0
        %9166 = vmatprep.subr.mxu0 0.0
        %9167 = vmatpush1.msra.mxu0 0.0
        %9168 = vmatprep.subr.mxu0 0.0
        %9169 = vmatpush1.msra.mxu0 0.0
        %9170 = vmatprep.subr.mxu0 0.0
        %9171 = vmatpush1.msra.mxu0 0.0
        %9172 = vmatprep.subr.mxu0 0.0
        %9173 = vmatpush1.msra.mxu0 0.0
        %9174 = vmatprep.subr.mxu0 0.0
        %9175 = vmatpush1.msra.mxu0 0.0
        %9176 = vmatprep.subr.mxu0 0.0
        %9177 = vmatpush1.msra.mxu0 0.0
        %9178 = vmatprep.subr.mxu0 0.0
        %9179 = vmatpush1.msra.mxu0 0.0
        %9180 = vmatprep.subr.mxu0 0.0
        %9181 = vmatpush1.msra.mxu0 0.0
        %9182 = vmatprep.subr.mxu0 0.0
        %9183 = vmatpush1.msra.mxu0 0.0
        %9184 = vmatprep.subr.mxu0 0.0
        %9185 = vmatpush1.msra.mxu0 0.0
        %9186 = vmatprep.subr.mxu0 0.0
        %9187 = vmatpush1.msra.mxu0 0.0
        %9188 = vmatprep.subr.mxu0 0.0
        %9189 = vmatpush1.msra.mxu0 0.0
        %9190 = vmatprep.subr.mxu0 0.0
        %9191 = vmatpush1.msra.mxu0 0.0
        %9192 = vmatprep.subr.mxu0 0.0
        %9193 = vmatpush1.msra.mxu0 0.0
        %9194 = vmatprep.subr.mxu0 0.0
        %9195 = vmatpush1.msra.mxu0 0.0
        %9196 = vmatprep.subr.mxu0 0.0
        %9197 = vmatpush1.msra.mxu0 0.0
        %9198 = vmatprep.subr.mxu0 0.0
        %9199 = vmatpush1.msra.mxu0 0.0
        %9200 = vmatprep.subr.mxu0 0.0
        %9201 = vmatpush1.msra.mxu0 0.0
        %9202 = vmatprep.mubr.f32.mxu0 0.0
        %9203 = vmatmul.mubr.f32.gmra.mrb[0].mxu0 %v9056
        %v9204 = vpop.f32.mrb[0].mxu0
        %v9205 = vadd.f32 0.0, %v9204
        %v9206 = vpop.f32.mrb[0].mxu0
        %9207 = vmatprep.mubr.f32.mxu0 0.0
        %9208 = vmatmul.mubr.f32.gmra.mrb[0].mxu0 %v9059
        %v9209 = vpop.f32.mrb[0].mxu0
        %v9210 = vadd.f32 0.0, %v9209
        %v9211 = vpop.f32.mrb[0].mxu0
        %9212 = vdwg.mxu0
        %9213 = vst [vmem:[#allocation7] sm:$0xff] %v9128
        %9214 = vst [vmem:[#allocation7 + $0x8] sm:$0xff] %v9130
        %9215 = vst.msk [vmem:[#allocation7 + $0x10] sm:$0xff] %vm759, %v9205
        %9216 = vst [vmem:[#allocation7 + $0x18] sm:$0x1] %v9134
        %9217 = vst [vmem:[#allocation7 + $0x20] sm:$0x1] %v9136
        %9218 = vst.msk [vmem:[#allocation7 + $0x28] sm:$0x1] %vm8906, %v9210
        %v9219 = vld [vmem:[#allocation7] ss:$8 sm:$0x7]
        %v9220 = vadd.f32 %v9219, 0.0
        %v9221 = vld [vmem:[%s8910] ss:$8 sm:$0x7]
        %9223 = vrot.lane.b32.xlu0 %v9221, 1
        %v9224 = vpop.permute.xlu0 %9223
        %v9225 = vrot.slane %v9224, 7
        %v9226 = vsel %vm1133, %v9225, %v9224
        %v9228 = vadd.f32 %v9220, %v9226
        %v9229 = vld [vmem:[%s8919] ss:$8 sm:$0x7]
        %9231 = vrot.lane.b32.xlu0 %v9229, 2
        %v9232 = vpop.permute.xlu0 %9231
        %v9233 = vrot.slane %v9232, 7
        %v9234 = vsel %vm1225, %v9233, %v9232
        %v9236 = vadd.f32 %v9228, %v9234
        %v9237 = vld [vmem:[%s8928] ss:$8 sm:$0x7]
        %9239 = vrot.lane.b32.xlu0 %v9237, 3
        %v9240 = vpop.permute.xlu0 %9239
        %v9241 = vrot.slane %v9240, 7
        %v9242 = vsel %vm1317, %v9241, %v9240
        %v9244 = vadd.f32 %v9236, %v9242
        %v9245 = vld [vmem:[%s8937] ss:$8 sm:$0x7]
        %9247 = vrot.lane.b32.xlu0 %v9245, 4
        %v9248 = vpop.permute.xlu0 %9247
        %v9249 = vrot.slane %v9248, 7
        %v9250 = vsel %vm745, %v9249, %v9248
        %v9252 = vadd.f32 %v9244, %v9250
        %v9253 = vld [vmem:[%s8946] ss:$8 sm:$0x7]
        %9255 = vrot.lane.b32.xlu0 %v9253, 5
        %v9256 = vpop.permute.xlu0 %9255
        %v9257 = vrot.slane %v9256, 7
        %v9258 = vsel %vm1500, %v9257, %v9256
        %v9260 = vadd.f32 %v9252, %v9258
        %v9261 = vld [vmem:[%s8955] ss:$8 sm:$0x7]
        %9263 = vrot.lane.b32.xlu0 %v9261, 6
        %v9264 = vpop.permute.xlu0 %9263
        %v9265 = vrot.slane %v9264, 7
        %v9266 = vsel %vm1592, %v9265, %v9264
        %v9268 = vadd.f32 %v9260, %v9266
        %v9269 = vld [vmem:[%s8964] ss:$8 sm:$0x7]
        %9271 = vrot.lane.b32.xlu0 %v9269, 7
        %v9272 = vpop.permute.xlu0 %9271
        %v9273 = vrot.slane %v9272, 7
        %v9274 = vsel %vm1684, %v9273, %v9272
        %v9276 = vadd.f32 %v9268, %v9274
        %v9277 = vld [vmem:[%s8973] ss:$8 sm:$0x3]
        %9279 = vrot.lane.b32.xlu0 %v9277, 8
        %v9280 = vpop.permute.xlu0 %9279
        %v9281 = vrot.slane %v9280, 7
        %v9282 = vsel %vm759, %v9281, %v9280
        %v9284 = vadd.f32 %v9276, %v9282
        %9286 = vrot.lane.b32.xlu0 %v9284, 120
        %v9287 = vpop.permute.xlu0 %9286
        %v9288 = vrot.slane %v9287, 1
        %v9289 = vsel %vm870, %v9287, %v9288
        %s9291 = scalar_lea.vmem %s731, 2 [#allocation8]
        %9292 = vst.msk [vmem:[%s9291] sm:$0x3] %vm785, %v9289
        %s9293 = sand.u32 %s555, 1
        %s9294 = scalar_lea.sflag [#allocation9], %s9293
        %s9295 = sand.u32 %s555, 1
        %s9296 = smul.addr %s9295, 4
        %s9297 = scalar_lea.vmem [#allocation8], %s9296
        // Predicated region
        $region117: #{tpu_custom_call.1} parent=115 // pred_check
          %p9298 = pneg %p565
        $region118: #{tpu_custom_call.1} parent=115 // pred_check_branch
          %9300 = sbr.rel (%p9298) target = $region120
        $region119: #{tpu_custom_call.1} parent=115 // pred_region
          %s9301 = smul.u32 2, %s38
          %s9303 = ssub.s32 64, 64
          %9304 = vsyncadd %s9294, %s9303
          %s9305 = smul.addr %s9301, 2
          %s9306 = smul.addr %s9305, 16
          %s9307 = scalar_lea.hbm %s24, %s9306
          %s9308 = sshll.u32 %s9297, 4
          %s9309 = int_to_ptr.vmem [resolvable:$true] %s9308
          %9314 = dma.vmem_to_hbm [thread:$0]  %s9309, 64, %s9307, %s9294, 32, 32, 2
        $region120: #{tpu_custom_call.1} parent=115 // pred_fallthru
          _
      $region116: #{tpu_custom_call.1} parent=5 // pred_fallthru
        _
      %p9315 = scmp.le.s32.totalorder 2, %s33
      // Predicated region
      $region121: #{tpu_custom_call.1} parent=5 // pred_check
        %p9316 = pneg %p9315
      $region122: #{tpu_custom_call.1} parent=5 // pred_check_branch
        %9318 = sbr.rel (%p9316) target = $region124
      $region123: #{tpu_custom_call.1} parent=5 // pred_region
        %s9319 = ssub.s32 %s33, 2
        // Predicated region
        $region125: #{tpu_custom_call.1} parent=123 // pred_check
          %p9320 = pneg %p571
        $region126: #{tpu_custom_call.1} parent=123 // pred_check_branch
          %9322 = sbr.rel (%p9320) target = $region128
        $region127: #{tpu_custom_call.1} parent=123 // pred_region
          %s9323 = sand.u32 %s556, 1
          %s9324 = scalar_lea.sflag [#allocation9], %s9323
          %s9325 = sand.u32 %s556, 1
          %s9326 = smul.addr %s9325, 4
          %s9327 = scalar_lea.vmem [#allocation8], %s9326
          %9328 = dma.done %s9324, 64
        $region128: #{tpu_custom_call.1} parent=123 // pred_fallthru
          _
      $region124: #{tpu_custom_call.1} parent=5 // pred_fallthru
        _
    $region6: #{tpu_custom_call.1} parent=1 // loop_footer
      %s37 = sadd.s32 1, %s33
    $region7: #{tpu_custom_call.1} parent=1 // loop_footer_branch
      %32 = sbr.rel target = $region3
    $region8: #{tpu_custom_call.1} parent=1 // loop_exit
      _
    %9329 = vsyncpa [#allocation9], 1
    %s9330 = scalar_lea.sflag [#allocation9], 1
    %9331 = vsyncpa %s9330, 1

</llo_original>
